<compile_context>
chip_gen: v7x
topology: tpu7x:2x2x1
jax: 0.10.0
libtpu: 0.0.40
codegen_flags: <defaults>
</compile_context>

<pallas_src>
import jax
import jax.numpy as jnp
from jax.experimental import pallas as pl
from jax.experimental.pallas import tpu as pltpu


OUT_PAD = 128      # lane-dense output width (15 real columns, rest zero)
N_OUT = 15         # 5 * 3


def _make_kernel(act_dtype):
    f32, bf16 = jnp.float32, jnp.bfloat16

    def kernel(cat1_ref, x1_ref,
               wc1_ref, bc1_ref, wc2_ref, bc2_ref, wc3_ref, bc3_ref,
               wa1_ref, ba1_ref, wa2_ref, ba2_ref, wa3_ref, ba3_ref,
               wm1_ref, bm1_ref, wm2_ref, bm2_ref, wm3_ref, bm3_ref,
               wm4_ref, bm4_ref, amask_ref, qstd_ref, qmn_ref,
               out_ref):

        def dot(x, w_ref):
            # bf16 MXU operands, f32 accumulation.
            return jnp.dot(x.astype(bf16), w_ref[...], preferred_element_type=f32)

        def lin_relu(x, w_ref, b_ref):
            # Hidden layers: bias-add + ReLU in act_dtype (bf16 on v6e/v7x).
            return jnp.maximum(dot(x, w_ref).astype(act_dtype) + b_ref[...], 0)

        def lin(x, w_ref, b_ref):
            # Sub-MLP outputs stay f32 (feed f32 element-wise math).
            return dot(x, w_ref) + b_ref[...]

        cat1 = cat1_ref[...]          # (TB, 116) bf16 : [input3 | input2 | input1]
        x1 = x1_ref[...]              # (TB, 128) bf16 : [input1 | zeros]

        # ---- scale_layer (+) aux_layer, merged block-diagonally (3 dots) ------
        h = lin_relu(cat1, wc1_ref, bc1_ref)          # (TB, 128)
        h = lin_relu(h, wc2_ref, bc2_ref)             # (TB, 128)
        sa = lin(h, wc3_ref, bc3_ref)                 # f32: [:52]=scale, [64:]=aux

        # ---- a = input1 * scale ------------------------------------------------
        a = x1 * sa                                   # f32; lanes >= 52 are 0

        # ---- attention_layer(a) (K padded to 128, output padded to 128) -------
        h = lin_relu(a, wa1_ref, ba1_ref)             # (TB, 64)
        h = lin_relu(h, wa2_ref, ba2_ref)             # (TB, 64)
        att = lin(h, wa3_ref, ba3_ref)                # (TB, 128) f32; lanes >= 52 are 0
        aa = att * a                                  # f32; lanes >= 52 are 0

        # ---- b = [att*a | aux]: masked add, then ONE K=128 dot for main L1 ----
        b = aa + sa * amask_ref[...]                  # lanes [:52]=aa, [64:]=aux
        h = lin_relu(b, wm1_ref, bm1_ref)             # (TB, 192)
        h = lin_relu(h, wm2_ref, bm2_ref)             # (TB, 384)
        h = lin_relu(h, wm3_ref, bm3_ref)             # (TB, 384)  Dropout(0)==id
        y = lin(h, wm4_ref, bm4_ref)                  # (TB, 128) f32; 15 real cols

        # ---- quartile affine as f32 epilogue (padded cols stay exactly 0) -----
        out_ref[...] = y * qstd_ref[...] + qmn_ref[...]

    return kernel


def combined_quartm_ml(input1, input2, input3, params, quart_mn, quart_std,
                       tile_b=None):
    """input1:(B,52) input2:(B,12) input3:(B,52) float32 -> (B, 5, 3) float32."""
    B = input1.shape[0]
    qm_rows, qm_cols = quart_mn.shape
    assert qm_rows * qm_cols == N_OUT

    f32, bf16 = jnp.float32, jnp.bfloat16

    # ---- generation-aware defaults --------------------------------------------
    kind = ""
    try:
        kind = jax.devices()[0].device_kind.lower()
    except Exception:
        pass
    is_v7 = "v7" in kind
    old_vpu = any(v in kind for v in ("v2", "v3", "v4", "v5"))  # no bf16 VALU
    act_dtype = f32 if old_vpu else bf16
    if kind:
        max_tile = 2048 if is_v7 else 4096           # v7x: 64 MiB VMEM; v5e/v6e: 128 MiB
        vmem_limit = (32 if is_v7 else 64) * 1024 * 1024
    else:                                            # unknown backend -> conservative
        max_tile, vmem_limit = 2048, 32 * 1024 * 1024

    def round_up(x, m):
        return (x + m - 1) // m * m

    if tile_b is None:
        # >= 2 grid tiles whenever possible so a v7x megacore can split the batch.
        tile_b = min(max_tile, round_up(max(pl.cdiv(B, 2), 16), 16))
    tile_b = max(16, round_up(int(tile_b), 16))      # 16-row multiples (bf16 packing)
    b_pad = round_up(B, tile_b)
    n_tiles = b_pad // tile_b

    # ---- glue-side input prep (concat + dtype + batch padding) ----------------
    cat1 = jnp.concatenate((input3, input2, input1), axis=1).astype(bf16)
    cat1 = jnp.pad(cat1, ((0, b_pad - B), (0, 0)))
    # input1 padded to 128 lanes (zeros beyond 52) so the a / att*a path is
    # lane-aligned with the merged 128-wide scale/aux output.
    x1p = jnp.pad(input1.astype(bf16), ((0, b_pad - B), (0, 128 - 52)))

    def w16(w):
        return jnp.asarray(w, f32).astype(bf16)

    def brow(b, dt):
        return jnp.asarray(b, f32).reshape(1, -1).astype(dt)

    (ws1, bs1), (ws2, bs2), (ws3, bs3) = params["scale"]
    (wa1, ba1), (wa2, ba2), (wa3, ba3) = params["att"]
    (wx1, bx1), (wx2, bx2), (wx3, bx3) = params["aux"]
    (wm1, bm1), (wm2, bm2), (wm3, bm3), (wm4, bm4) = params["main"]

    # Block-diagonal merge of scale (116->64->64->52) and aux (12->64->64->64):
    # lanes 0:63 carry the scale path, lanes 64:127 carry the aux path.
    wc1 = jnp.zeros((116, 128), f32).at[:, :64].set(ws1).at[52:64, 64:].set(wx1)
    bc1 = jnp.concatenate([bs1, bx1])
    wc2 = jnp.zeros((128, 128), f32).at[:64, :64].set(ws2).at[64:, 64:].set(wx2)
    bc2 = jnp.concatenate([bs2, bx2])
    wc3 = jnp.zeros((128, 128), f32).at[:64, :52].set(ws3).at[64:, 64:].set(wx3)
    bc3 = jnp.concatenate([bs3, jnp.zeros((12,), f32), bx3])

    # Attention MLP: pad K of layer 1 to 128 (input is the 128-lane `a`), pad the
    # output of layer 3 to 128 lanes (extra lanes are zero and get killed by a).
    wa1p = jnp.zeros((128, 64), f32).at[:52, :].set(wa1)
    wa3p = jnp.zeros((64, 128), f32).at[:, :52].set(wa3)
    ba3p = jnp.zeros((128,), f32).at[:52].set(ba3)

    # Main layer 1: rows 0:52 act on att*a (lanes 0:52), rows 64:128 on aux.
    wm1p = jnp.zeros((128, 192), f32).at[:52, :].set(wm1[:52]).at[64:, :].set(wm1[52:])
    # Last layer: zero-pad to 128 output lanes; quartile affine NOT folded in
    # (kept as an f32 epilogue for fidelity).
    wm4p = jnp.zeros((384, OUT_PAD), f32).at[:, :N_OUT].set(wm4)
    bm4p = jnp.zeros((OUT_PAD,), f32).at[:N_OUT].set(bm4)

    amask = jnp.zeros((1, 128), f32).at[0, 64:].set(1.0)           # selects aux lanes
    qstd = jnp.zeros((1, OUT_PAD), f32).at[0, :N_OUT].set(quart_std.reshape(-1).astype(f32))
    qmn = jnp.zeros((1, OUT_PAD), f32).at[0, :N_OUT].set(quart_mn.reshape(-1).astype(f32))

    args = [
        cat1, x1p,
        w16(wc1), brow(bc1, act_dtype), w16(wc2), brow(bc2, act_dtype),
        w16(wc3), brow(bc3, f32),
        w16(wa1p), brow(ba1, act_dtype), w16(wa2), brow(ba2, act_dtype),
        w16(wa3p), brow(ba3p, f32),
        w16(wm1p), brow(bm1, act_dtype), w16(wm2), brow(bm2, act_dtype),
        w16(wm3), brow(bm3, act_dtype), w16(wm4p), brow(bm4p, f32),
        amask, qstd, qmn,
    ]

    kernel = _make_kernel(act_dtype)

    def batch_spec(ncols):
        return pl.BlockSpec((tile_b, ncols), lambda i: (i, 0))

    def resident_spec(arr, single_buf):
        # Constant block index -> weights/biases stay resident in VMEM.
        if single_buf:
            return pl.BlockSpec(arr.shape, lambda i: (0, 0),
                                pipeline_mode=pl.Buffered(1))
        return pl.BlockSpec(arr.shape, lambda i: (0, 0))

    def run(single_buf):
        in_specs = ([batch_spec(116), batch_spec(128)]
                    + [resident_spec(a, single_buf) for a in args[2:]])
        return pl.pallas_call(
            kernel,
            out_shape=jax.ShapeDtypeStruct((b_pad, OUT_PAD), f32),
            grid=(n_tiles,),
            in_specs=in_specs,
            out_specs=pl.BlockSpec((tile_b, OUT_PAD), lambda i: (i, 0)),
            compiler_params=pltpu.CompilerParams(
                dimension_semantics=("parallel",),
                vmem_limit_bytes=vmem_limit,
            ),
        )(*args)

    try:
        # Single-buffer the resident weights (never re-DMA'd; halves their VMEM).
        out_padded = run(True)
    except Exception:
        # Fallback if this jax version does not accept pipeline_mode on BlockSpec.
        out_padded = run(False)

    return out_padded[:B, :N_OUT].reshape(B, qm_rows, qm_cols)


# ------------------------------ reference (f32) -------------------------------
def _reference(input1, input2, input3, params, quart_mn, quart_std):
    def mlp3(x, layers):
        (w1, b1), (w2, b2), (w3, b3) = layers
        h = jnp.maximum(x @ w1 + b1, 0.0)
        h = jnp.maximum(h @ w2 + b2, 0.0)
        return h @ w3 + b3

    cat = jnp.concatenate((input3, input2, input1), axis=1)
    a = input1 * mlp3(cat, params["scale"])
    b = jnp.concatenate((mlp3(a, params["att"]) * a, mlp3(input2, params["aux"])),
                        axis=1)
    (w1, b1), (w2, b2), (w3, b3), (w4, b4) = params["main"]
    h = jnp.maximum(b @ w1 + b1, 0.0)
    h = jnp.maximum(h @ w2 + b2, 0.0)
    h = jnp.maximum(h @ w3 + b3, 0.0)     # Dropout(0) is identity, then ReLU
    y = h @ w4 + b4
    return (y.reshape(a.shape[0], quart_mn.shape[0], quart_mn.shape[1])
            * quart_std + quart_mn)


def _init_params(key):
    def linear(key, fin, fout):
        kw, kb = jax.random.split(key)
        w = jax.random.normal(kw, (fin, fout), jnp.float32) * 0.1
        b = jax.random.normal(kb, (fout,), jnp.float32) * 0.1
        return (w, b)

    keys = jax.random.split(key, 13)
    return {
        "scale": [linear(keys[0], 116, 64), linear(keys[1], 64, 64),
                  linear(keys[2], 64, 52)],
        "att": [linear(keys[3], 52, 64), linear(keys[4], 64, 64),
                linear(keys[5], 64, 52)],
        "aux": [linear(keys[6], 12, 64), linear(keys[7], 64, 64),
                linear(keys[8], 64, 64)],
        "main": [linear(keys[9], 116, 192), linear(keys[10], 192, 384),
                 linear(keys[11], 384, 384), linear(keys[12], 384, 15)],
    }


if __name__ == "__main__":
    key = jax.random.PRNGKey(0)
    k_in1, k_in2, k_in3, k_mn, k_std, k_params = jax.random.split(key, 6)

    B = 37   # deliberately not a multiple of 16 to exercise batch padding
    input1 = jax.random.normal(k_in1, (B, 52), jnp.float32)
    input2 = jax.random.normal(k_in2, (B, 12), jnp.float32)
    input3 = jax.random.normal(k_in3, (B, 52), jnp.float32)

    quart_mn = jax.random.normal(k_mn, (5, 3), jnp.float32)
    quart_std = jax.random.uniform(k_std, (5, 3), jnp.float32, 0.5, 1.5)

    params = _init_params(k_params)

    # Default tile_b path: B=37 -> tile_b=32, 2 grid tiles (padding, resident
    # weights, batch pipelining and the 'parallel' axis are all exercised).
    out = combined_quartm_ml(input1, input2, input3, params, quart_mn, quart_std)
    out = jax.block_until_ready(out)

    ref = _reference(input1, input2, input3, params, quart_mn, quart_std)
    assert out.shape == (B, 5, 3)
    # bf16 matmul operands with f32 accumulation (and bf16 hidden activations on
    # v6e/v7x) -> compare with a magnitude-relative tolerance vs the f32 reference.
    err = float(jnp.max(jnp.abs(out - ref)) / (jnp.max(jnp.abs(ref)) + 1e-6))
    assert err < 5e-2, f"max relative error too large: {err}"

    print("KERNEL_OK")
</pallas_src>

<mosaic_0001>
module attributes {stable_mosaic.version = 11 : i64} {
  func.func @kernel(%arg0: i32, %arg1: memref<32x116xbf16, #tpu.memory_space<vmem>>, %arg2: memref<32x128xbf16, #tpu.memory_space<vmem>>, %arg3: memref<116x128xbf16, #tpu.memory_space<vmem>>, %arg4: memref<1x128xbf16, #tpu.memory_space<vmem>>, %arg5: memref<128x128xbf16, #tpu.memory_space<vmem>>, %arg6: memref<1x128xbf16, #tpu.memory_space<vmem>>, %arg7: memref<128x128xbf16, #tpu.memory_space<vmem>>, %arg8: memref<1x128xf32, #tpu.memory_space<vmem>>, %arg9: memref<128x64xbf16, #tpu.memory_space<vmem>>, %arg10: memref<1x64xbf16, #tpu.memory_space<vmem>>, %arg11: memref<64x64xbf16, #tpu.memory_space<vmem>>, %arg12: memref<1x64xbf16, #tpu.memory_space<vmem>>, %arg13: memref<64x128xbf16, #tpu.memory_space<vmem>>, %arg14: memref<1x128xf32, #tpu.memory_space<vmem>>, %arg15: memref<128x192xbf16, #tpu.memory_space<vmem>>, %arg16: memref<1x192xbf16, #tpu.memory_space<vmem>>, %arg17: memref<192x384xbf16, #tpu.memory_space<vmem>>, %arg18: memref<1x384xbf16, #tpu.memory_space<vmem>>, %arg19: memref<384x384xbf16, #tpu.memory_space<vmem>>, %arg20: memref<1x384xbf16, #tpu.memory_space<vmem>>, %arg21: memref<384x128xbf16, #tpu.memory_space<vmem>>, %arg22: memref<1x128xf32, #tpu.memory_space<vmem>>, %arg23: memref<1x128xf32, #tpu.memory_space<vmem>>, %arg24: memref<1x128xf32, #tpu.memory_space<vmem>>, %arg25: memref<1x128xf32, #tpu.memory_space<vmem>>, %arg26: memref<32x128xf32, #tpu.memory_space<vmem>>) attributes {dimension_semantics = [#tpu.dimension_semantics<parallel>], iteration_bounds = array<i64: 2>, scalar_prefetch = 0 : i64, scratch_operands = 0 : i64, tpu.core_type = #tpu.core_type<tc>, window_params = [{transform_indices = @transform_0, window_bounds = array<i64: 32, 116>}, {transform_indices = @transform_1, window_bounds = array<i64: 32, 128>}, {pipeline_mode = #tpu.pipeline_mode<synchronous>, transform_indices = @transform_2, window_bounds = array<i64: 116, 128>}, {pipeline_mode = #tpu.pipeline_mode<synchronous>, transform_indices = @transform_3, window_bounds = array<i64: 1, 128>}, {pipeline_mode = #tpu.pipeline_mode<synchronous>, transform_indices = @transform_4, window_bounds = array<i64: 128, 128>}, {pipeline_mode = #tpu.pipeline_mode<synchronous>, transform_indices = @transform_5, window_bounds = array<i64: 1, 128>}, {pipeline_mode = #tpu.pipeline_mode<synchronous>, transform_indices = @transform_6, window_bounds = array<i64: 128, 128>}, {pipeline_mode = #tpu.pipeline_mode<synchronous>, transform_indices = @transform_7, window_bounds = array<i64: 1, 128>}, {pipeline_mode = #tpu.pipeline_mode<synchronous>, transform_indices = @transform_8, window_bounds = array<i64: 128, 64>}, {pipeline_mode = #tpu.pipeline_mode<synchronous>, transform_indices = @transform_9, window_bounds = array<i64: 1, 64>}, {pipeline_mode = #tpu.pipeline_mode<synchronous>, transform_indices = @transform_10, window_bounds = array<i64: 64, 64>}, {pipeline_mode = #tpu.pipeline_mode<synchronous>, transform_indices = @transform_11, window_bounds = array<i64: 1, 64>}, {pipeline_mode = #tpu.pipeline_mode<synchronous>, transform_indices = @transform_12, window_bounds = array<i64: 64, 128>}, {pipeline_mode = #tpu.pipeline_mode<synchronous>, transform_indices = @transform_13, window_bounds = array<i64: 1, 128>}, {pipeline_mode = #tpu.pipeline_mode<synchronous>, transform_indices = @transform_14, window_bounds = array<i64: 128, 192>}, {pipeline_mode = #tpu.pipeline_mode<synchronous>, transform_indices = @transform_15, window_bounds = array<i64: 1, 192>}, {pipeline_mode = #tpu.pipeline_mode<synchronous>, transform_indices = @transform_16, window_bounds = array<i64: 192, 384>}, {pipeline_mode = #tpu.pipeline_mode<synchronous>, transform_indices = @transform_17, window_bounds = array<i64: 1, 384>}, {pipeline_mode = #tpu.pipeline_mode<synchronous>, transform_indices = @transform_18, window_bounds = array<i64: 384, 384>}, {pipeline_mode = #tpu.pipeline_mode<synchronous>, transform_indices = @transform_19, window_bounds = array<i64: 1, 384>}, {pipeline_mode = #tpu.pipeline_mode<synchronous>, transform_indices = @transform_20, window_bounds = array<i64: 384, 128>}, {pipeline_mode = #tpu.pipeline_mode<synchronous>, transform_indices = @transform_21, window_bounds = array<i64: 1, 128>}, {pipeline_mode = #tpu.pipeline_mode<synchronous>, transform_indices = @transform_22, window_bounds = array<i64: 1, 128>}, {pipeline_mode = #tpu.pipeline_mode<synchronous>, transform_indices = @transform_23, window_bounds = array<i64: 1, 128>}, {pipeline_mode = #tpu.pipeline_mode<synchronous>, transform_indices = @transform_24, window_bounds = array<i64: 1, 128>}, {transform_indices = @transform_25, window_bounds = array<i64: 32, 128>}]} {
    %c0 = arith.constant 0 : index
    %c0_0 = arith.constant 0 : index
    %0 = vector.load %arg1[%c0, %c0_0] : memref<32x116xbf16, #tpu.memory_space<vmem>>, vector<32x116xbf16>
    %c0_1 = arith.constant 0 : index
    %c0_2 = arith.constant 0 : index
    %1 = vector.load %arg2[%c0_1, %c0_2] : memref<32x128xbf16, #tpu.memory_space<vmem>>, vector<32x128xbf16>
    %c0_3 = arith.constant 0 : index
    %c0_4 = arith.constant 0 : index
    %2 = vector.load %arg3[%c0_3, %c0_4] : memref<116x128xbf16, #tpu.memory_space<vmem>>, vector<116x128xbf16>
    %cst = arith.constant dense<0.000000e+00> : vector<32x128xf32>
    %3 = tpu.matmul %0, %2, %cst {dimension_numbers = #tpu.dot_dimension_numbers<[1], [0], [0], [1], [0, 0, 1, 1], [], []>} : vector<32x116xbf16>, vector<116x128xbf16>, vector<32x128xf32> -> vector<32x128xf32>
    %4 = arith.truncf %3 : vector<32x128xf32> to vector<32x128xbf16>
    %c0_5 = arith.constant 0 : index
    %c0_6 = arith.constant 0 : index
    %5 = vector.load %arg4[%c0_5, %c0_6] : memref<1x128xbf16, #tpu.memory_space<vmem>>, vector<1x128xbf16>
    %6 = vector.broadcast %5 : vector<1x128xbf16> to vector<32x128xbf16>
    %7 = arith.addf %4, %6 : vector<32x128xbf16>
    %cst_7 = arith.constant 0.000000e+00 : bf16
    %8 = vector.broadcast %cst_7 : bf16 to vector<32x128xbf16>
    %9 = arith.maximumf %7, %8 : vector<32x128xbf16>
    %c0_8 = arith.constant 0 : index
    %c0_9 = arith.constant 0 : index
    %10 = vector.load %arg5[%c0_8, %c0_9] : memref<128x128xbf16, #tpu.memory_space<vmem>>, vector<128x128xbf16>
    %cst_10 = arith.constant dense<0.000000e+00> : vector<32x128xf32>
    %11 = tpu.matmul %9, %10, %cst_10 {dimension_numbers = #tpu.dot_dimension_numbers<[1], [0], [0], [1], [0, 0, 1, 1], [], []>} : vector<32x128xbf16>, vector<128x128xbf16>, vector<32x128xf32> -> vector<32x128xf32>
    %12 = arith.truncf %11 : vector<32x128xf32> to vector<32x128xbf16>
    %c0_11 = arith.constant 0 : index
    %c0_12 = arith.constant 0 : index
    %13 = vector.load %arg6[%c0_11, %c0_12] : memref<1x128xbf16, #tpu.memory_space<vmem>>, vector<1x128xbf16>
    %14 = vector.broadcast %13 : vector<1x128xbf16> to vector<32x128xbf16>
    %15 = arith.addf %12, %14 : vector<32x128xbf16>
    %cst_13 = arith.constant 0.000000e+00 : bf16
    %16 = vector.broadcast %cst_13 : bf16 to vector<32x128xbf16>
    %17 = arith.maximumf %15, %16 : vector<32x128xbf16>
    %c0_14 = arith.constant 0 : index
    %c0_15 = arith.constant 0 : index
    %18 = vector.load %arg7[%c0_14, %c0_15] : memref<128x128xbf16, #tpu.memory_space<vmem>>, vector<128x128xbf16>
    %cst_16 = arith.constant dense<0.000000e+00> : vector<32x128xf32>
    %19 = tpu.matmul %17, %18, %cst_16 {dimension_numbers = #tpu.dot_dimension_numbers<[1], [0], [0], [1], [0, 0, 1, 1], [], []>} : vector<32x128xbf16>, vector<128x128xbf16>, vector<32x128xf32> -> vector<32x128xf32>
    %c0_17 = arith.constant 0 : index
    %c0_18 = arith.constant 0 : index
    %20 = vector.load %arg8[%c0_17, %c0_18] : memref<1x128xf32, #tpu.memory_space<vmem>>, vector<1x128xf32>
    %21 = vector.broadcast %20 : vector<1x128xf32> to vector<32x128xf32>
    %22 = arith.addf %19, %21 : vector<32x128xf32>
    %23 = arith.extf %1 : vector<32x128xbf16> to vector<32x128xf32>
    %24 = arith.mulf %23, %22 : vector<32x128xf32>
    %25 = arith.truncf %24 : vector<32x128xf32> to vector<32x128xbf16>
    %c0_19 = arith.constant 0 : index
    %c0_20 = arith.constant 0 : index
    %26 = vector.load %arg9[%c0_19, %c0_20] : memref<128x64xbf16, #tpu.memory_space<vmem>>, vector<128x64xbf16>
    %cst_21 = arith.constant dense<0.000000e+00> : vector<32x64xf32>
    %27 = tpu.matmul %25, %26, %cst_21 {dimension_numbers = #tpu.dot_dimension_numbers<[1], [0], [0], [1], [0, 0, 1, 1], [], []>} : vector<32x128xbf16>, vector<128x64xbf16>, vector<32x64xf32> -> vector<32x64xf32>
    %28 = arith.truncf %27 : vector<32x64xf32> to vector<32x64xbf16>
    %c0_22 = arith.constant 0 : index
    %c0_23 = arith.constant 0 : index
    %29 = vector.load %arg10[%c0_22, %c0_23] : memref<1x64xbf16, #tpu.memory_space<vmem>>, vector<1x64xbf16>
    %30 = vector.broadcast %29 : vector<1x64xbf16> to vector<32x64xbf16>
    %31 = arith.addf %28, %30 : vector<32x64xbf16>
    %cst_24 = arith.constant 0.000000e+00 : bf16
    %32 = vector.broadcast %cst_24 : bf16 to vector<32x64xbf16>
    %33 = arith.maximumf %31, %32 : vector<32x64xbf16>
    %c0_25 = arith.constant 0 : index
    %c0_26 = arith.constant 0 : index
    %34 = vector.load %arg11[%c0_25, %c0_26] : memref<64x64xbf16, #tpu.memory_space<vmem>>, vector<64x64xbf16>
    %cst_27 = arith.constant dense<0.000000e+00> : vector<32x64xf32>
    %35 = tpu.matmul %33, %34, %cst_27 {dimension_numbers = #tpu.dot_dimension_numbers<[1], [0], [0], [1], [0, 0, 1, 1], [], []>} : vector<32x64xbf16>, vector<64x64xbf16>, vector<32x64xf32> -> vector<32x64xf32>
    %36 = arith.truncf %35 : vector<32x64xf32> to vector<32x64xbf16>
    %c0_28 = arith.constant 0 : index
    %c0_29 = arith.constant 0 : index
    %37 = vector.load %arg12[%c0_28, %c0_29] : memref<1x64xbf16, #tpu.memory_space<vmem>>, vector<1x64xbf16>
    %38 = vector.broadcast %37 : vector<1x64xbf16> to vector<32x64xbf16>
    %39 = arith.addf %36, %38 : vector<32x64xbf16>
    %cst_30 = arith.constant 0.000000e+00 : bf16
    %40 = vector.broadcast %cst_30 : bf16 to vector<32x64xbf16>
    %41 = arith.maximumf %39, %40 : vector<32x64xbf16>
    %c0_31 = arith.constant 0 : index
    %c0_32 = arith.constant 0 : index
    %42 = vector.load %arg13[%c0_31, %c0_32] : memref<64x128xbf16, #tpu.memory_space<vmem>>, vector<64x128xbf16>
    %cst_33 = arith.constant dense<0.000000e+00> : vector<32x128xf32>
    %43 = tpu.matmul %41, %42, %cst_33 {dimension_numbers = #tpu.dot_dimension_numbers<[1], [0], [0], [1], [0, 0, 1, 1], [], []>} : vector<32x64xbf16>, vector<64x128xbf16>, vector<32x128xf32> -> vector<32x128xf32>
    %c0_34 = arith.constant 0 : index
    %c0_35 = arith.constant 0 : index
    %44 = vector.load %arg14[%c0_34, %c0_35] : memref<1x128xf32, #tpu.memory_space<vmem>>, vector<1x128xf32>
    %45 = vector.broadcast %44 : vector<1x128xf32> to vector<32x128xf32>
    %46 = arith.addf %43, %45 : vector<32x128xf32>
    %47 = arith.mulf %46, %24 : vector<32x128xf32>
    %c0_36 = arith.constant 0 : index
    %c0_37 = arith.constant 0 : index
    %48 = vector.load %arg23[%c0_36, %c0_37] : memref<1x128xf32, #tpu.memory_space<vmem>>, vector<1x128xf32>
    %49 = vector.broadcast %48 : vector<1x128xf32> to vector<32x128xf32>
    %50 = arith.mulf %22, %49 : vector<32x128xf32>
    %51 = arith.addf %47, %50 : vector<32x128xf32>
    %52 = arith.truncf %51 : vector<32x128xf32> to vector<32x128xbf16>
    %c0_38 = arith.constant 0 : index
    %c0_39 = arith.constant 0 : index
    %53 = vector.load %arg15[%c0_38, %c0_39] : memref<128x192xbf16, #tpu.memory_space<vmem>>, vector<128x192xbf16>
    %cst_40 = arith.constant dense<0.000000e+00> : vector<32x192xf32>
    %54 = tpu.matmul %52, %53, %cst_40 {dimension_numbers = #tpu.dot_dimension_numbers<[1], [0], [0], [1], [0, 0, 1, 1], [], []>} : vector<32x128xbf16>, vector<128x192xbf16>, vector<32x192xf32> -> vector<32x192xf32>
    %55 = arith.truncf %54 : vector<32x192xf32> to vector<32x192xbf16>
    %c0_41 = arith.constant 0 : index
    %c0_42 = arith.constant 0 : index
    %56 = vector.load %arg16[%c0_41, %c0_42] : memref<1x192xbf16, #tpu.memory_space<vmem>>, vector<1x192xbf16>
    %57 = vector.broadcast %56 : vector<1x192xbf16> to vector<32x192xbf16>
    %58 = arith.addf %55, %57 : vector<32x192xbf16>
    %cst_43 = arith.constant 0.000000e+00 : bf16
    %59 = vector.broadcast %cst_43 : bf16 to vector<32x192xbf16>
    %60 = arith.maximumf %58, %59 : vector<32x192xbf16>
    %c0_44 = arith.constant 0 : index
    %c0_45 = arith.constant 0 : index
    %61 = vector.load %arg17[%c0_44, %c0_45] : memref<192x384xbf16, #tpu.memory_space<vmem>>, vector<192x384xbf16>
    %cst_46 = arith.constant dense<0.000000e+00> : vector<32x384xf32>
    %62 = tpu.matmul %60, %61, %cst_46 {dimension_numbers = #tpu.dot_dimension_numbers<[1], [0], [0], [1], [0, 0, 1, 1], [], []>} : vector<32x192xbf16>, vector<192x384xbf16>, vector<32x384xf32> -> vector<32x384xf32>
    %63 = arith.truncf %62 : vector<32x384xf32> to vector<32x384xbf16>
    %c0_47 = arith.constant 0 : index
    %c0_48 = arith.constant 0 : index
    %64 = vector.load %arg18[%c0_47, %c0_48] : memref<1x384xbf16, #tpu.memory_space<vmem>>, vector<1x384xbf16>
    %65 = vector.broadcast %64 : vector<1x384xbf16> to vector<32x384xbf16>
    %66 = arith.addf %63, %65 : vector<32x384xbf16>
    %cst_49 = arith.constant 0.000000e+00 : bf16
    %67 = vector.broadcast %cst_49 : bf16 to vector<32x384xbf16>
    %68 = arith.maximumf %66, %67 : vector<32x384xbf16>
    %c0_50 = arith.constant 0 : index
    %c0_51 = arith.constant 0 : index
    %69 = vector.load %arg19[%c0_50, %c0_51] : memref<384x384xbf16, #tpu.memory_space<vmem>>, vector<384x384xbf16>
    %cst_52 = arith.constant dense<0.000000e+00> : vector<32x384xf32>
    %70 = tpu.matmul %68, %69, %cst_52 {dimension_numbers = #tpu.dot_dimension_numbers<[1], [0], [0], [1], [0, 0, 1, 1], [], []>} : vector<32x384xbf16>, vector<384x384xbf16>, vector<32x384xf32> -> vector<32x384xf32>
    %71 = arith.truncf %70 : vector<32x384xf32> to vector<32x384xbf16>
    %c0_53 = arith.constant 0 : index
    %c0_54 = arith.constant 0 : index
    %72 = vector.load %arg20[%c0_53, %c0_54] : memref<1x384xbf16, #tpu.memory_space<vmem>>, vector<1x384xbf16>
    %73 = vector.broadcast %72 : vector<1x384xbf16> to vector<32x384xbf16>
    %74 = arith.addf %71, %73 : vector<32x384xbf16>
    %cst_55 = arith.constant 0.000000e+00 : bf16
    %75 = vector.broadcast %cst_55 : bf16 to vector<32x384xbf16>
    %76 = arith.maximumf %74, %75 : vector<32x384xbf16>
    %c0_56 = arith.constant 0 : index
    %c0_57 = arith.constant 0 : index
    %77 = vector.load %arg21[%c0_56, %c0_57] : memref<384x128xbf16, #tpu.memory_space<vmem>>, vector<384x128xbf16>
    %cst_58 = arith.constant dense<0.000000e+00> : vector<32x128xf32>
    %78 = tpu.matmul %76, %77, %cst_58 {dimension_numbers = #tpu.dot_dimension_numbers<[1], [0], [0], [1], [0, 0, 1, 1], [], []>} : vector<32x384xbf16>, vector<384x128xbf16>, vector<32x128xf32> -> vector<32x128xf32>
    %c0_59 = arith.constant 0 : index
    %c0_60 = arith.constant 0 : index
    %79 = vector.load %arg22[%c0_59, %c0_60] : memref<1x128xf32, #tpu.memory_space<vmem>>, vector<1x128xf32>
    %80 = vector.broadcast %79 : vector<1x128xf32> to vector<32x128xf32>
    %81 = arith.addf %78, %80 : vector<32x128xf32>
    %c0_61 = arith.constant 0 : index
    %c0_62 = arith.constant 0 : index
    %82 = vector.load %arg24[%c0_61, %c0_62] : memref<1x128xf32, #tpu.memory_space<vmem>>, vector<1x128xf32>
    %83 = vector.broadcast %82 : vector<1x128xf32> to vector<32x128xf32>
    %84 = arith.mulf %81, %83 : vector<32x128xf32>
    %c0_63 = arith.constant 0 : index
    %c0_64 = arith.constant 0 : index
    %85 = vector.load %arg25[%c0_63, %c0_64] : memref<1x128xf32, #tpu.memory_space<vmem>>, vector<1x128xf32>
    %86 = vector.broadcast %85 : vector<1x128xf32> to vector<32x128xf32>
    %87 = arith.addf %84, %86 : vector<32x128xf32>
    %c0_65 = arith.constant 0 : index
    %c0_66 = arith.constant 0 : index
    %88 = vector.load %arg26[%c0_65, %c0_66] : memref<32x128xf32, #tpu.memory_space<vmem>>, vector<32x128xf32>
    tpu.vector_store %arg26[%c0_65, %c0_66], %87 {strides = array<i32>} : memref<32x128xf32, #tpu.memory_space<vmem>>, vector<32x128xf32>,
    return
  }
  func.func @transform_0(%arg0: i32) -> (i32, i32) {
    %c0_i32 = arith.constant 0 : i32
    %c0_i32_0 = arith.constant 0 : i32
    return %arg0, %c0_i32 : i32, i32
  }
  func.func @transform_1(%arg0: i32) -> (i32, i32) {
    %c0_i32 = arith.constant 0 : i32
    %c0_i32_0 = arith.constant 0 : i32
    return %arg0, %c0_i32 : i32, i32
  }
  func.func @transform_2(%arg0: i32) -> (i32, i32) {
    %c0_i32 = arith.constant 0 : i32
    %c0_i32_0 = arith.constant 0 : i32
    %c0_i32_1 = arith.constant 0 : i32
    return %c0_i32, %c0_i32_0 : i32, i32
  }
  func.func @transform_3(%arg0: i32) -> (i32, i32) {
    %c0_i32 = arith.constant 0 : i32
    %c0_i32_0 = arith.constant 0 : i32
    %c0_i32_1 = arith.constant 0 : i32
    return %c0_i32, %c0_i32_0 : i32, i32
  }
  func.func @transform_4(%arg0: i32) -> (i32, i32) {
    %c0_i32 = arith.constant 0 : i32
    %c0_i32_0 = arith.constant 0 : i32
    %c0_i32_1 = arith.constant 0 : i32
    return %c0_i32, %c0_i32_0 : i32, i32
  }
  func.func @transform_5(%arg0: i32) -> (i32, i32) {
    %c0_i32 = arith.constant 0 : i32
    %c0_i32_0 = arith.constant 0 : i32
    %c0_i32_1 = arith.constant 0 : i32
    return %c0_i32, %c0_i32_0 : i32, i32
  }
  func.func @transform_6(%arg0: i32) -> (i32, i32) {
    %c0_i32 = arith.constant 0 : i32
    %c0_i32_0 = arith.constant 0 : i32
    %c0_i32_1 = arith.constant 0 : i32
    return %c0_i32, %c0_i32_0 : i32, i32
  }
  func.func @transform_7(%arg0: i32) -> (i32, i32) {
    %c0_i32 = arith.constant 0 : i32
    %c0_i32_0 = arith.constant 0 : i32
    %c0_i32_1 = arith.constant 0 : i32
    return %c0_i32, %c0_i32_0 : i32, i32
  }
  func.func @transform_8(%arg0: i32) -> (i32, i32) {
    %c0_i32 = arith.constant 0 : i32
    %c0_i32_0 = arith.constant 0 : i32
    %c0_i32_1 = arith.constant 0 : i32
    return %c0_i32, %c0_i32_0 : i32, i32
  }
  func.func @transform_9(%arg0: i32) -> (i32, i32) {
    %c0_i32 = arith.constant 0 : i32
    %c0_i32_0 = arith.constant 0 : i32
    %c0_i32_1 = arith.constant 0 : i32
    return %c0_i32, %c0_i32_0 : i32, i32
  }
  func.func @transform_10(%arg0: i32) -> (i32, i32) {
    %c0_i32 = arith.constant 0 : i32
    %c0_i32_0 = arith.constant 0 : i32
    %c0_i32_1 = arith.constant 0 : i32
    return %c0_i32, %c0_i32_0 : i32, i32
  }
  func.func @transform_11(%arg0: i32) -> (i32, i32) {
    %c0_i32 = arith.constant 0 : i32
    %c0_i32_0 = arith.constant 0 : i32
    %c0_i32_1 = arith.constant 0 : i32
    return %c0_i32, %c0_i32_0 : i32, i32
  }
  func.func @transform_12(%arg0: i32) -> (i32, i32) {
    %c0_i32 = arith.constant 0 : i32
    %c0_i32_0 = arith.constant 0 : i32
    %c0_i32_1 = arith.constant 0 : i32
    return %c0_i32, %c0_i32_0 : i32, i32
  }
  func.func @transform_13(%arg0: i32) -> (i32, i32) {
    %c0_i32 = arith.constant 0 : i32
    %c0_i32_0 = arith.constant 0 : i32
    %c0_i32_1 = arith.constant 0 : i32
    return %c0_i32, %c0_i32_0 : i32, i32
  }
  func.func @transform_14(%arg0: i32) -> (i32, i32) {
    %c0_i32 = arith.constant 0 : i32
    %c0_i32_0 = arith.constant 0 : i32
    %c0_i32_1 = arith.constant 0 : i32
    return %c0_i32, %c0_i32_0 : i32, i32
  }
  func.func @transform_15(%arg0: i32) -> (i32, i32) {
    %c0_i32 = arith.constant 0 : i32
    %c0_i32_0 = arith.constant 0 : i32
    %c0_i32_1 = arith.constant 0 : i32
    return %c0_i32, %c0_i32_0 : i32, i32
  }
  func.func @transform_16(%arg0: i32) -> (i32, i32) {
    %c0_i32 = arith.constant 0 : i32
    %c0_i32_0 = arith.constant 0 : i32
    %c0_i32_1 = arith.constant 0 : i32
    return %c0_i32, %c0_i32_0 : i32, i32
  }
  func.func @transform_17(%arg0: i32) -> (i32, i32) {
    %c0_i32 = arith.constant 0 : i32
    %c0_i32_0 = arith.constant 0 : i32
    %c0_i32_1 = arith.constant 0 : i32
    return %c0_i32, %c0_i32_0 : i32, i32
  }
  func.func @transform_18(%arg0: i32) -> (i32, i32) {
    %c0_i32 = arith.constant 0 : i32
    %c0_i32_0 = arith.constant 0 : i32
    %c0_i32_1 = arith.constant 0 : i32
    return %c0_i32, %c0_i32_0 : i32, i32
  }
  func.func @transform_19(%arg0: i32) -> (i32, i32) {
    %c0_i32 = arith.constant 0 : i32
    %c0_i32_0 = arith.constant 0 : i32
    %c0_i32_1 = arith.constant 0 : i32
    return %c0_i32, %c0_i32_0 : i32, i32
  }
  func.func @transform_20(%arg0: i32) -> (i32, i32) {
    %c0_i32 = arith.constant 0 : i32
    %c0_i32_0 = arith.constant 0 : i32
    %c0_i32_1 = arith.constant 0 : i32
    return %c0_i32, %c0_i32_0 : i32, i32
  }
  func.func @transform_21(%arg0: i32) -> (i32, i32) {
    %c0_i32 = arith.constant 0 : i32
    %c0_i32_0 = arith.constant 0 : i32
    %c0_i32_1 = arith.constant 0 : i32
    return %c0_i32, %c0_i32_0 : i32, i32
  }
  func.func @transform_22(%arg0: i32) -> (i32, i32) {
    %c0_i32 = arith.constant 0 : i32
    %c0_i32_0 = arith.constant 0 : i32
    %c0_i32_1 = arith.constant 0 : i32
    return %c0_i32, %c0_i32_0 : i32, i32
  }
  func.func @transform_23(%arg0: i32) -> (i32, i32) {
    %c0_i32 = arith.constant 0 : i32
    %c0_i32_0 = arith.constant 0 : i32
    %c0_i32_1 = arith.constant 0 : i32
    return %c0_i32, %c0_i32_0 : i32, i32
  }
  func.func @transform_24(%arg0: i32) -> (i32, i32) {
    %c0_i32 = arith.constant 0 : i32
    %c0_i32_0 = arith.constant 0 : i32
    %c0_i32_1 = arith.constant 0 : i32
    return %c0_i32, %c0_i32_0 : i32, i32
  }
  func.func @transform_25(%arg0: i32) -> (i32, i32) {
    %c0_i32 = arith.constant 0 : i32
    %c0_i32_0 = arith.constant 0 : i32
    return %arg0, %c0_i32 : i32, i32
  }
}

module attributes {stable_mosaic.version = 11 : i64} {
  func.func @kernel(%arg0: i32, %arg1: memref<32x116xbf16, #tpu.memory_space<vmem>>, %arg2: memref<32x128xbf16, #tpu.memory_space<vmem>>, %arg3: memref<116x128xbf16, #tpu.memory_space<vmem>>, %arg4: memref<1x128xbf16, #tpu.memory_space<vmem>>, %arg5: memref<128x128xbf16, #tpu.memory_space<vmem>>, %arg6: memref<1x128xbf16, #tpu.memory_space<vmem>>, %arg7: memref<128x128xbf16, #tpu.memory_space<vmem>>, %arg8: memref<1x128xf32, #tpu.memory_space<vmem>>, %arg9: memref<128x64xbf16, #tpu.memory_space<vmem>>, %arg10: memref<1x64xbf16, #tpu.memory_space<vmem>>, %arg11: memref<64x64xbf16, #tpu.memory_space<vmem>>, %arg12: memref<1x64xbf16, #tpu.memory_space<vmem>>, %arg13: memref<64x128xbf16, #tpu.memory_space<vmem>>, %arg14: memref<1x128xf32, #tpu.memory_space<vmem>>, %arg15: memref<128x192xbf16, #tpu.memory_space<vmem>>, %arg16: memref<1x192xbf16, #tpu.memory_space<vmem>>, %arg17: memref<192x384xbf16, #tpu.memory_space<vmem>>, %arg18: memref<1x384xbf16, #tpu.memory_space<vmem>>, %arg19: memref<384x384xbf16, #tpu.memory_space<vmem>>, %arg20: memref<1x384xbf16, #tpu.memory_space<vmem>>, %arg21: memref<384x128xbf16, #tpu.memory_space<vmem>>, %arg22: memref<1x128xf32, #tpu.memory_space<vmem>>, %arg23: memref<1x128xf32, #tpu.memory_space<vmem>>, %arg24: memref<1x128xf32, #tpu.memory_space<vmem>>, %arg25: memref<1x128xf32, #tpu.memory_space<vmem>>, %arg26: memref<32x128xf32, #tpu.memory_space<vmem>>) attributes {dimension_semantics = [#tpu.dimension_semantics<parallel>], iteration_bounds = array<i64: 2>, scalar_prefetch = 0 : i64, scratch_operands = 0 : i64, tpu.core_type = #tpu.core_type<tc>, window_params = [{transform_indices = @transform_0, window_bounds = array<i64: 32, 116>}, {transform_indices = @transform_1, window_bounds = array<i64: 32, 128>}, {pipeline_mode = #tpu.pipeline_mode<synchronous>, transform_indices = @transform_2, window_bounds = array<i64: 116, 128>}, {pipeline_mode = #tpu.pipeline_mode<synchronous>, transform_indices = @transform_3, window_bounds = array<i64: 1, 128>}, {pipeline_mode = #tpu.pipeline_mode<synchronous>, transform_indices = @transform_4, window_bounds = array<i64: 128, 128>}, {pipeline_mode = #tpu.pipeline_mode<synchronous>, transform_indices = @transform_5, window_bounds = array<i64: 1, 128>}, {pipeline_mode = #tpu.pipeline_mode<synchronous>, transform_indices = @transform_6, window_bounds = array<i64: 128, 128>}, {pipeline_mode = #tpu.pipeline_mode<synchronous>, transform_indices = @transform_7, window_bounds = array<i64: 1, 128>}, {pipeline_mode = #tpu.pipeline_mode<synchronous>, transform_indices = @transform_8, window_bounds = array<i64: 128, 64>}, {pipeline_mode = #tpu.pipeline_mode<synchronous>, transform_indices = @transform_9, window_bounds = array<i64: 1, 64>}, {pipeline_mode = #tpu.pipeline_mode<synchronous>, transform_indices = @transform_10, window_bounds = array<i64: 64, 64>}, {pipeline_mode = #tpu.pipeline_mode<synchronous>, transform_indices = @transform_11, window_bounds = array<i64: 1, 64>}, {pipeline_mode = #tpu.pipeline_mode<synchronous>, transform_indices = @transform_12, window_bounds = array<i64: 64, 128>}, {pipeline_mode = #tpu.pipeline_mode<synchronous>, transform_indices = @transform_13, window_bounds = array<i64: 1, 128>}, {pipeline_mode = #tpu.pipeline_mode<synchronous>, transform_indices = @transform_14, window_bounds = array<i64: 128, 192>}, {pipeline_mode = #tpu.pipeline_mode<synchronous>, transform_indices = @transform_15, window_bounds = array<i64: 1, 192>}, {pipeline_mode = #tpu.pipeline_mode<synchronous>, transform_indices = @transform_16, window_bounds = array<i64: 192, 384>}, {pipeline_mode = #tpu.pipeline_mode<synchronous>, transform_indices = @transform_17, window_bounds = array<i64: 1, 384>}, {pipeline_mode = #tpu.pipeline_mode<synchronous>, transform_indices = @transform_18, window_bounds = array<i64: 384, 384>}, {pipeline_mode = #tpu.pipeline_mode<synchronous>, transform_indices = @transform_19, window_bounds = array<i64: 1, 384>}, {pipeline_mode = #tpu.pipeline_mode<synchronous>, transform_indices = @transform_20, window_bounds = array<i64: 384, 128>}, {pipeline_mode = #tpu.pipeline_mode<synchronous>, transform_indices = @transform_21, window_bounds = array<i64: 1, 128>}, {pipeline_mode = #tpu.pipeline_mode<synchronous>, transform_indices = @transform_22, window_bounds = array<i64: 1, 128>}, {pipeline_mode = #tpu.pipeline_mode<synchronous>, transform_indices = @transform_23, window_bounds = array<i64: 1, 128>}, {pipeline_mode = #tpu.pipeline_mode<synchronous>, transform_indices = @transform_24, window_bounds = array<i64: 1, 128>}, {transform_indices = @transform_25, window_bounds = array<i64: 32, 128>}]} {
    %c0 = arith.constant 0 : index
    %c0_0 = arith.constant 0 : index
    %0 = vector.load %arg1[%c0, %c0_0] : memref<32x116xbf16, #tpu.memory_space<vmem>>, vector<32x116xbf16>
    %c0_1 = arith.constant 0 : index
    %c0_2 = arith.constant 0 : index
    %1 = vector.load %arg2[%c0_1, %c0_2] : memref<32x128xbf16, #tpu.memory_space<vmem>>, vector<32x128xbf16>
    %c0_3 = arith.constant 0 : index
    %c0_4 = arith.constant 0 : index
    %2 = vector.load %arg3[%c0_3, %c0_4] : memref<116x128xbf16, #tpu.memory_space<vmem>>, vector<116x128xbf16>
    %cst = arith.constant dense<0.000000e+00> : vector<32x128xf32>
    %3 = tpu.matmul %0, %2, %cst {dimension_numbers = #tpu.dot_dimension_numbers<[1], [0], [0], [1], [0, 0, 1, 1], [], []>} : vector<32x116xbf16>, vector<116x128xbf16>, vector<32x128xf32> -> vector<32x128xf32>
    %4 = arith.truncf %3 : vector<32x128xf32> to vector<32x128xbf16>
    %c0_5 = arith.constant 0 : index
    %c0_6 = arith.constant 0 : index
    %5 = vector.load %arg4[%c0_5, %c0_6] : memref<1x128xbf16, #tpu.memory_space<vmem>>, vector<1x128xbf16>
    %6 = vector.broadcast %5 : vector<1x128xbf16> to vector<32x128xbf16>
    %7 = arith.addf %4, %6 : vector<32x128xbf16>
    %cst_7 = arith.constant 0.000000e+00 : bf16
    %8 = vector.broadcast %cst_7 : bf16 to vector<32x128xbf16>
    %9 = arith.maximumf %7, %8 : vector<32x128xbf16>
    %c0_8 = arith.constant 0 : index
    %c0_9 = arith.constant 0 : index
    %10 = vector.load %arg5[%c0_8, %c0_9] : memref<128x128xbf16, #tpu.memory_space<vmem>>, vector<128x128xbf16>
    %cst_10 = arith.constant dense<0.000000e+00> : vector<32x128xf32>
    %11 = tpu.matmul %9, %10, %cst_10 {dimension_numbers = #tpu.dot_dimension_numbers<[1], [0], [0], [1], [0, 0, 1, 1], [], []>} : vector<32x128xbf16>, vector<128x128xbf16>, vector<32x128xf32> -> vector<32x128xf32>
    %12 = arith.truncf %11 : vector<32x128xf32> to vector<32x128xbf16>
    %c0_11 = arith.constant 0 : index
    %c0_12 = arith.constant 0 : index
    %13 = vector.load %arg6[%c0_11, %c0_12] : memref<1x128xbf16, #tpu.memory_space<vmem>>, vector<1x128xbf16>
    %14 = vector.broadcast %13 : vector<1x128xbf16> to vector<32x128xbf16>
    %15 = arith.addf %12, %14 : vector<32x128xbf16>
    %cst_13 = arith.constant 0.000000e+00 : bf16
    %16 = vector.broadcast %cst_13 : bf16 to vector<32x128xbf16>
    %17 = arith.maximumf %15, %16 : vector<32x128xbf16>
    %c0_14 = arith.constant 0 : index
    %c0_15 = arith.constant 0 : index
    %18 = vector.load %arg7[%c0_14, %c0_15] : memref<128x128xbf16, #tpu.memory_space<vmem>>, vector<128x128xbf16>
    %cst_16 = arith.constant dense<0.000000e+00> : vector<32x128xf32>
    %19 = tpu.matmul %17, %18, %cst_16 {dimension_numbers = #tpu.dot_dimension_numbers<[1], [0], [0], [1], [0, 0, 1, 1], [], []>} : vector<32x128xbf16>, vector<128x128xbf16>, vector<32x128xf32> -> vector<32x128xf32>
    %c0_17 = arith.constant 0 : index
    %c0_18 = arith.constant 0 : index
    %20 = vector.load %arg8[%c0_17, %c0_18] : memref<1x128xf32, #tpu.memory_space<vmem>>, vector<1x128xf32>
    %21 = vector.broadcast %20 : vector<1x128xf32> to vector<32x128xf32>
    %22 = arith.addf %19, %21 : vector<32x128xf32>
    %23 = arith.extf %1 : vector<32x128xbf16> to vector<32x128xf32>
    %24 = arith.mulf %23, %22 : vector<32x128xf32>
    %25 = arith.truncf %24 : vector<32x128xf32> to vector<32x128xbf16>
    %c0_19 = arith.constant 0 : index
    %c0_20 = arith.constant 0 : index
    %26 = vector.load %arg9[%c0_19, %c0_20] : memref<128x64xbf16, #tpu.memory_space<vmem>>, vector<128x64xbf16>
    %cst_21 = arith.constant dense<0.000000e+00> : vector<32x64xf32>
    %27 = tpu.matmul %25, %26, %cst_21 {dimension_numbers = #tpu.dot_dimension_numbers<[1], [0], [0], [1], [0, 0, 1, 1], [], []>} : vector<32x128xbf16>, vector<128x64xbf16>, vector<32x64xf32> -> vector<32x64xf32>
    %28 = arith.truncf %27 : vector<32x64xf32> to vector<32x64xbf16>
    %c0_22 = arith.constant 0 : index
    %c0_23 = arith.constant 0 : index
    %29 = vector.load %arg10[%c0_22, %c0_23] : memref<1x64xbf16, #tpu.memory_space<vmem>>, vector<1x64xbf16>
    %30 = vector.broadcast %29 : vector<1x64xbf16> to vector<32x64xbf16>
    %31 = arith.addf %28, %30 : vector<32x64xbf16>
    %cst_24 = arith.constant 0.000000e+00 : bf16
    %32 = vector.broadcast %cst_24 : bf16 to vector<32x64xbf16>
    %33 = arith.maximumf %31, %32 : vector<32x64xbf16>
    %c0_25 = arith.constant 0 : index
    %c0_26 = arith.constant 0 : index
    %34 = vector.load %arg11[%c0_25, %c0_26] : memref<64x64xbf16, #tpu.memory_space<vmem>>, vector<64x64xbf16>
    %cst_27 = arith.constant dense<0.000000e+00> : vector<32x64xf32>
    %35 = tpu.matmul %33, %34, %cst_27 {dimension_numbers = #tpu.dot_dimension_numbers<[1], [0], [0], [1], [0, 0, 1, 1], [], []>} : vector<32x64xbf16>, vector<64x64xbf16>, vector<32x64xf32> -> vector<32x64xf32>
    %36 = arith.truncf %35 : vector<32x64xf32> to vector<32x64xbf16>
    %c0_28 = arith.constant 0 : index
    %c0_29 = arith.constant 0 : index
    %37 = vector.load %arg12[%c0_28, %c0_29] : memref<1x64xbf16, #tpu.memory_space<vmem>>, vector<1x64xbf16>
    %38 = vector.broadcast %37 : vector<1x64xbf16> to vector<32x64xbf16>
    %39 = arith.addf %36, %38 : vector<32x64xbf16>
    %cst_30 = arith.constant 0.000000e+00 : bf16
    %40 = vector.broadcast %cst_30 : bf16 to vector<32x64xbf16>
    %41 = arith.maximumf %39, %40 : vector<32x64xbf16>
    %c0_31 = arith.constant 0 : index
    %c0_32 = arith.constant 0 : index
    %42 = vector.load %arg13[%c0_31, %c0_32] : memref<64x128xbf16, #tpu.memory_space<vmem>>, vector<64x128xbf16>
    %cst_33 = arith.constant dense<0.000000e+00> : vector<32x128xf32>
    %43 = tpu.matmul %41, %42, %cst_33 {dimension_numbers = #tpu.dot_dimension_numbers<[1], [0], [0], [1], [0, 0, 1, 1], [], []>} : vector<32x64xbf16>, vector<64x128xbf16>, vector<32x128xf32> -> vector<32x128xf32>
    %c0_34 = arith.constant 0 : index
    %c0_35 = arith.constant 0 : index
    %44 = vector.load %arg14[%c0_34, %c0_35] : memref<1x128xf32, #tpu.memory_space<vmem>>, vector<1x128xf32>
    %45 = vector.broadcast %44 : vector<1x128xf32> to vector<32x128xf32>
    %46 = arith.addf %43, %45 : vector<32x128xf32>
    %47 = arith.mulf %46, %24 : vector<32x128xf32>
    %c0_36 = arith.constant 0 : index
    %c0_37 = arith.constant 0 : index
    %48 = vector.load %arg23[%c0_36, %c0_37] : memref<1x128xf32, #tpu.memory_space<vmem>>, vector<1x128xf32>
    %49 = vector.broadcast %48 : vector<1x128xf32> to vector<32x128xf32>
    %50 = arith.mulf %22, %49 : vector<32x128xf32>
    %51 = arith.addf %47, %50 : vector<32x128xf32>
    %52 = arith.truncf %51 : vector<32x128xf32> to vector<32x128xbf16>
    %c0_38 = arith.constant 0 : index
    %c0_39 = arith.constant 0 : index
    %53 = vector.load %arg15[%c0_38, %c0_39] : memref<128x192xbf16, #tpu.memory_space<vmem>>, vector<128x192xbf16>
    %cst_40 = arith.constant dense<0.000000e+00> : vector<32x192xf32>
    %54 = tpu.matmul %52, %53, %cst_40 {dimension_numbers = #tpu.dot_dimension_numbers<[1], [0], [0], [1], [0, 0, 1, 1], [], []>} : vector<32x128xbf16>, vector<128x192xbf16>, vector<32x192xf32> -> vector<32x192xf32>
    %55 = arith.truncf %54 : vector<32x192xf32> to vector<32x192xbf16>
    %c0_41 = arith.constant 0 : index
    %c0_42 = arith.constant 0 : index
    %56 = vector.load %arg16[%c0_41, %c0_42] : memref<1x192xbf16, #tpu.memory_space<vmem>>, vector<1x192xbf16>
    %57 = vector.broadcast %56 : vector<1x192xbf16> to vector<32x192xbf16>
    %58 = arith.addf %55, %57 : vector<32x192xbf16>
    %cst_43 = arith.constant 0.000000e+00 : bf16
    %59 = vector.broadcast %cst_43 : bf16 to vector<32x192xbf16>
    %60 = arith.maximumf %58, %59 : vector<32x192xbf16>
    %c0_44 = arith.constant 0 : index
    %c0_45 = arith.constant 0 : index
    %61 = vector.load %arg17[%c0_44, %c0_45] : memref<192x384xbf16, #tpu.memory_space<vmem>>, vector<192x384xbf16>
    %cst_46 = arith.constant dense<0.000000e+00> : vector<32x384xf32>
    %62 = tpu.matmul %60, %61, %cst_46 {dimension_numbers = #tpu.dot_dimension_numbers<[1], [0], [0], [1], [0, 0, 1, 1], [], []>} : vector<32x192xbf16>, vector<192x384xbf16>, vector<32x384xf32> -> vector<32x384xf32>
    %63 = arith.truncf %62 : vector<32x384xf32> to vector<32x384xbf16>
    %c0_47 = arith.constant 0 : index
    %c0_48 = arith.constant 0 : index
    %64 = vector.load %arg18[%c0_47, %c0_48] : memref<1x384xbf16, #tpu.memory_space<vmem>>, vector<1x384xbf16>
    %65 = vector.broadcast %64 : vector<1x384xbf16> to vector<32x384xbf16>
    %66 = arith.addf %63, %65 : vector<32x384xbf16>
    %cst_49 = arith.constant 0.000000e+00 : bf16
    %67 = vector.broadcast %cst_49 : bf16 to vector<32x384xbf16>
    %68 = arith.maximumf %66, %67 : vector<32x384xbf16>
    %c0_50 = arith.constant 0 : index
    %c0_51 = arith.constant 0 : index
    %69 = vector.load %arg19[%c0_50, %c0_51] : memref<384x384xbf16, #tpu.memory_space<vmem>>, vector<384x384xbf16>
    %cst_52 = arith.constant dense<0.000000e+00> : vector<32x384xf32>
    %70 = tpu.matmul %68, %69, %cst_52 {dimension_numbers = #tpu.dot_dimension_numbers<[1], [0], [0], [1], [0, 0, 1, 1], [], []>} : vector<32x384xbf16>, vector<384x384xbf16>, vector<32x384xf32> -> vector<32x384xf32>
    %71 = arith.truncf %70 : vector<32x384xf32> to vector<32x384xbf16>
    %c0_53 = arith.constant 0 : index
    %c0_54 = arith.constant 0 : index
    %72 = vector.load %arg20[%c0_53, %c0_54] : memref<1x384xbf16, #tpu.memory_space<vmem>>, vector<1x384xbf16>
    %73 = vector.broadcast %72 : vector<1x384xbf16> to vector<32x384xbf16>
    %74 = arith.addf %71, %73 : vector<32x384xbf16>
    %cst_55 = arith.constant 0.000000e+00 : bf16
    %75 = vector.broadcast %cst_55 : bf16 to vector<32x384xbf16>
    %76 = arith.maximumf %74, %75 : vector<32x384xbf16>
    %c0_56 = arith.constant 0 : index
    %c0_57 = arith.constant 0 : index
    %77 = vector.load %arg21[%c0_56, %c0_57] : memref<384x128xbf16, #tpu.memory_space<vmem>>, vector<384x128xbf16>
    %cst_58 = arith.constant dense<0.000000e+00> : vector<32x128xf32>
    %78 = tpu.matmul %76, %77, %cst_58 {dimension_numbers = #tpu.dot_dimension_numbers<[1], [0], [0], [1], [0, 0, 1, 1], [], []>} : vector<32x384xbf16>, vector<384x128xbf16>, vector<32x128xf32> -> vector<32x128xf32>
    %c0_59 = arith.constant 0 : index
    %c0_60 = arith.constant 0 : index
    %79 = vector.load %arg22[%c0_59, %c0_60] : memref<1x128xf32, #tpu.memory_space<vmem>>, vector<1x128xf32>
    %80 = vector.broadcast %79 : vector<1x128xf32> to vector<32x128xf32>
    %81 = arith.addf %78, %80 : vector<32x128xf32>
    %c0_61 = arith.constant 0 : index
    %c0_62 = arith.constant 0 : index
    %82 = vector.load %arg24[%c0_61, %c0_62] : memref<1x128xf32, #tpu.memory_space<vmem>>, vector<1x128xf32>
    %83 = vector.broadcast %82 : vector<1x128xf32> to vector<32x128xf32>
    %84 = arith.mulf %81, %83 : vector<32x128xf32>
    %c0_63 = arith.constant 0 : index
    %c0_64 = arith.constant 0 : index
    %85 = vector.load %arg25[%c0_63, %c0_64] : memref<1x128xf32, #tpu.memory_space<vmem>>, vector<1x128xf32>
    %86 = vector.broadcast %85 : vector<1x128xf32> to vector<32x128xf32>
    %87 = arith.addf %84, %86 : vector<32x128xf32>
    %c0_65 = arith.constant 0 : index
    %c0_66 = arith.constant 0 : index
    %88 = vector.load %arg26[%c0_65, %c0_66] : memref<32x128xf32, #tpu.memory_space<vmem>>, vector<32x128xf32>
    tpu.vector_store %arg26[%c0_65, %c0_66], %87 {strides = array<i32>} : memref<32x128xf32, #tpu.memory_space<vmem>>, vector<32x128xf32>,
    return
  }
  func.func @transform_0(%arg0: i32) -> (i32, i32) {
    %c0_i32 = arith.constant 0 : i32
    %c0_i32_0 = arith.constant 0 : i32
    return %arg0, %c0_i32 : i32, i32
  }
  func.func @transform_1(%arg0: i32) -> (i32, i32) {
    %c0_i32 = arith.constant 0 : i32
    %c0_i32_0 = arith.constant 0 : i32
    return %arg0, %c0_i32 : i32, i32
  }
  func.func @transform_2(%arg0: i32) -> (i32, i32) {
    %c0_i32 = arith.constant 0 : i32
    %c0_i32_0 = arith.constant 0 : i32
    %c0_i32_1 = arith.constant 0 : i32
    return %c0_i32, %c0_i32_0 : i32, i32
  }
  func.func @transform_3(%arg0: i32) -> (i32, i32) {
    %c0_i32 = arith.constant 0 : i32
    %c0_i32_0 = arith.constant 0 : i32
    %c0_i32_1 = arith.constant 0 : i32
    return %c0_i32, %c0_i32_0 : i32, i32
  }
  func.func @transform_4(%arg0: i32) -> (i32, i32) {
    %c0_i32 = arith.constant 0 : i32
    %c0_i32_0 = arith.constant 0 : i32
    %c0_i32_1 = arith.constant 0 : i32
    return %c0_i32, %c0_i32_0 : i32, i32
  }
  func.func @transform_5(%arg0: i32) -> (i32, i32) {
    %c0_i32 = arith.constant 0 : i32
    %c0_i32_0 = arith.constant 0 : i32
    %c0_i32_1 = arith.constant 0 : i32
    return %c0_i32, %c0_i32_0 : i32, i32
  }
  func.func @transform_6(%arg0: i32) -> (i32, i32) {
    %c0_i32 = arith.constant 0 : i32
    %c0_i32_0 = arith.constant 0 : i32
    %c0_i32_1 = arith.constant 0 : i32
    return %c0_i32, %c0_i32_0 : i32, i32
  }
  func.func @transform_7(%arg0: i32) -> (i32, i32) {
    %c0_i32 = arith.constant 0 : i32
    %c0_i32_0 = arith.constant 0 : i32
    %c0_i32_1 = arith.constant 0 : i32
    return %c0_i32, %c0_i32_0 : i32, i32
  }
  func.func @transform_8(%arg0: i32) -> (i32, i32) {
    %c0_i32 = arith.constant 0 : i32
    %c0_i32_0 = arith.constant 0 : i32
    %c0_i32_1 = arith.constant 0 : i32
    return %c0_i32, %c0_i32_0 : i32, i32
  }
  func.func @transform_9(%arg0: i32) -> (i32, i32) {
    %c0_i32 = arith.constant 0 : i32
    %c0_i32_0 = arith.constant 0 : i32
    %c0_i32_1 = arith.constant 0 : i32
    return %c0_i32, %c0_i32_0 : i32, i32
  }
  func.func @transform_10(%arg0: i32) -> (i32, i32) {
    %c0_i32 = arith.constant 0 : i32
    %c0_i32_0 = arith.constant 0 : i32
    %c0_i32_1 = arith.constant 0 : i32
    return %c0_i32, %c0_i32_0 : i32, i32
  }
  func.func @transform_11(%arg0: i32) -> (i32, i32) {
    %c0_i32 = arith.constant 0 : i32
    %c0_i32_0 = arith.constant 0 : i32
    %c0_i32_1 = arith.constant 0 : i32
    return %c0_i32, %c0_i32_0 : i32, i32
  }
  func.func @transform_12(%arg0: i32) -> (i32, i32) {
    %c0_i32 = arith.constant 0 : i32
    %c0_i32_0 = arith.constant 0 : i32
    %c0_i32_1 = arith.constant 0 : i32
    return %c0_i32, %c0_i32_0 : i32, i32
  }
  func.func @transform_13(%arg0: i32) -> (i32, i32) {
    %c0_i32 = arith.constant 0 : i32
    %c0_i32_0 = arith.constant 0 : i32
    %c0_i32_1 = arith.constant 0 : i32
    return %c0_i32, %c0_i32_0 : i32, i32
  }
  func.func @transform_14(%arg0: i32) -> (i32, i32) {
    %c0_i32 = arith.constant 0 : i32
    %c0_i32_0 = arith.constant 0 : i32
    %c0_i32_1 = arith.constant 0 : i32
    return %c0_i32, %c0_i32_0 : i32, i32
  }
  func.func @transform_15(%arg0: i32) -> (i32, i32) {
    %c0_i32 = arith.constant 0 : i32
    %c0_i32_0 = arith.constant 0 : i32
    %c0_i32_1 = arith.constant 0 : i32
    return %c0_i32, %c0_i32_0 : i32, i32
  }
  func.func @transform_16(%arg0: i32) -> (i32, i32) {
    %c0_i32 = arith.constant 0 : i32
    %c0_i32_0 = arith.constant 0 : i32
    %c0_i32_1 = arith.constant 0 : i32
    return %c0_i32, %c0_i32_0 : i32, i32
  }
  func.func @transform_17(%arg0: i32) -> (i32, i32) {
    %c0_i32 = arith.constant 0 : i32
    %c0_i32_0 = arith.constant 0 : i32
    %c0_i32_1 = arith.constant 0 : i32
    return %c0_i32, %c0_i32_0 : i32, i32
  }
  func.func @transform_18(%arg0: i32) -> (i32, i32) {
    %c0_i32 = arith.constant 0 : i32
    %c0_i32_0 = arith.constant 0 : i32
    %c0_i32_1 = arith.constant 0 : i32
    return %c0_i32, %c0_i32_0 : i32, i32
  }
  func.func @transform_19(%arg0: i32) -> (i32, i32) {
    %c0_i32 = arith.constant 0 : i32
    %c0_i32_0 = arith.constant 0 : i32
    %c0_i32_1 = arith.constant 0 : i32
    return %c0_i32, %c0_i32_0 : i32, i32
  }
  func.func @transform_20(%arg0: i32) -> (i32, i32) {
    %c0_i32 = arith.constant 0 : i32
    %c0_i32_0 = arith.constant 0 : i32
    %c0_i32_1 = arith.constant 0 : i32
    return %c0_i32, %c0_i32_0 : i32, i32
  }
  func.func @transform_21(%arg0: i32) -> (i32, i32) {
    %c0_i32 = arith.constant 0 : i32
    %c0_i32_0 = arith.constant 0 : i32
    %c0_i32_1 = arith.constant 0 : i32
    return %c0_i32, %c0_i32_0 : i32, i32
  }
  func.func @transform_22(%arg0: i32) -> (i32, i32) {
    %c0_i32 = arith.constant 0 : i32
    %c0_i32_0 = arith.constant 0 : i32
    %c0_i32_1 = arith.constant 0 : i32
    return %c0_i32, %c0_i32_0 : i32, i32
  }
  func.func @transform_23(%arg0: i32) -> (i32, i32) {
    %c0_i32 = arith.constant 0 : i32
    %c0_i32_0 = arith.constant 0 : i32
    %c0_i32_1 = arith.constant 0 : i32
    return %c0_i32, %c0_i32_0 : i32, i32
  }
  func.func @transform_24(%arg0: i32) -> (i32, i32) {
    %c0_i32 = arith.constant 0 : i32
    %c0_i32_0 = arith.constant 0 : i32
    %c0_i32_1 = arith.constant 0 : i32
    return %c0_i32, %c0_i32_0 : i32, i32
  }
  func.func @transform_25(%arg0: i32) -> (i32, i32) {
    %c0_i32 = arith.constant 0 : i32
    %c0_i32_0 = arith.constant 0 : i32
    return %arg0, %c0_i32 : i32, i32
  }
}

</mosaic_0001>

<llo_original>
// kernel: tpu_custom_call.1
$region0: #{tpu_custom_call.1}
  #allocation0 [shape = 'u32[]', space=smem, size = 0x4, offset = 0x4, fixed_abs, tag = 'smem constant byte address 0x4 - core index']
  #allocation1 [shape = 'u32[144,128]{1,0:T(1,128)}', space=vmem, size = 0x12000, scoped, tag = 'internal scratch']
  %s0 = inlined_call_operand.hbm [shape: bf16[64,116], index: 0, kind: input, shape index: {}]
  %s1 = inlined_call_operand.hbm [shape: bf16[64,128], index: 1, kind: input, shape index: {}]
  %s2 = inlined_call_operand.hbm [shape: bf16[116,128], index: 2, kind: input, shape index: {}]
  %s3 = inlined_call_operand.hbm [shape: bf16[1,128], index: 3, kind: input, shape index: {}]
  %s4 = inlined_call_operand.hbm [shape: bf16[128,128], index: 4, kind: input, shape index: {}]
  %s5 = inlined_call_operand.hbm [shape: bf16[1,128], index: 5, kind: input, shape index: {}]
  %s6 = inlined_call_operand.hbm [shape: bf16[128,128], index: 6, kind: input, shape index: {}]
  %s7 = inlined_call_operand.hbm [shape: f32[1,128], index: 7, kind: input, shape index: {}]
  %s8 = inlined_call_operand.hbm [shape: bf16[128,64], index: 8, kind: input, shape index: {}]
  %s9 = inlined_call_operand.hbm [shape: bf16[1,64], index: 9, kind: input, shape index: {}]
  %s10 = inlined_call_operand.hbm [shape: bf16[64,64], index: 10, kind: input, shape index: {}]
  %s11 = inlined_call_operand.hbm [shape: bf16[1,64], index: 11, kind: input, shape index: {}]
  %s12 = inlined_call_operand.hbm [shape: bf16[64,128], index: 12, kind: input, shape index: {}]
  %s13 = inlined_call_operand.hbm [shape: f32[1,128], index: 13, kind: input, shape index: {}]
  %s14 = inlined_call_operand.hbm [shape: bf16[128,192], index: 14, kind: input, shape index: {}]
  %s15 = inlined_call_operand.hbm [shape: bf16[1,192], index: 15, kind: input, shape index: {}]
  %s16 = inlined_call_operand.hbm [shape: bf16[192,384], index: 16, kind: input, shape index: {}]
  %s17 = inlined_call_operand.hbm [shape: bf16[1,384], index: 17, kind: input, shape index: {}]
  %s18 = inlined_call_operand.hbm [shape: bf16[384,384], index: 18, kind: input, shape index: {}]
  %s19 = inlined_call_operand.hbm [shape: bf16[1,384], index: 19, kind: input, shape index: {}]
  %s20 = inlined_call_operand.hbm [shape: bf16[384,128], index: 20, kind: input, shape index: {}]
  %s21 = inlined_call_operand.hbm [shape: f32[1,128], index: 21, kind: input, shape index: {}]
  %s22 = inlined_call_operand.hbm [shape: f32[1,128], index: 22, kind: input, shape index: {}]
  %s23 = inlined_call_operand.hbm [shape: f32[1,128], index: 23, kind: input, shape index: {}]
  %s24 = inlined_call_operand.hbm [shape: f32[1,128], index: 24, kind: input, shape index: {}]
  %s25 = inlined_call_operand.hbm [shape: f32[64,128], index: 25, kind: output, shape index: {}]
  %s26 = sld [smem:[#allocation0]]
  $region233: #{tpu_custom_call.1} parent=0
    _
  %s28 = ssub.s32 1, %s26
  %s29 = scalar_select 0, %s28, %s26
  $region1: #{tpu_custom_call.1} parent=0
    #allocation2 [shape = 'u8[16384]{0}', space=vmem, size = 0x4000, scoped, tag = 'input window, operand 0']
    #allocation3 [shape = 's32[2]{0}', space=sflag, size = 0x8, scoped, tag = 'scoped memory for tpu_custom_call.1']
    #allocation4 [shape = 's32[2]{0}', space=sflag, size = 0x8, scoped, tag = 'scoped memory for tpu_custom_call.1']
    #allocation5 [shape = 'u8[16384]{0}', space=vmem, size = 0x4000, scoped, tag = 'input window, operand 1']
    #allocation6 [shape = 's32[2]{0}', space=sflag, size = 0x8, scoped, tag = 'scoped memory for tpu_custom_call.1']
    #allocation7 [shape = 'u8[30720]{0}', space=vmem, size = 0x7800, scoped, tag = 'input window, operand 2, single buffered']
    #allocation8 [shape = 'u8[512]{0}', space=vmem, size = 0x400, scoped, tag = 'input window, operand 3, single buffered']
    #allocation9 [shape = 's32[1]{0}', space=sflag, size = 0x4, scoped, tag = 'scoped memory for tpu_custom_call.1']
    #allocation10 [shape = 'u8[32768]{0}', space=vmem, size = 0x8000, scoped, tag = 'input window, operand 4, single buffered']
    #allocation11 [shape = 'u8[512]{0}', space=vmem, size = 0x400, scoped, tag = 'input window, operand 5, single buffered']
    #allocation12 [shape = 's32[1]{0}', space=sflag, size = 0x4, scoped, tag = 'scoped memory for tpu_custom_call.1']
    #allocation13 [shape = 'u8[32768]{0}', space=vmem, size = 0x8000, scoped, tag = 'input window, operand 6, single buffered']
    #allocation14 [shape = 'u8[512]{0}', space=vmem, size = 0x400, scoped, tag = 'input window, operand 7, single buffered']
    #allocation15 [shape = 's32[1]{0}', space=sflag, size = 0x4, scoped, tag = 'scoped memory for tpu_custom_call.1']
    #allocation16 [shape = 'u8[32768]{0}', space=vmem, size = 0x8000, scoped, tag = 'input window, operand 8, single buffered']
    #allocation17 [shape = 'u8[512]{0}', space=vmem, size = 0x400, scoped, tag = 'input window, operand 9, single buffered']
    #allocation18 [shape = 's32[1]{0}', space=sflag, size = 0x4, scoped, tag = 'scoped memory for tpu_custom_call.1']
    #allocation19 [shape = 'u8[16384]{0}', space=vmem, size = 0x4000, scoped, tag = 'input window, operand 10, single buffered']
    #allocation20 [shape = 'u8[512]{0}', space=vmem, size = 0x400, scoped, tag = 'input window, operand 11, single buffered']
    #allocation21 [shape = 's32[1]{0}', space=sflag, size = 0x4, scoped, tag = 'scoped memory for tpu_custom_call.1']
    #allocation22 [shape = 'u8[16384]{0}', space=vmem, size = 0x4000, scoped, tag = 'input window, operand 12, single buffered']
    #allocation23 [shape = 'u8[512]{0}', space=vmem, size = 0x400, scoped, tag = 'input window, operand 13, single buffered']
    #allocation24 [shape = 's32[1]{0}', space=sflag, size = 0x4, scoped, tag = 'scoped memory for tpu_custom_call.1']
    #allocation25 [shape = 'u8[65536]{0}', space=vmem, size = 0x10000, scoped, tag = 'input window, operand 14, single buffered']
    #allocation26 [shape = 'u8[1024]{0}', space=vmem, size = 0x400, scoped, tag = 'input window, operand 15, single buffered']
    #allocation27 [shape = 's32[1]{0}', space=sflag, size = 0x4, scoped, tag = 'scoped memory for tpu_custom_call.1']
    #allocation28 [shape = 'u8[147456]{0}', space=vmem, size = 0x24000, scoped, tag = 'input window, operand 16, single buffered']
    #allocation29 [shape = 'u8[1536]{0}', space=vmem, size = 0x800, scoped, tag = 'input window, operand 17, single buffered']
    #allocation30 [shape = 's32[1]{0}', space=sflag, size = 0x4, scoped, tag = 'scoped memory for tpu_custom_call.1']
    #allocation31 [shape = 'u8[294912]{0}', space=vmem, size = 0x48000, scoped, tag = 'input window, operand 18, single buffered']
    #allocation32 [shape = 'u8[1536]{0}', space=vmem, size = 0x800, scoped, tag = 'input window, operand 19, single buffered']
    #allocation33 [shape = 's32[1]{0}', space=sflag, size = 0x4, scoped, tag = 'scoped memory for tpu_custom_call.1']
    #allocation34 [shape = 'u8[98304]{0}', space=vmem, size = 0x18000, scoped, tag = 'input window, operand 20, single buffered']
    #allocation35 [shape = 'u8[512]{0}', space=vmem, size = 0x400, scoped, tag = 'input window, operand 21, single buffered']
    #allocation36 [shape = 's32[1]{0}', space=sflag, size = 0x4, scoped, tag = 'scoped memory for tpu_custom_call.1']
    #allocation37 [shape = 'u8[512]{0}', space=vmem, size = 0x400, scoped, tag = 'input window, operand 22, single buffered']
    #allocation38 [shape = 'u8[512]{0}', space=vmem, size = 0x400, scoped, tag = 'input window, operand 23, single buffered']
    #allocation39 [shape = 's32[1]{0}', space=sflag, size = 0x4, scoped, tag = 'scoped memory for tpu_custom_call.1']
    #allocation40 [shape = 'u8[512]{0}', space=vmem, size = 0x400, scoped, tag = 'input window, operand 24, single buffered']
    #allocation41 [shape = 'u8[32768]{0}', space=vmem, size = 0x8000, scoped, tag = 'output window, operand 0']
    %30 = vsyncpa [#allocation3], 0
    %s31 = scalar_lea.sflag [#allocation3], 1
    %32 = vsyncpa %s31, 0
    %33 = vsyncpa [#allocation6], 0
    %s34 = scalar_lea.sflag [#allocation6], 1
    %35 = vsyncpa %s34, 0
    %36 = vsyncpa [#allocation9], 0
    %37 = vsyncpa [#allocation12], 0
    %38 = vsyncpa [#allocation15], 0
    %39 = vsyncpa [#allocation18], 0
    %40 = vsyncpa [#allocation21], 0
    %41 = vsyncpa [#allocation24], 0
    %42 = vsyncpa [#allocation27], 0
    %43 = vsyncpa [#allocation30], 0
    %44 = vsyncpa [#allocation33], 0
    %45 = vsyncpa [#allocation36], 0
    %46 = vsyncpa [#allocation39], 0
    %47 = vsyncpa [#allocation4], 0
    %s48 = scalar_lea.sflag [#allocation4], 1
    %49 = vsyncpa %s48, 0
    loop: start=0, step=1, limit=4
    $region2: #{tpu_custom_call.1} parent=1 // loop_pre_header
      _
    $region3: #{tpu_custom_call.1} parent=1 // loop_header
      %s51 = sphi 0, %s55
      %p52 = scmp.ge.s32.totalorder %s51, 4
      %s61 = sphi 0, %s63
      %s64 = sphi 0, %s61
      %s65 = sphi 0, %s64
      %s81 = sphi 0, %s65
      %s87 = sphi 0, %s89
      %s90 = sphi 0, %s87
      %s91 = sphi 0, %s90
      %s107 = sphi 0, %s91
      %s111 = sphi 0, %s111
      %s113 = sphi 0, %s111
      %s114 = sphi 0, %s113
      %s128 = sphi 0, %s114
      %s132 = sphi 0, %s132
      %s134 = sphi 0, %s132
      %s135 = sphi 0, %s134
      %s149 = sphi 0, %s135
      %s153 = sphi 0, %s153
      %s155 = sphi 0, %s153
      %s156 = sphi 0, %s155
      %s170 = sphi 0, %s156
      %s174 = sphi 0, %s174
      %s176 = sphi 0, %s174
      %s177 = sphi 0, %s176
      %s191 = sphi 0, %s177
      %s195 = sphi 0, %s195
      %s197 = sphi 0, %s195
      %s198 = sphi 0, %s197
      %s212 = sphi 0, %s198
      %s216 = sphi 0, %s216
      %s218 = sphi 0, %s216
      %s219 = sphi 0, %s218
      %s233 = sphi 0, %s219
      %s237 = sphi 0, %s237
      %s239 = sphi 0, %s237
      %s240 = sphi 0, %s239
      %s254 = sphi 0, %s240
      %s258 = sphi 0, %s258
      %s260 = sphi 0, %s258
      %s261 = sphi 0, %s260
      %s275 = sphi 0, %s261
      %s279 = sphi 0, %s279
      %s281 = sphi 0, %s279
      %s282 = sphi 0, %s281
      %s296 = sphi 0, %s282
      %s300 = sphi 0, %s300
      %s302 = sphi 0, %s300
      %s303 = sphi 0, %s302
      %s317 = sphi 0, %s303
      %s321 = sphi 0, %s321
      %s323 = sphi 0, %s321
      %s324 = sphi 0, %s323
      %s338 = sphi 0, %s324
      %s342 = sphi 0, %s342
      %s344 = sphi 0, %s342
      %s345 = sphi 0, %s344
      %s359 = sphi 0, %s345
      %s363 = sphi 0, %s363
      %s365 = sphi 0, %s363
      %s366 = sphi 0, %s365
      %s380 = sphi 0, %s366
      %s384 = sphi 0, %s384
      %s386 = sphi 0, %s384
      %s387 = sphi 0, %s386
      %s401 = sphi 0, %s387
      %s405 = sphi 0, %s405
      %s407 = sphi 0, %s405
      %s408 = sphi 0, %s407
      %s422 = sphi 0, %s408
      %s426 = sphi 0, %s426
      %s428 = sphi 0, %s426
      %s429 = sphi 0, %s428
      %s443 = sphi 0, %s429
      %s447 = sphi 0, %s447
      %s449 = sphi 0, %s447
      %s450 = sphi 0, %s449
      %s464 = sphi 0, %s450
      %s468 = sphi 0, %s468
      %s470 = sphi 0, %s468
      %s471 = sphi 0, %s470
      %s485 = sphi 0, %s471
      %s489 = sphi 0, %s489
      %s491 = sphi 0, %s489
      %s492 = sphi 0, %s491
      %s506 = sphi 0, %s492
      %s510 = sphi 0, %s510
      %s512 = sphi 0, %s510
      %s513 = sphi 0, %s512
      %s527 = sphi 0, %s513
      %s531 = sphi 0, %s531
      %s533 = sphi 0, %s531
      %s534 = sphi 0, %s533
      %s548 = sphi 0, %s534
      %s552 = sphi 0, %s552
      %s554 = sphi 0, %s552
      %s555 = sphi 0, %s554
      %s569 = sphi 0, %s555
      %s573 = sphi 0, %s573
      %s575 = sphi 0, %s573
      %s576 = sphi 0, %s575
      %s590 = sphi 0, %s576
      %s596 = sphi 0, %s598
      %s599 = sphi 0, %s596
      %s600 = sphi 0, %s599
      %s616 = sphi 0, %s600
    $region4: #{tpu_custom_call.1} parent=1 // loop_header_branch
      %54 = sbr.rel (%p52) target = $region8
    $region5: #{tpu_custom_call.1} parent=1 // loop_body
      %s56 = ssub.s32 %s51, 1
      %s57 = ssub.s32 %s51, 2
      %s58 = sadd.s32 %s51, 1
      %s59 = ssub.s32 %s51, %s58
      %p60 = scmp.eq.s32.totalorder %s59, 0
      %s62 = sadd.s32 %s61, 1
      %s63 = scalar_select %p60, %s61, %s62
      %p66 = pneg %p60
      %p67 = scmp.eq.s32.totalorder %s51, 1
      %p68 = por %p66, %p67
      %p69 = scmp.ne.s32.totalorder %s61, %s64
      %p70 = scmp.eq.s32.totalorder %s51, 0
      %p71 = por %p69, %p70
      %p72 = scmp.ne.s32.totalorder %s61, %s64
      %p73 = scmp.eq.s32.totalorder %s56, 1
      %p74 = por %p72, %p73
      %p75 = scmp.ne.s32.totalorder %s64, %s65
      %p76 = scmp.eq.s32.totalorder %s56, 0
      %p77 = por %p75, %p76
      %p78 = scmp.ne.s32.totalorder %s64, %s65
      %p79 = scmp.eq.s32.totalorder %s57, 1
      %p80 = por %p78, %p79
      %p82 = scmp.ne.s32.totalorder %s65, %s81
      %p83 = scmp.eq.s32.totalorder %s57, 0
      %p84 = por %p82, %p83
      %s85 = ssub.s32 %s51, %s58
      %p86 = scmp.eq.s32.totalorder %s85, 0
      %s88 = sadd.s32 %s87, 1
      %s89 = scalar_select %p86, %s87, %s88
      %p92 = pneg %p86
      %p93 = scmp.eq.s32.totalorder %s51, 1
      %p94 = por %p92, %p93
      %p95 = scmp.ne.s32.totalorder %s87, %s90
      %p96 = scmp.eq.s32.totalorder %s51, 0
      %p97 = por %p95, %p96
      %p98 = scmp.ne.s32.totalorder %s87, %s90
      %p99 = scmp.eq.s32.totalorder %s56, 1
      %p100 = por %p98, %p99
      %p101 = scmp.ne.s32.totalorder %s90, %s91
      %p102 = scmp.eq.s32.totalorder %s56, 0
      %p103 = por %p101, %p102
      %p104 = scmp.ne.s32.totalorder %s90, %s91
      %p105 = scmp.eq.s32.totalorder %s57, 1
      %p106 = por %p104, %p105
      %p108 = scmp.ne.s32.totalorder %s91, %s107
      %p109 = scmp.eq.s32.totalorder %s57, 0
      %p110 = por %p108, %p109
      %s112 = sadd.s32 %s111, 1
      %p115 = scmp.eq.s32.totalorder %s51, 1
      %p116 = scmp.ne.s32.totalorder %s111, %s113
      %p117 = scmp.eq.s32.totalorder %s51, 0
      %p118 = por %p116, %p117
      %p119 = scmp.ne.s32.totalorder %s111, %s113
      %p120 = scmp.eq.s32.totalorder %s56, 1
      %p121 = por %p119, %p120
      %p122 = scmp.ne.s32.totalorder %s113, %s114
      %p123 = scmp.eq.s32.totalorder %s56, 0
      %p124 = por %p122, %p123
      %p125 = scmp.ne.s32.totalorder %s113, %s114
      %p126 = scmp.eq.s32.totalorder %s57, 1
      %p127 = por %p125, %p126
      %p129 = scmp.ne.s32.totalorder %s114, %s128
      %p130 = scmp.eq.s32.totalorder %s57, 0
      %p131 = por %p129, %p130
      %s133 = sadd.s32 %s132, 1
      %p136 = scmp.eq.s32.totalorder %s51, 1
      %p137 = scmp.ne.s32.totalorder %s132, %s134
      %p138 = scmp.eq.s32.totalorder %s51, 0
      %p139 = por %p137, %p138
      %p140 = scmp.ne.s32.totalorder %s132, %s134
      %p141 = scmp.eq.s32.totalorder %s56, 1
      %p142 = por %p140, %p141
      %p143 = scmp.ne.s32.totalorder %s134, %s135
      %p144 = scmp.eq.s32.totalorder %s56, 0
      %p145 = por %p143, %p144
      %p146 = scmp.ne.s32.totalorder %s134, %s135
      %p147 = scmp.eq.s32.totalorder %s57, 1
      %p148 = por %p146, %p147
      %p150 = scmp.ne.s32.totalorder %s135, %s149
      %p151 = scmp.eq.s32.totalorder %s57, 0
      %p152 = por %p150, %p151
      %s154 = sadd.s32 %s153, 1
      %p157 = scmp.eq.s32.totalorder %s51, 1
      %p158 = scmp.ne.s32.totalorder %s153, %s155
      %p159 = scmp.eq.s32.totalorder %s51, 0
      %p160 = por %p158, %p159
      %p161 = scmp.ne.s32.totalorder %s153, %s155
      %p162 = scmp.eq.s32.totalorder %s56, 1
      %p163 = por %p161, %p162
      %p164 = scmp.ne.s32.totalorder %s155, %s156
      %p165 = scmp.eq.s32.totalorder %s56, 0
      %p166 = por %p164, %p165
      %p167 = scmp.ne.s32.totalorder %s155, %s156
      %p168 = scmp.eq.s32.totalorder %s57, 1
      %p169 = por %p167, %p168
      %p171 = scmp.ne.s32.totalorder %s156, %s170
      %p172 = scmp.eq.s32.totalorder %s57, 0
      %p173 = por %p171, %p172
      %s175 = sadd.s32 %s174, 1
      %p178 = scmp.eq.s32.totalorder %s51, 1
      %p179 = scmp.ne.s32.totalorder %s174, %s176
      %p180 = scmp.eq.s32.totalorder %s51, 0
      %p181 = por %p179, %p180
      %p182 = scmp.ne.s32.totalorder %s174, %s176
      %p183 = scmp.eq.s32.totalorder %s56, 1
      %p184 = por %p182, %p183
      %p185 = scmp.ne.s32.totalorder %s176, %s177
      %p186 = scmp.eq.s32.totalorder %s56, 0
      %p187 = por %p185, %p186
      %p188 = scmp.ne.s32.totalorder %s176, %s177
      %p189 = scmp.eq.s32.totalorder %s57, 1
      %p190 = por %p188, %p189
      %p192 = scmp.ne.s32.totalorder %s177, %s191
      %p193 = scmp.eq.s32.totalorder %s57, 0
      %p194 = por %p192, %p193
      %s196 = sadd.s32 %s195, 1
      %p199 = scmp.eq.s32.totalorder %s51, 1
      %p200 = scmp.ne.s32.totalorder %s195, %s197
      %p201 = scmp.eq.s32.totalorder %s51, 0
      %p202 = por %p200, %p201
      %p203 = scmp.ne.s32.totalorder %s195, %s197
      %p204 = scmp.eq.s32.totalorder %s56, 1
      %p205 = por %p203, %p204
      %p206 = scmp.ne.s32.totalorder %s197, %s198
      %p207 = scmp.eq.s32.totalorder %s56, 0
      %p208 = por %p206, %p207
      %p209 = scmp.ne.s32.totalorder %s197, %s198
      %p210 = scmp.eq.s32.totalorder %s57, 1
      %p211 = por %p209, %p210
      %p213 = scmp.ne.s32.totalorder %s198, %s212
      %p214 = scmp.eq.s32.totalorder %s57, 0
      %p215 = por %p213, %p214
      %s217 = sadd.s32 %s216, 1
      %p220 = scmp.eq.s32.totalorder %s51, 1
      %p221 = scmp.ne.s32.totalorder %s216, %s218
      %p222 = scmp.eq.s32.totalorder %s51, 0
      %p223 = por %p221, %p222
      %p224 = scmp.ne.s32.totalorder %s216, %s218
      %p225 = scmp.eq.s32.totalorder %s56, 1
      %p226 = por %p224, %p225
      %p227 = scmp.ne.s32.totalorder %s218, %s219
      %p228 = scmp.eq.s32.totalorder %s56, 0
      %p229 = por %p227, %p228
      %p230 = scmp.ne.s32.totalorder %s218, %s219
      %p231 = scmp.eq.s32.totalorder %s57, 1
      %p232 = por %p230, %p231
      %p234 = scmp.ne.s32.totalorder %s219, %s233
      %p235 = scmp.eq.s32.totalorder %s57, 0
      %p236 = por %p234, %p235
      %s238 = sadd.s32 %s237, 1
      %p241 = scmp.eq.s32.totalorder %s51, 1
      %p242 = scmp.ne.s32.totalorder %s237, %s239
      %p243 = scmp.eq.s32.totalorder %s51, 0
      %p244 = por %p242, %p243
      %p245 = scmp.ne.s32.totalorder %s237, %s239
      %p246 = scmp.eq.s32.totalorder %s56, 1
      %p247 = por %p245, %p246
      %p248 = scmp.ne.s32.totalorder %s239, %s240
      %p249 = scmp.eq.s32.totalorder %s56, 0
      %p250 = por %p248, %p249
      %p251 = scmp.ne.s32.totalorder %s239, %s240
      %p252 = scmp.eq.s32.totalorder %s57, 1
      %p253 = por %p251, %p252
      %p255 = scmp.ne.s32.totalorder %s240, %s254
      %p256 = scmp.eq.s32.totalorder %s57, 0
      %p257 = por %p255, %p256
      %s259 = sadd.s32 %s258, 1
      %p262 = scmp.eq.s32.totalorder %s51, 1
      %p263 = scmp.ne.s32.totalorder %s258, %s260
      %p264 = scmp.eq.s32.totalorder %s51, 0
      %p265 = por %p263, %p264
      %p266 = scmp.ne.s32.totalorder %s258, %s260
      %p267 = scmp.eq.s32.totalorder %s56, 1
      %p268 = por %p266, %p267
      %p269 = scmp.ne.s32.totalorder %s260, %s261
      %p270 = scmp.eq.s32.totalorder %s56, 0
      %p271 = por %p269, %p270
      %p272 = scmp.ne.s32.totalorder %s260, %s261
      %p273 = scmp.eq.s32.totalorder %s57, 1
      %p274 = por %p272, %p273
      %p276 = scmp.ne.s32.totalorder %s261, %s275
      %p277 = scmp.eq.s32.totalorder %s57, 0
      %p278 = por %p276, %p277
      %s280 = sadd.s32 %s279, 1
      %p283 = scmp.eq.s32.totalorder %s51, 1
      %p284 = scmp.ne.s32.totalorder %s279, %s281
      %p285 = scmp.eq.s32.totalorder %s51, 0
      %p286 = por %p284, %p285
      %p287 = scmp.ne.s32.totalorder %s279, %s281
      %p288 = scmp.eq.s32.totalorder %s56, 1
      %p289 = por %p287, %p288
      %p290 = scmp.ne.s32.totalorder %s281, %s282
      %p291 = scmp.eq.s32.totalorder %s56, 0
      %p292 = por %p290, %p291
      %p293 = scmp.ne.s32.totalorder %s281, %s282
      %p294 = scmp.eq.s32.totalorder %s57, 1
      %p295 = por %p293, %p294
      %p297 = scmp.ne.s32.totalorder %s282, %s296
      %p298 = scmp.eq.s32.totalorder %s57, 0
      %p299 = por %p297, %p298
      %s301 = sadd.s32 %s300, 1
      %p304 = scmp.eq.s32.totalorder %s51, 1
      %p305 = scmp.ne.s32.totalorder %s300, %s302
      %p306 = scmp.eq.s32.totalorder %s51, 0
      %p307 = por %p305, %p306
      %p308 = scmp.ne.s32.totalorder %s300, %s302
      %p309 = scmp.eq.s32.totalorder %s56, 1
      %p310 = por %p308, %p309
      %p311 = scmp.ne.s32.totalorder %s302, %s303
      %p312 = scmp.eq.s32.totalorder %s56, 0
      %p313 = por %p311, %p312
      %p314 = scmp.ne.s32.totalorder %s302, %s303
      %p315 = scmp.eq.s32.totalorder %s57, 1
      %p316 = por %p314, %p315
      %p318 = scmp.ne.s32.totalorder %s303, %s317
      %p319 = scmp.eq.s32.totalorder %s57, 0
      %p320 = por %p318, %p319
      %s322 = sadd.s32 %s321, 1
      %p325 = scmp.eq.s32.totalorder %s51, 1
      %p326 = scmp.ne.s32.totalorder %s321, %s323
      %p327 = scmp.eq.s32.totalorder %s51, 0
      %p328 = por %p326, %p327
      %p329 = scmp.ne.s32.totalorder %s321, %s323
      %p330 = scmp.eq.s32.totalorder %s56, 1
      %p331 = por %p329, %p330
      %p332 = scmp.ne.s32.totalorder %s323, %s324
      %p333 = scmp.eq.s32.totalorder %s56, 0
      %p334 = por %p332, %p333
      %p335 = scmp.ne.s32.totalorder %s323, %s324
      %p336 = scmp.eq.s32.totalorder %s57, 1
      %p337 = por %p335, %p336
      %p339 = scmp.ne.s32.totalorder %s324, %s338
      %p340 = scmp.eq.s32.totalorder %s57, 0
      %p341 = por %p339, %p340
      %s343 = sadd.s32 %s342, 1
      %p346 = scmp.eq.s32.totalorder %s51, 1
      %p347 = scmp.ne.s32.totalorder %s342, %s344
      %p348 = scmp.eq.s32.totalorder %s51, 0
      %p349 = por %p347, %p348
      %p350 = scmp.ne.s32.totalorder %s342, %s344
      %p351 = scmp.eq.s32.totalorder %s56, 1
      %p352 = por %p350, %p351
      %p353 = scmp.ne.s32.totalorder %s344, %s345
      %p354 = scmp.eq.s32.totalorder %s56, 0
      %p355 = por %p353, %p354
      %p356 = scmp.ne.s32.totalorder %s344, %s345
      %p357 = scmp.eq.s32.totalorder %s57, 1
      %p358 = por %p356, %p357
      %p360 = scmp.ne.s32.totalorder %s345, %s359
      %p361 = scmp.eq.s32.totalorder %s57, 0
      %p362 = por %p360, %p361
      %s364 = sadd.s32 %s363, 1
      %p367 = scmp.eq.s32.totalorder %s51, 1
      %p368 = scmp.ne.s32.totalorder %s363, %s365
      %p369 = scmp.eq.s32.totalorder %s51, 0
      %p370 = por %p368, %p369
      %p371 = scmp.ne.s32.totalorder %s363, %s365
      %p372 = scmp.eq.s32.totalorder %s56, 1
      %p373 = por %p371, %p372
      %p374 = scmp.ne.s32.totalorder %s365, %s366
      %p375 = scmp.eq.s32.totalorder %s56, 0
      %p376 = por %p374, %p375
      %p377 = scmp.ne.s32.totalorder %s365, %s366
      %p378 = scmp.eq.s32.totalorder %s57, 1
      %p379 = por %p377, %p378
      %p381 = scmp.ne.s32.totalorder %s366, %s380
      %p382 = scmp.eq.s32.totalorder %s57, 0
      %p383 = por %p381, %p382
      %s385 = sadd.s32 %s384, 1
      %p388 = scmp.eq.s32.totalorder %s51, 1
      %p389 = scmp.ne.s32.totalorder %s384, %s386
      %p390 = scmp.eq.s32.totalorder %s51, 0
      %p391 = por %p389, %p390
      %p392 = scmp.ne.s32.totalorder %s384, %s386
      %p393 = scmp.eq.s32.totalorder %s56, 1
      %p394 = por %p392, %p393
      %p395 = scmp.ne.s32.totalorder %s386, %s387
      %p396 = scmp.eq.s32.totalorder %s56, 0
      %p397 = por %p395, %p396
      %p398 = scmp.ne.s32.totalorder %s386, %s387
      %p399 = scmp.eq.s32.totalorder %s57, 1
      %p400 = por %p398, %p399
      %p402 = scmp.ne.s32.totalorder %s387, %s401
      %p403 = scmp.eq.s32.totalorder %s57, 0
      %p404 = por %p402, %p403
      %s406 = sadd.s32 %s405, 1
      %p409 = scmp.eq.s32.totalorder %s51, 1
      %p410 = scmp.ne.s32.totalorder %s405, %s407
      %p411 = scmp.eq.s32.totalorder %s51, 0
      %p412 = por %p410, %p411
      %p413 = scmp.ne.s32.totalorder %s405, %s407
      %p414 = scmp.eq.s32.totalorder %s56, 1
      %p415 = por %p413, %p414
      %p416 = scmp.ne.s32.totalorder %s407, %s408
      %p417 = scmp.eq.s32.totalorder %s56, 0
      %p418 = por %p416, %p417
      %p419 = scmp.ne.s32.totalorder %s407, %s408
      %p420 = scmp.eq.s32.totalorder %s57, 1
      %p421 = por %p419, %p420
      %p423 = scmp.ne.s32.totalorder %s408, %s422
      %p424 = scmp.eq.s32.totalorder %s57, 0
      %p425 = por %p423, %p424
      %s427 = sadd.s32 %s426, 1
      %p430 = scmp.eq.s32.totalorder %s51, 1
      %p431 = scmp.ne.s32.totalorder %s426, %s428
      %p432 = scmp.eq.s32.totalorder %s51, 0
      %p433 = por %p431, %p432
      %p434 = scmp.ne.s32.totalorder %s426, %s428
      %p435 = scmp.eq.s32.totalorder %s56, 1
      %p436 = por %p434, %p435
      %p437 = scmp.ne.s32.totalorder %s428, %s429
      %p438 = scmp.eq.s32.totalorder %s56, 0
      %p439 = por %p437, %p438
      %p440 = scmp.ne.s32.totalorder %s428, %s429
      %p441 = scmp.eq.s32.totalorder %s57, 1
      %p442 = por %p440, %p441
      %p444 = scmp.ne.s32.totalorder %s429, %s443
      %p445 = scmp.eq.s32.totalorder %s57, 0
      %p446 = por %p444, %p445
      %s448 = sadd.s32 %s447, 1
      %p451 = scmp.eq.s32.totalorder %s51, 1
      %p452 = scmp.ne.s32.totalorder %s447, %s449
      %p453 = scmp.eq.s32.totalorder %s51, 0
      %p454 = por %p452, %p453
      %p455 = scmp.ne.s32.totalorder %s447, %s449
      %p456 = scmp.eq.s32.totalorder %s56, 1
      %p457 = por %p455, %p456
      %p458 = scmp.ne.s32.totalorder %s449, %s450
      %p459 = scmp.eq.s32.totalorder %s56, 0
      %p460 = por %p458, %p459
      %p461 = scmp.ne.s32.totalorder %s449, %s450
      %p462 = scmp.eq.s32.totalorder %s57, 1
      %p463 = por %p461, %p462
      %p465 = scmp.ne.s32.totalorder %s450, %s464
      %p466 = scmp.eq.s32.totalorder %s57, 0
      %p467 = por %p465, %p466
      %s469 = sadd.s32 %s468, 1
      %p472 = scmp.eq.s32.totalorder %s51, 1
      %p473 = scmp.ne.s32.totalorder %s468, %s470
      %p474 = scmp.eq.s32.totalorder %s51, 0
      %p475 = por %p473, %p474
      %p476 = scmp.ne.s32.totalorder %s468, %s470
      %p477 = scmp.eq.s32.totalorder %s56, 1
      %p478 = por %p476, %p477
      %p479 = scmp.ne.s32.totalorder %s470, %s471
      %p480 = scmp.eq.s32.totalorder %s56, 0
      %p481 = por %p479, %p480
      %p482 = scmp.ne.s32.totalorder %s470, %s471
      %p483 = scmp.eq.s32.totalorder %s57, 1
      %p484 = por %p482, %p483
      %p486 = scmp.ne.s32.totalorder %s471, %s485
      %p487 = scmp.eq.s32.totalorder %s57, 0
      %p488 = por %p486, %p487
      %s490 = sadd.s32 %s489, 1
      %p493 = scmp.eq.s32.totalorder %s51, 1
      %p494 = scmp.ne.s32.totalorder %s489, %s491
      %p495 = scmp.eq.s32.totalorder %s51, 0
      %p496 = por %p494, %p495
      %p497 = scmp.ne.s32.totalorder %s489, %s491
      %p498 = scmp.eq.s32.totalorder %s56, 1
      %p499 = por %p497, %p498
      %p500 = scmp.ne.s32.totalorder %s491, %s492
      %p501 = scmp.eq.s32.totalorder %s56, 0
      %p502 = por %p500, %p501
      %p503 = scmp.ne.s32.totalorder %s491, %s492
      %p504 = scmp.eq.s32.totalorder %s57, 1
      %p505 = por %p503, %p504
      %p507 = scmp.ne.s32.totalorder %s492, %s506
      %p508 = scmp.eq.s32.totalorder %s57, 0
      %p509 = por %p507, %p508
      %s511 = sadd.s32 %s510, 1
      %p514 = scmp.eq.s32.totalorder %s51, 1
      %p515 = scmp.ne.s32.totalorder %s510, %s512
      %p516 = scmp.eq.s32.totalorder %s51, 0
      %p517 = por %p515, %p516
      %p518 = scmp.ne.s32.totalorder %s510, %s512
      %p519 = scmp.eq.s32.totalorder %s56, 1
      %p520 = por %p518, %p519
      %p521 = scmp.ne.s32.totalorder %s512, %s513
      %p522 = scmp.eq.s32.totalorder %s56, 0
      %p523 = por %p521, %p522
      %p524 = scmp.ne.s32.totalorder %s512, %s513
      %p525 = scmp.eq.s32.totalorder %s57, 1
      %p526 = por %p524, %p525
      %p528 = scmp.ne.s32.totalorder %s513, %s527
      %p529 = scmp.eq.s32.totalorder %s57, 0
      %p530 = por %p528, %p529
      %s532 = sadd.s32 %s531, 1
      %p535 = scmp.eq.s32.totalorder %s51, 1
      %p536 = scmp.ne.s32.totalorder %s531, %s533
      %p537 = scmp.eq.s32.totalorder %s51, 0
      %p538 = por %p536, %p537
      %p539 = scmp.ne.s32.totalorder %s531, %s533
      %p540 = scmp.eq.s32.totalorder %s56, 1
      %p541 = por %p539, %p540
      %p542 = scmp.ne.s32.totalorder %s533, %s534
      %p543 = scmp.eq.s32.totalorder %s56, 0
      %p544 = por %p542, %p543
      %p545 = scmp.ne.s32.totalorder %s533, %s534
      %p546 = scmp.eq.s32.totalorder %s57, 1
      %p547 = por %p545, %p546
      %p549 = scmp.ne.s32.totalorder %s534, %s548
      %p550 = scmp.eq.s32.totalorder %s57, 0
      %p551 = por %p549, %p550
      %s553 = sadd.s32 %s552, 1
      %p556 = scmp.eq.s32.totalorder %s51, 1
      %p557 = scmp.ne.s32.totalorder %s552, %s554
      %p558 = scmp.eq.s32.totalorder %s51, 0
      %p559 = por %p557, %p558
      %p560 = scmp.ne.s32.totalorder %s552, %s554
      %p561 = scmp.eq.s32.totalorder %s56, 1
      %p562 = por %p560, %p561
      %p563 = scmp.ne.s32.totalorder %s554, %s555
      %p564 = scmp.eq.s32.totalorder %s56, 0
      %p565 = por %p563, %p564
      %p566 = scmp.ne.s32.totalorder %s554, %s555
      %p567 = scmp.eq.s32.totalorder %s57, 1
      %p568 = por %p566, %p567
      %p570 = scmp.ne.s32.totalorder %s555, %s569
      %p571 = scmp.eq.s32.totalorder %s57, 0
      %p572 = por %p570, %p571
      %s574 = sadd.s32 %s573, 1
      %p577 = scmp.eq.s32.totalorder %s51, 1
      %p578 = scmp.ne.s32.totalorder %s573, %s575
      %p579 = scmp.eq.s32.totalorder %s51, 0
      %p580 = por %p578, %p579
      %p581 = scmp.ne.s32.totalorder %s573, %s575
      %p582 = scmp.eq.s32.totalorder %s56, 1
      %p583 = por %p581, %p582
      %p584 = scmp.ne.s32.totalorder %s575, %s576
      %p585 = scmp.eq.s32.totalorder %s56, 0
      %p586 = por %p584, %p585
      %p587 = scmp.ne.s32.totalorder %s575, %s576
      %p588 = scmp.eq.s32.totalorder %s57, 1
      %p589 = por %p587, %p588
      %p591 = scmp.ne.s32.totalorder %s576, %s590
      %p592 = scmp.eq.s32.totalorder %s57, 0
      %p593 = por %p591, %p592
      %s594 = ssub.s32 %s51, %s58
      %p595 = scmp.eq.s32.totalorder %s594, 0
      %s597 = sadd.s32 %s596, 1
      %s598 = scalar_select %p595, %s596, %s597
      %p601 = pneg %p595
      %p602 = scmp.eq.s32.totalorder %s51, 1
      %p603 = por %p601, %p602
      %p604 = scmp.ne.s32.totalorder %s596, %s599
      %p605 = scmp.eq.s32.totalorder %s51, 0
      %p606 = por %p604, %p605
      %p607 = scmp.ne.s32.totalorder %s596, %s599
      %p608 = scmp.eq.s32.totalorder %s56, 1
      %p609 = por %p607, %p608
      %p610 = scmp.ne.s32.totalorder %s599, %s600
      %p611 = scmp.eq.s32.totalorder %s56, 0
      %p612 = por %p610, %p611
      %p613 = scmp.ne.s32.totalorder %s599, %s600
      %p614 = scmp.eq.s32.totalorder %s57, 1
      %p615 = por %p613, %p614
      %p617 = scmp.ne.s32.totalorder %s600, %s616
      %p618 = scmp.eq.s32.totalorder %s57, 0
      %p619 = por %p617, %p618
      %p620 = scmp.le.s32.totalorder 1, %s51
      %p621 = scmp.lt.s32.totalorder %s51, 3
      %p622 = pnand %p620, %p621
      %p623 = pneg %p622
      // Predicated region
      $region9: #{tpu_custom_call.1} parent=5 // pred_check
        _
      $region10: #{tpu_custom_call.1} parent=5 // pred_check_branch
        %625 = sbr.rel (%p622) target = $region12
      $region11: #{tpu_custom_call.1} parent=5 // pred_region
        %s626 = ssub.s32 %s51, 1
        // Predicated region
        $region13: #{tpu_custom_call.1} parent=11 // pred_check
          %p627 = pneg %p124
        $region14: #{tpu_custom_call.1} parent=11 // pred_check_branch
          %629 = sbr.rel (%p627) target = $region16
        $region15: #{tpu_custom_call.1} parent=11 // pred_region
          %s631 = ssub.s32 960, 960
          %632 = vsyncadd [#allocation6], %s631
          %s633 = sshll.u32 [#allocation7], 4
          %s634 = int_to_ptr.vmem [resolvable:$true] %s633
          %639 = dma.hbm_to_vmem [thread:$0]  %s2, 960, %s634, [#allocation6], 64, 64, 4
        $region16: #{tpu_custom_call.1} parent=11 // pred_fallthru
          _
        // Predicated region
        $region17: #{tpu_custom_call.1} parent=11 // pred_check
          %p640 = pneg %p145
        $region18: #{tpu_custom_call.1} parent=11 // pred_check_branch
          %642 = sbr.rel (%p640) target = $region20
        $region19: #{tpu_custom_call.1} parent=11 // pred_region
          %s644 = ssub.s32 16, 16
          %645 = vsyncadd [#allocation9], %s644
          %s647 = sshll.u32 [#allocation8], 4
          %s648 = int_to_ptr.vmem [resolvable:$true] %s647
          %650 = dma.hbm_to_vmem [thread:$0]  %s3, 16, %s648, [#allocation9]
        $region20: #{tpu_custom_call.1} parent=11 // pred_fallthru
          _
        // Predicated region
        $region21: #{tpu_custom_call.1} parent=11 // pred_check
          %p651 = pneg %p166
        $region22: #{tpu_custom_call.1} parent=11 // pred_check_branch
          %653 = sbr.rel (%p651) target = $region24
        $region23: #{tpu_custom_call.1} parent=11 // pred_region
          %s655 = ssub.s32 1024, 1024
          %656 = vsyncadd [#allocation9], %s655
          %s657 = sshll.u32 [#allocation10], 4
          %s658 = int_to_ptr.vmem [resolvable:$true] %s657
          %663 = dma.hbm_to_vmem [thread:$0]  %s4, 1024, %s658, [#allocation9], 64, 64, 4
        $region24: #{tpu_custom_call.1} parent=11 // pred_fallthru
          _
        // Predicated region
        $region25: #{tpu_custom_call.1} parent=11 // pred_check
          %p664 = pneg %p187
        $region26: #{tpu_custom_call.1} parent=11 // pred_check_branch
          %666 = sbr.rel (%p664) target = $region28
        $region27: #{tpu_custom_call.1} parent=11 // pred_region
          %s668 = ssub.s32 16, 16
          %669 = vsyncadd [#allocation12], %s668
          %s671 = sshll.u32 [#allocation11], 4
          %s672 = int_to_ptr.vmem [resolvable:$true] %s671
          %674 = dma.hbm_to_vmem [thread:$0]  %s5, 16, %s672, [#allocation12]
        $region28: #{tpu_custom_call.1} parent=11 // pred_fallthru
          _
        // Predicated region
        $region29: #{tpu_custom_call.1} parent=11 // pred_check
          %p675 = pneg %p208
        $region30: #{tpu_custom_call.1} parent=11 // pred_check_branch
          %677 = sbr.rel (%p675) target = $region32
        $region31: #{tpu_custom_call.1} parent=11 // pred_region
          %s679 = ssub.s32 1024, 1024
          %680 = vsyncadd [#allocation12], %s679
          %s681 = sshll.u32 [#allocation13], 4
          %s682 = int_to_ptr.vmem [resolvable:$true] %s681
          %687 = dma.hbm_to_vmem [thread:$0]  %s6, 1024, %s682, [#allocation12], 64, 64, 4
        $region32: #{tpu_custom_call.1} parent=11 // pred_fallthru
          _
        // Predicated region
        $region33: #{tpu_custom_call.1} parent=11 // pred_check
          %p688 = pneg %p229
        $region34: #{tpu_custom_call.1} parent=11 // pred_check_branch
          %690 = sbr.rel (%p688) target = $region36
        $region35: #{tpu_custom_call.1} parent=11 // pred_region
          %s692 = ssub.s32 16, 16
          %693 = vsyncadd [#allocation15], %s692
          %s695 = sshll.u32 [#allocation14], 4
          %s696 = int_to_ptr.vmem [resolvable:$true] %s695
          %698 = dma.hbm_to_vmem [thread:$0]  %s7, 16, %s696, [#allocation15]
        $region36: #{tpu_custom_call.1} parent=11 // pred_fallthru
          _
        // Predicated region
        $region37: #{tpu_custom_call.1} parent=11 // pred_check
          %p699 = pneg %p250
        $region38: #{tpu_custom_call.1} parent=11 // pred_check_branch
          %701 = sbr.rel (%p699) target = $region40
        $region39: #{tpu_custom_call.1} parent=11 // pred_region
          %s703 = ssub.s32 1024, 1024
          %704 = vsyncadd [#allocation15], %s703
          %s705 = sshll.u32 [#allocation16], 4
          %s706 = int_to_ptr.vmem [resolvable:$true] %s705
          %711 = dma.hbm_to_vmem [thread:$0]  %s8, 1024, %s706, [#allocation15], 64, 64, 4
        $region40: #{tpu_custom_call.1} parent=11 // pred_fallthru
          _
        // Predicated region
        $region41: #{tpu_custom_call.1} parent=11 // pred_check
          %p712 = pneg %p271
        $region42: #{tpu_custom_call.1} parent=11 // pred_check_branch
          %714 = sbr.rel (%p712) target = $region44
        $region43: #{tpu_custom_call.1} parent=11 // pred_region
          %s716 = ssub.s32 16, 16
          %717 = vsyncadd [#allocation18], %s716
          %s719 = sshll.u32 [#allocation17], 4
          %s720 = int_to_ptr.vmem [resolvable:$true] %s719
          %722 = dma.hbm_to_vmem [thread:$0]  %s9, 16, %s720, [#allocation18]
        $region44: #{tpu_custom_call.1} parent=11 // pred_fallthru
          _
        // Predicated region
        $region45: #{tpu_custom_call.1} parent=11 // pred_check
          %p723 = pneg %p292
        $region46: #{tpu_custom_call.1} parent=11 // pred_check_branch
          %725 = sbr.rel (%p723) target = $region48
        $region47: #{tpu_custom_call.1} parent=11 // pred_region
          %s727 = ssub.s32 512, 512
          %728 = vsyncadd [#allocation18], %s727
          %s729 = sshll.u32 [#allocation19], 4
          %s730 = int_to_ptr.vmem [resolvable:$true] %s729
          %735 = dma.hbm_to_vmem [thread:$0]  %s10, 512, %s730, [#allocation18], 64, 64, 4
        $region48: #{tpu_custom_call.1} parent=11 // pred_fallthru
          _
        // Predicated region
        $region49: #{tpu_custom_call.1} parent=11 // pred_check
          %p736 = pneg %p313
        $region50: #{tpu_custom_call.1} parent=11 // pred_check_branch
          %738 = sbr.rel (%p736) target = $region52
        $region51: #{tpu_custom_call.1} parent=11 // pred_region
          %s740 = ssub.s32 16, 16
          %741 = vsyncadd [#allocation21], %s740
          %s743 = sshll.u32 [#allocation20], 4
          %s744 = int_to_ptr.vmem [resolvable:$true] %s743
          %746 = dma.hbm_to_vmem [thread:$0]  %s11, 16, %s744, [#allocation21]
        $region52: #{tpu_custom_call.1} parent=11 // pred_fallthru
          _
        // Predicated region
        $region53: #{tpu_custom_call.1} parent=11 // pred_check
          %p747 = pneg %p334
        $region54: #{tpu_custom_call.1} parent=11 // pred_check_branch
          %749 = sbr.rel (%p747) target = $region56
        $region55: #{tpu_custom_call.1} parent=11 // pred_region
          %s751 = ssub.s32 512, 512
          %752 = vsyncadd [#allocation21], %s751
          %s753 = sshll.u32 [#allocation22], 4
          %s754 = int_to_ptr.vmem [resolvable:$true] %s753
          %759 = dma.hbm_to_vmem [thread:$0]  %s12, 512, %s754, [#allocation21], 64, 64, 4
        $region56: #{tpu_custom_call.1} parent=11 // pred_fallthru
          _
        // Predicated region
        $region57: #{tpu_custom_call.1} parent=11 // pred_check
          %p760 = pneg %p355
        $region58: #{tpu_custom_call.1} parent=11 // pred_check_branch
          %762 = sbr.rel (%p760) target = $region60
        $region59: #{tpu_custom_call.1} parent=11 // pred_region
          %s764 = ssub.s32 16, 16
          %765 = vsyncadd [#allocation24], %s764
          %s767 = sshll.u32 [#allocation23], 4
          %s768 = int_to_ptr.vmem [resolvable:$true] %s767
          %770 = dma.hbm_to_vmem [thread:$0]  %s13, 16, %s768, [#allocation24]
        $region60: #{tpu_custom_call.1} parent=11 // pred_fallthru
          _
        // Predicated region
        $region61: #{tpu_custom_call.1} parent=11 // pred_check
          %p771 = pneg %p376
        $region62: #{tpu_custom_call.1} parent=11 // pred_check_branch
          %773 = sbr.rel (%p771) target = $region64
        $region63: #{tpu_custom_call.1} parent=11 // pred_region
          %s775 = ssub.s32 2048, 2048
          %776 = vsyncadd [#allocation24], %s775
          %s777 = sshll.u32 [#allocation25], 4
          %s778 = int_to_ptr.vmem [resolvable:$true] %s777
          %783 = dma.hbm_to_vmem [thread:$0]  %s14, 2048, %s778, [#allocation24], 128, 128, 8
        $region64: #{tpu_custom_call.1} parent=11 // pred_fallthru
          _
        // Predicated region
        $region65: #{tpu_custom_call.1} parent=11 // pred_check
          %p784 = pneg %p397
        $region66: #{tpu_custom_call.1} parent=11 // pred_check_branch
          %786 = sbr.rel (%p784) target = $region68
        $region67: #{tpu_custom_call.1} parent=11 // pred_region
          %s788 = ssub.s32 32, 32
          %789 = vsyncadd [#allocation27], %s788
          %s791 = sshll.u32 [#allocation26], 4
          %s792 = int_to_ptr.vmem [resolvable:$true] %s791
          %794 = dma.hbm_to_vmem [thread:$0]  %s15, 32, %s792, [#allocation27]
        $region68: #{tpu_custom_call.1} parent=11 // pred_fallthru
          _
        // Predicated region
        $region69: #{tpu_custom_call.1} parent=11 // pred_check
          %p795 = pneg %p418
        $region70: #{tpu_custom_call.1} parent=11 // pred_check_branch
          %797 = sbr.rel (%p795) target = $region72
        $region71: #{tpu_custom_call.1} parent=11 // pred_region
          %s799 = ssub.s32 4608, 4608
          %800 = vsyncadd [#allocation27], %s799
          %s801 = sshll.u32 [#allocation28], 4
          %s802 = int_to_ptr.vmem [resolvable:$true] %s801
          %807 = dma.hbm_to_vmem [thread:$0]  %s16, 4608, %s802, [#allocation27], 192, 192, 12
        $region72: #{tpu_custom_call.1} parent=11 // pred_fallthru
          _
        // Predicated region
        $region73: #{tpu_custom_call.1} parent=11 // pred_check
          %p808 = pneg %p439
        $region74: #{tpu_custom_call.1} parent=11 // pred_check_branch
          %810 = sbr.rel (%p808) target = $region76
        $region75: #{tpu_custom_call.1} parent=11 // pred_region
          %s812 = ssub.s32 48, 48
          %813 = vsyncadd [#allocation30], %s812
          %s815 = sshll.u32 [#allocation29], 4
          %s816 = int_to_ptr.vmem [resolvable:$true] %s815
          %818 = dma.hbm_to_vmem [thread:$0]  %s17, 48, %s816, [#allocation30]
        $region76: #{tpu_custom_call.1} parent=11 // pred_fallthru
          _
        // Predicated region
        $region77: #{tpu_custom_call.1} parent=11 // pred_check
          %p819 = pneg %p460
        $region78: #{tpu_custom_call.1} parent=11 // pred_check_branch
          %821 = sbr.rel (%p819) target = $region80
        $region79: #{tpu_custom_call.1} parent=11 // pred_region
          %s823 = ssub.s32 9216, 9216
          %824 = vsyncadd [#allocation30], %s823
          %s825 = sshll.u32 [#allocation31], 4
          %s826 = int_to_ptr.vmem [resolvable:$true] %s825
          %831 = dma.hbm_to_vmem [thread:$0]  %s18, 9216, %s826, [#allocation30], 192, 192, 12
        $region80: #{tpu_custom_call.1} parent=11 // pred_fallthru
          _
        // Predicated region
        $region81: #{tpu_custom_call.1} parent=11 // pred_check
          %p832 = pneg %p481
        $region82: #{tpu_custom_call.1} parent=11 // pred_check_branch
          %834 = sbr.rel (%p832) target = $region84
        $region83: #{tpu_custom_call.1} parent=11 // pred_region
          %s836 = ssub.s32 48, 48
          %837 = vsyncadd [#allocation33], %s836
          %s839 = sshll.u32 [#allocation32], 4
          %s840 = int_to_ptr.vmem [resolvable:$true] %s839
          %842 = dma.hbm_to_vmem [thread:$0]  %s19, 48, %s840, [#allocation33]
        $region84: #{tpu_custom_call.1} parent=11 // pred_fallthru
          _
        // Predicated region
        $region85: #{tpu_custom_call.1} parent=11 // pred_check
          %p843 = pneg %p502
        $region86: #{tpu_custom_call.1} parent=11 // pred_check_branch
          %845 = sbr.rel (%p843) target = $region88
        $region87: #{tpu_custom_call.1} parent=11 // pred_region
          %s847 = ssub.s32 3072, 3072
          %848 = vsyncadd [#allocation33], %s847
          %s849 = sshll.u32 [#allocation34], 4
          %s850 = int_to_ptr.vmem [resolvable:$true] %s849
          %855 = dma.hbm_to_vmem [thread:$0]  %s20, 3072, %s850, [#allocation33], 64, 64, 4
        $region88: #{tpu_custom_call.1} parent=11 // pred_fallthru
          _
        // Predicated region
        $region89: #{tpu_custom_call.1} parent=11 // pred_check
          %p856 = pneg %p523
        $region90: #{tpu_custom_call.1} parent=11 // pred_check_branch
          %858 = sbr.rel (%p856) target = $region92
        $region91: #{tpu_custom_call.1} parent=11 // pred_region
          %s860 = ssub.s32 16, 16
          %861 = vsyncadd [#allocation36], %s860
          %s863 = sshll.u32 [#allocation35], 4
          %s864 = int_to_ptr.vmem [resolvable:$true] %s863
          %866 = dma.hbm_to_vmem [thread:$0]  %s21, 16, %s864, [#allocation36]
        $region92: #{tpu_custom_call.1} parent=11 // pred_fallthru
          _
        // Predicated region
        $region93: #{tpu_custom_call.1} parent=11 // pred_check
          %p867 = pneg %p544
        $region94: #{tpu_custom_call.1} parent=11 // pred_check_branch
          %869 = sbr.rel (%p867) target = $region96
        $region95: #{tpu_custom_call.1} parent=11 // pred_region
          %s871 = ssub.s32 16, 16
          %872 = vsyncadd [#allocation36], %s871
          %s874 = sshll.u32 [#allocation37], 4
          %s875 = int_to_ptr.vmem [resolvable:$true] %s874
          %877 = dma.hbm_to_vmem [thread:$0]  %s22, 16, %s875, [#allocation36]
        $region96: #{tpu_custom_call.1} parent=11 // pred_fallthru
          _
        // Predicated region
        $region97: #{tpu_custom_call.1} parent=11 // pred_check
          %p878 = pneg %p565
        $region98: #{tpu_custom_call.1} parent=11 // pred_check_branch
          %880 = sbr.rel (%p878) target = $region100
        $region99: #{tpu_custom_call.1} parent=11 // pred_region
          %s882 = ssub.s32 16, 16
          %883 = vsyncadd [#allocation39], %s882
          %s885 = sshll.u32 [#allocation38], 4
          %s886 = int_to_ptr.vmem [resolvable:$true] %s885
          %888 = dma.hbm_to_vmem [thread:$0]  %s23, 16, %s886, [#allocation39]
        $region100: #{tpu_custom_call.1} parent=11 // pred_fallthru
          _
        // Predicated region
        $region101: #{tpu_custom_call.1} parent=11 // pred_check
          %p889 = pneg %p586
        $region102: #{tpu_custom_call.1} parent=11 // pred_check_branch
          %891 = sbr.rel (%p889) target = $region104
        $region103: #{tpu_custom_call.1} parent=11 // pred_region
          %s893 = ssub.s32 16, 16
          %894 = vsyncadd [#allocation39], %s893
          %s896 = sshll.u32 [#allocation40], 4
          %s897 = int_to_ptr.vmem [resolvable:$true] %s896
          %899 = dma.hbm_to_vmem [thread:$0]  %s24, 16, %s897, [#allocation39]
        $region104: #{tpu_custom_call.1} parent=11 // pred_fallthru
          _
      $region12: #{tpu_custom_call.1} parent=5 // pred_fallthru
        _
      %p900 = scmp.lt.s32.totalorder %s51, 2
      // Predicated region
      $region105: #{tpu_custom_call.1} parent=5 // pred_check
        %p901 = pneg %p900
      $region106: #{tpu_custom_call.1} parent=5 // pred_check_branch
        %903 = sbr.rel (%p901) target = $region108
      $region107: #{tpu_custom_call.1} parent=5 // pred_region
        // Predicated region
        $region109: #{tpu_custom_call.1} parent=107 // pred_check
          %p904 = pneg %p71
        $region110: #{tpu_custom_call.1} parent=107 // pred_check_branch
          %906 = sbr.rel (%p904) target = $region112
        $region111: #{tpu_custom_call.1} parent=107 // pred_region
          %s907 = sand.u32 %s61, 1
          %s908 = scalar_lea.sflag [#allocation3], %s907
          %s909 = sand.u32 %s61, 1
          %s910 = smul.addr %s909, 16
          %s911 = scalar_lea.vmem [#allocation2], %s910
          %s912 = smul.u32 4, %s51
          %s914 = ssub.s32 256, 256
          %915 = vsyncadd %s908, %s914
          %s916 = smul.addr %s912, 64
          %s917 = scalar_lea.hbm %s0, %s916
          %s918 = sshll.u32 %s911, 4
          %s919 = int_to_ptr.vmem [resolvable:$true] %s918
          %924 = dma.hbm_to_vmem [thread:$0]  %s917, 256, %s919, %s908, 64, 64, 4
        $region112: #{tpu_custom_call.1} parent=107 // pred_fallthru
          _
        // Predicated region
        $region113: #{tpu_custom_call.1} parent=107 // pred_check
          %p925 = pneg %p97
        $region114: #{tpu_custom_call.1} parent=107 // pred_check_branch
          %927 = sbr.rel (%p925) target = $region116
        $region115: #{tpu_custom_call.1} parent=107 // pred_region
          %s928 = sand.u32 %s51, 1
          %s929 = scalar_lea.sflag [#allocation6], %s928
          %s930 = sand.u32 %s87, 1
          %s931 = smul.addr %s930, 16
          %s932 = scalar_lea.vmem [#allocation5], %s931
          %s933 = smul.u32 4, %s51
          %s935 = ssub.s32 256, 256
          %936 = vsyncadd %s929, %s935
          %s937 = smul.addr %s933, 64
          %s938 = scalar_lea.hbm %s1, %s937
          %s939 = sshll.u32 %s932, 4
          %s940 = int_to_ptr.vmem [resolvable:$true] %s939
          %945 = dma.hbm_to_vmem [thread:$0]  %s938, 256, %s940, %s929, 64, 64, 4
        $region116: #{tpu_custom_call.1} parent=107 // pred_fallthru
          _
      $region108: #{tpu_custom_call.1} parent=5 // pred_fallthru
        _
      %p946 = scmp.le.s32.totalorder 1, %s51
      %p947 = scmp.lt.s32.totalorder %s51, 3
      %p948 = pnand %p946, %p947
      %p949 = pneg %p948
      // Predicated region
      $region117: #{tpu_custom_call.1} parent=5 // pred_check
        _
      $region118: #{tpu_custom_call.1} parent=5 // pred_check_branch
        %951 = sbr.rel (%p948) target = $region120
      $region119: #{tpu_custom_call.1} parent=5 // pred_region
        %s952 = ssub.s32 %s51, 1
        %s953 = sand.u32 %s64, 1
        %s954 = scalar_lea.sflag [#allocation3], %s953
        %s955 = sand.u32 %s64, 1
        %s956 = smul.addr %s955, 16
        %s957 = scalar_lea.vmem [#allocation2], %s956
        // Predicated region
        $region121: #{tpu_custom_call.1} parent=119 // pred_check
          %p958 = pneg %p77
        $region122: #{tpu_custom_call.1} parent=119 // pred_check_branch
          %960 = sbr.rel (%p958) target = $region124
        $region123: #{tpu_custom_call.1} parent=119 // pred_region
          %961 = dma.done %s954, 256
        $region124: #{tpu_custom_call.1} parent=119 // pred_fallthru
          _
        %s962 = sand.u32 %s56, 1
        %s963 = scalar_lea.sflag [#allocation6], %s962
        %s964 = sand.u32 %s90, 1
        %s965 = smul.addr %s964, 16
        %s966 = scalar_lea.vmem [#allocation5], %s965
        // Predicated region
        $region125: #{tpu_custom_call.1} parent=119 // pred_check
          %p967 = pneg %p103
        $region126: #{tpu_custom_call.1} parent=119 // pred_check_branch
          %969 = sbr.rel (%p967) target = $region128
        $region127: #{tpu_custom_call.1} parent=119 // pred_region
          %970 = dma.done %s963, 256
        $region128: #{tpu_custom_call.1} parent=119 // pred_fallthru
          _
        // Predicated region
        $region129: #{tpu_custom_call.1} parent=119 // pred_check
          %p971 = pneg %p124
        $region130: #{tpu_custom_call.1} parent=119 // pred_check_branch
          %973 = sbr.rel (%p971) target = $region132
        $region131: #{tpu_custom_call.1} parent=119 // pred_region
          %974 = dma.done [#allocation6], 960
        $region132: #{tpu_custom_call.1} parent=119 // pred_fallthru
          _
        // Predicated region
        $region133: #{tpu_custom_call.1} parent=119 // pred_check
          %p975 = pneg %p145
        $region134: #{tpu_custom_call.1} parent=119 // pred_check_branch
          %977 = sbr.rel (%p975) target = $region136
        $region135: #{tpu_custom_call.1} parent=119 // pred_region
          %978 = dma.done [#allocation9], 16
        $region136: #{tpu_custom_call.1} parent=119 // pred_fallthru
          _
        // Predicated region
        $region137: #{tpu_custom_call.1} parent=119 // pred_check
          %p979 = pneg %p166
        $region138: #{tpu_custom_call.1} parent=119 // pred_check_branch
          %981 = sbr.rel (%p979) target = $region140
        $region139: #{tpu_custom_call.1} parent=119 // pred_region
          %982 = dma.done [#allocation9], 1024
        $region140: #{tpu_custom_call.1} parent=119 // pred_fallthru
          _
        // Predicated region
        $region141: #{tpu_custom_call.1} parent=119 // pred_check
          %p983 = pneg %p187
        $region142: #{tpu_custom_call.1} parent=119 // pred_check_branch
          %985 = sbr.rel (%p983) target = $region144
        $region143: #{tpu_custom_call.1} parent=119 // pred_region
          %986 = dma.done [#allocation12], 16
        $region144: #{tpu_custom_call.1} parent=119 // pred_fallthru
          _
        // Predicated region
        $region145: #{tpu_custom_call.1} parent=119 // pred_check
          %p987 = pneg %p208
        $region146: #{tpu_custom_call.1} parent=119 // pred_check_branch
          %989 = sbr.rel (%p987) target = $region148
        $region147: #{tpu_custom_call.1} parent=119 // pred_region
          %990 = dma.done [#allocation12], 1024
        $region148: #{tpu_custom_call.1} parent=119 // pred_fallthru
          _
        // Predicated region
        $region149: #{tpu_custom_call.1} parent=119 // pred_check
          %p991 = pneg %p229
        $region150: #{tpu_custom_call.1} parent=119 // pred_check_branch
          %993 = sbr.rel (%p991) target = $region152
        $region151: #{tpu_custom_call.1} parent=119 // pred_region
          %994 = dma.done [#allocation15], 16
        $region152: #{tpu_custom_call.1} parent=119 // pred_fallthru
          _
        // Predicated region
        $region153: #{tpu_custom_call.1} parent=119 // pred_check
          %p995 = pneg %p250
        $region154: #{tpu_custom_call.1} parent=119 // pred_check_branch
          %997 = sbr.rel (%p995) target = $region156
        $region155: #{tpu_custom_call.1} parent=119 // pred_region
          %998 = dma.done [#allocation15], 1024
        $region156: #{tpu_custom_call.1} parent=119 // pred_fallthru
          _
        // Predicated region
        $region157: #{tpu_custom_call.1} parent=119 // pred_check
          %p999 = pneg %p271
        $region158: #{tpu_custom_call.1} parent=119 // pred_check_branch
          %1001 = sbr.rel (%p999) target = $region160
        $region159: #{tpu_custom_call.1} parent=119 // pred_region
          %1002 = dma.done [#allocation18], 16
        $region160: #{tpu_custom_call.1} parent=119 // pred_fallthru
          _
        // Predicated region
        $region161: #{tpu_custom_call.1} parent=119 // pred_check
          %p1003 = pneg %p292
        $region162: #{tpu_custom_call.1} parent=119 // pred_check_branch
          %1005 = sbr.rel (%p1003) target = $region164
        $region163: #{tpu_custom_call.1} parent=119 // pred_region
          %1006 = dma.done [#allocation18], 512
        $region164: #{tpu_custom_call.1} parent=119 // pred_fallthru
          _
        // Predicated region
        $region165: #{tpu_custom_call.1} parent=119 // pred_check
          %p1007 = pneg %p313
        $region166: #{tpu_custom_call.1} parent=119 // pred_check_branch
          %1009 = sbr.rel (%p1007) target = $region168
        $region167: #{tpu_custom_call.1} parent=119 // pred_region
          %1010 = dma.done [#allocation21], 16
        $region168: #{tpu_custom_call.1} parent=119 // pred_fallthru
          _
        // Predicated region
        $region169: #{tpu_custom_call.1} parent=119 // pred_check
          %p1011 = pneg %p334
        $region170: #{tpu_custom_call.1} parent=119 // pred_check_branch
          %1013 = sbr.rel (%p1011) target = $region172
        $region171: #{tpu_custom_call.1} parent=119 // pred_region
          %1014 = dma.done [#allocation21], 512
        $region172: #{tpu_custom_call.1} parent=119 // pred_fallthru
          _
        // Predicated region
        $region173: #{tpu_custom_call.1} parent=119 // pred_check
          %p1015 = pneg %p355
        $region174: #{tpu_custom_call.1} parent=119 // pred_check_branch
          %1017 = sbr.rel (%p1015) target = $region176
        $region175: #{tpu_custom_call.1} parent=119 // pred_region
          %1018 = dma.done [#allocation24], 16
        $region176: #{tpu_custom_call.1} parent=119 // pred_fallthru
          _
        // Predicated region
        $region177: #{tpu_custom_call.1} parent=119 // pred_check
          %p1019 = pneg %p376
        $region178: #{tpu_custom_call.1} parent=119 // pred_check_branch
          %1021 = sbr.rel (%p1019) target = $region180
        $region179: #{tpu_custom_call.1} parent=119 // pred_region
          %1022 = dma.done [#allocation24], 2048
        $region180: #{tpu_custom_call.1} parent=119 // pred_fallthru
          _
        // Predicated region
        $region181: #{tpu_custom_call.1} parent=119 // pred_check
          %p1023 = pneg %p397
        $region182: #{tpu_custom_call.1} parent=119 // pred_check_branch
          %1025 = sbr.rel (%p1023) target = $region184
        $region183: #{tpu_custom_call.1} parent=119 // pred_region
          %1026 = dma.done [#allocation27], 32
        $region184: #{tpu_custom_call.1} parent=119 // pred_fallthru
          _
        // Predicated region
        $region185: #{tpu_custom_call.1} parent=119 // pred_check
          %p1027 = pneg %p418
        $region186: #{tpu_custom_call.1} parent=119 // pred_check_branch
          %1029 = sbr.rel (%p1027) target = $region188
        $region187: #{tpu_custom_call.1} parent=119 // pred_region
          %1030 = dma.done [#allocation27], 4608
        $region188: #{tpu_custom_call.1} parent=119 // pred_fallthru
          _
        // Predicated region
        $region189: #{tpu_custom_call.1} parent=119 // pred_check
          %p1031 = pneg %p439
        $region190: #{tpu_custom_call.1} parent=119 // pred_check_branch
          %1033 = sbr.rel (%p1031) target = $region192
        $region191: #{tpu_custom_call.1} parent=119 // pred_region
          %1034 = dma.done [#allocation30], 48
        $region192: #{tpu_custom_call.1} parent=119 // pred_fallthru
          _
        // Predicated region
        $region193: #{tpu_custom_call.1} parent=119 // pred_check
          %p1035 = pneg %p460
        $region194: #{tpu_custom_call.1} parent=119 // pred_check_branch
          %1037 = sbr.rel (%p1035) target = $region196
        $region195: #{tpu_custom_call.1} parent=119 // pred_region
          %1038 = dma.done [#allocation30], 9216
        $region196: #{tpu_custom_call.1} parent=119 // pred_fallthru
          _
        // Predicated region
        $region197: #{tpu_custom_call.1} parent=119 // pred_check
          %p1039 = pneg %p481
        $region198: #{tpu_custom_call.1} parent=119 // pred_check_branch
          %1041 = sbr.rel (%p1039) target = $region200
        $region199: #{tpu_custom_call.1} parent=119 // pred_region
          %1042 = dma.done [#allocation33], 48
        $region200: #{tpu_custom_call.1} parent=119 // pred_fallthru
          _
        // Predicated region
        $region201: #{tpu_custom_call.1} parent=119 // pred_check
          %p1043 = pneg %p502
        $region202: #{tpu_custom_call.1} parent=119 // pred_check_branch
          %1045 = sbr.rel (%p1043) target = $region204
        $region203: #{tpu_custom_call.1} parent=119 // pred_region
          %1046 = dma.done [#allocation33], 3072
        $region204: #{tpu_custom_call.1} parent=119 // pred_fallthru
          _
        // Predicated region
        $region205: #{tpu_custom_call.1} parent=119 // pred_check
          %p1047 = pneg %p523
        $region206: #{tpu_custom_call.1} parent=119 // pred_check_branch
          %1049 = sbr.rel (%p1047) target = $region208
        $region207: #{tpu_custom_call.1} parent=119 // pred_region
          %1050 = dma.done [#allocation36], 16
        $region208: #{tpu_custom_call.1} parent=119 // pred_fallthru
          _
        // Predicated region
        $region209: #{tpu_custom_call.1} parent=119 // pred_check
          %p1051 = pneg %p544
        $region210: #{tpu_custom_call.1} parent=119 // pred_check_branch
          %1053 = sbr.rel (%p1051) target = $region212
        $region211: #{tpu_custom_call.1} parent=119 // pred_region
          %1054 = dma.done [#allocation36], 16
        $region212: #{tpu_custom_call.1} parent=119 // pred_fallthru
          _
        // Predicated region
        $region213: #{tpu_custom_call.1} parent=119 // pred_check
          %p1055 = pneg %p565
        $region214: #{tpu_custom_call.1} parent=119 // pred_check_branch
          %1057 = sbr.rel (%p1055) target = $region216
        $region215: #{tpu_custom_call.1} parent=119 // pred_region
          %1058 = dma.done [#allocation39], 16
        $region216: #{tpu_custom_call.1} parent=119 // pred_fallthru
          _
        // Predicated region
        $region217: #{tpu_custom_call.1} parent=119 // pred_check
          %p1059 = pneg %p586
        $region218: #{tpu_custom_call.1} parent=119 // pred_check_branch
          %1061 = sbr.rel (%p1059) target = $region220
        $region219: #{tpu_custom_call.1} parent=119 // pred_region
          %1062 = dma.done [#allocation39], 16
        $region220: #{tpu_custom_call.1} parent=119 // pred_fallthru
          _
        %s1063 = sand.u32 %s64, 1
        %s1064 = scalar_lea.sflag [#allocation3], %s1063
        %s1065 = sand.u32 %s64, 1
        %s1066 = smul.addr %s1065, 16
        %s1067 = scalar_lea.vmem [#allocation2], %s1066
        %p1068 = pneg %p77
        %p1069 = pneg %p74
        %s1070 = sand.u32 %s56, 1
        %s1071 = scalar_lea.sflag [#allocation6], %s1070
        %s1072 = sand.u32 %s90, 1
        %s1073 = smul.addr %s1072, 16
        %s1074 = scalar_lea.vmem [#allocation5], %s1073
        %p1075 = pneg %p103
        %p1076 = pneg %p100
        %p1077 = pneg %p124
        %p1078 = pneg %p121
        %p1079 = pneg %p145
        %p1080 = pneg %p142
        %p1081 = pneg %p166
        %p1082 = pneg %p163
        %p1083 = pneg %p187
        %p1084 = pneg %p184
        %p1085 = pneg %p208
        %p1086 = pneg %p205
        %p1087 = pneg %p229
        %p1088 = pneg %p226
        %p1089 = pneg %p250
        %p1090 = pneg %p247
        %p1091 = pneg %p271
        %p1092 = pneg %p268
        %p1093 = pneg %p292
        %p1094 = pneg %p289
        %p1095 = pneg %p313
        %p1096 = pneg %p310
        %p1097 = pneg %p334
        %p1098 = pneg %p331
        %p1099 = pneg %p355
        %p1100 = pneg %p352
        %p1101 = pneg %p376
        %p1102 = pneg %p373
        %p1103 = pneg %p397
        %p1104 = pneg %p394
        %p1105 = pneg %p418
        %p1106 = pneg %p415
        %p1107 = pneg %p439
        %p1108 = pneg %p436
        %p1109 = pneg %p460
        %p1110 = pneg %p457
        %p1111 = pneg %p481
        %p1112 = pneg %p478
        %p1113 = pneg %p502
        %p1114 = pneg %p499
        %p1115 = pneg %p523
        %p1116 = pneg %p520
        %p1117 = pneg %p544
        %p1118 = pneg %p541
        %p1119 = pneg %p565
        %p1120 = pneg %p562
        %p1121 = pneg %p586
        %p1122 = pneg %p583
        %p1123 = pneg %p612
        %p1124 = pneg %p609
        %s1125 = sand.u32 %s599, 1
        %s1126 = scalar_lea.sflag [#allocation4], %s1125
        %s1127 = sand.u32 %s599, 1
        %s1128 = smul.addr %s1127, 32
        %s1129 = scalar_lea.vmem [#allocation41], %s1128
        %s1130 = smul.u32 4, %s56
        %s1131 = smul.u32 4, %s56
        %s1132 = smul.u32 4, %s56
        %v1134 = vld [vmem:[%s957] sm:$0xf]
        %v1135 = vld [vmem:[%s957 + $0x4] sm:$0xf]
        %v1136 = vld [vmem:[%s957 + $0x8] sm:$0xf]
        %v1137 = vld [vmem:[%s957 + $0xc] sm:$0xf]
        %v1138 = vld [vmem:[%s966] sm:$0xf]
        %v1139 = vld [vmem:[%s966 + $0x4] sm:$0xf]
        %v1140 = vld [vmem:[%s966 + $0x8] sm:$0xf]
        %v1141 = vld [vmem:[%s966 + $0xc] sm:$0xf]
        %v1142 = vld [vmem:[#allocation7] sm:$0xf]
        %v1143 = vld [vmem:[#allocation7 + $0x4] sm:$0xf]
        %v1144 = vld [vmem:[#allocation7 + $0x8] sm:$0xf]
        %v1145 = vld [vmem:[#allocation7 + $0xc] sm:$0xf]
        %v1146 = vld [vmem:[#allocation7 + $0x10] sm:$0xf]
        %v1147 = vld [vmem:[#allocation7 + $0x14] sm:$0xf]
        %v1148 = vld [vmem:[#allocation7 + $0x18] sm:$0xf]
        %v1149 = vld [vmem:[#allocation7 + $0x1c] sm:$0xf]
        %v1150 = vld [vmem:[#allocation7 + $0x20] sm:$0xf]
        %v1151 = vld [vmem:[#allocation7 + $0x24] sm:$0xf]
        %v1152 = vld [vmem:[#allocation7 + $0x28] sm:$0xf]
        %v1153 = vld [vmem:[#allocation7 + $0x2c] sm:$0xf]
        %v1154 = vld [vmem:[#allocation7 + $0x30] sm:$0xf]
        %v1155 = vld [vmem:[#allocation7 + $0x34] sm:$0xf]
        %v1156 = vld [vmem:[#allocation7 + $0x38] sm:$0x3]
        %v1161 = vunpack.c.l.b16 %v1134
        %v1162 = vunpack.c.l.b16 %v1135
        %v1163 = vunpack.c.l.b16 %v1136
        %v1164 = vunpack.c.l.b16 %v1137
        %v1165 = vpack.c.b16 %v1162, %v1161
        %v1166 = vpack.c.b16 %v1164, %v1163
        %v1182 = vunpack.c.l.b16 %v1142
        %v1183 = vunpack.c.l.b16 %v1143
        %v1184 = vunpack.c.l.b16 %v1144
        %v1185 = vunpack.c.l.b16 %v1145
        %v1186 = vunpack.c.l.b16 %v1146
        %v1187 = vunpack.c.l.b16 %v1147
        %v1188 = vunpack.c.l.b16 %v1148
        %v1189 = vunpack.c.l.b16 %v1149
        %v1190 = vunpack.c.l.b16 %v1150
        %v1191 = vunpack.c.l.b16 %v1151
        %v1192 = vunpack.c.l.b16 %v1152
        %v1193 = vunpack.c.l.b16 %v1153
        %v1194 = vunpack.c.l.b16 %v1154
        %v1195 = vunpack.c.l.b16 %v1155
        %v1196 = vunpack.c.l.b16 %v1156
        %v1197 = vpack.c.b16 %v1183, %v1182
        %v1198 = vpack.c.b16 %v1185, %v1184
        %v1199 = vpack.c.b16 %v1187, %v1186
        %v1200 = vpack.c.b16 %v1189, %v1188
        %v1201 = vpack.c.b16 %v1191, %v1190
        %v1202 = vpack.c.b16 %v1193, %v1192
        %v1203 = vpack.c.b16 %v1195, %v1194
        %v1204 = vpack.c.b16 %v1196, %v1196
        %vm1212 = vcmask 949248
        %v1214 = vsel %vm1212, %v1165, 0
        %v1217 = vsel %vm1212, %v1166, 0
        %vm1219 = vcmask 1041408
        %v1221 = vsel %vm1219, %v1204, 0
        %1223 = vmatprep.subr.bf16.mxu0 0
        %1224 = vmatpush1.bf16.msra.mxu0 %v1197
        %1225 = vmatprep.subr.bf16.mxu0 0
        %1226 = vmatpush1.bf16.msra.mxu0 %v1198
        %1227 = vmatprep.subr.bf16.mxu0 0
        %1228 = vmatpush1.bf16.msra.mxu0 %v1199
        %1229 = vmatprep.subr.bf16.mxu0 0
        %1230 = vmatpush1.bf16.msra.mxu0 %v1200
        %1231 = vmatprep.subr.bf16.mxu0 0
        %1232 = vmatpush1.bf16.msra.mxu0 %v1201
        %1233 = vmatprep.subr.bf16.mxu0 0
        %1234 = vmatpush1.bf16.msra.mxu0 %v1202
        %1235 = vmatprep.subr.bf16.mxu0 0
        %1236 = vmatpush1.bf16.msra.mxu0 %v1203
        %1237 = vmatprep.subr.bf16.mxu0 0
        %1238 = vmatpush1.bf16.msra.mxu0 %v1221
        %1239 = vmatprep.subr.bf16.mxu0 0
        %1240 = vmatpush1.bf16.msra.mxu0 0
        %1241 = vmatprep.subr.bf16.mxu0 0
        %1242 = vmatpush1.bf16.msra.mxu0 0
        %1243 = vmatprep.subr.bf16.mxu0 0
        %1244 = vmatpush1.bf16.msra.mxu0 0
        %1245 = vmatprep.subr.bf16.mxu0 0
        %1246 = vmatpush1.bf16.msra.mxu0 0
        %1247 = vmatprep.subr.bf16.mxu0 0
        %1248 = vmatpush1.bf16.msra.mxu0 0
        %1249 = vmatprep.subr.bf16.mxu0 0
        %1250 = vmatpush1.bf16.msra.mxu0 0
        %1251 = vmatprep.subr.bf16.mxu0 0
        %1252 = vmatpush1.bf16.msra.mxu0 0
        %1253 = vmatprep.subr.bf16.mxu0 0
        %1254 = vmatpush1.bf16.msra.mxu0 0
        %1255 = vmatprep.mubr.bf16.mxu0 0
        %1256 = vmatmul.mubr.bf16.gmra.mrb[0].mxu0 %v1214
        %v1257 = vpop.f32.mrb[0].mxu0
        %v1258 = vadd.f32 0.0, %v1257
        %v1259 = vpop.f32.mrb[0].mxu0
        %v1260 = vpop.f32.mrb[0].mxu0
        %v1261 = vadd.f32 0.0, %v1260
        %v1262 = vpop.f32.mrb[0].mxu0
        %1263 = vmatprep.mubr.bf16.mxu0 0
        %1264 = vmatmul.mubr.bf16.gmra.mrb[0].mxu0 %v1217
        %v1265 = vpop.f32.mrb[0].mxu0
        %v1266 = vadd.f32 0.0, %v1265
        %v1267 = vpop.f32.mrb[0].mxu0
        %v1268 = vpop.f32.mrb[0].mxu0
        %v1269 = vadd.f32 0.0, %v1268
        %v1270 = vpop.f32.mrb[0].mxu0
        %1271 = vdwg.mxu0
        %v1272 = vpack.c.bf16 %v1261, %v1258
        %v1273 = vpack.c.bf16 %v1269, %v1266
        %v1274 = vld [vmem:[#allocation8] sm:$0x1]
        %v1276 = vpack.i.b16 %v1274, %v1274
        %v1278 = vlaneseq
        %v1279 = vshrl.u32 %v1278, 7
        %v1280 = vsub.s32 0, %v1279
        %v1281 = vrot.slane %v1276, %v1280
        %v1282 = vadd.bf16 %v1272, %v1281
        %v1283 = vadd.bf16 %v1273, %v1281
        %v1284 = vmax.bf16 %v1282, 0
        %v1285 = vmax.bf16 %v1283, 0
        %v1286 = vld [vmem:[#allocation10] sm:$0xf]
        %v1287 = vld [vmem:[#allocation10 + $0x4] sm:$0xf]
        %v1288 = vld [vmem:[#allocation10 + $0x8] sm:$0xf]
        %v1289 = vld [vmem:[#allocation10 + $0xc] sm:$0xf]
        %v1290 = vld [vmem:[#allocation10 + $0x10] sm:$0xf]
        %v1291 = vld [vmem:[#allocation10 + $0x14] sm:$0xf]
        %v1292 = vld [vmem:[#allocation10 + $0x18] sm:$0xf]
        %v1293 = vld [vmem:[#allocation10 + $0x1c] sm:$0xf]
        %v1294 = vld [vmem:[#allocation10 + $0x20] sm:$0xf]
        %v1295 = vld [vmem:[#allocation10 + $0x24] sm:$0xf]
        %v1296 = vld [vmem:[#allocation10 + $0x28] sm:$0xf]
        %v1297 = vld [vmem:[#allocation10 + $0x2c] sm:$0xf]
        %v1298 = vld [vmem:[#allocation10 + $0x30] sm:$0xf]
        %v1299 = vld [vmem:[#allocation10 + $0x34] sm:$0xf]
        %v1300 = vld [vmem:[#allocation10 + $0x38] sm:$0xf]
        %v1301 = vld [vmem:[#allocation10 + $0x3c] sm:$0xf]
        %v1318 = vunpack.c.l.b16 %v1286
        %v1319 = vunpack.c.l.b16 %v1287
        %v1320 = vunpack.c.l.b16 %v1288
        %v1321 = vunpack.c.l.b16 %v1289
        %v1322 = vunpack.c.l.b16 %v1290
        %v1323 = vunpack.c.l.b16 %v1291
        %v1324 = vunpack.c.l.b16 %v1292
        %v1325 = vunpack.c.l.b16 %v1293
        %v1326 = vunpack.c.l.b16 %v1294
        %v1327 = vunpack.c.l.b16 %v1295
        %v1328 = vunpack.c.l.b16 %v1296
        %v1329 = vunpack.c.l.b16 %v1297
        %v1330 = vunpack.c.l.b16 %v1298
        %v1331 = vunpack.c.l.b16 %v1299
        %v1332 = vunpack.c.l.b16 %v1300
        %v1333 = vunpack.c.l.b16 %v1301
        %v1334 = vpack.c.b16 %v1319, %v1318
        %v1335 = vpack.c.b16 %v1321, %v1320
        %v1336 = vpack.c.b16 %v1323, %v1322
        %v1337 = vpack.c.b16 %v1325, %v1324
        %v1338 = vpack.c.b16 %v1327, %v1326
        %v1339 = vpack.c.b16 %v1329, %v1328
        %v1340 = vpack.c.b16 %v1331, %v1330
        %v1341 = vpack.c.b16 %v1333, %v1332
        %1350 = vmatprep.subr.bf16.mxu0 0
        %1351 = vmatpush1.bf16.msra.mxu0 %v1334
        %1352 = vmatprep.subr.bf16.mxu0 0
        %1353 = vmatpush1.bf16.msra.mxu0 %v1335
        %1354 = vmatprep.subr.bf16.mxu0 0
        %1355 = vmatpush1.bf16.msra.mxu0 %v1336
        %1356 = vmatprep.subr.bf16.mxu0 0
        %1357 = vmatpush1.bf16.msra.mxu0 %v1337
        %1358 = vmatprep.subr.bf16.mxu0 0
        %1359 = vmatpush1.bf16.msra.mxu0 %v1338
        %1360 = vmatprep.subr.bf16.mxu0 0
        %1361 = vmatpush1.bf16.msra.mxu0 %v1339
        %1362 = vmatprep.subr.bf16.mxu0 0
        %1363 = vmatpush1.bf16.msra.mxu0 %v1340
        %1364 = vmatprep.subr.bf16.mxu0 0
        %1365 = vmatpush1.bf16.msra.mxu0 %v1341
        %1366 = vmatprep.subr.bf16.mxu0 0
        %1367 = vmatpush1.bf16.msra.mxu0 0
        %1368 = vmatprep.subr.bf16.mxu0 0
        %1369 = vmatpush1.bf16.msra.mxu0 0
        %1370 = vmatprep.subr.bf16.mxu0 0
        %1371 = vmatpush1.bf16.msra.mxu0 0
        %1372 = vmatprep.subr.bf16.mxu0 0
        %1373 = vmatpush1.bf16.msra.mxu0 0
        %1374 = vmatprep.subr.bf16.mxu0 0
        %1375 = vmatpush1.bf16.msra.mxu0 0
        %1376 = vmatprep.subr.bf16.mxu0 0
        %1377 = vmatpush1.bf16.msra.mxu0 0
        %1378 = vmatprep.subr.bf16.mxu0 0
        %1379 = vmatpush1.bf16.msra.mxu0 0
        %1380 = vmatprep.subr.bf16.mxu0 0
        %1381 = vmatpush1.bf16.msra.mxu0 0
        %1382 = vmatprep.mubr.bf16.mxu0 0
        %1383 = vmatmul.mubr.bf16.gmra.mrb[0].mxu0 %v1284
        %v1384 = vpop.f32.mrb[0].mxu0
        %v1385 = vadd.f32 0.0, %v1384
        %v1386 = vpop.f32.mrb[0].mxu0
        %v1387 = vpop.f32.mrb[0].mxu0
        %v1388 = vadd.f32 0.0, %v1387
        %v1389 = vpop.f32.mrb[0].mxu0
        %1390 = vmatprep.mubr.bf16.mxu0 0
        %1391 = vmatmul.mubr.bf16.gmra.mrb[0].mxu0 %v1285
        %v1392 = vpop.f32.mrb[0].mxu0
        %v1393 = vadd.f32 0.0, %v1392
        %v1394 = vpop.f32.mrb[0].mxu0
        %v1395 = vpop.f32.mrb[0].mxu0
        %v1396 = vadd.f32 0.0, %v1395
        %v1397 = vpop.f32.mrb[0].mxu0
        %1398 = vdwg.mxu0
        %v1399 = vpack.c.bf16 %v1388, %v1385
        %v1400 = vpack.c.bf16 %v1396, %v1393
        %v1401 = vld [vmem:[#allocation11] sm:$0x1]
        %v1403 = vpack.i.b16 %v1401, %v1401
        %v1405 = vlaneseq
        %v1406 = vshrl.u32 %v1405, 7
        %v1407 = vsub.s32 0, %v1406
        %v1408 = vrot.slane %v1403, %v1407
        %v1409 = vadd.bf16 %v1399, %v1408
        %v1410 = vadd.bf16 %v1400, %v1408
        %v1411 = vmax.bf16 %v1409, 0
        %v1412 = vmax.bf16 %v1410, 0
        %v1413 = vld [vmem:[#allocation13] sm:$0xf]
        %v1414 = vld [vmem:[#allocation13 + $0x4] sm:$0xf]
        %v1415 = vld [vmem:[#allocation13 + $0x8] sm:$0xf]
        %v1416 = vld [vmem:[#allocation13 + $0xc] sm:$0xf]
        %v1417 = vld [vmem:[#allocation13 + $0x10] sm:$0xf]
        %v1418 = vld [vmem:[#allocation13 + $0x14] sm:$0xf]
        %v1419 = vld [vmem:[#allocation13 + $0x18] sm:$0xf]
        %v1420 = vld [vmem:[#allocation13 + $0x1c] sm:$0xf]
        %v1421 = vld [vmem:[#allocation13 + $0x20] sm:$0xf]
        %v1422 = vld [vmem:[#allocation13 + $0x24] sm:$0xf]
        %v1423 = vld [vmem:[#allocation13 + $0x28] sm:$0xf]
        %v1424 = vld [vmem:[#allocation13 + $0x2c] sm:$0xf]
        %v1425 = vld [vmem:[#allocation13 + $0x30] sm:$0xf]
        %v1426 = vld [vmem:[#allocation13 + $0x34] sm:$0xf]
        %v1427 = vld [vmem:[#allocation13 + $0x38] sm:$0xf]
        %v1428 = vld [vmem:[#allocation13 + $0x3c] sm:$0xf]
        %v1429 = vld [vmem:[#allocation14] sm:$0x1]
        %v1431 = vlaneseq
        %v1432 = vshrl.u32 %v1431, 7
        %v1433 = vsub.s32 0, %v1432
        %v1434 = vrot.slane %v1429, %v1433
        %v1452 = vunpack.c.l.b16 %v1413
        %v1453 = vunpack.c.l.b16 %v1414
        %v1454 = vunpack.c.l.b16 %v1415
        %v1455 = vunpack.c.l.b16 %v1416
        %v1456 = vunpack.c.l.b16 %v1417
        %v1457 = vunpack.c.l.b16 %v1418
        %v1458 = vunpack.c.l.b16 %v1419
        %v1459 = vunpack.c.l.b16 %v1420
        %v1460 = vunpack.c.l.b16 %v1421
        %v1461 = vunpack.c.l.b16 %v1422
        %v1462 = vunpack.c.l.b16 %v1423
        %v1463 = vunpack.c.l.b16 %v1424
        %v1464 = vunpack.c.l.b16 %v1425
        %v1465 = vunpack.c.l.b16 %v1426
        %v1466 = vunpack.c.l.b16 %v1427
        %v1467 = vunpack.c.l.b16 %v1428
        %v1468 = vpack.c.b16 %v1453, %v1452
        %v1469 = vpack.c.b16 %v1455, %v1454
        %v1470 = vpack.c.b16 %v1457, %v1456
        %v1471 = vpack.c.b16 %v1459, %v1458
        %v1472 = vpack.c.b16 %v1461, %v1460
        %v1473 = vpack.c.b16 %v1463, %v1462
        %v1474 = vpack.c.b16 %v1465, %v1464
        %v1475 = vpack.c.b16 %v1467, %v1466
        %1484 = vmatprep.subr.bf16.mxu0 0
        %1485 = vmatpush1.bf16.msra.mxu0 %v1468
        %1486 = vmatprep.subr.bf16.mxu0 0
        %1487 = vmatpush1.bf16.msra.mxu0 %v1469
        %1488 = vmatprep.subr.bf16.mxu0 0
        %1489 = vmatpush1.bf16.msra.mxu0 %v1470
        %1490 = vmatprep.subr.bf16.mxu0 0
        %1491 = vmatpush1.bf16.msra.mxu0 %v1471
        %1492 = vmatprep.subr.bf16.mxu0 0
        %1493 = vmatpush1.bf16.msra.mxu0 %v1472
        %1494 = vmatprep.subr.bf16.mxu0 0
        %1495 = vmatpush1.bf16.msra.mxu0 %v1473
        %1496 = vmatprep.subr.bf16.mxu0 0
        %1497 = vmatpush1.bf16.msra.mxu0 %v1474
        %1498 = vmatprep.subr.bf16.mxu0 0
        %1499 = vmatpush1.bf16.msra.mxu0 %v1475
        %1500 = vmatprep.subr.bf16.mxu0 0
        %1501 = vmatpush1.bf16.msra.mxu0 0
        %1502 = vmatprep.subr.bf16.mxu0 0
        %1503 = vmatpush1.bf16.msra.mxu0 0
        %1504 = vmatprep.subr.bf16.mxu0 0
        %1505 = vmatpush1.bf16.msra.mxu0 0
        %1506 = vmatprep.subr.bf16.mxu0 0
        %1507 = vmatpush1.bf16.msra.mxu0 0
        %1508 = vmatprep.subr.bf16.mxu0 0
        %1509 = vmatpush1.bf16.msra.mxu0 0
        %1510 = vmatprep.subr.bf16.mxu0 0
        %1511 = vmatpush1.bf16.msra.mxu0 0
        %1512 = vmatprep.subr.bf16.mxu0 0
        %1513 = vmatpush1.bf16.msra.mxu0 0
        %1514 = vmatprep.subr.bf16.mxu0 0
        %1515 = vmatpush1.bf16.msra.mxu0 0
        %1516 = vmatprep.mubr.bf16.mxu0 0
        %1517 = vmatmul.mubr.bf16.gmra.mrb[0].mxu0 %v1411
        %v1518 = vpop.f32.mrb[0].mxu0
        %v1519 = vadd.f32 %v1434, %v1518
        %v1520 = vpop.f32.mrb[0].mxu0
        %v1521 = vpop.f32.mrb[0].mxu0
        %v1522 = vadd.f32 %v1434, %v1521
        %v1523 = vpop.f32.mrb[0].mxu0
        %1524 = vmatprep.mubr.bf16.mxu0 0
        %1525 = vmatmul.mubr.bf16.gmra.mrb[0].mxu0 %v1412
        %v1526 = vpop.f32.mrb[0].mxu0
        %v1527 = vadd.f32 %v1434, %v1526
        %v1528 = vpop.f32.mrb[0].mxu0
        %v1529 = vpop.f32.mrb[0].mxu0
        %v1530 = vadd.f32 %v1434, %v1529
        %v1531 = vpop.f32.mrb[0].mxu0
        %1532 = vdwg.mxu0
        %v1533 = vunpack.c.l.bf16 %v1138
        %v1534 = vunpack.c.l.bf16 %v1139
        %v1535 = vunpack.c.l.bf16 %v1140
        %v1536 = vunpack.c.l.bf16 %v1141
        %v1537 = vmul.f32 %v1533, %v1519
        %v1538 = vmul.f32 %v1534, %v1522
        %v1539 = vmul.f32 %v1535, %v1527
        %v1540 = vmul.f32 %v1536, %v1530
        %v1541 = vpack.c.bf16 %v1538, %v1537
        %v1542 = vpack.c.bf16 %v1540, %v1539
        %v1543 = vld [vmem:[#allocation16] sm:$0xf]
        %v1544 = vld [vmem:[#allocation16 + $0x4] sm:$0xf]
        %v1545 = vld [vmem:[#allocation16 + $0x8] sm:$0xf]
        %v1546 = vld [vmem:[#allocation16 + $0xc] sm:$0xf]
        %v1547 = vld [vmem:[#allocation16 + $0x10] sm:$0xf]
        %v1548 = vld [vmem:[#allocation16 + $0x14] sm:$0xf]
        %v1549 = vld [vmem:[#allocation16 + $0x18] sm:$0xf]
        %v1550 = vld [vmem:[#allocation16 + $0x1c] sm:$0xf]
        %v1551 = vld [vmem:[#allocation16 + $0x20] sm:$0xf]
        %v1552 = vld [vmem:[#allocation16 + $0x24] sm:$0xf]
        %v1553 = vld [vmem:[#allocation16 + $0x28] sm:$0xf]
        %v1554 = vld [vmem:[#allocation16 + $0x2c] sm:$0xf]
        %v1555 = vld [vmem:[#allocation16 + $0x30] sm:$0xf]
        %v1556 = vld [vmem:[#allocation16 + $0x34] sm:$0xf]
        %v1557 = vld [vmem:[#allocation16 + $0x38] sm:$0xf]
        %v1558 = vld [vmem:[#allocation16 + $0x3c] sm:$0xf]
        %v1575 = vunpack.c.l.b16 %v1543
        %v1576 = vunpack.c.l.b16 %v1544
        %v1577 = vunpack.c.l.b16 %v1545
        %v1578 = vunpack.c.l.b16 %v1546
        %v1579 = vunpack.c.l.b16 %v1547
        %v1580 = vunpack.c.l.b16 %v1548
        %v1581 = vunpack.c.l.b16 %v1549
        %v1582 = vunpack.c.l.b16 %v1550
        %v1583 = vunpack.c.l.b16 %v1551
        %v1584 = vunpack.c.l.b16 %v1552
        %v1585 = vunpack.c.l.b16 %v1553
        %v1586 = vunpack.c.l.b16 %v1554
        %v1587 = vunpack.c.l.b16 %v1555
        %v1588 = vunpack.c.l.b16 %v1556
        %v1589 = vunpack.c.l.b16 %v1557
        %v1590 = vunpack.c.l.b16 %v1558
        %v1591 = vpack.c.b16 %v1576, %v1575
        %v1592 = vpack.c.b16 %v1578, %v1577
        %v1593 = vpack.c.b16 %v1580, %v1579
        %v1594 = vpack.c.b16 %v1582, %v1581
        %v1595 = vpack.c.b16 %v1584, %v1583
        %v1596 = vpack.c.b16 %v1586, %v1585
        %v1597 = vpack.c.b16 %v1588, %v1587
        %v1598 = vpack.c.b16 %v1590, %v1589
        %1607 = vmatprep.subr.bf16.mxu0 0
        %1608 = vmatpush1.bf16.msra.mxu0 %v1591
        %1609 = vmatprep.subr.bf16.mxu0 0
        %1610 = vmatpush1.bf16.msra.mxu0 %v1592
        %1611 = vmatprep.subr.bf16.mxu0 0
        %1612 = vmatpush1.bf16.msra.mxu0 %v1593
        %1613 = vmatprep.subr.bf16.mxu0 0
        %1614 = vmatpush1.bf16.msra.mxu0 %v1594
        %1615 = vmatprep.subr.bf16.mxu0 0
        %1616 = vmatpush1.bf16.msra.mxu0 %v1595
        %1617 = vmatprep.subr.bf16.mxu0 0
        %1618 = vmatpush1.bf16.msra.mxu0 %v1596
        %1619 = vmatprep.subr.bf16.mxu0 0
        %1620 = vmatpush1.bf16.msra.mxu0 %v1597
        %1621 = vmatprep.subr.bf16.mxu0 0
        %1622 = vmatpush1.bf16.msra.mxu0 %v1598
        %1623 = vmatprep.subr.bf16.mxu0 0
        %1624 = vmatpush1.bf16.msra.mxu0 0
        %1625 = vmatprep.subr.bf16.mxu0 0
        %1626 = vmatpush1.bf16.msra.mxu0 0
        %1627 = vmatprep.subr.bf16.mxu0 0
        %1628 = vmatpush1.bf16.msra.mxu0 0
        %1629 = vmatprep.subr.bf16.mxu0 0
        %1630 = vmatpush1.bf16.msra.mxu0 0
        %1631 = vmatprep.subr.bf16.mxu0 0
        %1632 = vmatpush1.bf16.msra.mxu0 0
        %1633 = vmatprep.subr.bf16.mxu0 0
        %1634 = vmatpush1.bf16.msra.mxu0 0
        %1635 = vmatprep.subr.bf16.mxu0 0
        %1636 = vmatpush1.bf16.msra.mxu0 0
        %1637 = vmatprep.subr.bf16.mxu0 0
        %1638 = vmatpush1.bf16.msra.mxu0 0
        %1639 = vmatprep.mubr.bf16.mxu0 0
        %1640 = vmatmul.mubr.bf16.gmra.mrb[0].mxu0 %v1541
        %v1641 = vpop.f32.mrb[0].mxu0
        %v1642 = vadd.f32 0.0, %v1641
        %v1643 = vpop.f32.mrb[0].mxu0
        %v1644 = vpop.f32.mrb[0].mxu0
        %v1645 = vadd.f32 0.0, %v1644
        %v1646 = vpop.f32.mrb[0].mxu0
        %1647 = vmatprep.mubr.bf16.mxu0 0
        %1648 = vmatmul.mubr.bf16.gmra.mrb[0].mxu0 %v1542
        %v1649 = vpop.f32.mrb[0].mxu0
        %v1650 = vadd.f32 0.0, %v1649
        %v1651 = vpop.f32.mrb[0].mxu0
        %v1652 = vpop.f32.mrb[0].mxu0
        %v1653 = vadd.f32 0.0, %v1652
        %v1654 = vpop.f32.mrb[0].mxu0
        %1655 = vdwg.mxu0
        %v1656 = vpack.c.bf16 %v1645, %v1642
        %v1657 = vpack.c.bf16 %v1653, %v1650
        %v1658 = vld [vmem:[#allocation17] sm:$0x1]
        %v1660 = vpack.i.b16 %v1658, %v1658
        %v1662 = vlaneseq
        %v1663 = vshrl.u32 %v1662, 7
        %v1664 = vsub.s32 0, %v1663
        %v1665 = vrot.slane %v1660, %v1664
        %v1666 = vadd.bf16 %v1656, %v1665
        %v1667 = vadd.bf16 %v1657, %v1665
        %v1668 = vmax.bf16 %v1666, 0
        %v1669 = vmax.bf16 %v1667, 0
        %v1670 = vld [vmem:[#allocation19] sm:$0xf]
        %v1671 = vld [vmem:[#allocation19 + $0x4] sm:$0xf]
        %v1672 = vld [vmem:[#allocation19 + $0x8] sm:$0xf]
        %v1673 = vld [vmem:[#allocation19 + $0xc] sm:$0xf]
        %v1674 = vld [vmem:[#allocation19 + $0x10] sm:$0xf]
        %v1675 = vld [vmem:[#allocation19 + $0x14] sm:$0xf]
        %v1676 = vld [vmem:[#allocation19 + $0x18] sm:$0xf]
        %v1677 = vld [vmem:[#allocation19 + $0x1c] sm:$0xf]
        %v1686 = vunpack.c.l.b16 %v1670
        %v1687 = vunpack.c.l.b16 %v1671
        %v1688 = vunpack.c.l.b16 %v1672
        %v1689 = vunpack.c.l.b16 %v1673
        %v1690 = vunpack.c.l.b16 %v1674
        %v1691 = vunpack.c.l.b16 %v1675
        %v1692 = vunpack.c.l.b16 %v1676
        %v1693 = vunpack.c.l.b16 %v1677
        %v1694 = vpack.c.b16 %v1687, %v1686
        %v1695 = vpack.c.b16 %v1689, %v1688
        %v1696 = vpack.c.b16 %v1691, %v1690
        %v1697 = vpack.c.b16 %v1693, %v1692
        %vm1702 = vcmask 523264
        %v1704 = vsel %vm1702, %v1668, 0
        %v1707 = vsel %vm1702, %v1669, 0
        %1709 = vmatprep.subr.bf16.mxu0 0
        %1710 = vmatpush1.bf16.msra.mxu0 %v1694
        %1711 = vmatprep.subr.bf16.mxu0 0
        %1712 = vmatpush1.bf16.msra.mxu0 %v1695
        %1713 = vmatprep.subr.bf16.mxu0 0
        %1714 = vmatpush1.bf16.msra.mxu0 %v1696
        %1715 = vmatprep.subr.bf16.mxu0 0
        %1716 = vmatpush1.bf16.msra.mxu0 %v1697
        %1717 = vmatprep.subr.bf16.mxu0 0
        %1718 = vmatpush1.bf16.msra.mxu0 0
        %1719 = vmatprep.subr.bf16.mxu0 0
        %1720 = vmatpush1.bf16.msra.mxu0 0
        %1721 = vmatprep.subr.bf16.mxu0 0
        %1722 = vmatpush1.bf16.msra.mxu0 0
        %1723 = vmatprep.subr.bf16.mxu0 0
        %1724 = vmatpush1.bf16.msra.mxu0 0
        %1725 = vmatprep.subr.bf16.mxu0 0
        %1726 = vmatpush1.bf16.msra.mxu0 0
        %1727 = vmatprep.subr.bf16.mxu0 0
        %1728 = vmatpush1.bf16.msra.mxu0 0
        %1729 = vmatprep.subr.bf16.mxu0 0
        %1730 = vmatpush1.bf16.msra.mxu0 0
        %1731 = vmatprep.subr.bf16.mxu0 0
        %1732 = vmatpush1.bf16.msra.mxu0 0
        %1733 = vmatprep.subr.bf16.mxu0 0
        %1734 = vmatpush1.bf16.msra.mxu0 0
        %1735 = vmatprep.subr.bf16.mxu0 0
        %1736 = vmatpush1.bf16.msra.mxu0 0
        %1737 = vmatprep.subr.bf16.mxu0 0
        %1738 = vmatpush1.bf16.msra.mxu0 0
        %1739 = vmatprep.subr.bf16.mxu0 0
        %1740 = vmatpush1.bf16.msra.mxu0 0
        %1741 = vmatprep.mubr.bf16.mxu0 0
        %1742 = vmatmul.mubr.bf16.gmra.mrb[0].mxu0 %v1704
        %v1743 = vpop.f32.mrb[0].mxu0
        %v1744 = vadd.f32 0.0, %v1743
        %v1745 = vpop.f32.mrb[0].mxu0
        %v1746 = vpop.f32.mrb[0].mxu0
        %v1747 = vadd.f32 0.0, %v1746
        %v1748 = vpop.f32.mrb[0].mxu0
        %1749 = vmatprep.mubr.bf16.mxu0 0
        %1750 = vmatmul.mubr.bf16.gmra.mrb[0].mxu0 %v1707
        %v1751 = vpop.f32.mrb[0].mxu0
        %v1752 = vadd.f32 0.0, %v1751
        %v1753 = vpop.f32.mrb[0].mxu0
        %v1754 = vpop.f32.mrb[0].mxu0
        %v1755 = vadd.f32 0.0, %v1754
        %v1756 = vpop.f32.mrb[0].mxu0
        %1757 = vdwg.mxu0
        %v1758 = vpack.c.bf16 %v1747, %v1744
        %v1759 = vpack.c.bf16 %v1755, %v1752
        %v1760 = vld [vmem:[#allocation20] sm:$0x1]
        %v1762 = vpack.i.b16 %v1760, %v1760
        %v1764 = vlaneseq
        %v1765 = vshrl.u32 %v1764, 7
        %v1766 = vsub.s32 0, %v1765
        %v1767 = vrot.slane %v1762, %v1766
        %v1768 = vadd.bf16 %v1758, %v1767
        %v1769 = vadd.bf16 %v1759, %v1767
        %v1770 = vmax.bf16 %v1768, 0
        %v1771 = vmax.bf16 %v1769, 0
        %v1772 = vld [vmem:[#allocation22] sm:$0xf]
        %v1773 = vld [vmem:[#allocation22 + $0x4] sm:$0xf]
        %v1774 = vld [vmem:[#allocation22 + $0x8] sm:$0xf]
        %v1775 = vld [vmem:[#allocation22 + $0xc] sm:$0xf]
        %v1776 = vld [vmem:[#allocation22 + $0x10] sm:$0xf]
        %v1777 = vld [vmem:[#allocation22 + $0x14] sm:$0xf]
        %v1778 = vld [vmem:[#allocation22 + $0x18] sm:$0xf]
        %v1779 = vld [vmem:[#allocation22 + $0x1c] sm:$0xf]
        %v1780 = vld [vmem:[#allocation23] sm:$0x1]
        %v1782 = vlaneseq
        %v1783 = vshrl.u32 %v1782, 7
        %v1784 = vsub.s32 0, %v1783
        %v1785 = vrot.slane %v1780, %v1784
        %v1795 = vunpack.c.l.b16 %v1772
        %v1796 = vunpack.c.l.b16 %v1773
        %v1797 = vunpack.c.l.b16 %v1774
        %v1798 = vunpack.c.l.b16 %v1775
        %v1799 = vunpack.c.l.b16 %v1776
        %v1800 = vunpack.c.l.b16 %v1777
        %v1801 = vunpack.c.l.b16 %v1778
        %v1802 = vunpack.c.l.b16 %v1779
        %v1803 = vpack.c.b16 %v1796, %v1795
        %v1804 = vpack.c.b16 %v1798, %v1797
        %v1805 = vpack.c.b16 %v1800, %v1799
        %v1806 = vpack.c.b16 %v1802, %v1801
        %v1812 = vsel %vm1702, %v1770, 0
        %v1815 = vsel %vm1702, %v1771, 0
        %1817 = vmatprep.subr.bf16.mxu0 0
        %1818 = vmatpush1.bf16.msra.mxu0 %v1803
        %1819 = vmatprep.subr.bf16.mxu0 0
        %1820 = vmatpush1.bf16.msra.mxu0 %v1804
        %1821 = vmatprep.subr.bf16.mxu0 0
        %1822 = vmatpush1.bf16.msra.mxu0 %v1805
        %1823 = vmatprep.subr.bf16.mxu0 0
        %1824 = vmatpush1.bf16.msra.mxu0 %v1806
        %1825 = vmatprep.subr.bf16.mxu0 0
        %1826 = vmatpush1.bf16.msra.mxu0 0
        %1827 = vmatprep.subr.bf16.mxu0 0
        %1828 = vmatpush1.bf16.msra.mxu0 0
        %1829 = vmatprep.subr.bf16.mxu0 0
        %1830 = vmatpush1.bf16.msra.mxu0 0
        %1831 = vmatprep.subr.bf16.mxu0 0
        %1832 = vmatpush1.bf16.msra.mxu0 0
        %1833 = vmatprep.subr.bf16.mxu0 0
        %1834 = vmatpush1.bf16.msra.mxu0 0
        %1835 = vmatprep.subr.bf16.mxu0 0
        %1836 = vmatpush1.bf16.msra.mxu0 0
        %1837 = vmatprep.subr.bf16.mxu0 0
        %1838 = vmatpush1.bf16.msra.mxu0 0
        %1839 = vmatprep.subr.bf16.mxu0 0
        %1840 = vmatpush1.bf16.msra.mxu0 0
        %1841 = vmatprep.subr.bf16.mxu0 0
        %1842 = vmatpush1.bf16.msra.mxu0 0
        %1843 = vmatprep.subr.bf16.mxu0 0
        %1844 = vmatpush1.bf16.msra.mxu0 0
        %1845 = vmatprep.subr.bf16.mxu0 0
        %1846 = vmatpush1.bf16.msra.mxu0 0
        %1847 = vmatprep.subr.bf16.mxu0 0
        %1848 = vmatpush1.bf16.msra.mxu0 0
        %1849 = vmatprep.mubr.bf16.mxu0 0
        %1850 = vmatmul.mubr.bf16.gmra.mrb[0].mxu0 %v1812
        %v1851 = vpop.f32.mrb[0].mxu0
        %v1852 = vadd.f32 %v1785, %v1851
        %v1853 = vpop.f32.mrb[0].mxu0
        %v1854 = vpop.f32.mrb[0].mxu0
        %v1855 = vadd.f32 %v1785, %v1854
        %v1856 = vpop.f32.mrb[0].mxu0
        %1857 = vmatprep.mubr.bf16.mxu0 0
        %1858 = vmatmul.mubr.bf16.gmra.mrb[0].mxu0 %v1815
        %v1859 = vpop.f32.mrb[0].mxu0
        %v1860 = vadd.f32 %v1785, %v1859
        %v1861 = vpop.f32.mrb[0].mxu0
        %v1862 = vpop.f32.mrb[0].mxu0
        %v1863 = vadd.f32 %v1785, %v1862
        %v1864 = vpop.f32.mrb[0].mxu0
        %1865 = vdwg.mxu0
        %v1866 = vmul.f32 %v1852, %v1537
        %v1867 = vmul.f32 %v1855, %v1538
        %v1868 = vmul.f32 %v1860, %v1539
        %v1869 = vmul.f32 %v1863, %v1540
        %v1870 = vld [vmem:[#allocation37] sm:$0x1]
        %v1872 = vlaneseq
        %v1873 = vshrl.u32 %v1872, 7
        %v1874 = vsub.s32 0, %v1873
        %v1875 = vrot.slane %v1870, %v1874
        %v1877 = vmul.f32 %v1519, %v1875
        %v1878 = vmul.f32 %v1522, %v1875
        %v1879 = vmul.f32 %v1527, %v1875
        %v1880 = vmul.f32 %v1530, %v1875
        %v1881 = vadd.f32 %v1866, %v1877
        %v1882 = vadd.f32 %v1867, %v1878
        %v1883 = vadd.f32 %v1868, %v1879
        %v1884 = vadd.f32 %v1869, %v1880
        %v1885 = vpack.c.bf16 %v1882, %v1881
        %v1886 = vpack.c.bf16 %v1884, %v1883
        %v1887 = vld [vmem:[#allocation25] sm:$0xff]
        %v1888 = vld [vmem:[#allocation25 + $0x8] sm:$0xff]
        %v1889 = vld [vmem:[#allocation25 + $0x10] sm:$0xff]
        %v1890 = vld [vmem:[#allocation25 + $0x18] sm:$0xff]
        %v1891 = vld [vmem:[#allocation25 + $0x20] sm:$0xff]
        %v1892 = vld [vmem:[#allocation25 + $0x28] sm:$0xff]
        %v1893 = vld [vmem:[#allocation25 + $0x30] sm:$0xff]
        %v1894 = vld [vmem:[#allocation25 + $0x38] sm:$0xff]
        %v1895 = vld [vmem:[#allocation25 + $0x40] sm:$0xff]
        %v1896 = vld [vmem:[#allocation25 + $0x48] sm:$0xff]
        %v1897 = vld [vmem:[#allocation25 + $0x50] sm:$0xff]
        %v1898 = vld [vmem:[#allocation25 + $0x58] sm:$0xff]
        %v1899 = vld [vmem:[#allocation25 + $0x60] sm:$0xff]
        %v1900 = vld [vmem:[#allocation25 + $0x68] sm:$0xff]
        %v1901 = vld [vmem:[#allocation25 + $0x70] sm:$0xff]
        %v1902 = vld [vmem:[#allocation25 + $0x78] sm:$0xff]
        %v1919 = vunpack.c.l.b16 %v1887
        %v1920 = vunpack.c.h.b16 %v1887
        %v1921 = vunpack.c.l.b16 %v1888
        %v1922 = vunpack.c.h.b16 %v1888
        %v1923 = vunpack.c.l.b16 %v1889
        %v1924 = vunpack.c.h.b16 %v1889
        %v1925 = vunpack.c.l.b16 %v1890
        %v1926 = vunpack.c.h.b16 %v1890
        %v1927 = vunpack.c.l.b16 %v1891
        %v1928 = vunpack.c.h.b16 %v1891
        %v1929 = vunpack.c.l.b16 %v1892
        %v1930 = vunpack.c.h.b16 %v1892
        %v1931 = vunpack.c.l.b16 %v1893
        %v1932 = vunpack.c.h.b16 %v1893
        %v1933 = vunpack.c.l.b16 %v1894
        %v1934 = vunpack.c.h.b16 %v1894
        %v1935 = vunpack.c.l.b16 %v1895
        %v1936 = vunpack.c.h.b16 %v1895
        %v1937 = vunpack.c.l.b16 %v1896
        %v1938 = vunpack.c.h.b16 %v1896
        %v1939 = vunpack.c.l.b16 %v1897
        %v1940 = vunpack.c.h.b16 %v1897
        %v1941 = vunpack.c.l.b16 %v1898
        %v1942 = vunpack.c.h.b16 %v1898
        %v1943 = vunpack.c.l.b16 %v1899
        %v1944 = vunpack.c.h.b16 %v1899
        %v1945 = vunpack.c.l.b16 %v1900
        %v1946 = vunpack.c.h.b16 %v1900
        %v1947 = vunpack.c.l.b16 %v1901
        %v1948 = vunpack.c.h.b16 %v1901
        %v1949 = vunpack.c.l.b16 %v1902
        %v1950 = vunpack.c.h.b16 %v1902
        %v1951 = vpack.c.b16 %v1921, %v1919
        %v1952 = vpack.c.b16 %v1922, %v1920
        %v1953 = vpack.c.b16 %v1925, %v1923
        %v1954 = vpack.c.b16 %v1926, %v1924
        %v1955 = vpack.c.b16 %v1929, %v1927
        %v1956 = vpack.c.b16 %v1930, %v1928
        %v1957 = vpack.c.b16 %v1933, %v1931
        %v1958 = vpack.c.b16 %v1934, %v1932
        %v1959 = vpack.c.b16 %v1937, %v1935
        %v1960 = vpack.c.b16 %v1938, %v1936
        %v1961 = vpack.c.b16 %v1941, %v1939
        %v1962 = vpack.c.b16 %v1942, %v1940
        %v1963 = vpack.c.b16 %v1945, %v1943
        %v1964 = vpack.c.b16 %v1946, %v1944
        %v1965 = vpack.c.b16 %v1949, %v1947
        %v1966 = vpack.c.b16 %v1950, %v1948
        %1983 = vmatprep.subr.bf16.mxu0 %v1952
        %1984 = vmatpush1.bf16.msra.mxu0 %v1951
        %1985 = vmatprep.subr.bf16.mxu0 %v1954
        %1986 = vmatpush1.bf16.msra.mxu0 %v1953
        %1987 = vmatprep.subr.bf16.mxu0 %v1956
        %1988 = vmatpush1.bf16.msra.mxu0 %v1955
        %1989 = vmatprep.subr.bf16.mxu0 %v1958
        %1990 = vmatpush1.bf16.msra.mxu0 %v1957
        %1991 = vmatprep.subr.bf16.mxu0 %v1960
        %1992 = vmatpush1.bf16.msra.mxu0 %v1959
        %1993 = vmatprep.subr.bf16.mxu0 %v1962
        %1994 = vmatpush1.bf16.msra.mxu0 %v1961
        %1995 = vmatprep.subr.bf16.mxu0 %v1964
        %1996 = vmatpush1.bf16.msra.mxu0 %v1963
        %1997 = vmatprep.subr.bf16.mxu0 %v1966
        %1998 = vmatpush1.bf16.msra.mxu0 %v1965
        %1999 = vmatprep.subr.bf16.mxu0 0
        %2000 = vmatpush1.bf16.msra.mxu0 0
        %2001 = vmatprep.subr.bf16.mxu0 0
        %2002 = vmatpush1.bf16.msra.mxu0 0
        %2003 = vmatprep.subr.bf16.mxu0 0
        %2004 = vmatpush1.bf16.msra.mxu0 0
        %2005 = vmatprep.subr.bf16.mxu0 0
        %2006 = vmatpush1.bf16.msra.mxu0 0
        %2007 = vmatprep.subr.bf16.mxu0 0
        %2008 = vmatpush1.bf16.msra.mxu0 0
        %2009 = vmatprep.subr.bf16.mxu0 0
        %2010 = vmatpush1.bf16.msra.mxu0 0
        %2011 = vmatprep.subr.bf16.mxu0 0
        %2012 = vmatpush1.bf16.msra.mxu0 0
        %2013 = vmatprep.subr.bf16.mxu0 0
        %2014 = vmatpush1.bf16.msra.mxu0 0
        %2015 = vmatprep.mubr.bf16.mxu0 0
        %2016 = vmatmul.mubr.bf16.gmra.mrb[0].mxu0 %v1885
        %v2017 = vpop.f32.mrb[0].mxu0
        %v2018 = vadd.f32 0.0, %v2017
        %v2019 = vpop.f32.mrb[0].mxu0
        %v2020 = vadd.f32 0.0, %v2019
        %v2021 = vpop.f32.mrb[0].mxu0
        %v2022 = vadd.f32 0.0, %v2021
        %v2023 = vpop.f32.mrb[0].mxu0
        %v2024 = vadd.f32 0.0, %v2023
        %2025 = vmatprep.mubr.bf16.mxu0 0
        %2026 = vmatmul.mubr.bf16.gmra.mrb[0].mxu0 %v1886
        %v2027 = vpop.f32.mrb[0].mxu0
        %v2028 = vadd.f32 0.0, %v2027
        %v2029 = vpop.f32.mrb[0].mxu0
        %v2030 = vadd.f32 0.0, %v2029
        %v2031 = vpop.f32.mrb[0].mxu0
        %v2032 = vadd.f32 0.0, %v2031
        %v2033 = vpop.f32.mrb[0].mxu0
        %v2034 = vadd.f32 0.0, %v2033
        %2035 = vdwg.mxu0
        %v2036 = vpack.c.bf16 %v2022, %v2018
        %v2037 = vpack.c.bf16 %v2024, %v2020
        %v2038 = vpack.c.bf16 %v2032, %v2028
        %v2039 = vpack.c.bf16 %v2034, %v2030
        %v2040 = vld [vmem:[#allocation26] sm:$0x3]
        %v2043 = vunpack.c.l.s4 1966171168
        %v2044 = vunpack.c.0.s8 %v2043
        %v2045 = vlaneseq
        %v2046 = vshrl.u32 %v2045, 7
        %v2047 = vsub.s32 %v2044, %v2046
        %v2048 = vrot.slane %v2040, %v2047
        %v2049 = vcombine.high %v2048, %v2048
        %v2051 = vunpack.c.l.s4 1966171168
        %v2052 = vunpack.c.0.s8 %v2051
        %v2053 = vlaneseq
        %v2054 = vshrl.u32 %v2053, 7
        %v2055 = vsub.s32 %v2052, %v2054
        %v2056 = vrot.slane %v2048, %v2055
        %v2058 = vunpack.c.l.s4 1966171168
        %v2059 = vunpack.c.0.s8 %v2058
        %v2060 = vlaneseq
        %v2061 = vshrl.u32 %v2060, 7
        %v2062 = vsub.s32 %v2059, %v2061
        %v2063 = vrot.slane %v2049, %v2062
        %v2065 = vpack.i.b16 %v2056, %v2056
        %v2067 = vlaneseq
        %v2068 = vshrl.u32 %v2067, 7
        %v2069 = vsub.s32 0, %v2068
        %v2070 = vrot.slane %v2065, %v2069
        %v2072 = vpack.i.b16 %v2063, %v2063
        %v2074 = vlaneseq
        %v2075 = vshrl.u32 %v2074, 7
        %v2076 = vsub.s32 0, %v2075
        %v2077 = vrot.slane %v2072, %v2076
        %v2078 = vadd.bf16 %v2036, %v2070
        %v2079 = vadd.bf16 %v2037, %v2077
        %v2080 = vadd.bf16 %v2038, %v2070
        %v2081 = vadd.bf16 %v2039, %v2077
        %v2082 = vmax.bf16 %v2078, 0
        %v2083 = vmax.bf16 %v2079, 0
        %v2084 = vmax.bf16 %v2080, 0
        %v2085 = vmax.bf16 %v2081, 0
        %v2086 = vld [vmem:[#allocation28] sm:$0xff]
        %v2087 = vld [vmem:[#allocation28 + $0x8] sm:$0xf]
        %v2088 = vld [vmem:[#allocation28 + $0xc] sm:$0xff]
        %v2089 = vld [vmem:[#allocation28 + $0x14] sm:$0xf]
        %v2090 = vld [vmem:[#allocation28 + $0x18] sm:$0xff]
        %v2091 = vld [vmem:[#allocation28 + $0x20] sm:$0xf]
        %v2092 = vld [vmem:[#allocation28 + $0x24] sm:$0xff]
        %v2093 = vld [vmem:[#allocation28 + $0x2c] sm:$0xf]
        %v2094 = vld [vmem:[#allocation28 + $0x30] sm:$0xff]
        %v2095 = vld [vmem:[#allocation28 + $0x38] sm:$0xf]
        %v2096 = vld [vmem:[#allocation28 + $0x3c] sm:$0xff]
        %v2097 = vld [vmem:[#allocation28 + $0x44] sm:$0xf]
        %v2098 = vld [vmem:[#allocation28 + $0x48] sm:$0xff]
        %v2099 = vld [vmem:[#allocation28 + $0x50] sm:$0xf]
        %v2100 = vld [vmem:[#allocation28 + $0x54] sm:$0xff]
        %v2101 = vld [vmem:[#allocation28 + $0x5c] sm:$0xf]
        %v2102 = vld [vmem:[#allocation28 + $0x60] sm:$0xff]
        %v2103 = vld [vmem:[#allocation28 + $0x68] sm:$0xf]
        %v2104 = vld [vmem:[#allocation28 + $0x6c] sm:$0xff]
        %v2105 = vld [vmem:[#allocation28 + $0x74] sm:$0xf]
        %v2106 = vld [vmem:[#allocation28 + $0x78] sm:$0xff]
        %v2107 = vld [vmem:[#allocation28 + $0x80] sm:$0xf]
        %v2108 = vld [vmem:[#allocation28 + $0x84] sm:$0xff]
        %v2109 = vld [vmem:[#allocation28 + $0x8c] sm:$0xf]
        %v2110 = vld [vmem:[#allocation28 + $0x90] sm:$0xff]
        %v2111 = vld [vmem:[#allocation28 + $0x98] sm:$0xf]
        %v2112 = vld [vmem:[#allocation28 + $0x9c] sm:$0xff]
        %v2113 = vld [vmem:[#allocation28 + $0xa4] sm:$0xf]
        %v2114 = vld [vmem:[#allocation28 + $0xa8] sm:$0xff]
        %v2115 = vld [vmem:[#allocation28 + $0xb0] sm:$0xf]
        %v2116 = vld [vmem:[#allocation28 + $0xb4] sm:$0xff]
        %v2117 = vld [vmem:[#allocation28 + $0xbc] sm:$0xf]
        %v2118 = vld [vmem:[#allocation28 + $0xc0] sm:$0xff]
        %v2119 = vld [vmem:[#allocation28 + $0xc8] sm:$0xf]
        %v2120 = vld [vmem:[#allocation28 + $0xcc] sm:$0xff]
        %v2121 = vld [vmem:[#allocation28 + $0xd4] sm:$0xf]
        %v2122 = vld [vmem:[#allocation28 + $0xd8] sm:$0xff]
        %v2123 = vld [vmem:[#allocation28 + $0xe0] sm:$0xf]
        %v2124 = vld [vmem:[#allocation28 + $0xe4] sm:$0xff]
        %v2125 = vld [vmem:[#allocation28 + $0xec] sm:$0xf]
        %v2126 = vld [vmem:[#allocation28 + $0xf0] sm:$0xff]
        %v2127 = vld [vmem:[#allocation28 + $0xf8] sm:$0xf]
        %v2128 = vld [vmem:[#allocation28 + $0xfc] sm:$0xff]
        %v2129 = vld [vmem:[#allocation28 + $0x104] sm:$0xf]
        %v2130 = vld [vmem:[#allocation28 + $0x108] sm:$0xff]
        %v2131 = vld [vmem:[#allocation28 + $0x110] sm:$0xf]
        %v2132 = vld [vmem:[#allocation28 + $0x114] sm:$0xff]
        %v2133 = vld [vmem:[#allocation28 + $0x11c] sm:$0xf]
        %v2182 = vunpack.c.l.b16 %v2086
        %v2183 = vunpack.c.h.b16 %v2086
        %v2184 = vunpack.c.l.b16 %v2087
        %v2185 = vunpack.c.l.b16 %v2088
        %v2186 = vunpack.c.h.b16 %v2088
        %v2187 = vunpack.c.l.b16 %v2089
        %v2188 = vunpack.c.l.b16 %v2090
        %v2189 = vunpack.c.h.b16 %v2090
        %v2190 = vunpack.c.l.b16 %v2091
        %v2191 = vunpack.c.l.b16 %v2092
        %v2192 = vunpack.c.h.b16 %v2092
        %v2193 = vunpack.c.l.b16 %v2093
        %v2194 = vunpack.c.l.b16 %v2094
        %v2195 = vunpack.c.h.b16 %v2094
        %v2196 = vunpack.c.l.b16 %v2095
        %v2197 = vunpack.c.l.b16 %v2096
        %v2198 = vunpack.c.h.b16 %v2096
        %v2199 = vunpack.c.l.b16 %v2097
        %v2200 = vunpack.c.l.b16 %v2098
        %v2201 = vunpack.c.h.b16 %v2098
        %v2202 = vunpack.c.l.b16 %v2099
        %v2203 = vunpack.c.l.b16 %v2100
        %v2204 = vunpack.c.h.b16 %v2100
        %v2205 = vunpack.c.l.b16 %v2101
        %v2206 = vunpack.c.l.b16 %v2102
        %v2207 = vunpack.c.h.b16 %v2102
        %v2208 = vunpack.c.l.b16 %v2103
        %v2209 = vunpack.c.l.b16 %v2104
        %v2210 = vunpack.c.h.b16 %v2104
        %v2211 = vunpack.c.l.b16 %v2105
        %v2212 = vunpack.c.l.b16 %v2106
        %v2213 = vunpack.c.h.b16 %v2106
        %v2214 = vunpack.c.l.b16 %v2107
        %v2215 = vunpack.c.l.b16 %v2108
        %v2216 = vunpack.c.h.b16 %v2108
        %v2217 = vunpack.c.l.b16 %v2109
        %v2218 = vunpack.c.l.b16 %v2110
        %v2219 = vunpack.c.h.b16 %v2110
        %v2220 = vunpack.c.l.b16 %v2111
        %v2221 = vunpack.c.l.b16 %v2112
        %v2222 = vunpack.c.h.b16 %v2112
        %v2223 = vunpack.c.l.b16 %v2113
        %v2224 = vunpack.c.l.b16 %v2114
        %v2225 = vunpack.c.h.b16 %v2114
        %v2226 = vunpack.c.l.b16 %v2115
        %v2227 = vunpack.c.l.b16 %v2116
        %v2228 = vunpack.c.h.b16 %v2116
        %v2229 = vunpack.c.l.b16 %v2117
        %v2230 = vunpack.c.l.b16 %v2118
        %v2231 = vunpack.c.h.b16 %v2118
        %v2232 = vunpack.c.l.b16 %v2119
        %v2233 = vunpack.c.l.b16 %v2120
        %v2234 = vunpack.c.h.b16 %v2120
        %v2235 = vunpack.c.l.b16 %v2121
        %v2236 = vunpack.c.l.b16 %v2122
        %v2237 = vunpack.c.h.b16 %v2122
        %v2238 = vunpack.c.l.b16 %v2123
        %v2239 = vunpack.c.l.b16 %v2124
        %v2240 = vunpack.c.h.b16 %v2124
        %v2241 = vunpack.c.l.b16 %v2125
        %v2242 = vunpack.c.l.b16 %v2126
        %v2243 = vunpack.c.h.b16 %v2126
        %v2244 = vunpack.c.l.b16 %v2127
        %v2245 = vunpack.c.l.b16 %v2128
        %v2246 = vunpack.c.h.b16 %v2128
        %v2247 = vunpack.c.l.b16 %v2129
        %v2248 = vunpack.c.l.b16 %v2130
        %v2249 = vunpack.c.h.b16 %v2130
        %v2250 = vunpack.c.l.b16 %v2131
        %v2251 = vunpack.c.l.b16 %v2132
        %v2252 = vunpack.c.h.b16 %v2132
        %v2253 = vunpack.c.l.b16 %v2133
        %v2254 = vpack.c.b16 %v2185, %v2182
        %v2255 = vpack.c.b16 %v2186, %v2183
        %v2256 = vpack.c.b16 %v2187, %v2184
        %v2257 = vpack.c.b16 %v2191, %v2188
        %v2258 = vpack.c.b16 %v2192, %v2189
        %v2259 = vpack.c.b16 %v2193, %v2190
        %v2260 = vpack.c.b16 %v2197, %v2194
        %v2261 = vpack.c.b16 %v2198, %v2195
        %v2262 = vpack.c.b16 %v2199, %v2196
        %v2263 = vpack.c.b16 %v2203, %v2200
        %v2264 = vpack.c.b16 %v2204, %v2201
        %v2265 = vpack.c.b16 %v2205, %v2202
        %v2266 = vpack.c.b16 %v2209, %v2206
        %v2267 = vpack.c.b16 %v2210, %v2207
        %v2268 = vpack.c.b16 %v2211, %v2208
        %v2269 = vpack.c.b16 %v2215, %v2212
        %v2270 = vpack.c.b16 %v2216, %v2213
        %v2271 = vpack.c.b16 %v2217, %v2214
        %v2272 = vpack.c.b16 %v2221, %v2218
        %v2273 = vpack.c.b16 %v2222, %v2219
        %v2274 = vpack.c.b16 %v2223, %v2220
        %v2275 = vpack.c.b16 %v2227, %v2224
        %v2276 = vpack.c.b16 %v2228, %v2225
        %v2277 = vpack.c.b16 %v2229, %v2226
        %v2278 = vpack.c.b16 %v2233, %v2230
        %v2279 = vpack.c.b16 %v2234, %v2231
        %v2280 = vpack.c.b16 %v2235, %v2232
        %v2281 = vpack.c.b16 %v2239, %v2236
        %v2282 = vpack.c.b16 %v2240, %v2237
        %v2283 = vpack.c.b16 %v2241, %v2238
        %v2284 = vpack.c.b16 %v2245, %v2242
        %v2285 = vpack.c.b16 %v2246, %v2243
        %v2286 = vpack.c.b16 %v2247, %v2244
        %v2287 = vpack.c.b16 %v2251, %v2248
        %v2288 = vpack.c.b16 %v2252, %v2249
        %v2289 = vpack.c.b16 %v2253, %v2250
        %v2327 = vsel %vm1702, %v2083, 0
        %v2330 = vsel %vm1702, %v2085, 0
        %2332 = vmatprep.subr.bf16.mxu0 %v2255
        %2333 = vmatpush1.bf16.msra.mxu0 %v2254
        %2334 = vmatprep.subr.bf16.mxu0 %v2258
        %2335 = vmatpush1.bf16.msra.mxu0 %v2257
        %2336 = vmatprep.subr.bf16.mxu0 %v2261
        %2337 = vmatpush1.bf16.msra.mxu0 %v2260
        %2338 = vmatprep.subr.bf16.mxu0 %v2264
        %2339 = vmatpush1.bf16.msra.mxu0 %v2263
        %2340 = vmatprep.subr.bf16.mxu0 %v2267
        %2341 = vmatpush1.bf16.msra.mxu0 %v2266
        %2342 = vmatprep.subr.bf16.mxu0 %v2270
        %2343 = vmatpush1.bf16.msra.mxu0 %v2269
        %2344 = vmatprep.subr.bf16.mxu0 %v2273
        %2345 = vmatpush1.bf16.msra.mxu0 %v2272
        %2346 = vmatprep.subr.bf16.mxu0 %v2276
        %2347 = vmatpush1.bf16.msra.mxu0 %v2275
        %2348 = vmatprep.subr.bf16.mxu0 %v2279
        %2349 = vmatpush1.bf16.msra.mxu0 %v2278
        %2350 = vmatprep.subr.bf16.mxu0 %v2282
        %2351 = vmatpush1.bf16.msra.mxu0 %v2281
        %2352 = vmatprep.subr.bf16.mxu0 %v2285
        %2353 = vmatpush1.bf16.msra.mxu0 %v2284
        %2354 = vmatprep.subr.bf16.mxu0 %v2288
        %2355 = vmatpush1.bf16.msra.mxu0 %v2287
        %2356 = vmatprep.subr.bf16.mxu0 0
        %2357 = vmatpush1.bf16.msra.mxu0 0
        %2358 = vmatprep.subr.bf16.mxu0 0
        %2359 = vmatpush1.bf16.msra.mxu0 0
        %2360 = vmatprep.subr.bf16.mxu0 0
        %2361 = vmatpush1.bf16.msra.mxu0 0
        %2362 = vmatprep.subr.bf16.mxu0 0
        %2363 = vmatpush1.bf16.msra.mxu0 0
        %2364 = vmatprep.mubr.bf16.mxu0 %v2327
        %2365 = vmatmul.mubr.bf16.gmra.mrb[0].mxu0 %v2082
        %v2366 = vpop.f32.mrb[0].mxu0
        %v2367 = vadd.f32 0.0, %v2366
        %v2368 = vpop.f32.mrb[0].mxu0
        %v2369 = vadd.f32 0.0, %v2368
        %v2370 = vpop.f32.mrb[0].mxu0
        %v2371 = vadd.f32 0.0, %v2370
        %v2372 = vpop.f32.mrb[0].mxu0
        %v2373 = vadd.f32 0.0, %v2372
        %2374 = vmatprep.mubr.bf16.mxu0 %v2330
        %2375 = vmatmul.mubr.bf16.gmra.mrb[0].mxu0 %v2084
        %v2376 = vpop.f32.mrb[0].mxu0
        %v2377 = vadd.f32 0.0, %v2376
        %v2378 = vpop.f32.mrb[0].mxu0
        %v2379 = vadd.f32 0.0, %v2378
        %v2380 = vpop.f32.mrb[0].mxu0
        %v2381 = vadd.f32 0.0, %v2380
        %v2382 = vpop.f32.mrb[0].mxu0
        %v2383 = vadd.f32 0.0, %v2382
        %2384 = vdwg.mxu0
        %2385 = vmatprep.subr.bf16.mxu0 0
        %2386 = vmatpush1.bf16.msra.mxu0 %v2256
        %2387 = vmatprep.subr.bf16.mxu0 0
        %2388 = vmatpush1.bf16.msra.mxu0 %v2259
        %2389 = vmatprep.subr.bf16.mxu0 0
        %2390 = vmatpush1.bf16.msra.mxu0 %v2262
        %2391 = vmatprep.subr.bf16.mxu0 0
        %2392 = vmatpush1.bf16.msra.mxu0 %v2265
        %2393 = vmatprep.subr.bf16.mxu0 0
        %2394 = vmatpush1.bf16.msra.mxu0 %v2268
        %2395 = vmatprep.subr.bf16.mxu0 0
        %2396 = vmatpush1.bf16.msra.mxu0 %v2271
        %2397 = vmatprep.subr.bf16.mxu0 0
        %2398 = vmatpush1.bf16.msra.mxu0 %v2274
        %2399 = vmatprep.subr.bf16.mxu0 0
        %2400 = vmatpush1.bf16.msra.mxu0 %v2277
        %2401 = vmatprep.subr.bf16.mxu0 0
        %2402 = vmatpush1.bf16.msra.mxu0 %v2280
        %2403 = vmatprep.subr.bf16.mxu0 0
        %2404 = vmatpush1.bf16.msra.mxu0 %v2283
        %2405 = vmatprep.subr.bf16.mxu0 0
        %2406 = vmatpush1.bf16.msra.mxu0 %v2286
        %2407 = vmatprep.subr.bf16.mxu0 0
        %2408 = vmatpush1.bf16.msra.mxu0 %v2289
        %2409 = vmatprep.subr.bf16.mxu0 0
        %2410 = vmatpush1.bf16.msra.mxu0 0
        %2411 = vmatprep.subr.bf16.mxu0 0
        %2412 = vmatpush1.bf16.msra.mxu0 0
        %2413 = vmatprep.subr.bf16.mxu0 0
        %2414 = vmatpush1.bf16.msra.mxu0 0
        %2415 = vmatprep.subr.bf16.mxu0 0
        %2416 = vmatpush1.bf16.msra.mxu0 0
        %2417 = vmatprep.mubr.bf16.mxu0 %v2327
        %2418 = vmatmul.mubr.bf16.gmra.mrb[0].mxu0 %v2082
        %v2419 = vpop.f32.mrb[0].mxu0
        %v2420 = vadd.f32 0.0, %v2419
        %v2421 = vpop.f32.mrb[0].mxu0
        %v2422 = vpop.f32.mrb[0].mxu0
        %v2423 = vadd.f32 0.0, %v2422
        %v2424 = vpop.f32.mrb[0].mxu0
        %2425 = vmatprep.mubr.bf16.mxu0 %v2330
        %2426 = vmatmul.mubr.bf16.gmra.mrb[0].mxu0 %v2084
        %v2427 = vpop.f32.mrb[0].mxu0
        %v2428 = vadd.f32 0.0, %v2427
        %v2429 = vpop.f32.mrb[0].mxu0
        %v2430 = vpop.f32.mrb[0].mxu0
        %v2431 = vadd.f32 0.0, %v2430
        %v2432 = vpop.f32.mrb[0].mxu0
        %2433 = vdwg.mxu0
        %v2434 = vpack.c.bf16 %v2371, %v2367
        %v2435 = vpack.c.bf16 %v2373, %v2369
        %v2436 = vpack.c.bf16 %v2423, %v2420
        %v2437 = vpack.c.bf16 %v2381, %v2377
        %v2438 = vpack.c.bf16 %v2383, %v2379
        %v2439 = vpack.c.bf16 %v2431, %v2428
        %v2440 = vld [vmem:[#allocation29] sm:$0x7]
        %v2443 = vunpack.c.l.s4 1966171168
        %v2444 = vunpack.c.0.s8 %v2443
        %v2445 = vlaneseq
        %v2446 = vshrl.u32 %v2445, 7
        %v2447 = vsub.s32 %v2444, %v2446
        %v2448 = vrot.slane %v2440, %v2447
        %v2449 = vcombine.high %v2448, %v2448
        %v2451 = vunpack.c.l.s4 1966171168
        %v2452 = vunpack.c.0.s8 %v2451
        %v2453 = vlaneseq
        %v2454 = vshrl.u32 %v2453, 7
        %v2455 = vsub.s32 %v2452, %v2454
        %v2456 = vrot.slane %v2448, %v2455
        %v2458 = vunpack.c.l.s4 1966171168
        %v2459 = vunpack.c.0.s8 %v2458
        %v2460 = vlaneseq
        %v2461 = vshrl.u32 %v2460, 7
        %v2462 = vsub.s32 %v2459, %v2461
        %v2463 = vrot.slane %v2449, %v2462
        %v2464 = vcombine.high %v2456, %v2456
        %v2466 = vpack.i.b16 %v2456, %v2456
        %v2468 = vlaneseq
        %v2469 = vshrl.u32 %v2468, 7
        %v2470 = vsub.s32 0, %v2469
        %v2471 = vrot.slane %v2466, %v2470
        %v2473 = vpack.i.b16 %v2463, %v2463
        %v2475 = vlaneseq
        %v2476 = vshrl.u32 %v2475, 7
        %v2477 = vsub.s32 0, %v2476
        %v2478 = vrot.slane %v2473, %v2477
        %v2480 = vpack.i.b16 %v2464, %v2464
        %v2482 = vlaneseq
        %v2483 = vshrl.u32 %v2482, 7
        %v2484 = vsub.s32 0, %v2483
        %v2485 = vrot.slane %v2480, %v2484
        %v2486 = vadd.bf16 %v2434, %v2471
        %v2487 = vadd.bf16 %v2435, %v2478
        %v2488 = vadd.bf16 %v2436, %v2485
        %v2489 = vadd.bf16 %v2437, %v2471
        %v2490 = vadd.bf16 %v2438, %v2478
        %v2491 = vadd.bf16 %v2439, %v2485
        %v2492 = vmax.bf16 %v2486, 0
        %v2493 = vmax.bf16 %v2487, 0
        %v2494 = vmax.bf16 %v2488, 0
        %v2495 = vmax.bf16 %v2489, 0
        %v2496 = vmax.bf16 %v2490, 0
        %v2497 = vmax.bf16 %v2491, 0
        %v2498 = vld [vmem:[#allocation31] sm:$0xff]
        %v2499 = vld [vmem:[#allocation31 + $0x8] sm:$0xf]
        %v2500 = vld [vmem:[#allocation31 + $0xc] sm:$0xff]
        %v2501 = vld [vmem:[#allocation31 + $0x14] sm:$0xf]
        %v2502 = vld [vmem:[#allocation31 + $0x18] sm:$0xff]
        %v2503 = vld [vmem:[#allocation31 + $0x20] sm:$0xf]
        %v2504 = vld [vmem:[#allocation31 + $0x24] sm:$0xff]
        %v2505 = vld [vmem:[#allocation31 + $0x2c] sm:$0xf]
        %v2506 = vld [vmem:[#allocation31 + $0x30] sm:$0xff]
        %v2507 = vld [vmem:[#allocation31 + $0x38] sm:$0xf]
        %v2508 = vld [vmem:[#allocation31 + $0x3c] sm:$0xff]
        %v2509 = vld [vmem:[#allocation31 + $0x44] sm:$0xf]
        %v2510 = vld [vmem:[#allocation31 + $0x48] sm:$0xff]
        %v2511 = vld [vmem:[#allocation31 + $0x50] sm:$0xf]
        %v2512 = vld [vmem:[#allocation31 + $0x54] sm:$0xff]
        %v2513 = vld [vmem:[#allocation31 + $0x5c] sm:$0xf]
        %v2514 = vld [vmem:[#allocation31 + $0x60] sm:$0xff]
        %v2515 = vld [vmem:[#allocation31 + $0x68] sm:$0xf]
        %v2516 = vld [vmem:[#allocation31 + $0x6c] sm:$0xff]
        %v2517 = vld [vmem:[#allocation31 + $0x74] sm:$0xf]
        %v2518 = vld [vmem:[#allocation31 + $0x78] sm:$0xff]
        %v2519 = vld [vmem:[#allocation31 + $0x80] sm:$0xf]
        %v2520 = vld [vmem:[#allocation31 + $0x84] sm:$0xff]
        %v2521 = vld [vmem:[#allocation31 + $0x8c] sm:$0xf]
        %v2522 = vld [vmem:[#allocation31 + $0x90] sm:$0xff]
        %v2523 = vld [vmem:[#allocation31 + $0x98] sm:$0xf]
        %v2524 = vld [vmem:[#allocation31 + $0x9c] sm:$0xff]
        %v2525 = vld [vmem:[#allocation31 + $0xa4] sm:$0xf]
        %v2526 = vld [vmem:[#allocation31 + $0xa8] sm:$0xff]
        %v2527 = vld [vmem:[#allocation31 + $0xb0] sm:$0xf]
        %v2528 = vld [vmem:[#allocation31 + $0xb4] sm:$0xff]
        %v2529 = vld [vmem:[#allocation31 + $0xbc] sm:$0xf]
        %v2530 = vld [vmem:[#allocation31 + $0xc0] sm:$0xff]
        %v2531 = vld [vmem:[#allocation31 + $0xc8] sm:$0xf]
        %v2532 = vld [vmem:[#allocation31 + $0xcc] sm:$0xff]
        %v2533 = vld [vmem:[#allocation31 + $0xd4] sm:$0xf]
        %v2534 = vld [vmem:[#allocation31 + $0xd8] sm:$0xff]
        %v2535 = vld [vmem:[#allocation31 + $0xe0] sm:$0xf]
        %v2536 = vld [vmem:[#allocation31 + $0xe4] sm:$0xff]
        %v2537 = vld [vmem:[#allocation31 + $0xec] sm:$0xf]
        %v2538 = vld [vmem:[#allocation31 + $0xf0] sm:$0xff]
        %v2539 = vld [vmem:[#allocation31 + $0xf8] sm:$0xf]
        %v2540 = vld [vmem:[#allocation31 + $0xfc] sm:$0xff]
        %v2541 = vld [vmem:[#allocation31 + $0x104] sm:$0xf]
        %v2542 = vld [vmem:[#allocation31 + $0x108] sm:$0xff]
        %v2543 = vld [vmem:[#allocation31 + $0x110] sm:$0xf]
        %v2544 = vld [vmem:[#allocation31 + $0x114] sm:$0xff]
        %v2545 = vld [vmem:[#allocation31 + $0x11c] sm:$0xf]
        %v2546 = vld [vmem:[#allocation31 + $0x120] sm:$0xff]
        %v2547 = vld [vmem:[#allocation31 + $0x128] sm:$0xf]
        %v2548 = vld [vmem:[#allocation31 + $0x12c] sm:$0xff]
        %v2549 = vld [vmem:[#allocation31 + $0x134] sm:$0xf]
        %v2550 = vld [vmem:[#allocation31 + $0x138] sm:$0xff]
        %v2551 = vld [vmem:[#allocation31 + $0x140] sm:$0xf]
        %v2552 = vld [vmem:[#allocation31 + $0x144] sm:$0xff]
        %v2553 = vld [vmem:[#allocation31 + $0x14c] sm:$0xf]
        %v2554 = vld [vmem:[#allocation31 + $0x150] sm:$0xff]
        %v2555 = vld [vmem:[#allocation31 + $0x158] sm:$0xf]
        %v2556 = vld [vmem:[#allocation31 + $0x15c] sm:$0xff]
        %v2557 = vld [vmem:[#allocation31 + $0x164] sm:$0xf]
        %v2558 = vld [vmem:[#allocation31 + $0x168] sm:$0xff]
        %v2559 = vld [vmem:[#allocation31 + $0x170] sm:$0xf]
        %v2560 = vld [vmem:[#allocation31 + $0x174] sm:$0xff]
        %v2561 = vld [vmem:[#allocation31 + $0x17c] sm:$0xf]
        %v2562 = vld [vmem:[#allocation31 + $0x180] sm:$0xff]
        %v2563 = vld [vmem:[#allocation31 + $0x188] sm:$0xf]
        %v2564 = vld [vmem:[#allocation31 + $0x18c] sm:$0xff]
        %v2565 = vld [vmem:[#allocation31 + $0x194] sm:$0xf]
        %v2566 = vld [vmem:[#allocation31 + $0x198] sm:$0xff]
        %v2567 = vld [vmem:[#allocation31 + $0x1a0] sm:$0xf]
        %v2568 = vld [vmem:[#allocation31 + $0x1a4] sm:$0xff]
        %v2569 = vld [vmem:[#allocation31 + $0x1ac] sm:$0xf]
        %v2570 = vld [vmem:[#allocation31 + $0x1b0] sm:$0xff]
        %v2571 = vld [vmem:[#allocation31 + $0x1b8] sm:$0xf]
        %v2572 = vld [vmem:[#allocation31 + $0x1bc] sm:$0xff]
        %v2573 = vld [vmem:[#allocation31 + $0x1c4] sm:$0xf]
        %v2574 = vld [vmem:[#allocation31 + $0x1c8] sm:$0xff]
        %v2575 = vld [vmem:[#allocation31 + $0x1d0] sm:$0xf]
        %v2576 = vld [vmem:[#allocation31 + $0x1d4] sm:$0xff]
        %v2577 = vld [vmem:[#allocation31 + $0x1dc] sm:$0xf]
        %v2578 = vld [vmem:[#allocation31 + $0x1e0] sm:$0xff]
        %v2579 = vld [vmem:[#allocation31 + $0x1e8] sm:$0xf]
        %v2580 = vld [vmem:[#allocation31 + $0x1ec] sm:$0xff]
        %v2581 = vld [vmem:[#allocation31 + $0x1f4] sm:$0xf]
        %v2582 = vld [vmem:[#allocation31 + $0x1f8] sm:$0xff]
        %v2583 = vld [vmem:[#allocation31 + $0x200] sm:$0xf]
        %v2584 = vld [vmem:[#allocation31 + $0x204] sm:$0xff]
        %v2585 = vld [vmem:[#allocation31 + $0x20c] sm:$0xf]
        %v2586 = vld [vmem:[#allocation31 + $0x210] sm:$0xff]
        %v2587 = vld [vmem:[#allocation31 + $0x218] sm:$0xf]
        %v2588 = vld [vmem:[#allocation31 + $0x21c] sm:$0xff]
        %v2589 = vld [vmem:[#allocation31 + $0x224] sm:$0xf]
        %v2590 = vld [vmem:[#allocation31 + $0x228] sm:$0xff]
        %v2591 = vld [vmem:[#allocation31 + $0x230] sm:$0xf]
        %v2592 = vld [vmem:[#allocation31 + $0x234] sm:$0xff]
        %v2593 = vld [vmem:[#allocation31 + $0x23c] sm:$0xf]
        %v2690 = vunpack.c.l.b16 %v2498
        %v2691 = vunpack.c.h.b16 %v2498
        %v2692 = vunpack.c.l.b16 %v2499
        %v2693 = vunpack.c.l.b16 %v2500
        %v2694 = vunpack.c.h.b16 %v2500
        %v2695 = vunpack.c.l.b16 %v2501
        %v2696 = vunpack.c.l.b16 %v2502
        %v2697 = vunpack.c.h.b16 %v2502
        %v2698 = vunpack.c.l.b16 %v2503
        %v2699 = vunpack.c.l.b16 %v2504
        %v2700 = vunpack.c.h.b16 %v2504
        %v2701 = vunpack.c.l.b16 %v2505
        %v2702 = vunpack.c.l.b16 %v2506
        %v2703 = vunpack.c.h.b16 %v2506
        %v2704 = vunpack.c.l.b16 %v2507
        %v2705 = vunpack.c.l.b16 %v2508
        %v2706 = vunpack.c.h.b16 %v2508
        %v2707 = vunpack.c.l.b16 %v2509
        %v2708 = vunpack.c.l.b16 %v2510
        %v2709 = vunpack.c.h.b16 %v2510
        %v2710 = vunpack.c.l.b16 %v2511
        %v2711 = vunpack.c.l.b16 %v2512
        %v2712 = vunpack.c.h.b16 %v2512
        %v2713 = vunpack.c.l.b16 %v2513
        %v2714 = vunpack.c.l.b16 %v2514
        %v2715 = vunpack.c.h.b16 %v2514
        %v2716 = vunpack.c.l.b16 %v2515
        %v2717 = vunpack.c.l.b16 %v2516
        %v2718 = vunpack.c.h.b16 %v2516
        %v2719 = vunpack.c.l.b16 %v2517
        %v2720 = vunpack.c.l.b16 %v2518
        %v2721 = vunpack.c.h.b16 %v2518
        %v2722 = vunpack.c.l.b16 %v2519
        %v2723 = vunpack.c.l.b16 %v2520
        %v2724 = vunpack.c.h.b16 %v2520
        %v2725 = vunpack.c.l.b16 %v2521
        %v2726 = vunpack.c.l.b16 %v2522
        %v2727 = vunpack.c.h.b16 %v2522
        %v2728 = vunpack.c.l.b16 %v2523
        %v2729 = vunpack.c.l.b16 %v2524
        %v2730 = vunpack.c.h.b16 %v2524
        %v2731 = vunpack.c.l.b16 %v2525
        %v2732 = vunpack.c.l.b16 %v2526
        %v2733 = vunpack.c.h.b16 %v2526
        %v2734 = vunpack.c.l.b16 %v2527
        %v2735 = vunpack.c.l.b16 %v2528
        %v2736 = vunpack.c.h.b16 %v2528
        %v2737 = vunpack.c.l.b16 %v2529
        %v2738 = vunpack.c.l.b16 %v2530
        %v2739 = vunpack.c.h.b16 %v2530
        %v2740 = vunpack.c.l.b16 %v2531
        %v2741 = vunpack.c.l.b16 %v2532
        %v2742 = vunpack.c.h.b16 %v2532
        %v2743 = vunpack.c.l.b16 %v2533
        %v2744 = vunpack.c.l.b16 %v2534
        %v2745 = vunpack.c.h.b16 %v2534
        %v2746 = vunpack.c.l.b16 %v2535
        %v2747 = vunpack.c.l.b16 %v2536
        %v2748 = vunpack.c.h.b16 %v2536
        %v2749 = vunpack.c.l.b16 %v2537
        %v2750 = vunpack.c.l.b16 %v2538
        %v2751 = vunpack.c.h.b16 %v2538
        %v2752 = vunpack.c.l.b16 %v2539
        %v2753 = vunpack.c.l.b16 %v2540
        %v2754 = vunpack.c.h.b16 %v2540
        %v2755 = vunpack.c.l.b16 %v2541
        %v2756 = vunpack.c.l.b16 %v2542
        %v2757 = vunpack.c.h.b16 %v2542
        %v2758 = vunpack.c.l.b16 %v2543
        %v2759 = vunpack.c.l.b16 %v2544
        %v2760 = vunpack.c.h.b16 %v2544
        %v2761 = vunpack.c.l.b16 %v2545
        %v2762 = vunpack.c.l.b16 %v2546
        %v2763 = vunpack.c.h.b16 %v2546
        %v2764 = vunpack.c.l.b16 %v2547
        %v2765 = vunpack.c.l.b16 %v2548
        %v2766 = vunpack.c.h.b16 %v2548
        %v2767 = vunpack.c.l.b16 %v2549
        %v2768 = vunpack.c.l.b16 %v2550
        %v2769 = vunpack.c.h.b16 %v2550
        %v2770 = vunpack.c.l.b16 %v2551
        %v2771 = vunpack.c.l.b16 %v2552
        %v2772 = vunpack.c.h.b16 %v2552
        %v2773 = vunpack.c.l.b16 %v2553
        %v2774 = vunpack.c.l.b16 %v2554
        %v2775 = vunpack.c.h.b16 %v2554
        %v2776 = vunpack.c.l.b16 %v2555
        %v2777 = vunpack.c.l.b16 %v2556
        %v2778 = vunpack.c.h.b16 %v2556
        %v2779 = vunpack.c.l.b16 %v2557
        %v2780 = vunpack.c.l.b16 %v2558
        %v2781 = vunpack.c.h.b16 %v2558
        %v2782 = vunpack.c.l.b16 %v2559
        %v2783 = vunpack.c.l.b16 %v2560
        %v2784 = vunpack.c.h.b16 %v2560
        %v2785 = vunpack.c.l.b16 %v2561
        %v2786 = vunpack.c.l.b16 %v2562
        %v2787 = vunpack.c.h.b16 %v2562
        %v2788 = vunpack.c.l.b16 %v2563
        %v2789 = vunpack.c.l.b16 %v2564
        %v2790 = vunpack.c.h.b16 %v2564
        %v2791 = vunpack.c.l.b16 %v2565
        %v2792 = vunpack.c.l.b16 %v2566
        %v2793 = vunpack.c.h.b16 %v2566
        %v2794 = vunpack.c.l.b16 %v2567
        %v2795 = vunpack.c.l.b16 %v2568
        %v2796 = vunpack.c.h.b16 %v2568
        %v2797 = vunpack.c.l.b16 %v2569
        %v2798 = vunpack.c.l.b16 %v2570
        %v2799 = vunpack.c.h.b16 %v2570
        %v2800 = vunpack.c.l.b16 %v2571
        %v2801 = vunpack.c.l.b16 %v2572
        %v2802 = vunpack.c.h.b16 %v2572
        %v2803 = vunpack.c.l.b16 %v2573
        %v2804 = vunpack.c.l.b16 %v2574
        %v2805 = vunpack.c.h.b16 %v2574
        %v2806 = vunpack.c.l.b16 %v2575
        %v2807 = vunpack.c.l.b16 %v2576
        %v2808 = vunpack.c.h.b16 %v2576
        %v2809 = vunpack.c.l.b16 %v2577
        %v2810 = vunpack.c.l.b16 %v2578
        %v2811 = vunpack.c.h.b16 %v2578
        %v2812 = vunpack.c.l.b16 %v2579
        %v2813 = vunpack.c.l.b16 %v2580
        %v2814 = vunpack.c.h.b16 %v2580
        %v2815 = vunpack.c.l.b16 %v2581
        %v2816 = vunpack.c.l.b16 %v2582
        %v2817 = vunpack.c.h.b16 %v2582
        %v2818 = vunpack.c.l.b16 %v2583
        %v2819 = vunpack.c.l.b16 %v2584
        %v2820 = vunpack.c.h.b16 %v2584
        %v2821 = vunpack.c.l.b16 %v2585
        %v2822 = vunpack.c.l.b16 %v2586
        %v2823 = vunpack.c.h.b16 %v2586
        %v2824 = vunpack.c.l.b16 %v2587
        %v2825 = vunpack.c.l.b16 %v2588
        %v2826 = vunpack.c.h.b16 %v2588
        %v2827 = vunpack.c.l.b16 %v2589
        %v2828 = vunpack.c.l.b16 %v2590
        %v2829 = vunpack.c.h.b16 %v2590
        %v2830 = vunpack.c.l.b16 %v2591
        %v2831 = vunpack.c.l.b16 %v2592
        %v2832 = vunpack.c.h.b16 %v2592
        %v2833 = vunpack.c.l.b16 %v2593
        %v2834 = vpack.c.b16 %v2693, %v2690
        %v2835 = vpack.c.b16 %v2694, %v2691
        %v2836 = vpack.c.b16 %v2695, %v2692
        %v2837 = vpack.c.b16 %v2699, %v2696
        %v2838 = vpack.c.b16 %v2700, %v2697
        %v2839 = vpack.c.b16 %v2701, %v2698
        %v2840 = vpack.c.b16 %v2705, %v2702
        %v2841 = vpack.c.b16 %v2706, %v2703
        %v2842 = vpack.c.b16 %v2707, %v2704
        %v2843 = vpack.c.b16 %v2711, %v2708
        %v2844 = vpack.c.b16 %v2712, %v2709
        %v2845 = vpack.c.b16 %v2713, %v2710
        %v2846 = vpack.c.b16 %v2717, %v2714
        %v2847 = vpack.c.b16 %v2718, %v2715
        %v2848 = vpack.c.b16 %v2719, %v2716
        %v2849 = vpack.c.b16 %v2723, %v2720
        %v2850 = vpack.c.b16 %v2724, %v2721
        %v2851 = vpack.c.b16 %v2725, %v2722
        %v2852 = vpack.c.b16 %v2729, %v2726
        %v2853 = vpack.c.b16 %v2730, %v2727
        %v2854 = vpack.c.b16 %v2731, %v2728
        %v2855 = vpack.c.b16 %v2735, %v2732
        %v2856 = vpack.c.b16 %v2736, %v2733
        %v2857 = vpack.c.b16 %v2737, %v2734
        %v2858 = vpack.c.b16 %v2741, %v2738
        %v2859 = vpack.c.b16 %v2742, %v2739
        %v2860 = vpack.c.b16 %v2743, %v2740
        %v2861 = vpack.c.b16 %v2747, %v2744
        %v2862 = vpack.c.b16 %v2748, %v2745
        %v2863 = vpack.c.b16 %v2749, %v2746
        %v2864 = vpack.c.b16 %v2753, %v2750
        %v2865 = vpack.c.b16 %v2754, %v2751
        %v2866 = vpack.c.b16 %v2755, %v2752
        %v2867 = vpack.c.b16 %v2759, %v2756
        %v2868 = vpack.c.b16 %v2760, %v2757
        %v2869 = vpack.c.b16 %v2761, %v2758
        %v2870 = vpack.c.b16 %v2765, %v2762
        %v2871 = vpack.c.b16 %v2766, %v2763
        %v2872 = vpack.c.b16 %v2767, %v2764
        %v2873 = vpack.c.b16 %v2771, %v2768
        %v2874 = vpack.c.b16 %v2772, %v2769
        %v2875 = vpack.c.b16 %v2773, %v2770
        %v2876 = vpack.c.b16 %v2777, %v2774
        %v2877 = vpack.c.b16 %v2778, %v2775
        %v2878 = vpack.c.b16 %v2779, %v2776
        %v2879 = vpack.c.b16 %v2783, %v2780
        %v2880 = vpack.c.b16 %v2784, %v2781
        %v2881 = vpack.c.b16 %v2785, %v2782
        %v2882 = vpack.c.b16 %v2789, %v2786
        %v2883 = vpack.c.b16 %v2790, %v2787
        %v2884 = vpack.c.b16 %v2791, %v2788
        %v2885 = vpack.c.b16 %v2795, %v2792
        %v2886 = vpack.c.b16 %v2796, %v2793
        %v2887 = vpack.c.b16 %v2797, %v2794
        %v2888 = vpack.c.b16 %v2801, %v2798
        %v2889 = vpack.c.b16 %v2802, %v2799
        %v2890 = vpack.c.b16 %v2803, %v2800
        %v2891 = vpack.c.b16 %v2807, %v2804
        %v2892 = vpack.c.b16 %v2808, %v2805
        %v2893 = vpack.c.b16 %v2809, %v2806
        %v2894 = vpack.c.b16 %v2813, %v2810
        %v2895 = vpack.c.b16 %v2814, %v2811
        %v2896 = vpack.c.b16 %v2815, %v2812
        %v2897 = vpack.c.b16 %v2819, %v2816
        %v2898 = vpack.c.b16 %v2820, %v2817
        %v2899 = vpack.c.b16 %v2821, %v2818
        %v2900 = vpack.c.b16 %v2825, %v2822
        %v2901 = vpack.c.b16 %v2826, %v2823
        %v2902 = vpack.c.b16 %v2827, %v2824
        %v2903 = vpack.c.b16 %v2831, %v2828
        %v2904 = vpack.c.b16 %v2832, %v2829
        %v2905 = vpack.c.b16 %v2833, %v2830
        %2978 = vmatprep.subr.bf16.mxu0 %v2835
        %2979 = vmatpush1.bf16.msra.mxu0 %v2834
        %2980 = vmatprep.subr.bf16.mxu0 %v2838
        %2981 = vmatpush1.bf16.msra.mxu0 %v2837
        %2982 = vmatprep.subr.bf16.mxu0 %v2841
        %2983 = vmatpush1.bf16.msra.mxu0 %v2840
        %2984 = vmatprep.subr.bf16.mxu0 %v2844
        %2985 = vmatpush1.bf16.msra.mxu0 %v2843
        %2986 = vmatprep.subr.bf16.mxu0 %v2847
        %2987 = vmatpush1.bf16.msra.mxu0 %v2846
        %2988 = vmatprep.subr.bf16.mxu0 %v2850
        %2989 = vmatpush1.bf16.msra.mxu0 %v2849
        %2990 = vmatprep.subr.bf16.mxu0 %v2853
        %2991 = vmatpush1.bf16.msra.mxu0 %v2852
        %2992 = vmatprep.subr.bf16.mxu0 %v2856
        %2993 = vmatpush1.bf16.msra.mxu0 %v2855
        %2994 = vmatprep.subr.bf16.mxu0 %v2859
        %2995 = vmatpush1.bf16.msra.mxu0 %v2858
        %2996 = vmatprep.subr.bf16.mxu0 %v2862
        %2997 = vmatpush1.bf16.msra.mxu0 %v2861
        %2998 = vmatprep.subr.bf16.mxu0 %v2865
        %2999 = vmatpush1.bf16.msra.mxu0 %v2864
        %3000 = vmatprep.subr.bf16.mxu0 %v2868
        %3001 = vmatpush1.bf16.msra.mxu0 %v2867
        %3002 = vmatprep.subr.bf16.mxu0 %v2871
        %3003 = vmatpush1.bf16.msra.mxu0 %v2870
        %3004 = vmatprep.subr.bf16.mxu0 %v2874
        %3005 = vmatpush1.bf16.msra.mxu0 %v2873
        %3006 = vmatprep.subr.bf16.mxu0 %v2877
        %3007 = vmatpush1.bf16.msra.mxu0 %v2876
        %3008 = vmatprep.subr.bf16.mxu0 %v2880
        %3009 = vmatpush1.bf16.msra.mxu0 %v2879
        %3010 = vmatprep.mubr.bf16.mxu0 %v2493
        %3011 = vmatmul.mubr.bf16.gmra.mrb[0].mxu0 %v2492
        %v3012 = vpop.f32.mrb[0].mxu0
        %v3013 = vadd.f32 0.0, %v3012
        %v3014 = vpop.f32.mrb[0].mxu0
        %v3015 = vadd.f32 0.0, %v3014
        %v3016 = vpop.f32.mrb[0].mxu0
        %v3017 = vadd.f32 0.0, %v3016
        %v3018 = vpop.f32.mrb[0].mxu0
        %v3019 = vadd.f32 0.0, %v3018
        %3020 = vmatprep.mubr.bf16.mxu0 %v2496
        %3021 = vmatmul.mubr.bf16.gmra.mrb[0].mxu0 %v2495
        %v3022 = vpop.f32.mrb[0].mxu0
        %v3023 = vadd.f32 0.0, %v3022
        %v3024 = vpop.f32.mrb[0].mxu0
        %v3025 = vadd.f32 0.0, %v3024
        %v3026 = vpop.f32.mrb[0].mxu0
        %v3027 = vadd.f32 0.0, %v3026
        %v3028 = vpop.f32.mrb[0].mxu0
        %v3029 = vadd.f32 0.0, %v3028
        %3030 = vdwg.mxu0
        %3031 = vmatprep.subr.bf16.mxu0 %v2883
        %3032 = vmatpush1.bf16.msra.mxu0 %v2882
        %3033 = vmatprep.subr.bf16.mxu0 %v2886
        %3034 = vmatpush1.bf16.msra.mxu0 %v2885
        %3035 = vmatprep.subr.bf16.mxu0 %v2889
        %3036 = vmatpush1.bf16.msra.mxu0 %v2888
        %3037 = vmatprep.subr.bf16.mxu0 %v2892
        %3038 = vmatpush1.bf16.msra.mxu0 %v2891
        %3039 = vmatprep.subr.bf16.mxu0 %v2895
        %3040 = vmatpush1.bf16.msra.mxu0 %v2894
        %3041 = vmatprep.subr.bf16.mxu0 %v2898
        %3042 = vmatpush1.bf16.msra.mxu0 %v2897
        %3043 = vmatprep.subr.bf16.mxu0 %v2901
        %3044 = vmatpush1.bf16.msra.mxu0 %v2900
        %3045 = vmatprep.subr.bf16.mxu0 %v2904
        %3046 = vmatpush1.bf16.msra.mxu0 %v2903
        %3047 = vmatprep.subr.bf16.mxu0 0
        %3048 = vmatpush1.bf16.msra.mxu0 0
        %3049 = vmatprep.subr.bf16.mxu0 0
        %3050 = vmatpush1.bf16.msra.mxu0 0
        %3051 = vmatprep.subr.bf16.mxu0 0
        %3052 = vmatpush1.bf16.msra.mxu0 0
        %3053 = vmatprep.subr.bf16.mxu0 0
        %3054 = vmatpush1.bf16.msra.mxu0 0
        %3055 = vmatprep.subr.bf16.mxu0 0
        %3056 = vmatpush1.bf16.msra.mxu0 0
        %3057 = vmatprep.subr.bf16.mxu0 0
        %3058 = vmatpush1.bf16.msra.mxu0 0
        %3059 = vmatprep.subr.bf16.mxu0 0
        %3060 = vmatpush1.bf16.msra.mxu0 0
        %3061 = vmatprep.subr.bf16.mxu0 0
        %3062 = vmatpush1.bf16.msra.mxu0 0
        %3063 = vmatprep.mubr.bf16.mxu0 0
        %3064 = vmatmul.mubr.bf16.gmra.mrb[0].mxu0 %v2494
        %v3065 = vpop.f32.mrb[0].mxu0
        %v3066 = vadd.f32 %v3013, %v3065
        %v3067 = vpop.f32.mrb[0].mxu0
        %v3068 = vadd.f32 %v3015, %v3067
        %v3069 = vpop.f32.mrb[0].mxu0
        %v3070 = vadd.f32 %v3017, %v3069
        %v3071 = vpop.f32.mrb[0].mxu0
        %v3072 = vadd.f32 %v3019, %v3071
        %3073 = vmatprep.mubr.bf16.mxu0 0
        %3074 = vmatmul.mubr.bf16.gmra.mrb[0].mxu0 %v2497
        %v3075 = vpop.f32.mrb[0].mxu0
        %v3076 = vadd.f32 %v3023, %v3075
        %v3077 = vpop.f32.mrb[0].mxu0
        %v3078 = vadd.f32 %v3025, %v3077
        %v3079 = vpop.f32.mrb[0].mxu0
        %v3080 = vadd.f32 %v3027, %v3079
        %v3081 = vpop.f32.mrb[0].mxu0
        %v3082 = vadd.f32 %v3029, %v3081
        %3083 = vdwg.mxu0
        %3084 = vmatprep.subr.bf16.mxu0 0
        %3085 = vmatpush1.bf16.msra.mxu0 %v2836
        %3086 = vmatprep.subr.bf16.mxu0 0
        %3087 = vmatpush1.bf16.msra.mxu0 %v2839
        %3088 = vmatprep.subr.bf16.mxu0 0
        %3089 = vmatpush1.bf16.msra.mxu0 %v2842
        %3090 = vmatprep.subr.bf16.mxu0 0
        %3091 = vmatpush1.bf16.msra.mxu0 %v2845
        %3092 = vmatprep.subr.bf16.mxu0 0
        %3093 = vmatpush1.bf16.msra.mxu0 %v2848
        %3094 = vmatprep.subr.bf16.mxu0 0
        %3095 = vmatpush1.bf16.msra.mxu0 %v2851
        %3096 = vmatprep.subr.bf16.mxu0 0
        %3097 = vmatpush1.bf16.msra.mxu0 %v2854
        %3098 = vmatprep.subr.bf16.mxu0 0
        %3099 = vmatpush1.bf16.msra.mxu0 %v2857
        %3100 = vmatprep.subr.bf16.mxu0 0
        %3101 = vmatpush1.bf16.msra.mxu0 %v2860
        %3102 = vmatprep.subr.bf16.mxu0 0
        %3103 = vmatpush1.bf16.msra.mxu0 %v2863
        %3104 = vmatprep.subr.bf16.mxu0 0
        %3105 = vmatpush1.bf16.msra.mxu0 %v2866
        %3106 = vmatprep.subr.bf16.mxu0 0
        %3107 = vmatpush1.bf16.msra.mxu0 %v2869
        %3108 = vmatprep.subr.bf16.mxu0 0
        %3109 = vmatpush1.bf16.msra.mxu0 %v2872
        %3110 = vmatprep.subr.bf16.mxu0 0
        %3111 = vmatpush1.bf16.msra.mxu0 %v2875
        %3112 = vmatprep.subr.bf16.mxu0 0
        %3113 = vmatpush1.bf16.msra.mxu0 %v2878
        %3114 = vmatprep.subr.bf16.mxu0 0
        %3115 = vmatpush1.bf16.msra.mxu0 %v2881
        %3116 = vmatprep.mubr.bf16.mxu0 %v2493
        %3117 = vmatmul.mubr.bf16.gmra.mrb[0].mxu0 %v2492
        %v3118 = vpop.f32.mrb[0].mxu0
        %v3119 = vadd.f32 0.0, %v3118
        %v3120 = vpop.f32.mrb[0].mxu0
        %v3121 = vpop.f32.mrb[0].mxu0
        %v3122 = vadd.f32 0.0, %v3121
        %v3123 = vpop.f32.mrb[0].mxu0
        %3124 = vmatprep.mubr.bf16.mxu0 %v2496
        %3125 = vmatmul.mubr.bf16.gmra.mrb[0].mxu0 %v2495
        %v3126 = vpop.f32.mrb[0].mxu0
        %v3127 = vadd.f32 0.0, %v3126
        %v3128 = vpop.f32.mrb[0].mxu0
        %v3129 = vpop.f32.mrb[0].mxu0
        %v3130 = vadd.f32 0.0, %v3129
        %v3131 = vpop.f32.mrb[0].mxu0
        %3132 = vdwg.mxu0
        %3133 = vmatprep.subr.bf16.mxu0 0
        %3134 = vmatpush1.bf16.msra.mxu0 %v2884
        %3135 = vmatprep.subr.bf16.mxu0 0
        %3136 = vmatpush1.bf16.msra.mxu0 %v2887
        %3137 = vmatprep.subr.bf16.mxu0 0
        %3138 = vmatpush1.bf16.msra.mxu0 %v2890
        %3139 = vmatprep.subr.bf16.mxu0 0
        %3140 = vmatpush1.bf16.msra.mxu0 %v2893
        %3141 = vmatprep.subr.bf16.mxu0 0
        %3142 = vmatpush1.bf16.msra.mxu0 %v2896
        %3143 = vmatprep.subr.bf16.mxu0 0
        %3144 = vmatpush1.bf16.msra.mxu0 %v2899
        %3145 = vmatprep.subr.bf16.mxu0 0
        %3146 = vmatpush1.bf16.msra.mxu0 %v2902
        %3147 = vmatprep.subr.bf16.mxu0 0
        %3148 = vmatpush1.bf16.msra.mxu0 %v2905
        %3149 = vmatprep.subr.bf16.mxu0 0
        %3150 = vmatpush1.bf16.msra.mxu0 0
        %3151 = vmatprep.subr.bf16.mxu0 0
        %3152 = vmatpush1.bf16.msra.mxu0 0
        %3153 = vmatprep.subr.bf16.mxu0 0
        %3154 = vmatpush1.bf16.msra.mxu0 0
        %3155 = vmatprep.subr.bf16.mxu0 0
        %3156 = vmatpush1.bf16.msra.mxu0 0
        %3157 = vmatprep.subr.bf16.mxu0 0
        %3158 = vmatpush1.bf16.msra.mxu0 0
        %3159 = vmatprep.subr.bf16.mxu0 0
        %3160 = vmatpush1.bf16.msra.mxu0 0
        %3161 = vmatprep.subr.bf16.mxu0 0
        %3162 = vmatpush1.bf16.msra.mxu0 0
        %3163 = vmatprep.subr.bf16.mxu0 0
        %3164 = vmatpush1.bf16.msra.mxu0 0
        %3165 = vmatprep.mubr.bf16.mxu0 0
        %3166 = vmatmul.mubr.bf16.gmra.mrb[0].mxu0 %v2494
        %v3167 = vpop.f32.mrb[0].mxu0
        %v3168 = vadd.f32 %v3119, %v3167
        %v3169 = vpop.f32.mrb[0].mxu0
        %v3170 = vpop.f32.mrb[0].mxu0
        %v3171 = vadd.f32 %v3122, %v3170
        %v3172 = vpop.f32.mrb[0].mxu0
        %3173 = vmatprep.mubr.bf16.mxu0 0
        %3174 = vmatmul.mubr.bf16.gmra.mrb[0].mxu0 %v2497
        %v3175 = vpop.f32.mrb[0].mxu0
        %v3176 = vadd.f32 %v3127, %v3175
        %v3177 = vpop.f32.mrb[0].mxu0
        %v3178 = vpop.f32.mrb[0].mxu0
        %v3179 = vadd.f32 %v3130, %v3178
        %v3180 = vpop.f32.mrb[0].mxu0
        %3181 = vdwg.mxu0
        %v3182 = vpack.c.bf16 %v3070, %v3066
        %v3183 = vpack.c.bf16 %v3072, %v3068
        %v3184 = vpack.c.bf16 %v3171, %v3168
        %v3185 = vpack.c.bf16 %v3080, %v3076
        %v3186 = vpack.c.bf16 %v3082, %v3078
        %v3187 = vpack.c.bf16 %v3179, %v3176
        %v3188 = vld [vmem:[#allocation32] sm:$0x7]
        %v3191 = vunpack.c.l.s4 1966171168
        %v3192 = vunpack.c.0.s8 %v3191
        %v3193 = vlaneseq
        %v3194 = vshrl.u32 %v3193, 7
        %v3195 = vsub.s32 %v3192, %v3194
        %v3196 = vrot.slane %v3188, %v3195
        %v3197 = vcombine.high %v3196, %v3196
        %v3199 = vunpack.c.l.s4 1966171168
        %v3200 = vunpack.c.0.s8 %v3199
        %v3201 = vlaneseq
        %v3202 = vshrl.u32 %v3201, 7
        %v3203 = vsub.s32 %v3200, %v3202
        %v3204 = vrot.slane %v3196, %v3203
        %v3206 = vunpack.c.l.s4 1966171168
        %v3207 = vunpack.c.0.s8 %v3206
        %v3208 = vlaneseq
        %v3209 = vshrl.u32 %v3208, 7
        %v3210 = vsub.s32 %v3207, %v3209
        %v3211 = vrot.slane %v3197, %v3210
        %v3212 = vcombine.high %v3204, %v3204
        %v3214 = vpack.i.b16 %v3204, %v3204
        %v3216 = vlaneseq
        %v3217 = vshrl.u32 %v3216, 7
        %v3218 = vsub.s32 0, %v3217
        %v3219 = vrot.slane %v3214, %v3218
        %v3221 = vpack.i.b16 %v3211, %v3211
        %v3223 = vlaneseq
        %v3224 = vshrl.u32 %v3223, 7
        %v3225 = vsub.s32 0, %v3224
        %v3226 = vrot.slane %v3221, %v3225
        %v3228 = vpack.i.b16 %v3212, %v3212
        %v3230 = vlaneseq
        %v3231 = vshrl.u32 %v3230, 7
        %v3232 = vsub.s32 0, %v3231
        %v3233 = vrot.slane %v3228, %v3232
        %v3234 = vadd.bf16 %v3182, %v3219
        %v3235 = vadd.bf16 %v3183, %v3226
        %v3236 = vadd.bf16 %v3184, %v3233
        %v3237 = vadd.bf16 %v3185, %v3219
        %v3238 = vadd.bf16 %v3186, %v3226
        %v3239 = vadd.bf16 %v3187, %v3233
        %v3240 = vmax.bf16 %v3234, 0
        %v3241 = vmax.bf16 %v3235, 0
        %v3242 = vmax.bf16 %v3236, 0
        %v3243 = vmax.bf16 %v3237, 0
        %v3244 = vmax.bf16 %v3238, 0
        %v3245 = vmax.bf16 %v3239, 0
        %v3246 = vld [vmem:[#allocation34] sm:$0xf]
        %v3247 = vld [vmem:[#allocation34 + $0x4] sm:$0xf]
        %v3248 = vld [vmem:[#allocation34 + $0x8] sm:$0xf]
        %v3249 = vld [vmem:[#allocation34 + $0xc] sm:$0xf]
        %v3250 = vld [vmem:[#allocation34 + $0x10] sm:$0xf]
        %v3251 = vld [vmem:[#allocation34 + $0x14] sm:$0xf]
        %v3252 = vld [vmem:[#allocation34 + $0x18] sm:$0xf]
        %v3253 = vld [vmem:[#allocation34 + $0x1c] sm:$0xf]
        %v3254 = vld [vmem:[#allocation34 + $0x20] sm:$0xf]
        %v3255 = vld [vmem:[#allocation34 + $0x24] sm:$0xf]
        %v3256 = vld [vmem:[#allocation34 + $0x28] sm:$0xf]
        %v3257 = vld [vmem:[#allocation34 + $0x2c] sm:$0xf]
        %v3258 = vld [vmem:[#allocation34 + $0x30] sm:$0xf]
        %v3259 = vld [vmem:[#allocation34 + $0x34] sm:$0xf]
        %v3260 = vld [vmem:[#allocation34 + $0x38] sm:$0xf]
        %v3261 = vld [vmem:[#allocation34 + $0x3c] sm:$0xf]
        %v3262 = vld [vmem:[#allocation34 + $0x40] sm:$0xf]
        %v3263 = vld [vmem:[#allocation34 + $0x44] sm:$0xf]
        %v3264 = vld [vmem:[#allocation34 + $0x48] sm:$0xf]
        %v3265 = vld [vmem:[#allocation34 + $0x4c] sm:$0xf]
        %v3266 = vld [vmem:[#allocation34 + $0x50] sm:$0xf]
        %v3267 = vld [vmem:[#allocation34 + $0x54] sm:$0xf]
        %v3268 = vld [vmem:[#allocation34 + $0x58] sm:$0xf]
        %v3269 = vld [vmem:[#allocation34 + $0x5c] sm:$0xf]
        %v3270 = vld [vmem:[#allocation34 + $0x60] sm:$0xf]
        %v3271 = vld [vmem:[#allocation34 + $0x64] sm:$0xf]
        %v3272 = vld [vmem:[#allocation34 + $0x68] sm:$0xf]
        %v3273 = vld [vmem:[#allocation34 + $0x6c] sm:$0xf]
        %v3274 = vld [vmem:[#allocation34 + $0x70] sm:$0xf]
        %v3275 = vld [vmem:[#allocation34 + $0x74] sm:$0xf]
        %v3276 = vld [vmem:[#allocation34 + $0x78] sm:$0xf]
        %v3277 = vld [vmem:[#allocation34 + $0x7c] sm:$0xf]
        %v3278 = vld [vmem:[#allocation34 + $0x80] sm:$0xf]
        %v3279 = vld [vmem:[#allocation34 + $0x84] sm:$0xf]
        %v3280 = vld [vmem:[#allocation34 + $0x88] sm:$0xf]
        %v3281 = vld [vmem:[#allocation34 + $0x8c] sm:$0xf]
        %v3282 = vld [vmem:[#allocation34 + $0x90] sm:$0xf]
        %v3283 = vld [vmem:[#allocation34 + $0x94] sm:$0xf]
        %v3284 = vld [vmem:[#allocation34 + $0x98] sm:$0xf]
        %v3285 = vld [vmem:[#allocation34 + $0x9c] sm:$0xf]
        %v3286 = vld [vmem:[#allocation34 + $0xa0] sm:$0xf]
        %v3287 = vld [vmem:[#allocation34 + $0xa4] sm:$0xf]
        %v3288 = vld [vmem:[#allocation34 + $0xa8] sm:$0xf]
        %v3289 = vld [vmem:[#allocation34 + $0xac] sm:$0xf]
        %v3290 = vld [vmem:[#allocation34 + $0xb0] sm:$0xf]
        %v3291 = vld [vmem:[#allocation34 + $0xb4] sm:$0xf]
        %v3292 = vld [vmem:[#allocation34 + $0xb8] sm:$0xf]
        %v3293 = vld [vmem:[#allocation34 + $0xbc] sm:$0xf]
        %v3294 = vld [vmem:[#allocation35] sm:$0x1]
        %v3296 = vlaneseq
        %v3297 = vshrl.u32 %v3296, 7
        %v3298 = vsub.s32 0, %v3297
        %v3299 = vrot.slane %v3294, %v3298
        %v3349 = vunpack.c.l.b16 %v3246
        %v3350 = vunpack.c.l.b16 %v3247
        %v3351 = vunpack.c.l.b16 %v3248
        %v3352 = vunpack.c.l.b16 %v3249
        %v3353 = vunpack.c.l.b16 %v3250
        %v3354 = vunpack.c.l.b16 %v3251
        %v3355 = vunpack.c.l.b16 %v3252
        %v3356 = vunpack.c.l.b16 %v3253
        %v3357 = vunpack.c.l.b16 %v3254
        %v3358 = vunpack.c.l.b16 %v3255
        %v3359 = vunpack.c.l.b16 %v3256
        %v3360 = vunpack.c.l.b16 %v3257
        %v3361 = vunpack.c.l.b16 %v3258
        %v3362 = vunpack.c.l.b16 %v3259
        %v3363 = vunpack.c.l.b16 %v3260
        %v3364 = vunpack.c.l.b16 %v3261
        %v3365 = vunpack.c.l.b16 %v3262
        %v3366 = vunpack.c.l.b16 %v3263
        %v3367 = vunpack.c.l.b16 %v3264
        %v3368 = vunpack.c.l.b16 %v3265
        %v3369 = vunpack.c.l.b16 %v3266
        %v3370 = vunpack.c.l.b16 %v3267
        %v3371 = vunpack.c.l.b16 %v3268
        %v3372 = vunpack.c.l.b16 %v3269
        %v3373 = vunpack.c.l.b16 %v3270
        %v3374 = vunpack.c.l.b16 %v3271
        %v3375 = vunpack.c.l.b16 %v3272
        %v3376 = vunpack.c.l.b16 %v3273
        %v3377 = vunpack.c.l.b16 %v3274
        %v3378 = vunpack.c.l.b16 %v3275
        %v3379 = vunpack.c.l.b16 %v3276
        %v3380 = vunpack.c.l.b16 %v3277
        %v3381 = vunpack.c.l.b16 %v3278
        %v3382 = vunpack.c.l.b16 %v3279
        %v3383 = vunpack.c.l.b16 %v3280
        %v3384 = vunpack.c.l.b16 %v3281
        %v3385 = vunpack.c.l.b16 %v3282
        %v3386 = vunpack.c.l.b16 %v3283
        %v3387 = vunpack.c.l.b16 %v3284
        %v3388 = vunpack.c.l.b16 %v3285
        %v3389 = vunpack.c.l.b16 %v3286
        %v3390 = vunpack.c.l.b16 %v3287
        %v3391 = vunpack.c.l.b16 %v3288
        %v3392 = vunpack.c.l.b16 %v3289
        %v3393 = vunpack.c.l.b16 %v3290
        %v3394 = vunpack.c.l.b16 %v3291
        %v3395 = vunpack.c.l.b16 %v3292
        %v3396 = vunpack.c.l.b16 %v3293
        %v3397 = vpack.c.b16 %v3350, %v3349
        %v3398 = vpack.c.b16 %v3352, %v3351
        %v3399 = vpack.c.b16 %v3354, %v3353
        %v3400 = vpack.c.b16 %v3356, %v3355
        %v3401 = vpack.c.b16 %v3358, %v3357
        %v3402 = vpack.c.b16 %v3360, %v3359
        %v3403 = vpack.c.b16 %v3362, %v3361
        %v3404 = vpack.c.b16 %v3364, %v3363
        %v3405 = vpack.c.b16 %v3366, %v3365
        %v3406 = vpack.c.b16 %v3368, %v3367
        %v3407 = vpack.c.b16 %v3370, %v3369
        %v3408 = vpack.c.b16 %v3372, %v3371
        %v3409 = vpack.c.b16 %v3374, %v3373
        %v3410 = vpack.c.b16 %v3376, %v3375
        %v3411 = vpack.c.b16 %v3378, %v3377
        %v3412 = vpack.c.b16 %v3380, %v3379
        %v3413 = vpack.c.b16 %v3382, %v3381
        %v3414 = vpack.c.b16 %v3384, %v3383
        %v3415 = vpack.c.b16 %v3386, %v3385
        %v3416 = vpack.c.b16 %v3388, %v3387
        %v3417 = vpack.c.b16 %v3390, %v3389
        %v3418 = vpack.c.b16 %v3392, %v3391
        %v3419 = vpack.c.b16 %v3394, %v3393
        %v3420 = vpack.c.b16 %v3396, %v3395
        %3445 = vmatprep.subr.bf16.mxu0 0
        %3446 = vmatpush1.bf16.msra.mxu0 %v3397
        %3447 = vmatprep.subr.bf16.mxu0 0
        %3448 = vmatpush1.bf16.msra.mxu0 %v3398
        %3449 = vmatprep.subr.bf16.mxu0 0
        %3450 = vmatpush1.bf16.msra.mxu0 %v3399
        %3451 = vmatprep.subr.bf16.mxu0 0
        %3452 = vmatpush1.bf16.msra.mxu0 %v3400
        %3453 = vmatprep.subr.bf16.mxu0 0
        %3454 = vmatpush1.bf16.msra.mxu0 %v3401
        %3455 = vmatprep.subr.bf16.mxu0 0
        %3456 = vmatpush1.bf16.msra.mxu0 %v3402
        %3457 = vmatprep.subr.bf16.mxu0 0
        %3458 = vmatpush1.bf16.msra.mxu0 %v3403
        %3459 = vmatprep.subr.bf16.mxu0 0
        %3460 = vmatpush1.bf16.msra.mxu0 %v3404
        %3461 = vmatprep.subr.bf16.mxu0 0
        %3462 = vmatpush1.bf16.msra.mxu0 %v3405
        %3463 = vmatprep.subr.bf16.mxu0 0
        %3464 = vmatpush1.bf16.msra.mxu0 %v3406
        %3465 = vmatprep.subr.bf16.mxu0 0
        %3466 = vmatpush1.bf16.msra.mxu0 %v3407
        %3467 = vmatprep.subr.bf16.mxu0 0
        %3468 = vmatpush1.bf16.msra.mxu0 %v3408
        %3469 = vmatprep.subr.bf16.mxu0 0
        %3470 = vmatpush1.bf16.msra.mxu0 %v3409
        %3471 = vmatprep.subr.bf16.mxu0 0
        %3472 = vmatpush1.bf16.msra.mxu0 %v3410
        %3473 = vmatprep.subr.bf16.mxu0 0
        %3474 = vmatpush1.bf16.msra.mxu0 %v3411
        %3475 = vmatprep.subr.bf16.mxu0 0
        %3476 = vmatpush1.bf16.msra.mxu0 %v3412
        %3477 = vmatprep.mubr.bf16.mxu0 %v3241
        %3478 = vmatmul.mubr.bf16.gmra.mrb[0].mxu0 %v3240
        %v3479 = vpop.f32.mrb[0].mxu0
        %v3480 = vadd.f32 %v3299, %v3479
        %v3481 = vpop.f32.mrb[0].mxu0
        %v3482 = vpop.f32.mrb[0].mxu0
        %v3483 = vadd.f32 %v3299, %v3482
        %v3484 = vpop.f32.mrb[0].mxu0
        %3485 = vmatprep.mubr.bf16.mxu0 %v3244
        %3486 = vmatmul.mubr.bf16.gmra.mrb[0].mxu0 %v3243
        %v3487 = vpop.f32.mrb[0].mxu0
        %v3488 = vadd.f32 %v3299, %v3487
        %v3489 = vpop.f32.mrb[0].mxu0
        %v3490 = vpop.f32.mrb[0].mxu0
        %v3491 = vadd.f32 %v3299, %v3490
        %v3492 = vpop.f32.mrb[0].mxu0
        %3493 = vdwg.mxu0
        %3494 = vmatprep.subr.bf16.mxu0 0
        %3495 = vmatpush1.bf16.msra.mxu0 %v3413
        %3496 = vmatprep.subr.bf16.mxu0 0
        %3497 = vmatpush1.bf16.msra.mxu0 %v3414
        %3498 = vmatprep.subr.bf16.mxu0 0
        %3499 = vmatpush1.bf16.msra.mxu0 %v3415
        %3500 = vmatprep.subr.bf16.mxu0 0
        %3501 = vmatpush1.bf16.msra.mxu0 %v3416
        %3502 = vmatprep.subr.bf16.mxu0 0
        %3503 = vmatpush1.bf16.msra.mxu0 %v3417
        %3504 = vmatprep.subr.bf16.mxu0 0
        %3505 = vmatpush1.bf16.msra.mxu0 %v3418
        %3506 = vmatprep.subr.bf16.mxu0 0
        %3507 = vmatpush1.bf16.msra.mxu0 %v3419
        %3508 = vmatprep.subr.bf16.mxu0 0
        %3509 = vmatpush1.bf16.msra.mxu0 %v3420
        %3510 = vmatprep.subr.bf16.mxu0 0
        %3511 = vmatpush1.bf16.msra.mxu0 0
        %3512 = vmatprep.subr.bf16.mxu0 0
        %3513 = vmatpush1.bf16.msra.mxu0 0
        %3514 = vmatprep.subr.bf16.mxu0 0
        %3515 = vmatpush1.bf16.msra.mxu0 0
        %3516 = vmatprep.subr.bf16.mxu0 0
        %3517 = vmatpush1.bf16.msra.mxu0 0
        %3518 = vmatprep.subr.bf16.mxu0 0
        %3519 = vmatpush1.bf16.msra.mxu0 0
        %3520 = vmatprep.subr.bf16.mxu0 0
        %3521 = vmatpush1.bf16.msra.mxu0 0
        %3522 = vmatprep.subr.bf16.mxu0 0
        %3523 = vmatpush1.bf16.msra.mxu0 0
        %3524 = vmatprep.subr.bf16.mxu0 0
        %3525 = vmatpush1.bf16.msra.mxu0 0
        %3526 = vmatprep.mubr.bf16.mxu0 0
        %3527 = vmatmul.mubr.bf16.gmra.mrb[0].mxu0 %v3242
        %v3528 = vpop.f32.mrb[0].mxu0
        %v3529 = vadd.f32 %v3480, %v3528
        %v3530 = vpop.f32.mrb[0].mxu0
        %v3531 = vpop.f32.mrb[0].mxu0
        %v3532 = vadd.f32 %v3483, %v3531
        %v3533 = vpop.f32.mrb[0].mxu0
        %3534 = vmatprep.mubr.bf16.mxu0 0
        %3535 = vmatmul.mubr.bf16.gmra.mrb[0].mxu0 %v3245
        %v3536 = vpop.f32.mrb[0].mxu0
        %v3537 = vadd.f32 %v3488, %v3536
        %v3538 = vpop.f32.mrb[0].mxu0
        %v3539 = vpop.f32.mrb[0].mxu0
        %v3540 = vadd.f32 %v3491, %v3539
        %v3541 = vpop.f32.mrb[0].mxu0
        %3542 = vdwg.mxu0
        %v3543 = vld [vmem:[#allocation38] sm:$0x1]
        %v3545 = vlaneseq
        %v3546 = vshrl.u32 %v3545, 7
        %v3547 = vsub.s32 0, %v3546
        %v3548 = vrot.slane %v3543, %v3547
        %v3550 = vmul.f32 %v3529, %v3548
        %v3551 = vmul.f32 %v3532, %v3548
        %v3552 = vmul.f32 %v3537, %v3548
        %v3553 = vmul.f32 %v3540, %v3548
        %v3554 = vld [vmem:[#allocation40] sm:$0x1]
        %v3556 = vlaneseq
        %v3557 = vshrl.u32 %v3556, 7
        %v3558 = vsub.s32 0, %v3557
        %v3559 = vrot.slane %v3554, %v3558
        %v3561 = vadd.f32 %v3550, %v3559
        %v3562 = vadd.f32 %v3551, %v3559
        %v3563 = vadd.f32 %v3552, %v3559
        %v3564 = vadd.f32 %v3553, %v3559
        %3565 = vst [vmem:[%s1129] sm:$0xff] %v3561
        %3566 = vst [vmem:[%s1129 + $0x8] sm:$0xff] %v3562
        %3567 = vst [vmem:[%s1129 + $0x10] sm:$0xff] %v3563
        %3568 = vst [vmem:[%s1129 + $0x18] sm:$0xff] %v3564
        %s3569 = sand.u32 %s599, 1
        %s3570 = scalar_lea.sflag [#allocation4], %s3569
        %s3571 = sand.u32 %s599, 1
        %s3572 = smul.addr %s3571, 32
        %s3573 = scalar_lea.vmem [#allocation41], %s3572
        // Predicated region
        $region221: #{tpu_custom_call.1} parent=119 // pred_check
          %p3574 = pneg %p609
        $region222: #{tpu_custom_call.1} parent=119 // pred_check_branch
          %3576 = sbr.rel (%p3574) target = $region224
        $region223: #{tpu_custom_call.1} parent=119 // pred_region
          %s3577 = smul.u32 4, %s56
          %s3579 = ssub.s32 512, 512
          %3580 = vsyncadd %s3570, %s3579
          %s3581 = smul.addr %s3577, 128
          %s3582 = scalar_lea.hbm %s25, %s3581
          %s3583 = sshll.u32 %s3573, 4
          %s3584 = int_to_ptr.vmem [resolvable:$true] %s3583
          %3589 = dma.vmem_to_hbm [thread:$0]  %s3584, 512, %s3582, %s3570, 128, 128, 8
        $region224: #{tpu_custom_call.1} parent=119 // pred_fallthru
          _
      $region120: #{tpu_custom_call.1} parent=5 // pred_fallthru
        _
      %p3590 = scmp.le.s32.totalorder 2, %s51
      // Predicated region
      $region225: #{tpu_custom_call.1} parent=5 // pred_check
        %p3591 = pneg %p3590
      $region226: #{tpu_custom_call.1} parent=5 // pred_check_branch
        %3593 = sbr.rel (%p3591) target = $region228
      $region227: #{tpu_custom_call.1} parent=5 // pred_region
        %s3594 = ssub.s32 %s51, 2
        // Predicated region
        $region229: #{tpu_custom_call.1} parent=227 // pred_check
          %p3595 = pneg %p615
        $region230: #{tpu_custom_call.1} parent=227 // pred_check_branch
          %3597 = sbr.rel (%p3595) target = $region232
        $region231: #{tpu_custom_call.1} parent=227 // pred_region
          %s3598 = sand.u32 %s600, 1
          %s3599 = scalar_lea.sflag [#allocation4], %s3598
          %s3600 = sand.u32 %s600, 1
          %s3601 = smul.addr %s3600, 32
          %s3602 = scalar_lea.vmem [#allocation41], %s3601
          %3603 = dma.done %s3599, 512
        $region232: #{tpu_custom_call.1} parent=227 // pred_fallthru
          _
      $region228: #{tpu_custom_call.1} parent=5 // pred_fallthru
        _
    $region6: #{tpu_custom_call.1} parent=1 // loop_footer
      %s55 = sadd.s32 1, %s51
    $region7: #{tpu_custom_call.1} parent=1 // loop_footer_branch
      %50 = sbr.rel target = $region3
    $region8: #{tpu_custom_call.1} parent=1 // loop_exit
      _
    %3604 = vsyncpa [#allocation3], 1
    %s3605 = scalar_lea.sflag [#allocation3], 1
    %3606 = vsyncpa %s3605, 1
    %3607 = vsyncpa [#allocation6], 1
    %s3608 = scalar_lea.sflag [#allocation6], 1
    %3609 = vsyncpa %s3608, 1
    %3610 = vsyncpa [#allocation9], 1
    %3611 = vsyncpa [#allocation12], 1
    %3612 = vsyncpa [#allocation15], 1
    %3613 = vsyncpa [#allocation18], 1
    %3614 = vsyncpa [#allocation21], 1
    %3615 = vsyncpa [#allocation24], 1
    %3616 = vsyncpa [#allocation27], 1
    %3617 = vsyncpa [#allocation30], 1
    %3618 = vsyncpa [#allocation33], 1
    %3619 = vsyncpa [#allocation36], 1
    %3620 = vsyncpa [#allocation39], 1
    %3621 = vsyncpa [#allocation4], 1
    %s3622 = scalar_lea.sflag [#allocation4], 1
    %3623 = vsyncpa %s3622, 1

// kernel: tpu_custom_call.1
$region0: #{tpu_custom_call.1}
  #allocation0 [shape = 'u32[]', space=smem, size = 0x4, offset = 0x4, fixed_abs, tag = 'smem constant byte address 0x4 - core index']
  #allocation1 [shape = 'u32[144,128]{1,0:T(1,128)}', space=vmem, size = 0x12000, scoped, tag = 'internal scratch']
  %s0 = inlined_call_operand.hbm [shape: bf16[64,116], index: 0, kind: input, shape index: {}]
  %s1 = inlined_call_operand.hbm [shape: bf16[64,128], index: 1, kind: input, shape index: {}]
  %s2 = inlined_call_operand.hbm [shape: bf16[116,128], index: 2, kind: input, shape index: {}]
  %s3 = inlined_call_operand.hbm [shape: bf16[1,128], index: 3, kind: input, shape index: {}]
  %s4 = inlined_call_operand.hbm [shape: bf16[128,128], index: 4, kind: input, shape index: {}]
  %s5 = inlined_call_operand.hbm [shape: bf16[1,128], index: 5, kind: input, shape index: {}]
  %s6 = inlined_call_operand.hbm [shape: bf16[128,128], index: 6, kind: input, shape index: {}]
  %s7 = inlined_call_operand.hbm [shape: f32[1,128], index: 7, kind: input, shape index: {}]
  %s8 = inlined_call_operand.hbm [shape: bf16[128,64], index: 8, kind: input, shape index: {}]
  %s9 = inlined_call_operand.hbm [shape: bf16[1,64], index: 9, kind: input, shape index: {}]
  %s10 = inlined_call_operand.hbm [shape: bf16[64,64], index: 10, kind: input, shape index: {}]
  %s11 = inlined_call_operand.hbm [shape: bf16[1,64], index: 11, kind: input, shape index: {}]
  %s12 = inlined_call_operand.hbm [shape: bf16[64,128], index: 12, kind: input, shape index: {}]
  %s13 = inlined_call_operand.hbm [shape: f32[1,128], index: 13, kind: input, shape index: {}]
  %s14 = inlined_call_operand.hbm [shape: bf16[128,192], index: 14, kind: input, shape index: {}]
  %s15 = inlined_call_operand.hbm [shape: bf16[1,192], index: 15, kind: input, shape index: {}]
  %s16 = inlined_call_operand.hbm [shape: bf16[192,384], index: 16, kind: input, shape index: {}]
  %s17 = inlined_call_operand.hbm [shape: bf16[1,384], index: 17, kind: input, shape index: {}]
  %s18 = inlined_call_operand.hbm [shape: bf16[384,384], index: 18, kind: input, shape index: {}]
  %s19 = inlined_call_operand.hbm [shape: bf16[1,384], index: 19, kind: input, shape index: {}]
  %s20 = inlined_call_operand.hbm [shape: bf16[384,128], index: 20, kind: input, shape index: {}]
  %s21 = inlined_call_operand.hbm [shape: f32[1,128], index: 21, kind: input, shape index: {}]
  %s22 = inlined_call_operand.hbm [shape: f32[1,128], index: 22, kind: input, shape index: {}]
  %s23 = inlined_call_operand.hbm [shape: f32[1,128], index: 23, kind: input, shape index: {}]
  %s24 = inlined_call_operand.hbm [shape: f32[1,128], index: 24, kind: input, shape index: {}]
  %s25 = inlined_call_operand.hbm [shape: f32[64,128], index: 25, kind: output, shape index: {}]
  %s26 = sld [smem:[#allocation0]]
  $region233: #{tpu_custom_call.1} parent=0
    _
  %s28 = ssub.s32 1, %s26
  %s29 = scalar_select 0, %s28, %s26
  $region1: #{tpu_custom_call.1} parent=0
    #allocation2 [shape = 'u8[16384]{0}', space=vmem, size = 0x4000, scoped, tag = 'input window, operand 0']
    #allocation3 [shape = 's32[2]{0}', space=sflag, size = 0x8, scoped, tag = 'scoped memory for tpu_custom_call.1']
    #allocation4 [shape = 's32[2]{0}', space=sflag, size = 0x8, scoped, tag = 'scoped memory for tpu_custom_call.1']
    #allocation5 [shape = 'u8[16384]{0}', space=vmem, size = 0x4000, scoped, tag = 'input window, operand 1']
    #allocation6 [shape = 's32[2]{0}', space=sflag, size = 0x8, scoped, tag = 'scoped memory for tpu_custom_call.1']
    #allocation7 [shape = 'u8[30720]{0}', space=vmem, size = 0x7800, scoped, tag = 'input window, operand 2, single buffered']
    #allocation8 [shape = 'u8[512]{0}', space=vmem, size = 0x400, scoped, tag = 'input window, operand 3, single buffered']
    #allocation9 [shape = 's32[1]{0}', space=sflag, size = 0x4, scoped, tag = 'scoped memory for tpu_custom_call.1']
    #allocation10 [shape = 'u8[32768]{0}', space=vmem, size = 0x8000, scoped, tag = 'input window, operand 4, single buffered']
    #allocation11 [shape = 'u8[512]{0}', space=vmem, size = 0x400, scoped, tag = 'input window, operand 5, single buffered']
    #allocation12 [shape = 's32[1]{0}', space=sflag, size = 0x4, scoped, tag = 'scoped memory for tpu_custom_call.1']
    #allocation13 [shape = 'u8[32768]{0}', space=vmem, size = 0x8000, scoped, tag = 'input window, operand 6, single buffered']
    #allocation14 [shape = 'u8[512]{0}', space=vmem, size = 0x400, scoped, tag = 'input window, operand 7, single buffered']
    #allocation15 [shape = 's32[1]{0}', space=sflag, size = 0x4, scoped, tag = 'scoped memory for tpu_custom_call.1']
    #allocation16 [shape = 'u8[32768]{0}', space=vmem, size = 0x8000, scoped, tag = 'input window, operand 8, single buffered']
    #allocation17 [shape = 'u8[512]{0}', space=vmem, size = 0x400, scoped, tag = 'input window, operand 9, single buffered']
    #allocation18 [shape = 's32[1]{0}', space=sflag, size = 0x4, scoped, tag = 'scoped memory for tpu_custom_call.1']
    #allocation19 [shape = 'u8[16384]{0}', space=vmem, size = 0x4000, scoped, tag = 'input window, operand 10, single buffered']
    #allocation20 [shape = 'u8[512]{0}', space=vmem, size = 0x400, scoped, tag = 'input window, operand 11, single buffered']
    #allocation21 [shape = 's32[1]{0}', space=sflag, size = 0x4, scoped, tag = 'scoped memory for tpu_custom_call.1']
    #allocation22 [shape = 'u8[16384]{0}', space=vmem, size = 0x4000, scoped, tag = 'input window, operand 12, single buffered']
    #allocation23 [shape = 'u8[512]{0}', space=vmem, size = 0x400, scoped, tag = 'input window, operand 13, single buffered']
    #allocation24 [shape = 's32[1]{0}', space=sflag, size = 0x4, scoped, tag = 'scoped memory for tpu_custom_call.1']
    #allocation25 [shape = 'u8[65536]{0}', space=vmem, size = 0x10000, scoped, tag = 'input window, operand 14, single buffered']
    #allocation26 [shape = 'u8[1024]{0}', space=vmem, size = 0x400, scoped, tag = 'input window, operand 15, single buffered']
    #allocation27 [shape = 's32[1]{0}', space=sflag, size = 0x4, scoped, tag = 'scoped memory for tpu_custom_call.1']
    #allocation28 [shape = 'u8[147456]{0}', space=vmem, size = 0x24000, scoped, tag = 'input window, operand 16, single buffered']
    #allocation29 [shape = 'u8[1536]{0}', space=vmem, size = 0x800, scoped, tag = 'input window, operand 17, single buffered']
    #allocation30 [shape = 's32[1]{0}', space=sflag, size = 0x4, scoped, tag = 'scoped memory for tpu_custom_call.1']
    #allocation31 [shape = 'u8[294912]{0}', space=vmem, size = 0x48000, scoped, tag = 'input window, operand 18, single buffered']
    #allocation32 [shape = 'u8[1536]{0}', space=vmem, size = 0x800, scoped, tag = 'input window, operand 19, single buffered']
    #allocation33 [shape = 's32[1]{0}', space=sflag, size = 0x4, scoped, tag = 'scoped memory for tpu_custom_call.1']
    #allocation34 [shape = 'u8[98304]{0}', space=vmem, size = 0x18000, scoped, tag = 'input window, operand 20, single buffered']
    #allocation35 [shape = 'u8[512]{0}', space=vmem, size = 0x400, scoped, tag = 'input window, operand 21, single buffered']
    #allocation36 [shape = 's32[1]{0}', space=sflag, size = 0x4, scoped, tag = 'scoped memory for tpu_custom_call.1']
    #allocation37 [shape = 'u8[512]{0}', space=vmem, size = 0x400, scoped, tag = 'input window, operand 22, single buffered']
    #allocation38 [shape = 'u8[512]{0}', space=vmem, size = 0x400, scoped, tag = 'input window, operand 23, single buffered']
    #allocation39 [shape = 's32[1]{0}', space=sflag, size = 0x4, scoped, tag = 'scoped memory for tpu_custom_call.1']
    #allocation40 [shape = 'u8[512]{0}', space=vmem, size = 0x400, scoped, tag = 'input window, operand 24, single buffered']
    #allocation41 [shape = 'u8[32768]{0}', space=vmem, size = 0x8000, scoped, tag = 'output window, operand 0']
    %30 = vsyncpa [#allocation3], 0
    %s31 = scalar_lea.sflag [#allocation3], 1
    %32 = vsyncpa %s31, 0
    %33 = vsyncpa [#allocation6], 0
    %s34 = scalar_lea.sflag [#allocation6], 1
    %35 = vsyncpa %s34, 0
    %36 = vsyncpa [#allocation9], 0
    %37 = vsyncpa [#allocation12], 0
    %38 = vsyncpa [#allocation15], 0
    %39 = vsyncpa [#allocation18], 0
    %40 = vsyncpa [#allocation21], 0
    %41 = vsyncpa [#allocation24], 0
    %42 = vsyncpa [#allocation27], 0
    %43 = vsyncpa [#allocation30], 0
    %44 = vsyncpa [#allocation33], 0
    %45 = vsyncpa [#allocation36], 0
    %46 = vsyncpa [#allocation39], 0
    %47 = vsyncpa [#allocation4], 0
    %s48 = scalar_lea.sflag [#allocation4], 1
    %49 = vsyncpa %s48, 0
    loop: start=0, step=1, limit=4
    $region2: #{tpu_custom_call.1} parent=1 // loop_pre_header
      _
    $region3: #{tpu_custom_call.1} parent=1 // loop_header
      %s51 = sphi 0, %s55
      %p52 = scmp.ge.s32.totalorder %s51, 4
      %s61 = sphi 0, %s63
      %s64 = sphi 0, %s61
      %s65 = sphi 0, %s64
      %s81 = sphi 0, %s65
      %s87 = sphi 0, %s89
      %s90 = sphi 0, %s87
      %s91 = sphi 0, %s90
      %s107 = sphi 0, %s91
      %s111 = sphi 0, %s111
      %s113 = sphi 0, %s111
      %s114 = sphi 0, %s113
      %s128 = sphi 0, %s114
      %s132 = sphi 0, %s132
      %s134 = sphi 0, %s132
      %s135 = sphi 0, %s134
      %s149 = sphi 0, %s135
      %s153 = sphi 0, %s153
      %s155 = sphi 0, %s153
      %s156 = sphi 0, %s155
      %s170 = sphi 0, %s156
      %s174 = sphi 0, %s174
      %s176 = sphi 0, %s174
      %s177 = sphi 0, %s176
      %s191 = sphi 0, %s177
      %s195 = sphi 0, %s195
      %s197 = sphi 0, %s195
      %s198 = sphi 0, %s197
      %s212 = sphi 0, %s198
      %s216 = sphi 0, %s216
      %s218 = sphi 0, %s216
      %s219 = sphi 0, %s218
      %s233 = sphi 0, %s219
      %s237 = sphi 0, %s237
      %s239 = sphi 0, %s237
      %s240 = sphi 0, %s239
      %s254 = sphi 0, %s240
      %s258 = sphi 0, %s258
      %s260 = sphi 0, %s258
      %s261 = sphi 0, %s260
      %s275 = sphi 0, %s261
      %s279 = sphi 0, %s279
      %s281 = sphi 0, %s279
      %s282 = sphi 0, %s281
      %s296 = sphi 0, %s282
      %s300 = sphi 0, %s300
      %s302 = sphi 0, %s300
      %s303 = sphi 0, %s302
      %s317 = sphi 0, %s303
      %s321 = sphi 0, %s321
      %s323 = sphi 0, %s321
      %s324 = sphi 0, %s323
      %s338 = sphi 0, %s324
      %s342 = sphi 0, %s342
      %s344 = sphi 0, %s342
      %s345 = sphi 0, %s344
      %s359 = sphi 0, %s345
      %s363 = sphi 0, %s363
      %s365 = sphi 0, %s363
      %s366 = sphi 0, %s365
      %s380 = sphi 0, %s366
      %s384 = sphi 0, %s384
      %s386 = sphi 0, %s384
      %s387 = sphi 0, %s386
      %s401 = sphi 0, %s387
      %s405 = sphi 0, %s405
      %s407 = sphi 0, %s405
      %s408 = sphi 0, %s407
      %s422 = sphi 0, %s408
      %s426 = sphi 0, %s426
      %s428 = sphi 0, %s426
      %s429 = sphi 0, %s428
      %s443 = sphi 0, %s429
      %s447 = sphi 0, %s447
      %s449 = sphi 0, %s447
      %s450 = sphi 0, %s449
      %s464 = sphi 0, %s450
      %s468 = sphi 0, %s468
      %s470 = sphi 0, %s468
      %s471 = sphi 0, %s470
      %s485 = sphi 0, %s471
      %s489 = sphi 0, %s489
      %s491 = sphi 0, %s489
      %s492 = sphi 0, %s491
      %s506 = sphi 0, %s492
      %s510 = sphi 0, %s510
      %s512 = sphi 0, %s510
      %s513 = sphi 0, %s512
      %s527 = sphi 0, %s513
      %s531 = sphi 0, %s531
      %s533 = sphi 0, %s531
      %s534 = sphi 0, %s533
      %s548 = sphi 0, %s534
      %s552 = sphi 0, %s552
      %s554 = sphi 0, %s552
      %s555 = sphi 0, %s554
      %s569 = sphi 0, %s555
      %s573 = sphi 0, %s573
      %s575 = sphi 0, %s573
      %s576 = sphi 0, %s575
      %s590 = sphi 0, %s576
      %s596 = sphi 0, %s598
      %s599 = sphi 0, %s596
      %s600 = sphi 0, %s599
      %s616 = sphi 0, %s600
    $region4: #{tpu_custom_call.1} parent=1 // loop_header_branch
      %54 = sbr.rel (%p52) target = $region8
    $region5: #{tpu_custom_call.1} parent=1 // loop_body
      %s56 = ssub.s32 %s51, 1
      %s57 = ssub.s32 %s51, 2
      %s58 = sadd.s32 %s51, 1
      %s59 = ssub.s32 %s51, %s58
      %p60 = scmp.eq.s32.totalorder %s59, 0
      %s62 = sadd.s32 %s61, 1
      %s63 = scalar_select %p60, %s61, %s62
      %p66 = pneg %p60
      %p67 = scmp.eq.s32.totalorder %s51, 1
      %p68 = por %p66, %p67
      %p69 = scmp.ne.s32.totalorder %s61, %s64
      %p70 = scmp.eq.s32.totalorder %s51, 0
      %p71 = por %p69, %p70
      %p72 = scmp.ne.s32.totalorder %s61, %s64
      %p73 = scmp.eq.s32.totalorder %s56, 1
      %p74 = por %p72, %p73
      %p75 = scmp.ne.s32.totalorder %s64, %s65
      %p76 = scmp.eq.s32.totalorder %s56, 0
      %p77 = por %p75, %p76
      %p78 = scmp.ne.s32.totalorder %s64, %s65
      %p79 = scmp.eq.s32.totalorder %s57, 1
      %p80 = por %p78, %p79
      %p82 = scmp.ne.s32.totalorder %s65, %s81
      %p83 = scmp.eq.s32.totalorder %s57, 0
      %p84 = por %p82, %p83
      %s85 = ssub.s32 %s51, %s58
      %p86 = scmp.eq.s32.totalorder %s85, 0
      %s88 = sadd.s32 %s87, 1
      %s89 = scalar_select %p86, %s87, %s88
      %p92 = pneg %p86
      %p93 = scmp.eq.s32.totalorder %s51, 1
      %p94 = por %p92, %p93
      %p95 = scmp.ne.s32.totalorder %s87, %s90
      %p96 = scmp.eq.s32.totalorder %s51, 0
      %p97 = por %p95, %p96
      %p98 = scmp.ne.s32.totalorder %s87, %s90
      %p99 = scmp.eq.s32.totalorder %s56, 1
      %p100 = por %p98, %p99
      %p101 = scmp.ne.s32.totalorder %s90, %s91
      %p102 = scmp.eq.s32.totalorder %s56, 0
      %p103 = por %p101, %p102
      %p104 = scmp.ne.s32.totalorder %s90, %s91
      %p105 = scmp.eq.s32.totalorder %s57, 1
      %p106 = por %p104, %p105
      %p108 = scmp.ne.s32.totalorder %s91, %s107
      %p109 = scmp.eq.s32.totalorder %s57, 0
      %p110 = por %p108, %p109
      %s112 = sadd.s32 %s111, 1
      %p115 = scmp.eq.s32.totalorder %s51, 1
      %p116 = scmp.ne.s32.totalorder %s111, %s113
      %p117 = scmp.eq.s32.totalorder %s51, 0
      %p118 = por %p116, %p117
      %p119 = scmp.ne.s32.totalorder %s111, %s113
      %p120 = scmp.eq.s32.totalorder %s56, 1
      %p121 = por %p119, %p120
      %p122 = scmp.ne.s32.totalorder %s113, %s114
      %p123 = scmp.eq.s32.totalorder %s56, 0
      %p124 = por %p122, %p123
      %p125 = scmp.ne.s32.totalorder %s113, %s114
      %p126 = scmp.eq.s32.totalorder %s57, 1
      %p127 = por %p125, %p126
      %p129 = scmp.ne.s32.totalorder %s114, %s128
      %p130 = scmp.eq.s32.totalorder %s57, 0
      %p131 = por %p129, %p130
      %s133 = sadd.s32 %s132, 1
      %p136 = scmp.eq.s32.totalorder %s51, 1
      %p137 = scmp.ne.s32.totalorder %s132, %s134
      %p138 = scmp.eq.s32.totalorder %s51, 0
      %p139 = por %p137, %p138
      %p140 = scmp.ne.s32.totalorder %s132, %s134
      %p141 = scmp.eq.s32.totalorder %s56, 1
      %p142 = por %p140, %p141
      %p143 = scmp.ne.s32.totalorder %s134, %s135
      %p144 = scmp.eq.s32.totalorder %s56, 0
      %p145 = por %p143, %p144
      %p146 = scmp.ne.s32.totalorder %s134, %s135
      %p147 = scmp.eq.s32.totalorder %s57, 1
      %p148 = por %p146, %p147
      %p150 = scmp.ne.s32.totalorder %s135, %s149
      %p151 = scmp.eq.s32.totalorder %s57, 0
      %p152 = por %p150, %p151
      %s154 = sadd.s32 %s153, 1
      %p157 = scmp.eq.s32.totalorder %s51, 1
      %p158 = scmp.ne.s32.totalorder %s153, %s155
      %p159 = scmp.eq.s32.totalorder %s51, 0
      %p160 = por %p158, %p159
      %p161 = scmp.ne.s32.totalorder %s153, %s155
      %p162 = scmp.eq.s32.totalorder %s56, 1
      %p163 = por %p161, %p162
      %p164 = scmp.ne.s32.totalorder %s155, %s156
      %p165 = scmp.eq.s32.totalorder %s56, 0
      %p166 = por %p164, %p165
      %p167 = scmp.ne.s32.totalorder %s155, %s156
      %p168 = scmp.eq.s32.totalorder %s57, 1
      %p169 = por %p167, %p168
      %p171 = scmp.ne.s32.totalorder %s156, %s170
      %p172 = scmp.eq.s32.totalorder %s57, 0
      %p173 = por %p171, %p172
      %s175 = sadd.s32 %s174, 1
      %p178 = scmp.eq.s32.totalorder %s51, 1
      %p179 = scmp.ne.s32.totalorder %s174, %s176
      %p180 = scmp.eq.s32.totalorder %s51, 0
      %p181 = por %p179, %p180
      %p182 = scmp.ne.s32.totalorder %s174, %s176
      %p183 = scmp.eq.s32.totalorder %s56, 1
      %p184 = por %p182, %p183
      %p185 = scmp.ne.s32.totalorder %s176, %s177
      %p186 = scmp.eq.s32.totalorder %s56, 0
      %p187 = por %p185, %p186
      %p188 = scmp.ne.s32.totalorder %s176, %s177
      %p189 = scmp.eq.s32.totalorder %s57, 1
      %p190 = por %p188, %p189
      %p192 = scmp.ne.s32.totalorder %s177, %s191
      %p193 = scmp.eq.s32.totalorder %s57, 0
      %p194 = por %p192, %p193
      %s196 = sadd.s32 %s195, 1
      %p199 = scmp.eq.s32.totalorder %s51, 1
      %p200 = scmp.ne.s32.totalorder %s195, %s197
      %p201 = scmp.eq.s32.totalorder %s51, 0
      %p202 = por %p200, %p201
      %p203 = scmp.ne.s32.totalorder %s195, %s197
      %p204 = scmp.eq.s32.totalorder %s56, 1
      %p205 = por %p203, %p204
      %p206 = scmp.ne.s32.totalorder %s197, %s198
      %p207 = scmp.eq.s32.totalorder %s56, 0
      %p208 = por %p206, %p207
      %p209 = scmp.ne.s32.totalorder %s197, %s198
      %p210 = scmp.eq.s32.totalorder %s57, 1
      %p211 = por %p209, %p210
      %p213 = scmp.ne.s32.totalorder %s198, %s212
      %p214 = scmp.eq.s32.totalorder %s57, 0
      %p215 = por %p213, %p214
      %s217 = sadd.s32 %s216, 1
      %p220 = scmp.eq.s32.totalorder %s51, 1
      %p221 = scmp.ne.s32.totalorder %s216, %s218
      %p222 = scmp.eq.s32.totalorder %s51, 0
      %p223 = por %p221, %p222
      %p224 = scmp.ne.s32.totalorder %s216, %s218
      %p225 = scmp.eq.s32.totalorder %s56, 1
      %p226 = por %p224, %p225
      %p227 = scmp.ne.s32.totalorder %s218, %s219
      %p228 = scmp.eq.s32.totalorder %s56, 0
      %p229 = por %p227, %p228
      %p230 = scmp.ne.s32.totalorder %s218, %s219
      %p231 = scmp.eq.s32.totalorder %s57, 1
      %p232 = por %p230, %p231
      %p234 = scmp.ne.s32.totalorder %s219, %s233
      %p235 = scmp.eq.s32.totalorder %s57, 0
      %p236 = por %p234, %p235
      %s238 = sadd.s32 %s237, 1
      %p241 = scmp.eq.s32.totalorder %s51, 1
      %p242 = scmp.ne.s32.totalorder %s237, %s239
      %p243 = scmp.eq.s32.totalorder %s51, 0
      %p244 = por %p242, %p243
      %p245 = scmp.ne.s32.totalorder %s237, %s239
      %p246 = scmp.eq.s32.totalorder %s56, 1
      %p247 = por %p245, %p246
      %p248 = scmp.ne.s32.totalorder %s239, %s240
      %p249 = scmp.eq.s32.totalorder %s56, 0
      %p250 = por %p248, %p249
      %p251 = scmp.ne.s32.totalorder %s239, %s240
      %p252 = scmp.eq.s32.totalorder %s57, 1
      %p253 = por %p251, %p252
      %p255 = scmp.ne.s32.totalorder %s240, %s254
      %p256 = scmp.eq.s32.totalorder %s57, 0
      %p257 = por %p255, %p256
      %s259 = sadd.s32 %s258, 1
      %p262 = scmp.eq.s32.totalorder %s51, 1
      %p263 = scmp.ne.s32.totalorder %s258, %s260
      %p264 = scmp.eq.s32.totalorder %s51, 0
      %p265 = por %p263, %p264
      %p266 = scmp.ne.s32.totalorder %s258, %s260
      %p267 = scmp.eq.s32.totalorder %s56, 1
      %p268 = por %p266, %p267
      %p269 = scmp.ne.s32.totalorder %s260, %s261
      %p270 = scmp.eq.s32.totalorder %s56, 0
      %p271 = por %p269, %p270
      %p272 = scmp.ne.s32.totalorder %s260, %s261
      %p273 = scmp.eq.s32.totalorder %s57, 1
      %p274 = por %p272, %p273
      %p276 = scmp.ne.s32.totalorder %s261, %s275
      %p277 = scmp.eq.s32.totalorder %s57, 0
      %p278 = por %p276, %p277
      %s280 = sadd.s32 %s279, 1
      %p283 = scmp.eq.s32.totalorder %s51, 1
      %p284 = scmp.ne.s32.totalorder %s279, %s281
      %p285 = scmp.eq.s32.totalorder %s51, 0
      %p286 = por %p284, %p285
      %p287 = scmp.ne.s32.totalorder %s279, %s281
      %p288 = scmp.eq.s32.totalorder %s56, 1
      %p289 = por %p287, %p288
      %p290 = scmp.ne.s32.totalorder %s281, %s282
      %p291 = scmp.eq.s32.totalorder %s56, 0
      %p292 = por %p290, %p291
      %p293 = scmp.ne.s32.totalorder %s281, %s282
      %p294 = scmp.eq.s32.totalorder %s57, 1
      %p295 = por %p293, %p294
      %p297 = scmp.ne.s32.totalorder %s282, %s296
      %p298 = scmp.eq.s32.totalorder %s57, 0
      %p299 = por %p297, %p298
      %s301 = sadd.s32 %s300, 1
      %p304 = scmp.eq.s32.totalorder %s51, 1
      %p305 = scmp.ne.s32.totalorder %s300, %s302
      %p306 = scmp.eq.s32.totalorder %s51, 0
      %p307 = por %p305, %p306
      %p308 = scmp.ne.s32.totalorder %s300, %s302
      %p309 = scmp.eq.s32.totalorder %s56, 1
      %p310 = por %p308, %p309
      %p311 = scmp.ne.s32.totalorder %s302, %s303
      %p312 = scmp.eq.s32.totalorder %s56, 0
      %p313 = por %p311, %p312
      %p314 = scmp.ne.s32.totalorder %s302, %s303
      %p315 = scmp.eq.s32.totalorder %s57, 1
      %p316 = por %p314, %p315
      %p318 = scmp.ne.s32.totalorder %s303, %s317
      %p319 = scmp.eq.s32.totalorder %s57, 0
      %p320 = por %p318, %p319
      %s322 = sadd.s32 %s321, 1
      %p325 = scmp.eq.s32.totalorder %s51, 1
      %p326 = scmp.ne.s32.totalorder %s321, %s323
      %p327 = scmp.eq.s32.totalorder %s51, 0
      %p328 = por %p326, %p327
      %p329 = scmp.ne.s32.totalorder %s321, %s323
      %p330 = scmp.eq.s32.totalorder %s56, 1
      %p331 = por %p329, %p330
      %p332 = scmp.ne.s32.totalorder %s323, %s324
      %p333 = scmp.eq.s32.totalorder %s56, 0
      %p334 = por %p332, %p333
      %p335 = scmp.ne.s32.totalorder %s323, %s324
      %p336 = scmp.eq.s32.totalorder %s57, 1
      %p337 = por %p335, %p336
      %p339 = scmp.ne.s32.totalorder %s324, %s338
      %p340 = scmp.eq.s32.totalorder %s57, 0
      %p341 = por %p339, %p340
      %s343 = sadd.s32 %s342, 1
      %p346 = scmp.eq.s32.totalorder %s51, 1
      %p347 = scmp.ne.s32.totalorder %s342, %s344
      %p348 = scmp.eq.s32.totalorder %s51, 0
      %p349 = por %p347, %p348
      %p350 = scmp.ne.s32.totalorder %s342, %s344
      %p351 = scmp.eq.s32.totalorder %s56, 1
      %p352 = por %p350, %p351
      %p353 = scmp.ne.s32.totalorder %s344, %s345
      %p354 = scmp.eq.s32.totalorder %s56, 0
      %p355 = por %p353, %p354
      %p356 = scmp.ne.s32.totalorder %s344, %s345
      %p357 = scmp.eq.s32.totalorder %s57, 1
      %p358 = por %p356, %p357
      %p360 = scmp.ne.s32.totalorder %s345, %s359
      %p361 = scmp.eq.s32.totalorder %s57, 0
      %p362 = por %p360, %p361
      %s364 = sadd.s32 %s363, 1
      %p367 = scmp.eq.s32.totalorder %s51, 1
      %p368 = scmp.ne.s32.totalorder %s363, %s365
      %p369 = scmp.eq.s32.totalorder %s51, 0
      %p370 = por %p368, %p369
      %p371 = scmp.ne.s32.totalorder %s363, %s365
      %p372 = scmp.eq.s32.totalorder %s56, 1
      %p373 = por %p371, %p372
      %p374 = scmp.ne.s32.totalorder %s365, %s366
      %p375 = scmp.eq.s32.totalorder %s56, 0
      %p376 = por %p374, %p375
      %p377 = scmp.ne.s32.totalorder %s365, %s366
      %p378 = scmp.eq.s32.totalorder %s57, 1
      %p379 = por %p377, %p378
      %p381 = scmp.ne.s32.totalorder %s366, %s380
      %p382 = scmp.eq.s32.totalorder %s57, 0
      %p383 = por %p381, %p382
      %s385 = sadd.s32 %s384, 1
      %p388 = scmp.eq.s32.totalorder %s51, 1
      %p389 = scmp.ne.s32.totalorder %s384, %s386
      %p390 = scmp.eq.s32.totalorder %s51, 0
      %p391 = por %p389, %p390
      %p392 = scmp.ne.s32.totalorder %s384, %s386
      %p393 = scmp.eq.s32.totalorder %s56, 1
      %p394 = por %p392, %p393
      %p395 = scmp.ne.s32.totalorder %s386, %s387
      %p396 = scmp.eq.s32.totalorder %s56, 0
      %p397 = por %p395, %p396
      %p398 = scmp.ne.s32.totalorder %s386, %s387
      %p399 = scmp.eq.s32.totalorder %s57, 1
      %p400 = por %p398, %p399
      %p402 = scmp.ne.s32.totalorder %s387, %s401
      %p403 = scmp.eq.s32.totalorder %s57, 0
      %p404 = por %p402, %p403
      %s406 = sadd.s32 %s405, 1
      %p409 = scmp.eq.s32.totalorder %s51, 1
      %p410 = scmp.ne.s32.totalorder %s405, %s407
      %p411 = scmp.eq.s32.totalorder %s51, 0
      %p412 = por %p410, %p411
      %p413 = scmp.ne.s32.totalorder %s405, %s407
      %p414 = scmp.eq.s32.totalorder %s56, 1
      %p415 = por %p413, %p414
      %p416 = scmp.ne.s32.totalorder %s407, %s408
      %p417 = scmp.eq.s32.totalorder %s56, 0
      %p418 = por %p416, %p417
      %p419 = scmp.ne.s32.totalorder %s407, %s408
      %p420 = scmp.eq.s32.totalorder %s57, 1
      %p421 = por %p419, %p420
      %p423 = scmp.ne.s32.totalorder %s408, %s422
      %p424 = scmp.eq.s32.totalorder %s57, 0
      %p425 = por %p423, %p424
      %s427 = sadd.s32 %s426, 1
      %p430 = scmp.eq.s32.totalorder %s51, 1
      %p431 = scmp.ne.s32.totalorder %s426, %s428
      %p432 = scmp.eq.s32.totalorder %s51, 0
      %p433 = por %p431, %p432
      %p434 = scmp.ne.s32.totalorder %s426, %s428
      %p435 = scmp.eq.s32.totalorder %s56, 1
      %p436 = por %p434, %p435
      %p437 = scmp.ne.s32.totalorder %s428, %s429
      %p438 = scmp.eq.s32.totalorder %s56, 0
      %p439 = por %p437, %p438
      %p440 = scmp.ne.s32.totalorder %s428, %s429
      %p441 = scmp.eq.s32.totalorder %s57, 1
      %p442 = por %p440, %p441
      %p444 = scmp.ne.s32.totalorder %s429, %s443
      %p445 = scmp.eq.s32.totalorder %s57, 0
      %p446 = por %p444, %p445
      %s448 = sadd.s32 %s447, 1
      %p451 = scmp.eq.s32.totalorder %s51, 1
      %p452 = scmp.ne.s32.totalorder %s447, %s449
      %p453 = scmp.eq.s32.totalorder %s51, 0
      %p454 = por %p452, %p453
      %p455 = scmp.ne.s32.totalorder %s447, %s449
      %p456 = scmp.eq.s32.totalorder %s56, 1
      %p457 = por %p455, %p456
      %p458 = scmp.ne.s32.totalorder %s449, %s450
      %p459 = scmp.eq.s32.totalorder %s56, 0
      %p460 = por %p458, %p459
      %p461 = scmp.ne.s32.totalorder %s449, %s450
      %p462 = scmp.eq.s32.totalorder %s57, 1
      %p463 = por %p461, %p462
      %p465 = scmp.ne.s32.totalorder %s450, %s464
      %p466 = scmp.eq.s32.totalorder %s57, 0
      %p467 = por %p465, %p466
      %s469 = sadd.s32 %s468, 1
      %p472 = scmp.eq.s32.totalorder %s51, 1
      %p473 = scmp.ne.s32.totalorder %s468, %s470
      %p474 = scmp.eq.s32.totalorder %s51, 0
      %p475 = por %p473, %p474
      %p476 = scmp.ne.s32.totalorder %s468, %s470
      %p477 = scmp.eq.s32.totalorder %s56, 1
      %p478 = por %p476, %p477
      %p479 = scmp.ne.s32.totalorder %s470, %s471
      %p480 = scmp.eq.s32.totalorder %s56, 0
      %p481 = por %p479, %p480
      %p482 = scmp.ne.s32.totalorder %s470, %s471
      %p483 = scmp.eq.s32.totalorder %s57, 1
      %p484 = por %p482, %p483
      %p486 = scmp.ne.s32.totalorder %s471, %s485
      %p487 = scmp.eq.s32.totalorder %s57, 0
      %p488 = por %p486, %p487
      %s490 = sadd.s32 %s489, 1
      %p493 = scmp.eq.s32.totalorder %s51, 1
      %p494 = scmp.ne.s32.totalorder %s489, %s491
      %p495 = scmp.eq.s32.totalorder %s51, 0
      %p496 = por %p494, %p495
      %p497 = scmp.ne.s32.totalorder %s489, %s491
      %p498 = scmp.eq.s32.totalorder %s56, 1
      %p499 = por %p497, %p498
      %p500 = scmp.ne.s32.totalorder %s491, %s492
      %p501 = scmp.eq.s32.totalorder %s56, 0
      %p502 = por %p500, %p501
      %p503 = scmp.ne.s32.totalorder %s491, %s492
      %p504 = scmp.eq.s32.totalorder %s57, 1
      %p505 = por %p503, %p504
      %p507 = scmp.ne.s32.totalorder %s492, %s506
      %p508 = scmp.eq.s32.totalorder %s57, 0
      %p509 = por %p507, %p508
      %s511 = sadd.s32 %s510, 1
      %p514 = scmp.eq.s32.totalorder %s51, 1
      %p515 = scmp.ne.s32.totalorder %s510, %s512
      %p516 = scmp.eq.s32.totalorder %s51, 0
      %p517 = por %p515, %p516
      %p518 = scmp.ne.s32.totalorder %s510, %s512
      %p519 = scmp.eq.s32.totalorder %s56, 1
      %p520 = por %p518, %p519
      %p521 = scmp.ne.s32.totalorder %s512, %s513
      %p522 = scmp.eq.s32.totalorder %s56, 0
      %p523 = por %p521, %p522
      %p524 = scmp.ne.s32.totalorder %s512, %s513
      %p525 = scmp.eq.s32.totalorder %s57, 1
      %p526 = por %p524, %p525
      %p528 = scmp.ne.s32.totalorder %s513, %s527
      %p529 = scmp.eq.s32.totalorder %s57, 0
      %p530 = por %p528, %p529
      %s532 = sadd.s32 %s531, 1
      %p535 = scmp.eq.s32.totalorder %s51, 1
      %p536 = scmp.ne.s32.totalorder %s531, %s533
      %p537 = scmp.eq.s32.totalorder %s51, 0
      %p538 = por %p536, %p537
      %p539 = scmp.ne.s32.totalorder %s531, %s533
      %p540 = scmp.eq.s32.totalorder %s56, 1
      %p541 = por %p539, %p540
      %p542 = scmp.ne.s32.totalorder %s533, %s534
      %p543 = scmp.eq.s32.totalorder %s56, 0
      %p544 = por %p542, %p543
      %p545 = scmp.ne.s32.totalorder %s533, %s534
      %p546 = scmp.eq.s32.totalorder %s57, 1
      %p547 = por %p545, %p546
      %p549 = scmp.ne.s32.totalorder %s534, %s548
      %p550 = scmp.eq.s32.totalorder %s57, 0
      %p551 = por %p549, %p550
      %s553 = sadd.s32 %s552, 1
      %p556 = scmp.eq.s32.totalorder %s51, 1
      %p557 = scmp.ne.s32.totalorder %s552, %s554
      %p558 = scmp.eq.s32.totalorder %s51, 0
      %p559 = por %p557, %p558
      %p560 = scmp.ne.s32.totalorder %s552, %s554
      %p561 = scmp.eq.s32.totalorder %s56, 1
      %p562 = por %p560, %p561
      %p563 = scmp.ne.s32.totalorder %s554, %s555
      %p564 = scmp.eq.s32.totalorder %s56, 0
      %p565 = por %p563, %p564
      %p566 = scmp.ne.s32.totalorder %s554, %s555
      %p567 = scmp.eq.s32.totalorder %s57, 1
      %p568 = por %p566, %p567
      %p570 = scmp.ne.s32.totalorder %s555, %s569
      %p571 = scmp.eq.s32.totalorder %s57, 0
      %p572 = por %p570, %p571
      %s574 = sadd.s32 %s573, 1
      %p577 = scmp.eq.s32.totalorder %s51, 1
      %p578 = scmp.ne.s32.totalorder %s573, %s575
      %p579 = scmp.eq.s32.totalorder %s51, 0
      %p580 = por %p578, %p579
      %p581 = scmp.ne.s32.totalorder %s573, %s575
      %p582 = scmp.eq.s32.totalorder %s56, 1
      %p583 = por %p581, %p582
      %p584 = scmp.ne.s32.totalorder %s575, %s576
      %p585 = scmp.eq.s32.totalorder %s56, 0
      %p586 = por %p584, %p585
      %p587 = scmp.ne.s32.totalorder %s575, %s576
      %p588 = scmp.eq.s32.totalorder %s57, 1
      %p589 = por %p587, %p588
      %p591 = scmp.ne.s32.totalorder %s576, %s590
      %p592 = scmp.eq.s32.totalorder %s57, 0
      %p593 = por %p591, %p592
      %s594 = ssub.s32 %s51, %s58
      %p595 = scmp.eq.s32.totalorder %s594, 0
      %s597 = sadd.s32 %s596, 1
      %s598 = scalar_select %p595, %s596, %s597
      %p601 = pneg %p595
      %p602 = scmp.eq.s32.totalorder %s51, 1
      %p603 = por %p601, %p602
      %p604 = scmp.ne.s32.totalorder %s596, %s599
      %p605 = scmp.eq.s32.totalorder %s51, 0
      %p606 = por %p604, %p605
      %p607 = scmp.ne.s32.totalorder %s596, %s599
      %p608 = scmp.eq.s32.totalorder %s56, 1
      %p609 = por %p607, %p608
      %p610 = scmp.ne.s32.totalorder %s599, %s600
      %p611 = scmp.eq.s32.totalorder %s56, 0
      %p612 = por %p610, %p611
      %p613 = scmp.ne.s32.totalorder %s599, %s600
      %p614 = scmp.eq.s32.totalorder %s57, 1
      %p615 = por %p613, %p614
      %p617 = scmp.ne.s32.totalorder %s600, %s616
      %p618 = scmp.eq.s32.totalorder %s57, 0
      %p619 = por %p617, %p618
      %p620 = scmp.le.s32.totalorder 1, %s51
      %p621 = scmp.lt.s32.totalorder %s51, 3
      %p622 = pnand %p620, %p621
      %p623 = pneg %p622
      // Predicated region
      $region9: #{tpu_custom_call.1} parent=5 // pred_check
        _
      $region10: #{tpu_custom_call.1} parent=5 // pred_check_branch
        %625 = sbr.rel (%p622) target = $region12
      $region11: #{tpu_custom_call.1} parent=5 // pred_region
        %s626 = ssub.s32 %s51, 1
        // Predicated region
        $region13: #{tpu_custom_call.1} parent=11 // pred_check
          %p627 = pneg %p124
        $region14: #{tpu_custom_call.1} parent=11 // pred_check_branch
          %629 = sbr.rel (%p627) target = $region16
        $region15: #{tpu_custom_call.1} parent=11 // pred_region
          %s631 = ssub.s32 960, 960
          %632 = vsyncadd [#allocation6], %s631
          %s633 = sshll.u32 [#allocation7], 4
          %s634 = int_to_ptr.vmem [resolvable:$true] %s633
          %639 = dma.hbm_to_vmem [thread:$0]  %s2, 960, %s634, [#allocation6], 64, 64, 4
        $region16: #{tpu_custom_call.1} parent=11 // pred_fallthru
          _
        // Predicated region
        $region17: #{tpu_custom_call.1} parent=11 // pred_check
          %p640 = pneg %p145
        $region18: #{tpu_custom_call.1} parent=11 // pred_check_branch
          %642 = sbr.rel (%p640) target = $region20
        $region19: #{tpu_custom_call.1} parent=11 // pred_region
          %s644 = ssub.s32 16, 16
          %645 = vsyncadd [#allocation9], %s644
          %s647 = sshll.u32 [#allocation8], 4
          %s648 = int_to_ptr.vmem [resolvable:$true] %s647
          %650 = dma.hbm_to_vmem [thread:$0]  %s3, 16, %s648, [#allocation9]
        $region20: #{tpu_custom_call.1} parent=11 // pred_fallthru
          _
        // Predicated region
        $region21: #{tpu_custom_call.1} parent=11 // pred_check
          %p651 = pneg %p166
        $region22: #{tpu_custom_call.1} parent=11 // pred_check_branch
          %653 = sbr.rel (%p651) target = $region24
        $region23: #{tpu_custom_call.1} parent=11 // pred_region
          %s655 = ssub.s32 1024, 1024
          %656 = vsyncadd [#allocation9], %s655
          %s657 = sshll.u32 [#allocation10], 4
          %s658 = int_to_ptr.vmem [resolvable:$true] %s657
          %663 = dma.hbm_to_vmem [thread:$0]  %s4, 1024, %s658, [#allocation9], 64, 64, 4
        $region24: #{tpu_custom_call.1} parent=11 // pred_fallthru
          _
        // Predicated region
        $region25: #{tpu_custom_call.1} parent=11 // pred_check
          %p664 = pneg %p187
        $region26: #{tpu_custom_call.1} parent=11 // pred_check_branch
          %666 = sbr.rel (%p664) target = $region28
        $region27: #{tpu_custom_call.1} parent=11 // pred_region
          %s668 = ssub.s32 16, 16
          %669 = vsyncadd [#allocation12], %s668
          %s671 = sshll.u32 [#allocation11], 4
          %s672 = int_to_ptr.vmem [resolvable:$true] %s671
          %674 = dma.hbm_to_vmem [thread:$0]  %s5, 16, %s672, [#allocation12]
        $region28: #{tpu_custom_call.1} parent=11 // pred_fallthru
          _
        // Predicated region
        $region29: #{tpu_custom_call.1} parent=11 // pred_check
          %p675 = pneg %p208
        $region30: #{tpu_custom_call.1} parent=11 // pred_check_branch
          %677 = sbr.rel (%p675) target = $region32
        $region31: #{tpu_custom_call.1} parent=11 // pred_region
          %s679 = ssub.s32 1024, 1024
          %680 = vsyncadd [#allocation12], %s679
          %s681 = sshll.u32 [#allocation13], 4
          %s682 = int_to_ptr.vmem [resolvable:$true] %s681
          %687 = dma.hbm_to_vmem [thread:$0]  %s6, 1024, %s682, [#allocation12], 64, 64, 4
        $region32: #{tpu_custom_call.1} parent=11 // pred_fallthru
          _
        // Predicated region
        $region33: #{tpu_custom_call.1} parent=11 // pred_check
          %p688 = pneg %p229
        $region34: #{tpu_custom_call.1} parent=11 // pred_check_branch
          %690 = sbr.rel (%p688) target = $region36
        $region35: #{tpu_custom_call.1} parent=11 // pred_region
          %s692 = ssub.s32 16, 16
          %693 = vsyncadd [#allocation15], %s692
          %s695 = sshll.u32 [#allocation14], 4
          %s696 = int_to_ptr.vmem [resolvable:$true] %s695
          %698 = dma.hbm_to_vmem [thread:$0]  %s7, 16, %s696, [#allocation15]
        $region36: #{tpu_custom_call.1} parent=11 // pred_fallthru
          _
        // Predicated region
        $region37: #{tpu_custom_call.1} parent=11 // pred_check
          %p699 = pneg %p250
        $region38: #{tpu_custom_call.1} parent=11 // pred_check_branch
          %701 = sbr.rel (%p699) target = $region40
        $region39: #{tpu_custom_call.1} parent=11 // pred_region
          %s703 = ssub.s32 1024, 1024
          %704 = vsyncadd [#allocation15], %s703
          %s705 = sshll.u32 [#allocation16], 4
          %s706 = int_to_ptr.vmem [resolvable:$true] %s705
          %711 = dma.hbm_to_vmem [thread:$0]  %s8, 1024, %s706, [#allocation15], 64, 64, 4
        $region40: #{tpu_custom_call.1} parent=11 // pred_fallthru
          _
        // Predicated region
        $region41: #{tpu_custom_call.1} parent=11 // pred_check
          %p712 = pneg %p271
        $region42: #{tpu_custom_call.1} parent=11 // pred_check_branch
          %714 = sbr.rel (%p712) target = $region44
        $region43: #{tpu_custom_call.1} parent=11 // pred_region
          %s716 = ssub.s32 16, 16
          %717 = vsyncadd [#allocation18], %s716
          %s719 = sshll.u32 [#allocation17], 4
          %s720 = int_to_ptr.vmem [resolvable:$true] %s719
          %722 = dma.hbm_to_vmem [thread:$0]  %s9, 16, %s720, [#allocation18]
        $region44: #{tpu_custom_call.1} parent=11 // pred_fallthru
          _
        // Predicated region
        $region45: #{tpu_custom_call.1} parent=11 // pred_check
          %p723 = pneg %p292
        $region46: #{tpu_custom_call.1} parent=11 // pred_check_branch
          %725 = sbr.rel (%p723) target = $region48
        $region47: #{tpu_custom_call.1} parent=11 // pred_region
          %s727 = ssub.s32 512, 512
          %728 = vsyncadd [#allocation18], %s727
          %s729 = sshll.u32 [#allocation19], 4
          %s730 = int_to_ptr.vmem [resolvable:$true] %s729
          %735 = dma.hbm_to_vmem [thread:$0]  %s10, 512, %s730, [#allocation18], 64, 64, 4
        $region48: #{tpu_custom_call.1} parent=11 // pred_fallthru
          _
        // Predicated region
        $region49: #{tpu_custom_call.1} parent=11 // pred_check
          %p736 = pneg %p313
        $region50: #{tpu_custom_call.1} parent=11 // pred_check_branch
          %738 = sbr.rel (%p736) target = $region52
        $region51: #{tpu_custom_call.1} parent=11 // pred_region
          %s740 = ssub.s32 16, 16
          %741 = vsyncadd [#allocation21], %s740
          %s743 = sshll.u32 [#allocation20], 4
          %s744 = int_to_ptr.vmem [resolvable:$true] %s743
          %746 = dma.hbm_to_vmem [thread:$0]  %s11, 16, %s744, [#allocation21]
        $region52: #{tpu_custom_call.1} parent=11 // pred_fallthru
          _
        // Predicated region
        $region53: #{tpu_custom_call.1} parent=11 // pred_check
          %p747 = pneg %p334
        $region54: #{tpu_custom_call.1} parent=11 // pred_check_branch
          %749 = sbr.rel (%p747) target = $region56
        $region55: #{tpu_custom_call.1} parent=11 // pred_region
          %s751 = ssub.s32 512, 512
          %752 = vsyncadd [#allocation21], %s751
          %s753 = sshll.u32 [#allocation22], 4
          %s754 = int_to_ptr.vmem [resolvable:$true] %s753
          %759 = dma.hbm_to_vmem [thread:$0]  %s12, 512, %s754, [#allocation21], 64, 64, 4
        $region56: #{tpu_custom_call.1} parent=11 // pred_fallthru
          _
        // Predicated region
        $region57: #{tpu_custom_call.1} parent=11 // pred_check
          %p760 = pneg %p355
        $region58: #{tpu_custom_call.1} parent=11 // pred_check_branch
          %762 = sbr.rel (%p760) target = $region60
        $region59: #{tpu_custom_call.1} parent=11 // pred_region
          %s764 = ssub.s32 16, 16
          %765 = vsyncadd [#allocation24], %s764
          %s767 = sshll.u32 [#allocation23], 4
          %s768 = int_to_ptr.vmem [resolvable:$true] %s767
          %770 = dma.hbm_to_vmem [thread:$0]  %s13, 16, %s768, [#allocation24]
        $region60: #{tpu_custom_call.1} parent=11 // pred_fallthru
          _
        // Predicated region
        $region61: #{tpu_custom_call.1} parent=11 // pred_check
          %p771 = pneg %p376
        $region62: #{tpu_custom_call.1} parent=11 // pred_check_branch
          %773 = sbr.rel (%p771) target = $region64
        $region63: #{tpu_custom_call.1} parent=11 // pred_region
          %s775 = ssub.s32 2048, 2048
          %776 = vsyncadd [#allocation24], %s775
          %s777 = sshll.u32 [#allocation25], 4
          %s778 = int_to_ptr.vmem [resolvable:$true] %s777
          %783 = dma.hbm_to_vmem [thread:$0]  %s14, 2048, %s778, [#allocation24], 128, 128, 8
        $region64: #{tpu_custom_call.1} parent=11 // pred_fallthru
          _
        // Predicated region
        $region65: #{tpu_custom_call.1} parent=11 // pred_check
          %p784 = pneg %p397
        $region66: #{tpu_custom_call.1} parent=11 // pred_check_branch
          %786 = sbr.rel (%p784) target = $region68
        $region67: #{tpu_custom_call.1} parent=11 // pred_region
          %s788 = ssub.s32 32, 32
          %789 = vsyncadd [#allocation27], %s788
          %s791 = sshll.u32 [#allocation26], 4
          %s792 = int_to_ptr.vmem [resolvable:$true] %s791
          %794 = dma.hbm_to_vmem [thread:$0]  %s15, 32, %s792, [#allocation27]
        $region68: #{tpu_custom_call.1} parent=11 // pred_fallthru
          _
        // Predicated region
        $region69: #{tpu_custom_call.1} parent=11 // pred_check
          %p795 = pneg %p418
        $region70: #{tpu_custom_call.1} parent=11 // pred_check_branch
          %797 = sbr.rel (%p795) target = $region72
        $region71: #{tpu_custom_call.1} parent=11 // pred_region
          %s799 = ssub.s32 4608, 4608
          %800 = vsyncadd [#allocation27], %s799
          %s801 = sshll.u32 [#allocation28], 4
          %s802 = int_to_ptr.vmem [resolvable:$true] %s801
          %807 = dma.hbm_to_vmem [thread:$0]  %s16, 4608, %s802, [#allocation27], 192, 192, 12
        $region72: #{tpu_custom_call.1} parent=11 // pred_fallthru
          _
        // Predicated region
        $region73: #{tpu_custom_call.1} parent=11 // pred_check
          %p808 = pneg %p439
        $region74: #{tpu_custom_call.1} parent=11 // pred_check_branch
          %810 = sbr.rel (%p808) target = $region76
        $region75: #{tpu_custom_call.1} parent=11 // pred_region
          %s812 = ssub.s32 48, 48
          %813 = vsyncadd [#allocation30], %s812
          %s815 = sshll.u32 [#allocation29], 4
          %s816 = int_to_ptr.vmem [resolvable:$true] %s815
          %818 = dma.hbm_to_vmem [thread:$0]  %s17, 48, %s816, [#allocation30]
        $region76: #{tpu_custom_call.1} parent=11 // pred_fallthru
          _
        // Predicated region
        $region77: #{tpu_custom_call.1} parent=11 // pred_check
          %p819 = pneg %p460
        $region78: #{tpu_custom_call.1} parent=11 // pred_check_branch
          %821 = sbr.rel (%p819) target = $region80
        $region79: #{tpu_custom_call.1} parent=11 // pred_region
          %s823 = ssub.s32 9216, 9216
          %824 = vsyncadd [#allocation30], %s823
          %s825 = sshll.u32 [#allocation31], 4
          %s826 = int_to_ptr.vmem [resolvable:$true] %s825
          %831 = dma.hbm_to_vmem [thread:$0]  %s18, 9216, %s826, [#allocation30], 192, 192, 12
        $region80: #{tpu_custom_call.1} parent=11 // pred_fallthru
          _
        // Predicated region
        $region81: #{tpu_custom_call.1} parent=11 // pred_check
          %p832 = pneg %p481
        $region82: #{tpu_custom_call.1} parent=11 // pred_check_branch
          %834 = sbr.rel (%p832) target = $region84
        $region83: #{tpu_custom_call.1} parent=11 // pred_region
          %s836 = ssub.s32 48, 48
          %837 = vsyncadd [#allocation33], %s836
          %s839 = sshll.u32 [#allocation32], 4
          %s840 = int_to_ptr.vmem [resolvable:$true] %s839
          %842 = dma.hbm_to_vmem [thread:$0]  %s19, 48, %s840, [#allocation33]
        $region84: #{tpu_custom_call.1} parent=11 // pred_fallthru
          _
        // Predicated region
        $region85: #{tpu_custom_call.1} parent=11 // pred_check
          %p843 = pneg %p502
        $region86: #{tpu_custom_call.1} parent=11 // pred_check_branch
          %845 = sbr.rel (%p843) target = $region88
        $region87: #{tpu_custom_call.1} parent=11 // pred_region
          %s847 = ssub.s32 3072, 3072
          %848 = vsyncadd [#allocation33], %s847
          %s849 = sshll.u32 [#allocation34], 4
          %s850 = int_to_ptr.vmem [resolvable:$true] %s849
          %855 = dma.hbm_to_vmem [thread:$0]  %s20, 3072, %s850, [#allocation33], 64, 64, 4
        $region88: #{tpu_custom_call.1} parent=11 // pred_fallthru
          _
        // Predicated region
        $region89: #{tpu_custom_call.1} parent=11 // pred_check
          %p856 = pneg %p523
        $region90: #{tpu_custom_call.1} parent=11 // pred_check_branch
          %858 = sbr.rel (%p856) target = $region92
        $region91: #{tpu_custom_call.1} parent=11 // pred_region
          %s860 = ssub.s32 16, 16
          %861 = vsyncadd [#allocation36], %s860
          %s863 = sshll.u32 [#allocation35], 4
          %s864 = int_to_ptr.vmem [resolvable:$true] %s863
          %866 = dma.hbm_to_vmem [thread:$0]  %s21, 16, %s864, [#allocation36]
        $region92: #{tpu_custom_call.1} parent=11 // pred_fallthru
          _
        // Predicated region
        $region93: #{tpu_custom_call.1} parent=11 // pred_check
          %p867 = pneg %p544
        $region94: #{tpu_custom_call.1} parent=11 // pred_check_branch
          %869 = sbr.rel (%p867) target = $region96
        $region95: #{tpu_custom_call.1} parent=11 // pred_region
          %s871 = ssub.s32 16, 16
          %872 = vsyncadd [#allocation36], %s871
          %s874 = sshll.u32 [#allocation37], 4
          %s875 = int_to_ptr.vmem [resolvable:$true] %s874
          %877 = dma.hbm_to_vmem [thread:$0]  %s22, 16, %s875, [#allocation36]
        $region96: #{tpu_custom_call.1} parent=11 // pred_fallthru
          _
        // Predicated region
        $region97: #{tpu_custom_call.1} parent=11 // pred_check
          %p878 = pneg %p565
        $region98: #{tpu_custom_call.1} parent=11 // pred_check_branch
          %880 = sbr.rel (%p878) target = $region100
        $region99: #{tpu_custom_call.1} parent=11 // pred_region
          %s882 = ssub.s32 16, 16
          %883 = vsyncadd [#allocation39], %s882
          %s885 = sshll.u32 [#allocation38], 4
          %s886 = int_to_ptr.vmem [resolvable:$true] %s885
          %888 = dma.hbm_to_vmem [thread:$0]  %s23, 16, %s886, [#allocation39]
        $region100: #{tpu_custom_call.1} parent=11 // pred_fallthru
          _
        // Predicated region
        $region101: #{tpu_custom_call.1} parent=11 // pred_check
          %p889 = pneg %p586
        $region102: #{tpu_custom_call.1} parent=11 // pred_check_branch
          %891 = sbr.rel (%p889) target = $region104
        $region103: #{tpu_custom_call.1} parent=11 // pred_region
          %s893 = ssub.s32 16, 16
          %894 = vsyncadd [#allocation39], %s893
          %s896 = sshll.u32 [#allocation40], 4
          %s897 = int_to_ptr.vmem [resolvable:$true] %s896
          %899 = dma.hbm_to_vmem [thread:$0]  %s24, 16, %s897, [#allocation39]
        $region104: #{tpu_custom_call.1} parent=11 // pred_fallthru
          _
      $region12: #{tpu_custom_call.1} parent=5 // pred_fallthru
        _
      %p900 = scmp.lt.s32.totalorder %s51, 2
      // Predicated region
      $region105: #{tpu_custom_call.1} parent=5 // pred_check
        %p901 = pneg %p900
      $region106: #{tpu_custom_call.1} parent=5 // pred_check_branch
        %903 = sbr.rel (%p901) target = $region108
      $region107: #{tpu_custom_call.1} parent=5 // pred_region
        // Predicated region
        $region109: #{tpu_custom_call.1} parent=107 // pred_check
          %p904 = pneg %p71
        $region110: #{tpu_custom_call.1} parent=107 // pred_check_branch
          %906 = sbr.rel (%p904) target = $region112
        $region111: #{tpu_custom_call.1} parent=107 // pred_region
          %s907 = sand.u32 %s61, 1
          %s908 = scalar_lea.sflag [#allocation3], %s907
          %s909 = sand.u32 %s61, 1
          %s910 = smul.addr %s909, 16
          %s911 = scalar_lea.vmem [#allocation2], %s910
          %s912 = smul.u32 4, %s51
          %s914 = ssub.s32 256, 256
          %915 = vsyncadd %s908, %s914
          %s916 = smul.addr %s912, 64
          %s917 = scalar_lea.hbm %s0, %s916
          %s918 = sshll.u32 %s911, 4
          %s919 = int_to_ptr.vmem [resolvable:$true] %s918
          %924 = dma.hbm_to_vmem [thread:$0]  %s917, 256, %s919, %s908, 64, 64, 4
        $region112: #{tpu_custom_call.1} parent=107 // pred_fallthru
          _
        // Predicated region
        $region113: #{tpu_custom_call.1} parent=107 // pred_check
          %p925 = pneg %p97
        $region114: #{tpu_custom_call.1} parent=107 // pred_check_branch
          %927 = sbr.rel (%p925) target = $region116
        $region115: #{tpu_custom_call.1} parent=107 // pred_region
          %s928 = sand.u32 %s51, 1
          %s929 = scalar_lea.sflag [#allocation6], %s928
          %s930 = sand.u32 %s87, 1
          %s931 = smul.addr %s930, 16
          %s932 = scalar_lea.vmem [#allocation5], %s931
          %s933 = smul.u32 4, %s51
          %s935 = ssub.s32 256, 256
          %936 = vsyncadd %s929, %s935
          %s937 = smul.addr %s933, 64
          %s938 = scalar_lea.hbm %s1, %s937
          %s939 = sshll.u32 %s932, 4
          %s940 = int_to_ptr.vmem [resolvable:$true] %s939
          %945 = dma.hbm_to_vmem [thread:$0]  %s938, 256, %s940, %s929, 64, 64, 4
        $region116: #{tpu_custom_call.1} parent=107 // pred_fallthru
          _
      $region108: #{tpu_custom_call.1} parent=5 // pred_fallthru
        _
      %p946 = scmp.le.s32.totalorder 1, %s51
      %p947 = scmp.lt.s32.totalorder %s51, 3
      %p948 = pnand %p946, %p947
      %p949 = pneg %p948
      // Predicated region
      $region117: #{tpu_custom_call.1} parent=5 // pred_check
        _
      $region118: #{tpu_custom_call.1} parent=5 // pred_check_branch
        %951 = sbr.rel (%p948) target = $region120
      $region119: #{tpu_custom_call.1} parent=5 // pred_region
        %s952 = ssub.s32 %s51, 1
        %s953 = sand.u32 %s64, 1
        %s954 = scalar_lea.sflag [#allocation3], %s953
        %s955 = sand.u32 %s64, 1
        %s956 = smul.addr %s955, 16
        %s957 = scalar_lea.vmem [#allocation2], %s956
        // Predicated region
        $region121: #{tpu_custom_call.1} parent=119 // pred_check
          %p958 = pneg %p77
        $region122: #{tpu_custom_call.1} parent=119 // pred_check_branch
          %960 = sbr.rel (%p958) target = $region124
        $region123: #{tpu_custom_call.1} parent=119 // pred_region
          %961 = dma.done %s954, 256
        $region124: #{tpu_custom_call.1} parent=119 // pred_fallthru
          _
        %s962 = sand.u32 %s56, 1
        %s963 = scalar_lea.sflag [#allocation6], %s962
        %s964 = sand.u32 %s90, 1
        %s965 = smul.addr %s964, 16
        %s966 = scalar_lea.vmem [#allocation5], %s965
        // Predicated region
        $region125: #{tpu_custom_call.1} parent=119 // pred_check
          %p967 = pneg %p103
        $region126: #{tpu_custom_call.1} parent=119 // pred_check_branch
          %969 = sbr.rel (%p967) target = $region128
        $region127: #{tpu_custom_call.1} parent=119 // pred_region
          %970 = dma.done %s963, 256
        $region128: #{tpu_custom_call.1} parent=119 // pred_fallthru
          _
        // Predicated region
        $region129: #{tpu_custom_call.1} parent=119 // pred_check
          %p971 = pneg %p124
        $region130: #{tpu_custom_call.1} parent=119 // pred_check_branch
          %973 = sbr.rel (%p971) target = $region132
        $region131: #{tpu_custom_call.1} parent=119 // pred_region
          %974 = dma.done [#allocation6], 960
        $region132: #{tpu_custom_call.1} parent=119 // pred_fallthru
          _
        // Predicated region
        $region133: #{tpu_custom_call.1} parent=119 // pred_check
          %p975 = pneg %p145
        $region134: #{tpu_custom_call.1} parent=119 // pred_check_branch
          %977 = sbr.rel (%p975) target = $region136
        $region135: #{tpu_custom_call.1} parent=119 // pred_region
          %978 = dma.done [#allocation9], 16
        $region136: #{tpu_custom_call.1} parent=119 // pred_fallthru
          _
        // Predicated region
        $region137: #{tpu_custom_call.1} parent=119 // pred_check
          %p979 = pneg %p166
        $region138: #{tpu_custom_call.1} parent=119 // pred_check_branch
          %981 = sbr.rel (%p979) target = $region140
        $region139: #{tpu_custom_call.1} parent=119 // pred_region
          %982 = dma.done [#allocation9], 1024
        $region140: #{tpu_custom_call.1} parent=119 // pred_fallthru
          _
        // Predicated region
        $region141: #{tpu_custom_call.1} parent=119 // pred_check
          %p983 = pneg %p187
        $region142: #{tpu_custom_call.1} parent=119 // pred_check_branch
          %985 = sbr.rel (%p983) target = $region144
        $region143: #{tpu_custom_call.1} parent=119 // pred_region
          %986 = dma.done [#allocation12], 16
        $region144: #{tpu_custom_call.1} parent=119 // pred_fallthru
          _
        // Predicated region
        $region145: #{tpu_custom_call.1} parent=119 // pred_check
          %p987 = pneg %p208
        $region146: #{tpu_custom_call.1} parent=119 // pred_check_branch
          %989 = sbr.rel (%p987) target = $region148
        $region147: #{tpu_custom_call.1} parent=119 // pred_region
          %990 = dma.done [#allocation12], 1024
        $region148: #{tpu_custom_call.1} parent=119 // pred_fallthru
          _
        // Predicated region
        $region149: #{tpu_custom_call.1} parent=119 // pred_check
          %p991 = pneg %p229
        $region150: #{tpu_custom_call.1} parent=119 // pred_check_branch
          %993 = sbr.rel (%p991) target = $region152
        $region151: #{tpu_custom_call.1} parent=119 // pred_region
          %994 = dma.done [#allocation15], 16
        $region152: #{tpu_custom_call.1} parent=119 // pred_fallthru
          _
        // Predicated region
        $region153: #{tpu_custom_call.1} parent=119 // pred_check
          %p995 = pneg %p250
        $region154: #{tpu_custom_call.1} parent=119 // pred_check_branch
          %997 = sbr.rel (%p995) target = $region156
        $region155: #{tpu_custom_call.1} parent=119 // pred_region
          %998 = dma.done [#allocation15], 1024
        $region156: #{tpu_custom_call.1} parent=119 // pred_fallthru
          _
        // Predicated region
        $region157: #{tpu_custom_call.1} parent=119 // pred_check
          %p999 = pneg %p271
        $region158: #{tpu_custom_call.1} parent=119 // pred_check_branch
          %1001 = sbr.rel (%p999) target = $region160
        $region159: #{tpu_custom_call.1} parent=119 // pred_region
          %1002 = dma.done [#allocation18], 16
        $region160: #{tpu_custom_call.1} parent=119 // pred_fallthru
          _
        // Predicated region
        $region161: #{tpu_custom_call.1} parent=119 // pred_check
          %p1003 = pneg %p292
        $region162: #{tpu_custom_call.1} parent=119 // pred_check_branch
          %1005 = sbr.rel (%p1003) target = $region164
        $region163: #{tpu_custom_call.1} parent=119 // pred_region
          %1006 = dma.done [#allocation18], 512
        $region164: #{tpu_custom_call.1} parent=119 // pred_fallthru
          _
        // Predicated region
        $region165: #{tpu_custom_call.1} parent=119 // pred_check
          %p1007 = pneg %p313
        $region166: #{tpu_custom_call.1} parent=119 // pred_check_branch
          %1009 = sbr.rel (%p1007) target = $region168
        $region167: #{tpu_custom_call.1} parent=119 // pred_region
          %1010 = dma.done [#allocation21], 16
        $region168: #{tpu_custom_call.1} parent=119 // pred_fallthru
          _
        // Predicated region
        $region169: #{tpu_custom_call.1} parent=119 // pred_check
          %p1011 = pneg %p334
        $region170: #{tpu_custom_call.1} parent=119 // pred_check_branch
          %1013 = sbr.rel (%p1011) target = $region172
        $region171: #{tpu_custom_call.1} parent=119 // pred_region
          %1014 = dma.done [#allocation21], 512
        $region172: #{tpu_custom_call.1} parent=119 // pred_fallthru
          _
        // Predicated region
        $region173: #{tpu_custom_call.1} parent=119 // pred_check
          %p1015 = pneg %p355
        $region174: #{tpu_custom_call.1} parent=119 // pred_check_branch
          %1017 = sbr.rel (%p1015) target = $region176
        $region175: #{tpu_custom_call.1} parent=119 // pred_region
          %1018 = dma.done [#allocation24], 16
        $region176: #{tpu_custom_call.1} parent=119 // pred_fallthru
          _
        // Predicated region
        $region177: #{tpu_custom_call.1} parent=119 // pred_check
          %p1019 = pneg %p376
        $region178: #{tpu_custom_call.1} parent=119 // pred_check_branch
          %1021 = sbr.rel (%p1019) target = $region180
        $region179: #{tpu_custom_call.1} parent=119 // pred_region
          %1022 = dma.done [#allocation24], 2048
        $region180: #{tpu_custom_call.1} parent=119 // pred_fallthru
          _
        // Predicated region
        $region181: #{tpu_custom_call.1} parent=119 // pred_check
          %p1023 = pneg %p397
        $region182: #{tpu_custom_call.1} parent=119 // pred_check_branch
          %1025 = sbr.rel (%p1023) target = $region184
        $region183: #{tpu_custom_call.1} parent=119 // pred_region
          %1026 = dma.done [#allocation27], 32
        $region184: #{tpu_custom_call.1} parent=119 // pred_fallthru
          _
        // Predicated region
        $region185: #{tpu_custom_call.1} parent=119 // pred_check
          %p1027 = pneg %p418
        $region186: #{tpu_custom_call.1} parent=119 // pred_check_branch
          %1029 = sbr.rel (%p1027) target = $region188
        $region187: #{tpu_custom_call.1} parent=119 // pred_region
          %1030 = dma.done [#allocation27], 4608
        $region188: #{tpu_custom_call.1} parent=119 // pred_fallthru
          _
        // Predicated region
        $region189: #{tpu_custom_call.1} parent=119 // pred_check
          %p1031 = pneg %p439
        $region190: #{tpu_custom_call.1} parent=119 // pred_check_branch
          %1033 = sbr.rel (%p1031) target = $region192
        $region191: #{tpu_custom_call.1} parent=119 // pred_region
          %1034 = dma.done [#allocation30], 48
        $region192: #{tpu_custom_call.1} parent=119 // pred_fallthru
          _
        // Predicated region
        $region193: #{tpu_custom_call.1} parent=119 // pred_check
          %p1035 = pneg %p460
        $region194: #{tpu_custom_call.1} parent=119 // pred_check_branch
          %1037 = sbr.rel (%p1035) target = $region196
        $region195: #{tpu_custom_call.1} parent=119 // pred_region
          %1038 = dma.done [#allocation30], 9216
        $region196: #{tpu_custom_call.1} parent=119 // pred_fallthru
          _
        // Predicated region
        $region197: #{tpu_custom_call.1} parent=119 // pred_check
          %p1039 = pneg %p481
        $region198: #{tpu_custom_call.1} parent=119 // pred_check_branch
          %1041 = sbr.rel (%p1039) target = $region200
        $region199: #{tpu_custom_call.1} parent=119 // pred_region
          %1042 = dma.done [#allocation33], 48
        $region200: #{tpu_custom_call.1} parent=119 // pred_fallthru
          _
        // Predicated region
        $region201: #{tpu_custom_call.1} parent=119 // pred_check
          %p1043 = pneg %p502
        $region202: #{tpu_custom_call.1} parent=119 // pred_check_branch
          %1045 = sbr.rel (%p1043) target = $region204
        $region203: #{tpu_custom_call.1} parent=119 // pred_region
          %1046 = dma.done [#allocation33], 3072
        $region204: #{tpu_custom_call.1} parent=119 // pred_fallthru
          _
        // Predicated region
        $region205: #{tpu_custom_call.1} parent=119 // pred_check
          %p1047 = pneg %p523
        $region206: #{tpu_custom_call.1} parent=119 // pred_check_branch
          %1049 = sbr.rel (%p1047) target = $region208
        $region207: #{tpu_custom_call.1} parent=119 // pred_region
          %1050 = dma.done [#allocation36], 16
        $region208: #{tpu_custom_call.1} parent=119 // pred_fallthru
          _
        // Predicated region
        $region209: #{tpu_custom_call.1} parent=119 // pred_check
          %p1051 = pneg %p544
        $region210: #{tpu_custom_call.1} parent=119 // pred_check_branch
          %1053 = sbr.rel (%p1051) target = $region212
        $region211: #{tpu_custom_call.1} parent=119 // pred_region
          %1054 = dma.done [#allocation36], 16
        $region212: #{tpu_custom_call.1} parent=119 // pred_fallthru
          _
        // Predicated region
        $region213: #{tpu_custom_call.1} parent=119 // pred_check
          %p1055 = pneg %p565
        $region214: #{tpu_custom_call.1} parent=119 // pred_check_branch
          %1057 = sbr.rel (%p1055) target = $region216
        $region215: #{tpu_custom_call.1} parent=119 // pred_region
          %1058 = dma.done [#allocation39], 16
        $region216: #{tpu_custom_call.1} parent=119 // pred_fallthru
          _
        // Predicated region
        $region217: #{tpu_custom_call.1} parent=119 // pred_check
          %p1059 = pneg %p586
        $region218: #{tpu_custom_call.1} parent=119 // pred_check_branch
          %1061 = sbr.rel (%p1059) target = $region220
        $region219: #{tpu_custom_call.1} parent=119 // pred_region
          %1062 = dma.done [#allocation39], 16
        $region220: #{tpu_custom_call.1} parent=119 // pred_fallthru
          _
        %s1063 = sand.u32 %s64, 1
        %s1064 = scalar_lea.sflag [#allocation3], %s1063
        %s1065 = sand.u32 %s64, 1
        %s1066 = smul.addr %s1065, 16
        %s1067 = scalar_lea.vmem [#allocation2], %s1066
        %p1068 = pneg %p77
        %p1069 = pneg %p74
        %s1070 = sand.u32 %s56, 1
        %s1071 = scalar_lea.sflag [#allocation6], %s1070
        %s1072 = sand.u32 %s90, 1
        %s1073 = smul.addr %s1072, 16
        %s1074 = scalar_lea.vmem [#allocation5], %s1073
        %p1075 = pneg %p103
        %p1076 = pneg %p100
        %p1077 = pneg %p124
        %p1078 = pneg %p121
        %p1079 = pneg %p145
        %p1080 = pneg %p142
        %p1081 = pneg %p166
        %p1082 = pneg %p163
        %p1083 = pneg %p187
        %p1084 = pneg %p184
        %p1085 = pneg %p208
        %p1086 = pneg %p205
        %p1087 = pneg %p229
        %p1088 = pneg %p226
        %p1089 = pneg %p250
        %p1090 = pneg %p247
        %p1091 = pneg %p271
        %p1092 = pneg %p268
        %p1093 = pneg %p292
        %p1094 = pneg %p289
        %p1095 = pneg %p313
        %p1096 = pneg %p310
        %p1097 = pneg %p334
        %p1098 = pneg %p331
        %p1099 = pneg %p355
        %p1100 = pneg %p352
        %p1101 = pneg %p376
        %p1102 = pneg %p373
        %p1103 = pneg %p397
        %p1104 = pneg %p394
        %p1105 = pneg %p418
        %p1106 = pneg %p415
        %p1107 = pneg %p439
        %p1108 = pneg %p436
        %p1109 = pneg %p460
        %p1110 = pneg %p457
        %p1111 = pneg %p481
        %p1112 = pneg %p478
        %p1113 = pneg %p502
        %p1114 = pneg %p499
        %p1115 = pneg %p523
        %p1116 = pneg %p520
        %p1117 = pneg %p544
        %p1118 = pneg %p541
        %p1119 = pneg %p565
        %p1120 = pneg %p562
        %p1121 = pneg %p586
        %p1122 = pneg %p583
        %p1123 = pneg %p612
        %p1124 = pneg %p609
        %s1125 = sand.u32 %s599, 1
        %s1126 = scalar_lea.sflag [#allocation4], %s1125
        %s1127 = sand.u32 %s599, 1
        %s1128 = smul.addr %s1127, 32
        %s1129 = scalar_lea.vmem [#allocation41], %s1128
        %s1130 = smul.u32 4, %s56
        %s1131 = smul.u32 4, %s56
        %s1132 = smul.u32 4, %s56
        %v1134 = vld [vmem:[%s957] sm:$0xf]
        %v1135 = vld [vmem:[%s957 + $0x4] sm:$0xf]
        %v1136 = vld [vmem:[%s957 + $0x8] sm:$0xf]
        %v1137 = vld [vmem:[%s957 + $0xc] sm:$0xf]
        %v1138 = vld [vmem:[%s966] sm:$0xf]
        %v1139 = vld [vmem:[%s966 + $0x4] sm:$0xf]
        %v1140 = vld [vmem:[%s966 + $0x8] sm:$0xf]
        %v1141 = vld [vmem:[%s966 + $0xc] sm:$0xf]
        %v1142 = vld [vmem:[#allocation7] sm:$0xf]
        %v1143 = vld [vmem:[#allocation7 + $0x4] sm:$0xf]
        %v1144 = vld [vmem:[#allocation7 + $0x8] sm:$0xf]
        %v1145 = vld [vmem:[#allocation7 + $0xc] sm:$0xf]
        %v1146 = vld [vmem:[#allocation7 + $0x10] sm:$0xf]
        %v1147 = vld [vmem:[#allocation7 + $0x14] sm:$0xf]
        %v1148 = vld [vmem:[#allocation7 + $0x18] sm:$0xf]
        %v1149 = vld [vmem:[#allocation7 + $0x1c] sm:$0xf]
        %v1150 = vld [vmem:[#allocation7 + $0x20] sm:$0xf]
        %v1151 = vld [vmem:[#allocation7 + $0x24] sm:$0xf]
        %v1152 = vld [vmem:[#allocation7 + $0x28] sm:$0xf]
        %v1153 = vld [vmem:[#allocation7 + $0x2c] sm:$0xf]
        %v1154 = vld [vmem:[#allocation7 + $0x30] sm:$0xf]
        %v1155 = vld [vmem:[#allocation7 + $0x34] sm:$0xf]
        %v1156 = vld [vmem:[#allocation7 + $0x38] sm:$0x3]
        %v1161 = vunpack.c.l.b16 %v1134
        %v1162 = vunpack.c.l.b16 %v1135
        %v1163 = vunpack.c.l.b16 %v1136
        %v1164 = vunpack.c.l.b16 %v1137
        %v1165 = vpack.c.b16 %v1162, %v1161
        %v1166 = vpack.c.b16 %v1164, %v1163
        %v1182 = vunpack.c.l.b16 %v1142
        %v1183 = vunpack.c.l.b16 %v1143
        %v1184 = vunpack.c.l.b16 %v1144
        %v1185 = vunpack.c.l.b16 %v1145
        %v1186 = vunpack.c.l.b16 %v1146
        %v1187 = vunpack.c.l.b16 %v1147
        %v1188 = vunpack.c.l.b16 %v1148
        %v1189 = vunpack.c.l.b16 %v1149
        %v1190 = vunpack.c.l.b16 %v1150
        %v1191 = vunpack.c.l.b16 %v1151
        %v1192 = vunpack.c.l.b16 %v1152
        %v1193 = vunpack.c.l.b16 %v1153
        %v1194 = vunpack.c.l.b16 %v1154
        %v1195 = vunpack.c.l.b16 %v1155
        %v1196 = vunpack.c.l.b16 %v1156
        %v1197 = vpack.c.b16 %v1183, %v1182
        %v1198 = vpack.c.b16 %v1185, %v1184
        %v1199 = vpack.c.b16 %v1187, %v1186
        %v1200 = vpack.c.b16 %v1189, %v1188
        %v1201 = vpack.c.b16 %v1191, %v1190
        %v1202 = vpack.c.b16 %v1193, %v1192
        %v1203 = vpack.c.b16 %v1195, %v1194
        %v1204 = vpack.c.b16 %v1196, %v1196
        %vm1212 = vcmask 949248
        %v1214 = vsel %vm1212, %v1165, 0
        %v1217 = vsel %vm1212, %v1166, 0
        %vm1219 = vcmask 1041408
        %v1221 = vsel %vm1219, %v1204, 0
        %1223 = vmatprep.subr.bf16.mxu0 0
        %1224 = vmatpush1.bf16.msra.mxu0 %v1197
        %1225 = vmatprep.subr.bf16.mxu0 0
        %1226 = vmatpush1.bf16.msra.mxu0 %v1198
        %1227 = vmatprep.subr.bf16.mxu0 0
        %1228 = vmatpush1.bf16.msra.mxu0 %v1199
        %1229 = vmatprep.subr.bf16.mxu0 0
        %1230 = vmatpush1.bf16.msra.mxu0 %v1200
        %1231 = vmatprep.subr.bf16.mxu0 0
        %1232 = vmatpush1.bf16.msra.mxu0 %v1201
        %1233 = vmatprep.subr.bf16.mxu0 0
        %1234 = vmatpush1.bf16.msra.mxu0 %v1202
        %1235 = vmatprep.subr.bf16.mxu0 0
        %1236 = vmatpush1.bf16.msra.mxu0 %v1203
        %1237 = vmatprep.subr.bf16.mxu0 0
        %1238 = vmatpush1.bf16.msra.mxu0 %v1221
        %1239 = vmatprep.subr.bf16.mxu0 0
        %1240 = vmatpush1.bf16.msra.mxu0 0
        %1241 = vmatprep.subr.bf16.mxu0 0
        %1242 = vmatpush1.bf16.msra.mxu0 0
        %1243 = vmatprep.subr.bf16.mxu0 0
        %1244 = vmatpush1.bf16.msra.mxu0 0
        %1245 = vmatprep.subr.bf16.mxu0 0
        %1246 = vmatpush1.bf16.msra.mxu0 0
        %1247 = vmatprep.subr.bf16.mxu0 0
        %1248 = vmatpush1.bf16.msra.mxu0 0
        %1249 = vmatprep.subr.bf16.mxu0 0
        %1250 = vmatpush1.bf16.msra.mxu0 0
        %1251 = vmatprep.subr.bf16.mxu0 0
        %1252 = vmatpush1.bf16.msra.mxu0 0
        %1253 = vmatprep.subr.bf16.mxu0 0
        %1254 = vmatpush1.bf16.msra.mxu0 0
        %1255 = vmatprep.mubr.bf16.mxu0 0
        %1256 = vmatmul.mubr.bf16.gmra.mrb[0].mxu0 %v1214
        %v1257 = vpop.f32.mrb[0].mxu0
        %v1258 = vadd.f32 0.0, %v1257
        %v1259 = vpop.f32.mrb[0].mxu0
        %v1260 = vpop.f32.mrb[0].mxu0
        %v1261 = vadd.f32 0.0, %v1260
        %v1262 = vpop.f32.mrb[0].mxu0
        %1263 = vmatprep.mubr.bf16.mxu0 0
        %1264 = vmatmul.mubr.bf16.gmra.mrb[0].mxu0 %v1217
        %v1265 = vpop.f32.mrb[0].mxu0
        %v1266 = vadd.f32 0.0, %v1265
        %v1267 = vpop.f32.mrb[0].mxu0
        %v1268 = vpop.f32.mrb[0].mxu0
        %v1269 = vadd.f32 0.0, %v1268
        %v1270 = vpop.f32.mrb[0].mxu0
        %1271 = vdwg.mxu0
        %v1272 = vpack.c.bf16 %v1261, %v1258
        %v1273 = vpack.c.bf16 %v1269, %v1266
        %v1274 = vld [vmem:[#allocation8] sm:$0x1]
        %v1276 = vpack.i.b16 %v1274, %v1274
        %v1278 = vlaneseq
        %v1279 = vshrl.u32 %v1278, 7
        %v1280 = vsub.s32 0, %v1279
        %v1281 = vrot.slane %v1276, %v1280
        %v1282 = vadd.bf16 %v1272, %v1281
        %v1283 = vadd.bf16 %v1273, %v1281
        %v1284 = vmax.bf16 %v1282, 0
        %v1285 = vmax.bf16 %v1283, 0
        %v1286 = vld [vmem:[#allocation10] sm:$0xf]
        %v1287 = vld [vmem:[#allocation10 + $0x4] sm:$0xf]
        %v1288 = vld [vmem:[#allocation10 + $0x8] sm:$0xf]
        %v1289 = vld [vmem:[#allocation10 + $0xc] sm:$0xf]
        %v1290 = vld [vmem:[#allocation10 + $0x10] sm:$0xf]
        %v1291 = vld [vmem:[#allocation10 + $0x14] sm:$0xf]
        %v1292 = vld [vmem:[#allocation10 + $0x18] sm:$0xf]
        %v1293 = vld [vmem:[#allocation10 + $0x1c] sm:$0xf]
        %v1294 = vld [vmem:[#allocation10 + $0x20] sm:$0xf]
        %v1295 = vld [vmem:[#allocation10 + $0x24] sm:$0xf]
        %v1296 = vld [vmem:[#allocation10 + $0x28] sm:$0xf]
        %v1297 = vld [vmem:[#allocation10 + $0x2c] sm:$0xf]
        %v1298 = vld [vmem:[#allocation10 + $0x30] sm:$0xf]
        %v1299 = vld [vmem:[#allocation10 + $0x34] sm:$0xf]
        %v1300 = vld [vmem:[#allocation10 + $0x38] sm:$0xf]
        %v1301 = vld [vmem:[#allocation10 + $0x3c] sm:$0xf]
        %v1318 = vunpack.c.l.b16 %v1286
        %v1319 = vunpack.c.l.b16 %v1287
        %v1320 = vunpack.c.l.b16 %v1288
        %v1321 = vunpack.c.l.b16 %v1289
        %v1322 = vunpack.c.l.b16 %v1290
        %v1323 = vunpack.c.l.b16 %v1291
        %v1324 = vunpack.c.l.b16 %v1292
        %v1325 = vunpack.c.l.b16 %v1293
        %v1326 = vunpack.c.l.b16 %v1294
        %v1327 = vunpack.c.l.b16 %v1295
        %v1328 = vunpack.c.l.b16 %v1296
        %v1329 = vunpack.c.l.b16 %v1297
        %v1330 = vunpack.c.l.b16 %v1298
        %v1331 = vunpack.c.l.b16 %v1299
        %v1332 = vunpack.c.l.b16 %v1300
        %v1333 = vunpack.c.l.b16 %v1301
        %v1334 = vpack.c.b16 %v1319, %v1318
        %v1335 = vpack.c.b16 %v1321, %v1320
        %v1336 = vpack.c.b16 %v1323, %v1322
        %v1337 = vpack.c.b16 %v1325, %v1324
        %v1338 = vpack.c.b16 %v1327, %v1326
        %v1339 = vpack.c.b16 %v1329, %v1328
        %v1340 = vpack.c.b16 %v1331, %v1330
        %v1341 = vpack.c.b16 %v1333, %v1332
        %1350 = vmatprep.subr.bf16.mxu0 0
        %1351 = vmatpush1.bf16.msra.mxu0 %v1334
        %1352 = vmatprep.subr.bf16.mxu0 0
        %1353 = vmatpush1.bf16.msra.mxu0 %v1335
        %1354 = vmatprep.subr.bf16.mxu0 0
        %1355 = vmatpush1.bf16.msra.mxu0 %v1336
        %1356 = vmatprep.subr.bf16.mxu0 0
        %1357 = vmatpush1.bf16.msra.mxu0 %v1337
        %1358 = vmatprep.subr.bf16.mxu0 0
        %1359 = vmatpush1.bf16.msra.mxu0 %v1338
        %1360 = vmatprep.subr.bf16.mxu0 0
        %1361 = vmatpush1.bf16.msra.mxu0 %v1339
        %1362 = vmatprep.subr.bf16.mxu0 0
        %1363 = vmatpush1.bf16.msra.mxu0 %v1340
        %1364 = vmatprep.subr.bf16.mxu0 0
        %1365 = vmatpush1.bf16.msra.mxu0 %v1341
        %1366 = vmatprep.subr.bf16.mxu0 0
        %1367 = vmatpush1.bf16.msra.mxu0 0
        %1368 = vmatprep.subr.bf16.mxu0 0
        %1369 = vmatpush1.bf16.msra.mxu0 0
        %1370 = vmatprep.subr.bf16.mxu0 0
        %1371 = vmatpush1.bf16.msra.mxu0 0
        %1372 = vmatprep.subr.bf16.mxu0 0
        %1373 = vmatpush1.bf16.msra.mxu0 0
        %1374 = vmatprep.subr.bf16.mxu0 0
        %1375 = vmatpush1.bf16.msra.mxu0 0
        %1376 = vmatprep.subr.bf16.mxu0 0
        %1377 = vmatpush1.bf16.msra.mxu0 0
        %1378 = vmatprep.subr.bf16.mxu0 0
        %1379 = vmatpush1.bf16.msra.mxu0 0
        %1380 = vmatprep.subr.bf16.mxu0 0
        %1381 = vmatpush1.bf16.msra.mxu0 0
        %1382 = vmatprep.mubr.bf16.mxu0 0
        %1383 = vmatmul.mubr.bf16.gmra.mrb[0].mxu0 %v1284
        %v1384 = vpop.f32.mrb[0].mxu0
        %v1385 = vadd.f32 0.0, %v1384
        %v1386 = vpop.f32.mrb[0].mxu0
        %v1387 = vpop.f32.mrb[0].mxu0
        %v1388 = vadd.f32 0.0, %v1387
        %v1389 = vpop.f32.mrb[0].mxu0
        %1390 = vmatprep.mubr.bf16.mxu0 0
        %1391 = vmatmul.mubr.bf16.gmra.mrb[0].mxu0 %v1285
        %v1392 = vpop.f32.mrb[0].mxu0
        %v1393 = vadd.f32 0.0, %v1392
        %v1394 = vpop.f32.mrb[0].mxu0
        %v1395 = vpop.f32.mrb[0].mxu0
        %v1396 = vadd.f32 0.0, %v1395
        %v1397 = vpop.f32.mrb[0].mxu0
        %1398 = vdwg.mxu0
        %v1399 = vpack.c.bf16 %v1388, %v1385
        %v1400 = vpack.c.bf16 %v1396, %v1393
        %v1401 = vld [vmem:[#allocation11] sm:$0x1]
        %v1403 = vpack.i.b16 %v1401, %v1401
        %v1405 = vlaneseq
        %v1406 = vshrl.u32 %v1405, 7
        %v1407 = vsub.s32 0, %v1406
        %v1408 = vrot.slane %v1403, %v1407
        %v1409 = vadd.bf16 %v1399, %v1408
        %v1410 = vadd.bf16 %v1400, %v1408
        %v1411 = vmax.bf16 %v1409, 0
        %v1412 = vmax.bf16 %v1410, 0
        %v1413 = vld [vmem:[#allocation13] sm:$0xf]
        %v1414 = vld [vmem:[#allocation13 + $0x4] sm:$0xf]
        %v1415 = vld [vmem:[#allocation13 + $0x8] sm:$0xf]
        %v1416 = vld [vmem:[#allocation13 + $0xc] sm:$0xf]
        %v1417 = vld [vmem:[#allocation13 + $0x10] sm:$0xf]
        %v1418 = vld [vmem:[#allocation13 + $0x14] sm:$0xf]
        %v1419 = vld [vmem:[#allocation13 + $0x18] sm:$0xf]
        %v1420 = vld [vmem:[#allocation13 + $0x1c] sm:$0xf]
        %v1421 = vld [vmem:[#allocation13 + $0x20] sm:$0xf]
        %v1422 = vld [vmem:[#allocation13 + $0x24] sm:$0xf]
        %v1423 = vld [vmem:[#allocation13 + $0x28] sm:$0xf]
        %v1424 = vld [vmem:[#allocation13 + $0x2c] sm:$0xf]
        %v1425 = vld [vmem:[#allocation13 + $0x30] sm:$0xf]
        %v1426 = vld [vmem:[#allocation13 + $0x34] sm:$0xf]
        %v1427 = vld [vmem:[#allocation13 + $0x38] sm:$0xf]
        %v1428 = vld [vmem:[#allocation13 + $0x3c] sm:$0xf]
        %v1429 = vld [vmem:[#allocation14] sm:$0x1]
        %v1431 = vlaneseq
        %v1432 = vshrl.u32 %v1431, 7
        %v1433 = vsub.s32 0, %v1432
        %v1434 = vrot.slane %v1429, %v1433
        %v1452 = vunpack.c.l.b16 %v1413
        %v1453 = vunpack.c.l.b16 %v1414
        %v1454 = vunpack.c.l.b16 %v1415
        %v1455 = vunpack.c.l.b16 %v1416
        %v1456 = vunpack.c.l.b16 %v1417
        %v1457 = vunpack.c.l.b16 %v1418
        %v1458 = vunpack.c.l.b16 %v1419
        %v1459 = vunpack.c.l.b16 %v1420
        %v1460 = vunpack.c.l.b16 %v1421
        %v1461 = vunpack.c.l.b16 %v1422
        %v1462 = vunpack.c.l.b16 %v1423
        %v1463 = vunpack.c.l.b16 %v1424
        %v1464 = vunpack.c.l.b16 %v1425
        %v1465 = vunpack.c.l.b16 %v1426
        %v1466 = vunpack.c.l.b16 %v1427
        %v1467 = vunpack.c.l.b16 %v1428
        %v1468 = vpack.c.b16 %v1453, %v1452
        %v1469 = vpack.c.b16 %v1455, %v1454
        %v1470 = vpack.c.b16 %v1457, %v1456
        %v1471 = vpack.c.b16 %v1459, %v1458
        %v1472 = vpack.c.b16 %v1461, %v1460
        %v1473 = vpack.c.b16 %v1463, %v1462
        %v1474 = vpack.c.b16 %v1465, %v1464
        %v1475 = vpack.c.b16 %v1467, %v1466
        %1484 = vmatprep.subr.bf16.mxu0 0
        %1485 = vmatpush1.bf16.msra.mxu0 %v1468
        %1486 = vmatprep.subr.bf16.mxu0 0
        %1487 = vmatpush1.bf16.msra.mxu0 %v1469
        %1488 = vmatprep.subr.bf16.mxu0 0
        %1489 = vmatpush1.bf16.msra.mxu0 %v1470
        %1490 = vmatprep.subr.bf16.mxu0 0
        %1491 = vmatpush1.bf16.msra.mxu0 %v1471
        %1492 = vmatprep.subr.bf16.mxu0 0
        %1493 = vmatpush1.bf16.msra.mxu0 %v1472
        %1494 = vmatprep.subr.bf16.mxu0 0
        %1495 = vmatpush1.bf16.msra.mxu0 %v1473
        %1496 = vmatprep.subr.bf16.mxu0 0
        %1497 = vmatpush1.bf16.msra.mxu0 %v1474
        %1498 = vmatprep.subr.bf16.mxu0 0
        %1499 = vmatpush1.bf16.msra.mxu0 %v1475
        %1500 = vmatprep.subr.bf16.mxu0 0
        %1501 = vmatpush1.bf16.msra.mxu0 0
        %1502 = vmatprep.subr.bf16.mxu0 0
        %1503 = vmatpush1.bf16.msra.mxu0 0
        %1504 = vmatprep.subr.bf16.mxu0 0
        %1505 = vmatpush1.bf16.msra.mxu0 0
        %1506 = vmatprep.subr.bf16.mxu0 0
        %1507 = vmatpush1.bf16.msra.mxu0 0
        %1508 = vmatprep.subr.bf16.mxu0 0
        %1509 = vmatpush1.bf16.msra.mxu0 0
        %1510 = vmatprep.subr.bf16.mxu0 0
        %1511 = vmatpush1.bf16.msra.mxu0 0
        %1512 = vmatprep.subr.bf16.mxu0 0
        %1513 = vmatpush1.bf16.msra.mxu0 0
        %1514 = vmatprep.subr.bf16.mxu0 0
        %1515 = vmatpush1.bf16.msra.mxu0 0
        %1516 = vmatprep.mubr.bf16.mxu0 0
        %1517 = vmatmul.mubr.bf16.gmra.mrb[0].mxu0 %v1411
        %v1518 = vpop.f32.mrb[0].mxu0
        %v1519 = vadd.f32 %v1434, %v1518
        %v1520 = vpop.f32.mrb[0].mxu0
        %v1521 = vpop.f32.mrb[0].mxu0
        %v1522 = vadd.f32 %v1434, %v1521
        %v1523 = vpop.f32.mrb[0].mxu0
        %1524 = vmatprep.mubr.bf16.mxu0 0
        %1525 = vmatmul.mubr.bf16.gmra.mrb[0].mxu0 %v1412
        %v1526 = vpop.f32.mrb[0].mxu0
        %v1527 = vadd.f32 %v1434, %v1526
        %v1528 = vpop.f32.mrb[0].mxu0
        %v1529 = vpop.f32.mrb[0].mxu0
        %v1530 = vadd.f32 %v1434, %v1529
        %v1531 = vpop.f32.mrb[0].mxu0
        %1532 = vdwg.mxu0
        %v1533 = vunpack.c.l.bf16 %v1138
        %v1534 = vunpack.c.l.bf16 %v1139
        %v1535 = vunpack.c.l.bf16 %v1140
        %v1536 = vunpack.c.l.bf16 %v1141
        %v1537 = vmul.f32 %v1533, %v1519
        %v1538 = vmul.f32 %v1534, %v1522
        %v1539 = vmul.f32 %v1535, %v1527
        %v1540 = vmul.f32 %v1536, %v1530
        %v1541 = vpack.c.bf16 %v1538, %v1537
        %v1542 = vpack.c.bf16 %v1540, %v1539
        %v1543 = vld [vmem:[#allocation16] sm:$0xf]
        %v1544 = vld [vmem:[#allocation16 + $0x4] sm:$0xf]
        %v1545 = vld [vmem:[#allocation16 + $0x8] sm:$0xf]
        %v1546 = vld [vmem:[#allocation16 + $0xc] sm:$0xf]
        %v1547 = vld [vmem:[#allocation16 + $0x10] sm:$0xf]
        %v1548 = vld [vmem:[#allocation16 + $0x14] sm:$0xf]
        %v1549 = vld [vmem:[#allocation16 + $0x18] sm:$0xf]
        %v1550 = vld [vmem:[#allocation16 + $0x1c] sm:$0xf]
        %v1551 = vld [vmem:[#allocation16 + $0x20] sm:$0xf]
        %v1552 = vld [vmem:[#allocation16 + $0x24] sm:$0xf]
        %v1553 = vld [vmem:[#allocation16 + $0x28] sm:$0xf]
        %v1554 = vld [vmem:[#allocation16 + $0x2c] sm:$0xf]
        %v1555 = vld [vmem:[#allocation16 + $0x30] sm:$0xf]
        %v1556 = vld [vmem:[#allocation16 + $0x34] sm:$0xf]
        %v1557 = vld [vmem:[#allocation16 + $0x38] sm:$0xf]
        %v1558 = vld [vmem:[#allocation16 + $0x3c] sm:$0xf]
        %v1575 = vunpack.c.l.b16 %v1543
        %v1576 = vunpack.c.l.b16 %v1544
        %v1577 = vunpack.c.l.b16 %v1545
        %v1578 = vunpack.c.l.b16 %v1546
        %v1579 = vunpack.c.l.b16 %v1547
        %v1580 = vunpack.c.l.b16 %v1548
        %v1581 = vunpack.c.l.b16 %v1549
        %v1582 = vunpack.c.l.b16 %v1550
        %v1583 = vunpack.c.l.b16 %v1551
        %v1584 = vunpack.c.l.b16 %v1552
        %v1585 = vunpack.c.l.b16 %v1553
        %v1586 = vunpack.c.l.b16 %v1554
        %v1587 = vunpack.c.l.b16 %v1555
        %v1588 = vunpack.c.l.b16 %v1556
        %v1589 = vunpack.c.l.b16 %v1557
        %v1590 = vunpack.c.l.b16 %v1558
        %v1591 = vpack.c.b16 %v1576, %v1575
        %v1592 = vpack.c.b16 %v1578, %v1577
        %v1593 = vpack.c.b16 %v1580, %v1579
        %v1594 = vpack.c.b16 %v1582, %v1581
        %v1595 = vpack.c.b16 %v1584, %v1583
        %v1596 = vpack.c.b16 %v1586, %v1585
        %v1597 = vpack.c.b16 %v1588, %v1587
        %v1598 = vpack.c.b16 %v1590, %v1589
        %1607 = vmatprep.subr.bf16.mxu0 0
        %1608 = vmatpush1.bf16.msra.mxu0 %v1591
        %1609 = vmatprep.subr.bf16.mxu0 0
        %1610 = vmatpush1.bf16.msra.mxu0 %v1592
        %1611 = vmatprep.subr.bf16.mxu0 0
        %1612 = vmatpush1.bf16.msra.mxu0 %v1593
        %1613 = vmatprep.subr.bf16.mxu0 0
        %1614 = vmatpush1.bf16.msra.mxu0 %v1594
        %1615 = vmatprep.subr.bf16.mxu0 0
        %1616 = vmatpush1.bf16.msra.mxu0 %v1595
        %1617 = vmatprep.subr.bf16.mxu0 0
        %1618 = vmatpush1.bf16.msra.mxu0 %v1596
        %1619 = vmatprep.subr.bf16.mxu0 0
        %1620 = vmatpush1.bf16.msra.mxu0 %v1597
        %1621 = vmatprep.subr.bf16.mxu0 0
        %1622 = vmatpush1.bf16.msra.mxu0 %v1598
        %1623 = vmatprep.subr.bf16.mxu0 0
        %1624 = vmatpush1.bf16.msra.mxu0 0
        %1625 = vmatprep.subr.bf16.mxu0 0
        %1626 = vmatpush1.bf16.msra.mxu0 0
        %1627 = vmatprep.subr.bf16.mxu0 0
        %1628 = vmatpush1.bf16.msra.mxu0 0
        %1629 = vmatprep.subr.bf16.mxu0 0
        %1630 = vmatpush1.bf16.msra.mxu0 0
        %1631 = vmatprep.subr.bf16.mxu0 0
        %1632 = vmatpush1.bf16.msra.mxu0 0
        %1633 = vmatprep.subr.bf16.mxu0 0
        %1634 = vmatpush1.bf16.msra.mxu0 0
        %1635 = vmatprep.subr.bf16.mxu0 0
        %1636 = vmatpush1.bf16.msra.mxu0 0
        %1637 = vmatprep.subr.bf16.mxu0 0
        %1638 = vmatpush1.bf16.msra.mxu0 0
        %1639 = vmatprep.mubr.bf16.mxu0 0
        %1640 = vmatmul.mubr.bf16.gmra.mrb[0].mxu0 %v1541
        %v1641 = vpop.f32.mrb[0].mxu0
        %v1642 = vadd.f32 0.0, %v1641
        %v1643 = vpop.f32.mrb[0].mxu0
        %v1644 = vpop.f32.mrb[0].mxu0
        %v1645 = vadd.f32 0.0, %v1644
        %v1646 = vpop.f32.mrb[0].mxu0
        %1647 = vmatprep.mubr.bf16.mxu0 0
        %1648 = vmatmul.mubr.bf16.gmra.mrb[0].mxu0 %v1542
        %v1649 = vpop.f32.mrb[0].mxu0
        %v1650 = vadd.f32 0.0, %v1649
        %v1651 = vpop.f32.mrb[0].mxu0
        %v1652 = vpop.f32.mrb[0].mxu0
        %v1653 = vadd.f32 0.0, %v1652
        %v1654 = vpop.f32.mrb[0].mxu0
        %1655 = vdwg.mxu0
        %v1656 = vpack.c.bf16 %v1645, %v1642
        %v1657 = vpack.c.bf16 %v1653, %v1650
        %v1658 = vld [vmem:[#allocation17] sm:$0x1]
        %v1660 = vpack.i.b16 %v1658, %v1658
        %v1662 = vlaneseq
        %v1663 = vshrl.u32 %v1662, 7
        %v1664 = vsub.s32 0, %v1663
        %v1665 = vrot.slane %v1660, %v1664
        %v1666 = vadd.bf16 %v1656, %v1665
        %v1667 = vadd.bf16 %v1657, %v1665
        %v1668 = vmax.bf16 %v1666, 0
        %v1669 = vmax.bf16 %v1667, 0
        %v1670 = vld [vmem:[#allocation19] sm:$0xf]
        %v1671 = vld [vmem:[#allocation19 + $0x4] sm:$0xf]
        %v1672 = vld [vmem:[#allocation19 + $0x8] sm:$0xf]
        %v1673 = vld [vmem:[#allocation19 + $0xc] sm:$0xf]
        %v1674 = vld [vmem:[#allocation19 + $0x10] sm:$0xf]
        %v1675 = vld [vmem:[#allocation19 + $0x14] sm:$0xf]
        %v1676 = vld [vmem:[#allocation19 + $0x18] sm:$0xf]
        %v1677 = vld [vmem:[#allocation19 + $0x1c] sm:$0xf]
        %v1686 = vunpack.c.l.b16 %v1670
        %v1687 = vunpack.c.l.b16 %v1671
        %v1688 = vunpack.c.l.b16 %v1672
        %v1689 = vunpack.c.l.b16 %v1673
        %v1690 = vunpack.c.l.b16 %v1674
        %v1691 = vunpack.c.l.b16 %v1675
        %v1692 = vunpack.c.l.b16 %v1676
        %v1693 = vunpack.c.l.b16 %v1677
        %v1694 = vpack.c.b16 %v1687, %v1686
        %v1695 = vpack.c.b16 %v1689, %v1688
        %v1696 = vpack.c.b16 %v1691, %v1690
        %v1697 = vpack.c.b16 %v1693, %v1692
        %vm1702 = vcmask 523264
        %v1704 = vsel %vm1702, %v1668, 0
        %v1707 = vsel %vm1702, %v1669, 0
        %1709 = vmatprep.subr.bf16.mxu0 0
        %1710 = vmatpush1.bf16.msra.mxu0 %v1694
        %1711 = vmatprep.subr.bf16.mxu0 0
        %1712 = vmatpush1.bf16.msra.mxu0 %v1695
        %1713 = vmatprep.subr.bf16.mxu0 0
        %1714 = vmatpush1.bf16.msra.mxu0 %v1696
        %1715 = vmatprep.subr.bf16.mxu0 0
        %1716 = vmatpush1.bf16.msra.mxu0 %v1697
        %1717 = vmatprep.subr.bf16.mxu0 0
        %1718 = vmatpush1.bf16.msra.mxu0 0
        %1719 = vmatprep.subr.bf16.mxu0 0
        %1720 = vmatpush1.bf16.msra.mxu0 0
        %1721 = vmatprep.subr.bf16.mxu0 0
        %1722 = vmatpush1.bf16.msra.mxu0 0
        %1723 = vmatprep.subr.bf16.mxu0 0
        %1724 = vmatpush1.bf16.msra.mxu0 0
        %1725 = vmatprep.subr.bf16.mxu0 0
        %1726 = vmatpush1.bf16.msra.mxu0 0
        %1727 = vmatprep.subr.bf16.mxu0 0
        %1728 = vmatpush1.bf16.msra.mxu0 0
        %1729 = vmatprep.subr.bf16.mxu0 0
        %1730 = vmatpush1.bf16.msra.mxu0 0
        %1731 = vmatprep.subr.bf16.mxu0 0
        %1732 = vmatpush1.bf16.msra.mxu0 0
        %1733 = vmatprep.subr.bf16.mxu0 0
        %1734 = vmatpush1.bf16.msra.mxu0 0
        %1735 = vmatprep.subr.bf16.mxu0 0
        %1736 = vmatpush1.bf16.msra.mxu0 0
        %1737 = vmatprep.subr.bf16.mxu0 0
        %1738 = vmatpush1.bf16.msra.mxu0 0
        %1739 = vmatprep.subr.bf16.mxu0 0
        %1740 = vmatpush1.bf16.msra.mxu0 0
        %1741 = vmatprep.mubr.bf16.mxu0 0
        %1742 = vmatmul.mubr.bf16.gmra.mrb[0].mxu0 %v1704
        %v1743 = vpop.f32.mrb[0].mxu0
        %v1744 = vadd.f32 0.0, %v1743
        %v1745 = vpop.f32.mrb[0].mxu0
        %v1746 = vpop.f32.mrb[0].mxu0
        %v1747 = vadd.f32 0.0, %v1746
        %v1748 = vpop.f32.mrb[0].mxu0
        %1749 = vmatprep.mubr.bf16.mxu0 0
        %1750 = vmatmul.mubr.bf16.gmra.mrb[0].mxu0 %v1707
        %v1751 = vpop.f32.mrb[0].mxu0
        %v1752 = vadd.f32 0.0, %v1751
        %v1753 = vpop.f32.mrb[0].mxu0
        %v1754 = vpop.f32.mrb[0].mxu0
        %v1755 = vadd.f32 0.0, %v1754
        %v1756 = vpop.f32.mrb[0].mxu0
        %1757 = vdwg.mxu0
        %v1758 = vpack.c.bf16 %v1747, %v1744
        %v1759 = vpack.c.bf16 %v1755, %v1752
        %v1760 = vld [vmem:[#allocation20] sm:$0x1]
        %v1762 = vpack.i.b16 %v1760, %v1760
        %v1764 = vlaneseq
        %v1765 = vshrl.u32 %v1764, 7
        %v1766 = vsub.s32 0, %v1765
        %v1767 = vrot.slane %v1762, %v1766
        %v1768 = vadd.bf16 %v1758, %v1767
        %v1769 = vadd.bf16 %v1759, %v1767
        %v1770 = vmax.bf16 %v1768, 0
        %v1771 = vmax.bf16 %v1769, 0
        %v1772 = vld [vmem:[#allocation22] sm:$0xf]
        %v1773 = vld [vmem:[#allocation22 + $0x4] sm:$0xf]
        %v1774 = vld [vmem:[#allocation22 + $0x8] sm:$0xf]
        %v1775 = vld [vmem:[#allocation22 + $0xc] sm:$0xf]
        %v1776 = vld [vmem:[#allocation22 + $0x10] sm:$0xf]
        %v1777 = vld [vmem:[#allocation22 + $0x14] sm:$0xf]
        %v1778 = vld [vmem:[#allocation22 + $0x18] sm:$0xf]
        %v1779 = vld [vmem:[#allocation22 + $0x1c] sm:$0xf]
        %v1780 = vld [vmem:[#allocation23] sm:$0x1]
        %v1782 = vlaneseq
        %v1783 = vshrl.u32 %v1782, 7
        %v1784 = vsub.s32 0, %v1783
        %v1785 = vrot.slane %v1780, %v1784
        %v1795 = vunpack.c.l.b16 %v1772
        %v1796 = vunpack.c.l.b16 %v1773
        %v1797 = vunpack.c.l.b16 %v1774
        %v1798 = vunpack.c.l.b16 %v1775
        %v1799 = vunpack.c.l.b16 %v1776
        %v1800 = vunpack.c.l.b16 %v1777
        %v1801 = vunpack.c.l.b16 %v1778
        %v1802 = vunpack.c.l.b16 %v1779
        %v1803 = vpack.c.b16 %v1796, %v1795
        %v1804 = vpack.c.b16 %v1798, %v1797
        %v1805 = vpack.c.b16 %v1800, %v1799
        %v1806 = vpack.c.b16 %v1802, %v1801
        %v1812 = vsel %vm1702, %v1770, 0
        %v1815 = vsel %vm1702, %v1771, 0
        %1817 = vmatprep.subr.bf16.mxu0 0
        %1818 = vmatpush1.bf16.msra.mxu0 %v1803
        %1819 = vmatprep.subr.bf16.mxu0 0
        %1820 = vmatpush1.bf16.msra.mxu0 %v1804
        %1821 = vmatprep.subr.bf16.mxu0 0
        %1822 = vmatpush1.bf16.msra.mxu0 %v1805
        %1823 = vmatprep.subr.bf16.mxu0 0
        %1824 = vmatpush1.bf16.msra.mxu0 %v1806
        %1825 = vmatprep.subr.bf16.mxu0 0
        %1826 = vmatpush1.bf16.msra.mxu0 0
        %1827 = vmatprep.subr.bf16.mxu0 0
        %1828 = vmatpush1.bf16.msra.mxu0 0
        %1829 = vmatprep.subr.bf16.mxu0 0
        %1830 = vmatpush1.bf16.msra.mxu0 0
        %1831 = vmatprep.subr.bf16.mxu0 0
        %1832 = vmatpush1.bf16.msra.mxu0 0
        %1833 = vmatprep.subr.bf16.mxu0 0
        %1834 = vmatpush1.bf16.msra.mxu0 0
        %1835 = vmatprep.subr.bf16.mxu0 0
        %1836 = vmatpush1.bf16.msra.mxu0 0
        %1837 = vmatprep.subr.bf16.mxu0 0
        %1838 = vmatpush1.bf16.msra.mxu0 0
        %1839 = vmatprep.subr.bf16.mxu0 0
        %1840 = vmatpush1.bf16.msra.mxu0 0
        %1841 = vmatprep.subr.bf16.mxu0 0
        %1842 = vmatpush1.bf16.msra.mxu0 0
        %1843 = vmatprep.subr.bf16.mxu0 0
        %1844 = vmatpush1.bf16.msra.mxu0 0
        %1845 = vmatprep.subr.bf16.mxu0 0
        %1846 = vmatpush1.bf16.msra.mxu0 0
        %1847 = vmatprep.subr.bf16.mxu0 0
        %1848 = vmatpush1.bf16.msra.mxu0 0
        %1849 = vmatprep.mubr.bf16.mxu0 0
        %1850 = vmatmul.mubr.bf16.gmra.mrb[0].mxu0 %v1812
        %v1851 = vpop.f32.mrb[0].mxu0
        %v1852 = vadd.f32 %v1785, %v1851
        %v1853 = vpop.f32.mrb[0].mxu0
        %v1854 = vpop.f32.mrb[0].mxu0
        %v1855 = vadd.f32 %v1785, %v1854
        %v1856 = vpop.f32.mrb[0].mxu0
        %1857 = vmatprep.mubr.bf16.mxu0 0
        %1858 = vmatmul.mubr.bf16.gmra.mrb[0].mxu0 %v1815
        %v1859 = vpop.f32.mrb[0].mxu0
        %v1860 = vadd.f32 %v1785, %v1859
        %v1861 = vpop.f32.mrb[0].mxu0
        %v1862 = vpop.f32.mrb[0].mxu0
        %v1863 = vadd.f32 %v1785, %v1862
        %v1864 = vpop.f32.mrb[0].mxu0
        %1865 = vdwg.mxu0
        %v1866 = vmul.f32 %v1852, %v1537
        %v1867 = vmul.f32 %v1855, %v1538
        %v1868 = vmul.f32 %v1860, %v1539
        %v1869 = vmul.f32 %v1863, %v1540
        %v1870 = vld [vmem:[#allocation37] sm:$0x1]
        %v1872 = vlaneseq
        %v1873 = vshrl.u32 %v1872, 7
        %v1874 = vsub.s32 0, %v1873
        %v1875 = vrot.slane %v1870, %v1874
        %v1877 = vmul.f32 %v1519, %v1875
        %v1878 = vmul.f32 %v1522, %v1875
        %v1879 = vmul.f32 %v1527, %v1875
        %v1880 = vmul.f32 %v1530, %v1875
        %v1881 = vadd.f32 %v1866, %v1877
        %v1882 = vadd.f32 %v1867, %v1878
        %v1883 = vadd.f32 %v1868, %v1879
        %v1884 = vadd.f32 %v1869, %v1880
        %v1885 = vpack.c.bf16 %v1882, %v1881
        %v1886 = vpack.c.bf16 %v1884, %v1883
        %v1887 = vld [vmem:[#allocation25] sm:$0xff]
        %v1888 = vld [vmem:[#allocation25 + $0x8] sm:$0xff]
        %v1889 = vld [vmem:[#allocation25 + $0x10] sm:$0xff]
        %v1890 = vld [vmem:[#allocation25 + $0x18] sm:$0xff]
        %v1891 = vld [vmem:[#allocation25 + $0x20] sm:$0xff]
        %v1892 = vld [vmem:[#allocation25 + $0x28] sm:$0xff]
        %v1893 = vld [vmem:[#allocation25 + $0x30] sm:$0xff]
        %v1894 = vld [vmem:[#allocation25 + $0x38] sm:$0xff]
        %v1895 = vld [vmem:[#allocation25 + $0x40] sm:$0xff]
        %v1896 = vld [vmem:[#allocation25 + $0x48] sm:$0xff]
        %v1897 = vld [vmem:[#allocation25 + $0x50] sm:$0xff]
        %v1898 = vld [vmem:[#allocation25 + $0x58] sm:$0xff]
        %v1899 = vld [vmem:[#allocation25 + $0x60] sm:$0xff]
        %v1900 = vld [vmem:[#allocation25 + $0x68] sm:$0xff]
        %v1901 = vld [vmem:[#allocation25 + $0x70] sm:$0xff]
        %v1902 = vld [vmem:[#allocation25 + $0x78] sm:$0xff]
        %v1919 = vunpack.c.l.b16 %v1887
        %v1920 = vunpack.c.h.b16 %v1887
        %v1921 = vunpack.c.l.b16 %v1888
        %v1922 = vunpack.c.h.b16 %v1888
        %v1923 = vunpack.c.l.b16 %v1889
        %v1924 = vunpack.c.h.b16 %v1889
        %v1925 = vunpack.c.l.b16 %v1890
        %v1926 = vunpack.c.h.b16 %v1890
        %v1927 = vunpack.c.l.b16 %v1891
        %v1928 = vunpack.c.h.b16 %v1891
        %v1929 = vunpack.c.l.b16 %v1892
        %v1930 = vunpack.c.h.b16 %v1892
        %v1931 = vunpack.c.l.b16 %v1893
        %v1932 = vunpack.c.h.b16 %v1893
        %v1933 = vunpack.c.l.b16 %v1894
        %v1934 = vunpack.c.h.b16 %v1894
        %v1935 = vunpack.c.l.b16 %v1895
        %v1936 = vunpack.c.h.b16 %v1895
        %v1937 = vunpack.c.l.b16 %v1896
        %v1938 = vunpack.c.h.b16 %v1896
        %v1939 = vunpack.c.l.b16 %v1897
        %v1940 = vunpack.c.h.b16 %v1897
        %v1941 = vunpack.c.l.b16 %v1898
        %v1942 = vunpack.c.h.b16 %v1898
        %v1943 = vunpack.c.l.b16 %v1899
        %v1944 = vunpack.c.h.b16 %v1899
        %v1945 = vunpack.c.l.b16 %v1900
        %v1946 = vunpack.c.h.b16 %v1900
        %v1947 = vunpack.c.l.b16 %v1901
        %v1948 = vunpack.c.h.b16 %v1901
        %v1949 = vunpack.c.l.b16 %v1902
        %v1950 = vunpack.c.h.b16 %v1902
        %v1951 = vpack.c.b16 %v1921, %v1919
        %v1952 = vpack.c.b16 %v1922, %v1920
        %v1953 = vpack.c.b16 %v1925, %v1923
        %v1954 = vpack.c.b16 %v1926, %v1924
        %v1955 = vpack.c.b16 %v1929, %v1927
        %v1956 = vpack.c.b16 %v1930, %v1928
        %v1957 = vpack.c.b16 %v1933, %v1931
        %v1958 = vpack.c.b16 %v1934, %v1932
        %v1959 = vpack.c.b16 %v1937, %v1935
        %v1960 = vpack.c.b16 %v1938, %v1936
        %v1961 = vpack.c.b16 %v1941, %v1939
        %v1962 = vpack.c.b16 %v1942, %v1940
        %v1963 = vpack.c.b16 %v1945, %v1943
        %v1964 = vpack.c.b16 %v1946, %v1944
        %v1965 = vpack.c.b16 %v1949, %v1947
        %v1966 = vpack.c.b16 %v1950, %v1948
        %1983 = vmatprep.subr.bf16.mxu0 %v1952
        %1984 = vmatpush1.bf16.msra.mxu0 %v1951
        %1985 = vmatprep.subr.bf16.mxu0 %v1954
        %1986 = vmatpush1.bf16.msra.mxu0 %v1953
        %1987 = vmatprep.subr.bf16.mxu0 %v1956
        %1988 = vmatpush1.bf16.msra.mxu0 %v1955
        %1989 = vmatprep.subr.bf16.mxu0 %v1958
        %1990 = vmatpush1.bf16.msra.mxu0 %v1957
        %1991 = vmatprep.subr.bf16.mxu0 %v1960
        %1992 = vmatpush1.bf16.msra.mxu0 %v1959
        %1993 = vmatprep.subr.bf16.mxu0 %v1962
        %1994 = vmatpush1.bf16.msra.mxu0 %v1961
        %1995 = vmatprep.subr.bf16.mxu0 %v1964
        %1996 = vmatpush1.bf16.msra.mxu0 %v1963
        %1997 = vmatprep.subr.bf16.mxu0 %v1966
        %1998 = vmatpush1.bf16.msra.mxu0 %v1965
        %1999 = vmatprep.subr.bf16.mxu0 0
        %2000 = vmatpush1.bf16.msra.mxu0 0
        %2001 = vmatprep.subr.bf16.mxu0 0
        %2002 = vmatpush1.bf16.msra.mxu0 0
        %2003 = vmatprep.subr.bf16.mxu0 0
        %2004 = vmatpush1.bf16.msra.mxu0 0
        %2005 = vmatprep.subr.bf16.mxu0 0
        %2006 = vmatpush1.bf16.msra.mxu0 0
        %2007 = vmatprep.subr.bf16.mxu0 0
        %2008 = vmatpush1.bf16.msra.mxu0 0
        %2009 = vmatprep.subr.bf16.mxu0 0
        %2010 = vmatpush1.bf16.msra.mxu0 0
        %2011 = vmatprep.subr.bf16.mxu0 0
        %2012 = vmatpush1.bf16.msra.mxu0 0
        %2013 = vmatprep.subr.bf16.mxu0 0
        %2014 = vmatpush1.bf16.msra.mxu0 0
        %2015 = vmatprep.mubr.bf16.mxu0 0
        %2016 = vmatmul.mubr.bf16.gmra.mrb[0].mxu0 %v1885
        %v2017 = vpop.f32.mrb[0].mxu0
        %v2018 = vadd.f32 0.0, %v2017
        %v2019 = vpop.f32.mrb[0].mxu0
        %v2020 = vadd.f32 0.0, %v2019
        %v2021 = vpop.f32.mrb[0].mxu0
        %v2022 = vadd.f32 0.0, %v2021
        %v2023 = vpop.f32.mrb[0].mxu0
        %v2024 = vadd.f32 0.0, %v2023
        %2025 = vmatprep.mubr.bf16.mxu0 0
        %2026 = vmatmul.mubr.bf16.gmra.mrb[0].mxu0 %v1886
        %v2027 = vpop.f32.mrb[0].mxu0
        %v2028 = vadd.f32 0.0, %v2027
        %v2029 = vpop.f32.mrb[0].mxu0
        %v2030 = vadd.f32 0.0, %v2029
        %v2031 = vpop.f32.mrb[0].mxu0
        %v2032 = vadd.f32 0.0, %v2031
        %v2033 = vpop.f32.mrb[0].mxu0
        %v2034 = vadd.f32 0.0, %v2033
        %2035 = vdwg.mxu0
        %v2036 = vpack.c.bf16 %v2022, %v2018
        %v2037 = vpack.c.bf16 %v2024, %v2020
        %v2038 = vpack.c.bf16 %v2032, %v2028
        %v2039 = vpack.c.bf16 %v2034, %v2030
        %v2040 = vld [vmem:[#allocation26] sm:$0x3]
        %v2043 = vunpack.c.l.s4 1966171168
        %v2044 = vunpack.c.0.s8 %v2043
        %v2045 = vlaneseq
        %v2046 = vshrl.u32 %v2045, 7
        %v2047 = vsub.s32 %v2044, %v2046
        %v2048 = vrot.slane %v2040, %v2047
        %v2049 = vcombine.high %v2048, %v2048
        %v2051 = vunpack.c.l.s4 1966171168
        %v2052 = vunpack.c.0.s8 %v2051
        %v2053 = vlaneseq
        %v2054 = vshrl.u32 %v2053, 7
        %v2055 = vsub.s32 %v2052, %v2054
        %v2056 = vrot.slane %v2048, %v2055
        %v2058 = vunpack.c.l.s4 1966171168
        %v2059 = vunpack.c.0.s8 %v2058
        %v2060 = vlaneseq
        %v2061 = vshrl.u32 %v2060, 7
        %v2062 = vsub.s32 %v2059, %v2061
        %v2063 = vrot.slane %v2049, %v2062
        %v2065 = vpack.i.b16 %v2056, %v2056
        %v2067 = vlaneseq
        %v2068 = vshrl.u32 %v2067, 7
        %v2069 = vsub.s32 0, %v2068
        %v2070 = vrot.slane %v2065, %v2069
        %v2072 = vpack.i.b16 %v2063, %v2063
        %v2074 = vlaneseq
        %v2075 = vshrl.u32 %v2074, 7
        %v2076 = vsub.s32 0, %v2075
        %v2077 = vrot.slane %v2072, %v2076
        %v2078 = vadd.bf16 %v2036, %v2070
        %v2079 = vadd.bf16 %v2037, %v2077
        %v2080 = vadd.bf16 %v2038, %v2070
        %v2081 = vadd.bf16 %v2039, %v2077
        %v2082 = vmax.bf16 %v2078, 0
        %v2083 = vmax.bf16 %v2079, 0
        %v2084 = vmax.bf16 %v2080, 0
        %v2085 = vmax.bf16 %v2081, 0
        %v2086 = vld [vmem:[#allocation28] sm:$0xff]
        %v2087 = vld [vmem:[#allocation28 + $0x8] sm:$0xf]
        %v2088 = vld [vmem:[#allocation28 + $0xc] sm:$0xff]
        %v2089 = vld [vmem:[#allocation28 + $0x14] sm:$0xf]
        %v2090 = vld [vmem:[#allocation28 + $0x18] sm:$0xff]
        %v2091 = vld [vmem:[#allocation28 + $0x20] sm:$0xf]
        %v2092 = vld [vmem:[#allocation28 + $0x24] sm:$0xff]
        %v2093 = vld [vmem:[#allocation28 + $0x2c] sm:$0xf]
        %v2094 = vld [vmem:[#allocation28 + $0x30] sm:$0xff]
        %v2095 = vld [vmem:[#allocation28 + $0x38] sm:$0xf]
        %v2096 = vld [vmem:[#allocation28 + $0x3c] sm:$0xff]
        %v2097 = vld [vmem:[#allocation28 + $0x44] sm:$0xf]
        %v2098 = vld [vmem:[#allocation28 + $0x48] sm:$0xff]
        %v2099 = vld [vmem:[#allocation28 + $0x50] sm:$0xf]
        %v2100 = vld [vmem:[#allocation28 + $0x54] sm:$0xff]
        %v2101 = vld [vmem:[#allocation28 + $0x5c] sm:$0xf]
        %v2102 = vld [vmem:[#allocation28 + $0x60] sm:$0xff]
        %v2103 = vld [vmem:[#allocation28 + $0x68] sm:$0xf]
        %v2104 = vld [vmem:[#allocation28 + $0x6c] sm:$0xff]
        %v2105 = vld [vmem:[#allocation28 + $0x74] sm:$0xf]
        %v2106 = vld [vmem:[#allocation28 + $0x78] sm:$0xff]
        %v2107 = vld [vmem:[#allocation28 + $0x80] sm:$0xf]
        %v2108 = vld [vmem:[#allocation28 + $0x84] sm:$0xff]
        %v2109 = vld [vmem:[#allocation28 + $0x8c] sm:$0xf]
        %v2110 = vld [vmem:[#allocation28 + $0x90] sm:$0xff]
        %v2111 = vld [vmem:[#allocation28 + $0x98] sm:$0xf]
        %v2112 = vld [vmem:[#allocation28 + $0x9c] sm:$0xff]
        %v2113 = vld [vmem:[#allocation28 + $0xa4] sm:$0xf]
        %v2114 = vld [vmem:[#allocation28 + $0xa8] sm:$0xff]
        %v2115 = vld [vmem:[#allocation28 + $0xb0] sm:$0xf]
        %v2116 = vld [vmem:[#allocation28 + $0xb4] sm:$0xff]
        %v2117 = vld [vmem:[#allocation28 + $0xbc] sm:$0xf]
        %v2118 = vld [vmem:[#allocation28 + $0xc0] sm:$0xff]
        %v2119 = vld [vmem:[#allocation28 + $0xc8] sm:$0xf]
        %v2120 = vld [vmem:[#allocation28 + $0xcc] sm:$0xff]
        %v2121 = vld [vmem:[#allocation28 + $0xd4] sm:$0xf]
        %v2122 = vld [vmem:[#allocation28 + $0xd8] sm:$0xff]
        %v2123 = vld [vmem:[#allocation28 + $0xe0] sm:$0xf]
        %v2124 = vld [vmem:[#allocation28 + $0xe4] sm:$0xff]
        %v2125 = vld [vmem:[#allocation28 + $0xec] sm:$0xf]
        %v2126 = vld [vmem:[#allocation28 + $0xf0] sm:$0xff]
        %v2127 = vld [vmem:[#allocation28 + $0xf8] sm:$0xf]
        %v2128 = vld [vmem:[#allocation28 + $0xfc] sm:$0xff]
        %v2129 = vld [vmem:[#allocation28 + $0x104] sm:$0xf]
        %v2130 = vld [vmem:[#allocation28 + $0x108] sm:$0xff]
        %v2131 = vld [vmem:[#allocation28 + $0x110] sm:$0xf]
        %v2132 = vld [vmem:[#allocation28 + $0x114] sm:$0xff]
        %v2133 = vld [vmem:[#allocation28 + $0x11c] sm:$0xf]
        %v2182 = vunpack.c.l.b16 %v2086
        %v2183 = vunpack.c.h.b16 %v2086
        %v2184 = vunpack.c.l.b16 %v2087
        %v2185 = vunpack.c.l.b16 %v2088
        %v2186 = vunpack.c.h.b16 %v2088
        %v2187 = vunpack.c.l.b16 %v2089
        %v2188 = vunpack.c.l.b16 %v2090
        %v2189 = vunpack.c.h.b16 %v2090
        %v2190 = vunpack.c.l.b16 %v2091
        %v2191 = vunpack.c.l.b16 %v2092
        %v2192 = vunpack.c.h.b16 %v2092
        %v2193 = vunpack.c.l.b16 %v2093
        %v2194 = vunpack.c.l.b16 %v2094
        %v2195 = vunpack.c.h.b16 %v2094
        %v2196 = vunpack.c.l.b16 %v2095
        %v2197 = vunpack.c.l.b16 %v2096
        %v2198 = vunpack.c.h.b16 %v2096
        %v2199 = vunpack.c.l.b16 %v2097
        %v2200 = vunpack.c.l.b16 %v2098
        %v2201 = vunpack.c.h.b16 %v2098
        %v2202 = vunpack.c.l.b16 %v2099
        %v2203 = vunpack.c.l.b16 %v2100
        %v2204 = vunpack.c.h.b16 %v2100
        %v2205 = vunpack.c.l.b16 %v2101
        %v2206 = vunpack.c.l.b16 %v2102
        %v2207 = vunpack.c.h.b16 %v2102
        %v2208 = vunpack.c.l.b16 %v2103
        %v2209 = vunpack.c.l.b16 %v2104
        %v2210 = vunpack.c.h.b16 %v2104
        %v2211 = vunpack.c.l.b16 %v2105
        %v2212 = vunpack.c.l.b16 %v2106
        %v2213 = vunpack.c.h.b16 %v2106
        %v2214 = vunpack.c.l.b16 %v2107
        %v2215 = vunpack.c.l.b16 %v2108
        %v2216 = vunpack.c.h.b16 %v2108
        %v2217 = vunpack.c.l.b16 %v2109
        %v2218 = vunpack.c.l.b16 %v2110
        %v2219 = vunpack.c.h.b16 %v2110
        %v2220 = vunpack.c.l.b16 %v2111
        %v2221 = vunpack.c.l.b16 %v2112
        %v2222 = vunpack.c.h.b16 %v2112
        %v2223 = vunpack.c.l.b16 %v2113
        %v2224 = vunpack.c.l.b16 %v2114
        %v2225 = vunpack.c.h.b16 %v2114
        %v2226 = vunpack.c.l.b16 %v2115
        %v2227 = vunpack.c.l.b16 %v2116
        %v2228 = vunpack.c.h.b16 %v2116
        %v2229 = vunpack.c.l.b16 %v2117
        %v2230 = vunpack.c.l.b16 %v2118
        %v2231 = vunpack.c.h.b16 %v2118
        %v2232 = vunpack.c.l.b16 %v2119
        %v2233 = vunpack.c.l.b16 %v2120
        %v2234 = vunpack.c.h.b16 %v2120
        %v2235 = vunpack.c.l.b16 %v2121
        %v2236 = vunpack.c.l.b16 %v2122
        %v2237 = vunpack.c.h.b16 %v2122
        %v2238 = vunpack.c.l.b16 %v2123
        %v2239 = vunpack.c.l.b16 %v2124
        %v2240 = vunpack.c.h.b16 %v2124
        %v2241 = vunpack.c.l.b16 %v2125
        %v2242 = vunpack.c.l.b16 %v2126
        %v2243 = vunpack.c.h.b16 %v2126
        %v2244 = vunpack.c.l.b16 %v2127
        %v2245 = vunpack.c.l.b16 %v2128
        %v2246 = vunpack.c.h.b16 %v2128
        %v2247 = vunpack.c.l.b16 %v2129
        %v2248 = vunpack.c.l.b16 %v2130
        %v2249 = vunpack.c.h.b16 %v2130
        %v2250 = vunpack.c.l.b16 %v2131
        %v2251 = vunpack.c.l.b16 %v2132
        %v2252 = vunpack.c.h.b16 %v2132
        %v2253 = vunpack.c.l.b16 %v2133
        %v2254 = vpack.c.b16 %v2185, %v2182
        %v2255 = vpack.c.b16 %v2186, %v2183
        %v2256 = vpack.c.b16 %v2187, %v2184
        %v2257 = vpack.c.b16 %v2191, %v2188
        %v2258 = vpack.c.b16 %v2192, %v2189
        %v2259 = vpack.c.b16 %v2193, %v2190
        %v2260 = vpack.c.b16 %v2197, %v2194
        %v2261 = vpack.c.b16 %v2198, %v2195
        %v2262 = vpack.c.b16 %v2199, %v2196
        %v2263 = vpack.c.b16 %v2203, %v2200
        %v2264 = vpack.c.b16 %v2204, %v2201
        %v2265 = vpack.c.b16 %v2205, %v2202
        %v2266 = vpack.c.b16 %v2209, %v2206
        %v2267 = vpack.c.b16 %v2210, %v2207
        %v2268 = vpack.c.b16 %v2211, %v2208
        %v2269 = vpack.c.b16 %v2215, %v2212
        %v2270 = vpack.c.b16 %v2216, %v2213
        %v2271 = vpack.c.b16 %v2217, %v2214
        %v2272 = vpack.c.b16 %v2221, %v2218
        %v2273 = vpack.c.b16 %v2222, %v2219
        %v2274 = vpack.c.b16 %v2223, %v2220
        %v2275 = vpack.c.b16 %v2227, %v2224
        %v2276 = vpack.c.b16 %v2228, %v2225
        %v2277 = vpack.c.b16 %v2229, %v2226
        %v2278 = vpack.c.b16 %v2233, %v2230
        %v2279 = vpack.c.b16 %v2234, %v2231
        %v2280 = vpack.c.b16 %v2235, %v2232
        %v2281 = vpack.c.b16 %v2239, %v2236
        %v2282 = vpack.c.b16 %v2240, %v2237
        %v2283 = vpack.c.b16 %v2241, %v2238
        %v2284 = vpack.c.b16 %v2245, %v2242
        %v2285 = vpack.c.b16 %v2246, %v2243
        %v2286 = vpack.c.b16 %v2247, %v2244
        %v2287 = vpack.c.b16 %v2251, %v2248
        %v2288 = vpack.c.b16 %v2252, %v2249
        %v2289 = vpack.c.b16 %v2253, %v2250
        %v2327 = vsel %vm1702, %v2083, 0
        %v2330 = vsel %vm1702, %v2085, 0
        %2332 = vmatprep.subr.bf16.mxu0 %v2255
        %2333 = vmatpush1.bf16.msra.mxu0 %v2254
        %2334 = vmatprep.subr.bf16.mxu0 %v2258
        %2335 = vmatpush1.bf16.msra.mxu0 %v2257
        %2336 = vmatprep.subr.bf16.mxu0 %v2261
        %2337 = vmatpush1.bf16.msra.mxu0 %v2260
        %2338 = vmatprep.subr.bf16.mxu0 %v2264
        %2339 = vmatpush1.bf16.msra.mxu0 %v2263
        %2340 = vmatprep.subr.bf16.mxu0 %v2267
        %2341 = vmatpush1.bf16.msra.mxu0 %v2266
        %2342 = vmatprep.subr.bf16.mxu0 %v2270
        %2343 = vmatpush1.bf16.msra.mxu0 %v2269
        %2344 = vmatprep.subr.bf16.mxu0 %v2273
        %2345 = vmatpush1.bf16.msra.mxu0 %v2272
        %2346 = vmatprep.subr.bf16.mxu0 %v2276
        %2347 = vmatpush1.bf16.msra.mxu0 %v2275
        %2348 = vmatprep.subr.bf16.mxu0 %v2279
        %2349 = vmatpush1.bf16.msra.mxu0 %v2278
        %2350 = vmatprep.subr.bf16.mxu0 %v2282
        %2351 = vmatpush1.bf16.msra.mxu0 %v2281
        %2352 = vmatprep.subr.bf16.mxu0 %v2285
        %2353 = vmatpush1.bf16.msra.mxu0 %v2284
        %2354 = vmatprep.subr.bf16.mxu0 %v2288
        %2355 = vmatpush1.bf16.msra.mxu0 %v2287
        %2356 = vmatprep.subr.bf16.mxu0 0
        %2357 = vmatpush1.bf16.msra.mxu0 0
        %2358 = vmatprep.subr.bf16.mxu0 0
        %2359 = vmatpush1.bf16.msra.mxu0 0
        %2360 = vmatprep.subr.bf16.mxu0 0
        %2361 = vmatpush1.bf16.msra.mxu0 0
        %2362 = vmatprep.subr.bf16.mxu0 0
        %2363 = vmatpush1.bf16.msra.mxu0 0
        %2364 = vmatprep.mubr.bf16.mxu0 %v2327
        %2365 = vmatmul.mubr.bf16.gmra.mrb[0].mxu0 %v2082
        %v2366 = vpop.f32.mrb[0].mxu0
        %v2367 = vadd.f32 0.0, %v2366
        %v2368 = vpop.f32.mrb[0].mxu0
        %v2369 = vadd.f32 0.0, %v2368
        %v2370 = vpop.f32.mrb[0].mxu0
        %v2371 = vadd.f32 0.0, %v2370
        %v2372 = vpop.f32.mrb[0].mxu0
        %v2373 = vadd.f32 0.0, %v2372
        %2374 = vmatprep.mubr.bf16.mxu0 %v2330
        %2375 = vmatmul.mubr.bf16.gmra.mrb[0].mxu0 %v2084
        %v2376 = vpop.f32.mrb[0].mxu0
        %v2377 = vadd.f32 0.0, %v2376
        %v2378 = vpop.f32.mrb[0].mxu0
        %v2379 = vadd.f32 0.0, %v2378
        %v2380 = vpop.f32.mrb[0].mxu0
        %v2381 = vadd.f32 0.0, %v2380
        %v2382 = vpop.f32.mrb[0].mxu0
        %v2383 = vadd.f32 0.0, %v2382
        %2384 = vdwg.mxu0
        %2385 = vmatprep.subr.bf16.mxu0 0
        %2386 = vmatpush1.bf16.msra.mxu0 %v2256
        %2387 = vmatprep.subr.bf16.mxu0 0
        %2388 = vmatpush1.bf16.msra.mxu0 %v2259
        %2389 = vmatprep.subr.bf16.mxu0 0
        %2390 = vmatpush1.bf16.msra.mxu0 %v2262
        %2391 = vmatprep.subr.bf16.mxu0 0
        %2392 = vmatpush1.bf16.msra.mxu0 %v2265
        %2393 = vmatprep.subr.bf16.mxu0 0
        %2394 = vmatpush1.bf16.msra.mxu0 %v2268
        %2395 = vmatprep.subr.bf16.mxu0 0
        %2396 = vmatpush1.bf16.msra.mxu0 %v2271
        %2397 = vmatprep.subr.bf16.mxu0 0
        %2398 = vmatpush1.bf16.msra.mxu0 %v2274
        %2399 = vmatprep.subr.bf16.mxu0 0
        %2400 = vmatpush1.bf16.msra.mxu0 %v2277
        %2401 = vmatprep.subr.bf16.mxu0 0
        %2402 = vmatpush1.bf16.msra.mxu0 %v2280
        %2403 = vmatprep.subr.bf16.mxu0 0
        %2404 = vmatpush1.bf16.msra.mxu0 %v2283
        %2405 = vmatprep.subr.bf16.mxu0 0
        %2406 = vmatpush1.bf16.msra.mxu0 %v2286
        %2407 = vmatprep.subr.bf16.mxu0 0
        %2408 = vmatpush1.bf16.msra.mxu0 %v2289
        %2409 = vmatprep.subr.bf16.mxu0 0
        %2410 = vmatpush1.bf16.msra.mxu0 0
        %2411 = vmatprep.subr.bf16.mxu0 0
        %2412 = vmatpush1.bf16.msra.mxu0 0
        %2413 = vmatprep.subr.bf16.mxu0 0
        %2414 = vmatpush1.bf16.msra.mxu0 0
        %2415 = vmatprep.subr.bf16.mxu0 0
        %2416 = vmatpush1.bf16.msra.mxu0 0
        %2417 = vmatprep.mubr.bf16.mxu0 %v2327
        %2418 = vmatmul.mubr.bf16.gmra.mrb[0].mxu0 %v2082
        %v2419 = vpop.f32.mrb[0].mxu0
        %v2420 = vadd.f32 0.0, %v2419
        %v2421 = vpop.f32.mrb[0].mxu0
        %v2422 = vpop.f32.mrb[0].mxu0
        %v2423 = vadd.f32 0.0, %v2422
        %v2424 = vpop.f32.mrb[0].mxu0
        %2425 = vmatprep.mubr.bf16.mxu0 %v2330
        %2426 = vmatmul.mubr.bf16.gmra.mrb[0].mxu0 %v2084
        %v2427 = vpop.f32.mrb[0].mxu0
        %v2428 = vadd.f32 0.0, %v2427
        %v2429 = vpop.f32.mrb[0].mxu0
        %v2430 = vpop.f32.mrb[0].mxu0
        %v2431 = vadd.f32 0.0, %v2430
        %v2432 = vpop.f32.mrb[0].mxu0
        %2433 = vdwg.mxu0
        %v2434 = vpack.c.bf16 %v2371, %v2367
        %v2435 = vpack.c.bf16 %v2373, %v2369
        %v2436 = vpack.c.bf16 %v2423, %v2420
        %v2437 = vpack.c.bf16 %v2381, %v2377
        %v2438 = vpack.c.bf16 %v2383, %v2379
        %v2439 = vpack.c.bf16 %v2431, %v2428
        %v2440 = vld [vmem:[#allocation29] sm:$0x7]
        %v2443 = vunpack.c.l.s4 1966171168
        %v2444 = vunpack.c.0.s8 %v2443
        %v2445 = vlaneseq
        %v2446 = vshrl.u32 %v2445, 7
        %v2447 = vsub.s32 %v2444, %v2446
        %v2448 = vrot.slane %v2440, %v2447
        %v2449 = vcombine.high %v2448, %v2448
        %v2451 = vunpack.c.l.s4 1966171168
        %v2452 = vunpack.c.0.s8 %v2451
        %v2453 = vlaneseq
        %v2454 = vshrl.u32 %v2453, 7
        %v2455 = vsub.s32 %v2452, %v2454
        %v2456 = vrot.slane %v2448, %v2455
        %v2458 = vunpack.c.l.s4 1966171168
        %v2459 = vunpack.c.0.s8 %v2458
        %v2460 = vlaneseq
        %v2461 = vshrl.u32 %v2460, 7
        %v2462 = vsub.s32 %v2459, %v2461
        %v2463 = vrot.slane %v2449, %v2462
        %v2464 = vcombine.high %v2456, %v2456
        %v2466 = vpack.i.b16 %v2456, %v2456
        %v2468 = vlaneseq
        %v2469 = vshrl.u32 %v2468, 7
        %v2470 = vsub.s32 0, %v2469
        %v2471 = vrot.slane %v2466, %v2470
        %v2473 = vpack.i.b16 %v2463, %v2463
        %v2475 = vlaneseq
        %v2476 = vshrl.u32 %v2475, 7
        %v2477 = vsub.s32 0, %v2476
        %v2478 = vrot.slane %v2473, %v2477
        %v2480 = vpack.i.b16 %v2464, %v2464
        %v2482 = vlaneseq
        %v2483 = vshrl.u32 %v2482, 7
        %v2484 = vsub.s32 0, %v2483
        %v2485 = vrot.slane %v2480, %v2484
        %v2486 = vadd.bf16 %v2434, %v2471
        %v2487 = vadd.bf16 %v2435, %v2478
        %v2488 = vadd.bf16 %v2436, %v2485
        %v2489 = vadd.bf16 %v2437, %v2471
        %v2490 = vadd.bf16 %v2438, %v2478
        %v2491 = vadd.bf16 %v2439, %v2485
        %v2492 = vmax.bf16 %v2486, 0
        %v2493 = vmax.bf16 %v2487, 0
        %v2494 = vmax.bf16 %v2488, 0
        %v2495 = vmax.bf16 %v2489, 0
        %v2496 = vmax.bf16 %v2490, 0
        %v2497 = vmax.bf16 %v2491, 0
        %v2498 = vld [vmem:[#allocation31] sm:$0xff]
        %v2499 = vld [vmem:[#allocation31 + $0x8] sm:$0xf]
        %v2500 = vld [vmem:[#allocation31 + $0xc] sm:$0xff]
        %v2501 = vld [vmem:[#allocation31 + $0x14] sm:$0xf]
        %v2502 = vld [vmem:[#allocation31 + $0x18] sm:$0xff]
        %v2503 = vld [vmem:[#allocation31 + $0x20] sm:$0xf]
        %v2504 = vld [vmem:[#allocation31 + $0x24] sm:$0xff]
        %v2505 = vld [vmem:[#allocation31 + $0x2c] sm:$0xf]
        %v2506 = vld [vmem:[#allocation31 + $0x30] sm:$0xff]
        %v2507 = vld [vmem:[#allocation31 + $0x38] sm:$0xf]
        %v2508 = vld [vmem:[#allocation31 + $0x3c] sm:$0xff]
        %v2509 = vld [vmem:[#allocation31 + $0x44] sm:$0xf]
        %v2510 = vld [vmem:[#allocation31 + $0x48] sm:$0xff]
        %v2511 = vld [vmem:[#allocation31 + $0x50] sm:$0xf]
        %v2512 = vld [vmem:[#allocation31 + $0x54] sm:$0xff]
        %v2513 = vld [vmem:[#allocation31 + $0x5c] sm:$0xf]
        %v2514 = vld [vmem:[#allocation31 + $0x60] sm:$0xff]
        %v2515 = vld [vmem:[#allocation31 + $0x68] sm:$0xf]
        %v2516 = vld [vmem:[#allocation31 + $0x6c] sm:$0xff]
        %v2517 = vld [vmem:[#allocation31 + $0x74] sm:$0xf]
        %v2518 = vld [vmem:[#allocation31 + $0x78] sm:$0xff]
        %v2519 = vld [vmem:[#allocation31 + $0x80] sm:$0xf]
        %v2520 = vld [vmem:[#allocation31 + $0x84] sm:$0xff]
        %v2521 = vld [vmem:[#allocation31 + $0x8c] sm:$0xf]
        %v2522 = vld [vmem:[#allocation31 + $0x90] sm:$0xff]
        %v2523 = vld [vmem:[#allocation31 + $0x98] sm:$0xf]
        %v2524 = vld [vmem:[#allocation31 + $0x9c] sm:$0xff]
        %v2525 = vld [vmem:[#allocation31 + $0xa4] sm:$0xf]
        %v2526 = vld [vmem:[#allocation31 + $0xa8] sm:$0xff]
        %v2527 = vld [vmem:[#allocation31 + $0xb0] sm:$0xf]
        %v2528 = vld [vmem:[#allocation31 + $0xb4] sm:$0xff]
        %v2529 = vld [vmem:[#allocation31 + $0xbc] sm:$0xf]
        %v2530 = vld [vmem:[#allocation31 + $0xc0] sm:$0xff]
        %v2531 = vld [vmem:[#allocation31 + $0xc8] sm:$0xf]
        %v2532 = vld [vmem:[#allocation31 + $0xcc] sm:$0xff]
        %v2533 = vld [vmem:[#allocation31 + $0xd4] sm:$0xf]
        %v2534 = vld [vmem:[#allocation31 + $0xd8] sm:$0xff]
        %v2535 = vld [vmem:[#allocation31 + $0xe0] sm:$0xf]
        %v2536 = vld [vmem:[#allocation31 + $0xe4] sm:$0xff]
        %v2537 = vld [vmem:[#allocation31 + $0xec] sm:$0xf]
        %v2538 = vld [vmem:[#allocation31 + $0xf0] sm:$0xff]
        %v2539 = vld [vmem:[#allocation31 + $0xf8] sm:$0xf]
        %v2540 = vld [vmem:[#allocation31 + $0xfc] sm:$0xff]
        %v2541 = vld [vmem:[#allocation31 + $0x104] sm:$0xf]
        %v2542 = vld [vmem:[#allocation31 + $0x108] sm:$0xff]
        %v2543 = vld [vmem:[#allocation31 + $0x110] sm:$0xf]
        %v2544 = vld [vmem:[#allocation31 + $0x114] sm:$0xff]
        %v2545 = vld [vmem:[#allocation31 + $0x11c] sm:$0xf]
        %v2546 = vld [vmem:[#allocation31 + $0x120] sm:$0xff]
        %v2547 = vld [vmem:[#allocation31 + $0x128] sm:$0xf]
        %v2548 = vld [vmem:[#allocation31 + $0x12c] sm:$0xff]
        %v2549 = vld [vmem:[#allocation31 + $0x134] sm:$0xf]
        %v2550 = vld [vmem:[#allocation31 + $0x138] sm:$0xff]
        %v2551 = vld [vmem:[#allocation31 + $0x140] sm:$0xf]
        %v2552 = vld [vmem:[#allocation31 + $0x144] sm:$0xff]
        %v2553 = vld [vmem:[#allocation31 + $0x14c] sm:$0xf]
        %v2554 = vld [vmem:[#allocation31 + $0x150] sm:$0xff]
        %v2555 = vld [vmem:[#allocation31 + $0x158] sm:$0xf]
        %v2556 = vld [vmem:[#allocation31 + $0x15c] sm:$0xff]
        %v2557 = vld [vmem:[#allocation31 + $0x164] sm:$0xf]
        %v2558 = vld [vmem:[#allocation31 + $0x168] sm:$0xff]
        %v2559 = vld [vmem:[#allocation31 + $0x170] sm:$0xf]
        %v2560 = vld [vmem:[#allocation31 + $0x174] sm:$0xff]
        %v2561 = vld [vmem:[#allocation31 + $0x17c] sm:$0xf]
        %v2562 = vld [vmem:[#allocation31 + $0x180] sm:$0xff]
        %v2563 = vld [vmem:[#allocation31 + $0x188] sm:$0xf]
        %v2564 = vld [vmem:[#allocation31 + $0x18c] sm:$0xff]
        %v2565 = vld [vmem:[#allocation31 + $0x194] sm:$0xf]
        %v2566 = vld [vmem:[#allocation31 + $0x198] sm:$0xff]
        %v2567 = vld [vmem:[#allocation31 + $0x1a0] sm:$0xf]
        %v2568 = vld [vmem:[#allocation31 + $0x1a4] sm:$0xff]
        %v2569 = vld [vmem:[#allocation31 + $0x1ac] sm:$0xf]
        %v2570 = vld [vmem:[#allocation31 + $0x1b0] sm:$0xff]
        %v2571 = vld [vmem:[#allocation31 + $0x1b8] sm:$0xf]
        %v2572 = vld [vmem:[#allocation31 + $0x1bc] sm:$0xff]
        %v2573 = vld [vmem:[#allocation31 + $0x1c4] sm:$0xf]
        %v2574 = vld [vmem:[#allocation31 + $0x1c8] sm:$0xff]
        %v2575 = vld [vmem:[#allocation31 + $0x1d0] sm:$0xf]
        %v2576 = vld [vmem:[#allocation31 + $0x1d4] sm:$0xff]
        %v2577 = vld [vmem:[#allocation31 + $0x1dc] sm:$0xf]
        %v2578 = vld [vmem:[#allocation31 + $0x1e0] sm:$0xff]
        %v2579 = vld [vmem:[#allocation31 + $0x1e8] sm:$0xf]
        %v2580 = vld [vmem:[#allocation31 + $0x1ec] sm:$0xff]
        %v2581 = vld [vmem:[#allocation31 + $0x1f4] sm:$0xf]
        %v2582 = vld [vmem:[#allocation31 + $0x1f8] sm:$0xff]
        %v2583 = vld [vmem:[#allocation31 + $0x200] sm:$0xf]
        %v2584 = vld [vmem:[#allocation31 + $0x204] sm:$0xff]
        %v2585 = vld [vmem:[#allocation31 + $0x20c] sm:$0xf]
        %v2586 = vld [vmem:[#allocation31 + $0x210] sm:$0xff]
        %v2587 = vld [vmem:[#allocation31 + $0x218] sm:$0xf]
        %v2588 = vld [vmem:[#allocation31 + $0x21c] sm:$0xff]
        %v2589 = vld [vmem:[#allocation31 + $0x224] sm:$0xf]
        %v2590 = vld [vmem:[#allocation31 + $0x228] sm:$0xff]
        %v2591 = vld [vmem:[#allocation31 + $0x230] sm:$0xf]
        %v2592 = vld [vmem:[#allocation31 + $0x234] sm:$0xff]
        %v2593 = vld [vmem:[#allocation31 + $0x23c] sm:$0xf]
        %v2690 = vunpack.c.l.b16 %v2498
        %v2691 = vunpack.c.h.b16 %v2498
        %v2692 = vunpack.c.l.b16 %v2499
        %v2693 = vunpack.c.l.b16 %v2500
        %v2694 = vunpack.c.h.b16 %v2500
        %v2695 = vunpack.c.l.b16 %v2501
        %v2696 = vunpack.c.l.b16 %v2502
        %v2697 = vunpack.c.h.b16 %v2502
        %v2698 = vunpack.c.l.b16 %v2503
        %v2699 = vunpack.c.l.b16 %v2504
        %v2700 = vunpack.c.h.b16 %v2504
        %v2701 = vunpack.c.l.b16 %v2505
        %v2702 = vunpack.c.l.b16 %v2506
        %v2703 = vunpack.c.h.b16 %v2506
        %v2704 = vunpack.c.l.b16 %v2507
        %v2705 = vunpack.c.l.b16 %v2508
        %v2706 = vunpack.c.h.b16 %v2508
        %v2707 = vunpack.c.l.b16 %v2509
        %v2708 = vunpack.c.l.b16 %v2510
        %v2709 = vunpack.c.h.b16 %v2510
        %v2710 = vunpack.c.l.b16 %v2511
        %v2711 = vunpack.c.l.b16 %v2512
        %v2712 = vunpack.c.h.b16 %v2512
        %v2713 = vunpack.c.l.b16 %v2513
        %v2714 = vunpack.c.l.b16 %v2514
        %v2715 = vunpack.c.h.b16 %v2514
        %v2716 = vunpack.c.l.b16 %v2515
        %v2717 = vunpack.c.l.b16 %v2516
        %v2718 = vunpack.c.h.b16 %v2516
        %v2719 = vunpack.c.l.b16 %v2517
        %v2720 = vunpack.c.l.b16 %v2518
        %v2721 = vunpack.c.h.b16 %v2518
        %v2722 = vunpack.c.l.b16 %v2519
        %v2723 = vunpack.c.l.b16 %v2520
        %v2724 = vunpack.c.h.b16 %v2520
        %v2725 = vunpack.c.l.b16 %v2521
        %v2726 = vunpack.c.l.b16 %v2522
        %v2727 = vunpack.c.h.b16 %v2522
        %v2728 = vunpack.c.l.b16 %v2523
        %v2729 = vunpack.c.l.b16 %v2524
        %v2730 = vunpack.c.h.b16 %v2524
        %v2731 = vunpack.c.l.b16 %v2525
        %v2732 = vunpack.c.l.b16 %v2526
        %v2733 = vunpack.c.h.b16 %v2526
        %v2734 = vunpack.c.l.b16 %v2527
        %v2735 = vunpack.c.l.b16 %v2528
        %v2736 = vunpack.c.h.b16 %v2528
        %v2737 = vunpack.c.l.b16 %v2529
        %v2738 = vunpack.c.l.b16 %v2530
        %v2739 = vunpack.c.h.b16 %v2530
        %v2740 = vunpack.c.l.b16 %v2531
        %v2741 = vunpack.c.l.b16 %v2532
        %v2742 = vunpack.c.h.b16 %v2532
        %v2743 = vunpack.c.l.b16 %v2533
        %v2744 = vunpack.c.l.b16 %v2534
        %v2745 = vunpack.c.h.b16 %v2534
        %v2746 = vunpack.c.l.b16 %v2535
        %v2747 = vunpack.c.l.b16 %v2536
        %v2748 = vunpack.c.h.b16 %v2536
        %v2749 = vunpack.c.l.b16 %v2537
        %v2750 = vunpack.c.l.b16 %v2538
        %v2751 = vunpack.c.h.b16 %v2538
        %v2752 = vunpack.c.l.b16 %v2539
        %v2753 = vunpack.c.l.b16 %v2540
        %v2754 = vunpack.c.h.b16 %v2540
        %v2755 = vunpack.c.l.b16 %v2541
        %v2756 = vunpack.c.l.b16 %v2542
        %v2757 = vunpack.c.h.b16 %v2542
        %v2758 = vunpack.c.l.b16 %v2543
        %v2759 = vunpack.c.l.b16 %v2544
        %v2760 = vunpack.c.h.b16 %v2544
        %v2761 = vunpack.c.l.b16 %v2545
        %v2762 = vunpack.c.l.b16 %v2546
        %v2763 = vunpack.c.h.b16 %v2546
        %v2764 = vunpack.c.l.b16 %v2547
        %v2765 = vunpack.c.l.b16 %v2548
        %v2766 = vunpack.c.h.b16 %v2548
        %v2767 = vunpack.c.l.b16 %v2549
        %v2768 = vunpack.c.l.b16 %v2550
        %v2769 = vunpack.c.h.b16 %v2550
        %v2770 = vunpack.c.l.b16 %v2551
        %v2771 = vunpack.c.l.b16 %v2552
        %v2772 = vunpack.c.h.b16 %v2552
        %v2773 = vunpack.c.l.b16 %v2553
        %v2774 = vunpack.c.l.b16 %v2554
        %v2775 = vunpack.c.h.b16 %v2554
        %v2776 = vunpack.c.l.b16 %v2555
        %v2777 = vunpack.c.l.b16 %v2556
        %v2778 = vunpack.c.h.b16 %v2556
        %v2779 = vunpack.c.l.b16 %v2557
        %v2780 = vunpack.c.l.b16 %v2558
        %v2781 = vunpack.c.h.b16 %v2558
        %v2782 = vunpack.c.l.b16 %v2559
        %v2783 = vunpack.c.l.b16 %v2560
        %v2784 = vunpack.c.h.b16 %v2560
        %v2785 = vunpack.c.l.b16 %v2561
        %v2786 = vunpack.c.l.b16 %v2562
        %v2787 = vunpack.c.h.b16 %v2562
        %v2788 = vunpack.c.l.b16 %v2563
        %v2789 = vunpack.c.l.b16 %v2564
        %v2790 = vunpack.c.h.b16 %v2564
        %v2791 = vunpack.c.l.b16 %v2565
        %v2792 = vunpack.c.l.b16 %v2566
        %v2793 = vunpack.c.h.b16 %v2566
        %v2794 = vunpack.c.l.b16 %v2567
        %v2795 = vunpack.c.l.b16 %v2568
        %v2796 = vunpack.c.h.b16 %v2568
        %v2797 = vunpack.c.l.b16 %v2569
        %v2798 = vunpack.c.l.b16 %v2570
        %v2799 = vunpack.c.h.b16 %v2570
        %v2800 = vunpack.c.l.b16 %v2571
        %v2801 = vunpack.c.l.b16 %v2572
        %v2802 = vunpack.c.h.b16 %v2572
        %v2803 = vunpack.c.l.b16 %v2573
        %v2804 = vunpack.c.l.b16 %v2574
        %v2805 = vunpack.c.h.b16 %v2574
        %v2806 = vunpack.c.l.b16 %v2575
        %v2807 = vunpack.c.l.b16 %v2576
        %v2808 = vunpack.c.h.b16 %v2576
        %v2809 = vunpack.c.l.b16 %v2577
        %v2810 = vunpack.c.l.b16 %v2578
        %v2811 = vunpack.c.h.b16 %v2578
        %v2812 = vunpack.c.l.b16 %v2579
        %v2813 = vunpack.c.l.b16 %v2580
        %v2814 = vunpack.c.h.b16 %v2580
        %v2815 = vunpack.c.l.b16 %v2581
        %v2816 = vunpack.c.l.b16 %v2582
        %v2817 = vunpack.c.h.b16 %v2582
        %v2818 = vunpack.c.l.b16 %v2583
        %v2819 = vunpack.c.l.b16 %v2584
        %v2820 = vunpack.c.h.b16 %v2584
        %v2821 = vunpack.c.l.b16 %v2585
        %v2822 = vunpack.c.l.b16 %v2586
        %v2823 = vunpack.c.h.b16 %v2586
        %v2824 = vunpack.c.l.b16 %v2587
        %v2825 = vunpack.c.l.b16 %v2588
        %v2826 = vunpack.c.h.b16 %v2588
        %v2827 = vunpack.c.l.b16 %v2589
        %v2828 = vunpack.c.l.b16 %v2590
        %v2829 = vunpack.c.h.b16 %v2590
        %v2830 = vunpack.c.l.b16 %v2591
        %v2831 = vunpack.c.l.b16 %v2592
        %v2832 = vunpack.c.h.b16 %v2592
        %v2833 = vunpack.c.l.b16 %v2593
        %v2834 = vpack.c.b16 %v2693, %v2690
        %v2835 = vpack.c.b16 %v2694, %v2691
        %v2836 = vpack.c.b16 %v2695, %v2692
        %v2837 = vpack.c.b16 %v2699, %v2696
        %v2838 = vpack.c.b16 %v2700, %v2697
        %v2839 = vpack.c.b16 %v2701, %v2698
        %v2840 = vpack.c.b16 %v2705, %v2702
        %v2841 = vpack.c.b16 %v2706, %v2703
        %v2842 = vpack.c.b16 %v2707, %v2704
        %v2843 = vpack.c.b16 %v2711, %v2708
        %v2844 = vpack.c.b16 %v2712, %v2709
        %v2845 = vpack.c.b16 %v2713, %v2710
        %v2846 = vpack.c.b16 %v2717, %v2714
        %v2847 = vpack.c.b16 %v2718, %v2715
        %v2848 = vpack.c.b16 %v2719, %v2716
        %v2849 = vpack.c.b16 %v2723, %v2720
        %v2850 = vpack.c.b16 %v2724, %v2721
        %v2851 = vpack.c.b16 %v2725, %v2722
        %v2852 = vpack.c.b16 %v2729, %v2726
        %v2853 = vpack.c.b16 %v2730, %v2727
        %v2854 = vpack.c.b16 %v2731, %v2728
        %v2855 = vpack.c.b16 %v2735, %v2732
        %v2856 = vpack.c.b16 %v2736, %v2733
        %v2857 = vpack.c.b16 %v2737, %v2734
        %v2858 = vpack.c.b16 %v2741, %v2738
        %v2859 = vpack.c.b16 %v2742, %v2739
        %v2860 = vpack.c.b16 %v2743, %v2740
        %v2861 = vpack.c.b16 %v2747, %v2744
        %v2862 = vpack.c.b16 %v2748, %v2745
        %v2863 = vpack.c.b16 %v2749, %v2746
        %v2864 = vpack.c.b16 %v2753, %v2750
        %v2865 = vpack.c.b16 %v2754, %v2751
        %v2866 = vpack.c.b16 %v2755, %v2752
        %v2867 = vpack.c.b16 %v2759, %v2756
        %v2868 = vpack.c.b16 %v2760, %v2757
        %v2869 = vpack.c.b16 %v2761, %v2758
        %v2870 = vpack.c.b16 %v2765, %v2762
        %v2871 = vpack.c.b16 %v2766, %v2763
        %v2872 = vpack.c.b16 %v2767, %v2764
        %v2873 = vpack.c.b16 %v2771, %v2768
        %v2874 = vpack.c.b16 %v2772, %v2769
        %v2875 = vpack.c.b16 %v2773, %v2770
        %v2876 = vpack.c.b16 %v2777, %v2774
        %v2877 = vpack.c.b16 %v2778, %v2775
        %v2878 = vpack.c.b16 %v2779, %v2776
        %v2879 = vpack.c.b16 %v2783, %v2780
        %v2880 = vpack.c.b16 %v2784, %v2781
        %v2881 = vpack.c.b16 %v2785, %v2782
        %v2882 = vpack.c.b16 %v2789, %v2786
        %v2883 = vpack.c.b16 %v2790, %v2787
        %v2884 = vpack.c.b16 %v2791, %v2788
        %v2885 = vpack.c.b16 %v2795, %v2792
        %v2886 = vpack.c.b16 %v2796, %v2793
        %v2887 = vpack.c.b16 %v2797, %v2794
        %v2888 = vpack.c.b16 %v2801, %v2798
        %v2889 = vpack.c.b16 %v2802, %v2799
        %v2890 = vpack.c.b16 %v2803, %v2800
        %v2891 = vpack.c.b16 %v2807, %v2804
        %v2892 = vpack.c.b16 %v2808, %v2805
        %v2893 = vpack.c.b16 %v2809, %v2806
        %v2894 = vpack.c.b16 %v2813, %v2810
        %v2895 = vpack.c.b16 %v2814, %v2811
        %v2896 = vpack.c.b16 %v2815, %v2812
        %v2897 = vpack.c.b16 %v2819, %v2816
        %v2898 = vpack.c.b16 %v2820, %v2817
        %v2899 = vpack.c.b16 %v2821, %v2818
        %v2900 = vpack.c.b16 %v2825, %v2822
        %v2901 = vpack.c.b16 %v2826, %v2823
        %v2902 = vpack.c.b16 %v2827, %v2824
        %v2903 = vpack.c.b16 %v2831, %v2828
        %v2904 = vpack.c.b16 %v2832, %v2829
        %v2905 = vpack.c.b16 %v2833, %v2830
        %2978 = vmatprep.subr.bf16.mxu0 %v2835
        %2979 = vmatpush1.bf16.msra.mxu0 %v2834
        %2980 = vmatprep.subr.bf16.mxu0 %v2838
        %2981 = vmatpush1.bf16.msra.mxu0 %v2837
        %2982 = vmatprep.subr.bf16.mxu0 %v2841
        %2983 = vmatpush1.bf16.msra.mxu0 %v2840
        %2984 = vmatprep.subr.bf16.mxu0 %v2844
        %2985 = vmatpush1.bf16.msra.mxu0 %v2843
        %2986 = vmatprep.subr.bf16.mxu0 %v2847
        %2987 = vmatpush1.bf16.msra.mxu0 %v2846
        %2988 = vmatprep.subr.bf16.mxu0 %v2850
        %2989 = vmatpush1.bf16.msra.mxu0 %v2849
        %2990 = vmatprep.subr.bf16.mxu0 %v2853
        %2991 = vmatpush1.bf16.msra.mxu0 %v2852
        %2992 = vmatprep.subr.bf16.mxu0 %v2856
        %2993 = vmatpush1.bf16.msra.mxu0 %v2855
        %2994 = vmatprep.subr.bf16.mxu0 %v2859
        %2995 = vmatpush1.bf16.msra.mxu0 %v2858
        %2996 = vmatprep.subr.bf16.mxu0 %v2862
        %2997 = vmatpush1.bf16.msra.mxu0 %v2861
        %2998 = vmatprep.subr.bf16.mxu0 %v2865
        %2999 = vmatpush1.bf16.msra.mxu0 %v2864
        %3000 = vmatprep.subr.bf16.mxu0 %v2868
        %3001 = vmatpush1.bf16.msra.mxu0 %v2867
        %3002 = vmatprep.subr.bf16.mxu0 %v2871
        %3003 = vmatpush1.bf16.msra.mxu0 %v2870
        %3004 = vmatprep.subr.bf16.mxu0 %v2874
        %3005 = vmatpush1.bf16.msra.mxu0 %v2873
        %3006 = vmatprep.subr.bf16.mxu0 %v2877
        %3007 = vmatpush1.bf16.msra.mxu0 %v2876
        %3008 = vmatprep.subr.bf16.mxu0 %v2880
        %3009 = vmatpush1.bf16.msra.mxu0 %v2879
        %3010 = vmatprep.mubr.bf16.mxu0 %v2493
        %3011 = vmatmul.mubr.bf16.gmra.mrb[0].mxu0 %v2492
        %v3012 = vpop.f32.mrb[0].mxu0
        %v3013 = vadd.f32 0.0, %v3012
        %v3014 = vpop.f32.mrb[0].mxu0
        %v3015 = vadd.f32 0.0, %v3014
        %v3016 = vpop.f32.mrb[0].mxu0
        %v3017 = vadd.f32 0.0, %v3016
        %v3018 = vpop.f32.mrb[0].mxu0
        %v3019 = vadd.f32 0.0, %v3018
        %3020 = vmatprep.mubr.bf16.mxu0 %v2496
        %3021 = vmatmul.mubr.bf16.gmra.mrb[0].mxu0 %v2495
        %v3022 = vpop.f32.mrb[0].mxu0
        %v3023 = vadd.f32 0.0, %v3022
        %v3024 = vpop.f32.mrb[0].mxu0
        %v3025 = vadd.f32 0.0, %v3024
        %v3026 = vpop.f32.mrb[0].mxu0
        %v3027 = vadd.f32 0.0, %v3026
        %v3028 = vpop.f32.mrb[0].mxu0
        %v3029 = vadd.f32 0.0, %v3028
        %3030 = vdwg.mxu0
        %3031 = vmatprep.subr.bf16.mxu0 %v2883
        %3032 = vmatpush1.bf16.msra.mxu0 %v2882
        %3033 = vmatprep.subr.bf16.mxu0 %v2886
        %3034 = vmatpush1.bf16.msra.mxu0 %v2885
        %3035 = vmatprep.subr.bf16.mxu0 %v2889
        %3036 = vmatpush1.bf16.msra.mxu0 %v2888
        %3037 = vmatprep.subr.bf16.mxu0 %v2892
        %3038 = vmatpush1.bf16.msra.mxu0 %v2891
        %3039 = vmatprep.subr.bf16.mxu0 %v2895
        %3040 = vmatpush1.bf16.msra.mxu0 %v2894
        %3041 = vmatprep.subr.bf16.mxu0 %v2898
        %3042 = vmatpush1.bf16.msra.mxu0 %v2897
        %3043 = vmatprep.subr.bf16.mxu0 %v2901
        %3044 = vmatpush1.bf16.msra.mxu0 %v2900
        %3045 = vmatprep.subr.bf16.mxu0 %v2904
        %3046 = vmatpush1.bf16.msra.mxu0 %v2903
        %3047 = vmatprep.subr.bf16.mxu0 0
        %3048 = vmatpush1.bf16.msra.mxu0 0
        %3049 = vmatprep.subr.bf16.mxu0 0
        %3050 = vmatpush1.bf16.msra.mxu0 0
        %3051 = vmatprep.subr.bf16.mxu0 0
        %3052 = vmatpush1.bf16.msra.mxu0 0
        %3053 = vmatprep.subr.bf16.mxu0 0
        %3054 = vmatpush1.bf16.msra.mxu0 0
        %3055 = vmatprep.subr.bf16.mxu0 0
        %3056 = vmatpush1.bf16.msra.mxu0 0
        %3057 = vmatprep.subr.bf16.mxu0 0
        %3058 = vmatpush1.bf16.msra.mxu0 0
        %3059 = vmatprep.subr.bf16.mxu0 0
        %3060 = vmatpush1.bf16.msra.mxu0 0
        %3061 = vmatprep.subr.bf16.mxu0 0
        %3062 = vmatpush1.bf16.msra.mxu0 0
        %3063 = vmatprep.mubr.bf16.mxu0 0
        %3064 = vmatmul.mubr.bf16.gmra.mrb[0].mxu0 %v2494
        %v3065 = vpop.f32.mrb[0].mxu0
        %v3066 = vadd.f32 %v3013, %v3065
        %v3067 = vpop.f32.mrb[0].mxu0
        %v3068 = vadd.f32 %v3015, %v3067
        %v3069 = vpop.f32.mrb[0].mxu0
        %v3070 = vadd.f32 %v3017, %v3069
        %v3071 = vpop.f32.mrb[0].mxu0
        %v3072 = vadd.f32 %v3019, %v3071
        %3073 = vmatprep.mubr.bf16.mxu0 0
        %3074 = vmatmul.mubr.bf16.gmra.mrb[0].mxu0 %v2497
        %v3075 = vpop.f32.mrb[0].mxu0
        %v3076 = vadd.f32 %v3023, %v3075
        %v3077 = vpop.f32.mrb[0].mxu0
        %v3078 = vadd.f32 %v3025, %v3077
        %v3079 = vpop.f32.mrb[0].mxu0
        %v3080 = vadd.f32 %v3027, %v3079
        %v3081 = vpop.f32.mrb[0].mxu0
        %v3082 = vadd.f32 %v3029, %v3081
        %3083 = vdwg.mxu0
        %3084 = vmatprep.subr.bf16.mxu0 0
        %3085 = vmatpush1.bf16.msra.mxu0 %v2836
        %3086 = vmatprep.subr.bf16.mxu0 0
        %3087 = vmatpush1.bf16.msra.mxu0 %v2839
        %3088 = vmatprep.subr.bf16.mxu0 0
        %3089 = vmatpush1.bf16.msra.mxu0 %v2842
        %3090 = vmatprep.subr.bf16.mxu0 0
        %3091 = vmatpush1.bf16.msra.mxu0 %v2845
        %3092 = vmatprep.subr.bf16.mxu0 0
        %3093 = vmatpush1.bf16.msra.mxu0 %v2848
        %3094 = vmatprep.subr.bf16.mxu0 0
        %3095 = vmatpush1.bf16.msra.mxu0 %v2851
        %3096 = vmatprep.subr.bf16.mxu0 0
        %3097 = vmatpush1.bf16.msra.mxu0 %v2854
        %3098 = vmatprep.subr.bf16.mxu0 0
        %3099 = vmatpush1.bf16.msra.mxu0 %v2857
        %3100 = vmatprep.subr.bf16.mxu0 0
        %3101 = vmatpush1.bf16.msra.mxu0 %v2860
        %3102 = vmatprep.subr.bf16.mxu0 0
        %3103 = vmatpush1.bf16.msra.mxu0 %v2863
        %3104 = vmatprep.subr.bf16.mxu0 0
        %3105 = vmatpush1.bf16.msra.mxu0 %v2866
        %3106 = vmatprep.subr.bf16.mxu0 0
        %3107 = vmatpush1.bf16.msra.mxu0 %v2869
        %3108 = vmatprep.subr.bf16.mxu0 0
        %3109 = vmatpush1.bf16.msra.mxu0 %v2872
        %3110 = vmatprep.subr.bf16.mxu0 0
        %3111 = vmatpush1.bf16.msra.mxu0 %v2875
        %3112 = vmatprep.subr.bf16.mxu0 0
        %3113 = vmatpush1.bf16.msra.mxu0 %v2878
        %3114 = vmatprep.subr.bf16.mxu0 0
        %3115 = vmatpush1.bf16.msra.mxu0 %v2881
        %3116 = vmatprep.mubr.bf16.mxu0 %v2493
        %3117 = vmatmul.mubr.bf16.gmra.mrb[0].mxu0 %v2492
        %v3118 = vpop.f32.mrb[0].mxu0
        %v3119 = vadd.f32 0.0, %v3118
        %v3120 = vpop.f32.mrb[0].mxu0
        %v3121 = vpop.f32.mrb[0].mxu0
        %v3122 = vadd.f32 0.0, %v3121
        %v3123 = vpop.f32.mrb[0].mxu0
        %3124 = vmatprep.mubr.bf16.mxu0 %v2496
        %3125 = vmatmul.mubr.bf16.gmra.mrb[0].mxu0 %v2495
        %v3126 = vpop.f32.mrb[0].mxu0
        %v3127 = vadd.f32 0.0, %v3126
        %v3128 = vpop.f32.mrb[0].mxu0
        %v3129 = vpop.f32.mrb[0].mxu0
        %v3130 = vadd.f32 0.0, %v3129
        %v3131 = vpop.f32.mrb[0].mxu0
        %3132 = vdwg.mxu0
        %3133 = vmatprep.subr.bf16.mxu0 0
        %3134 = vmatpush1.bf16.msra.mxu0 %v2884
        %3135 = vmatprep.subr.bf16.mxu0 0
        %3136 = vmatpush1.bf16.msra.mxu0 %v2887
        %3137 = vmatprep.subr.bf16.mxu0 0
        %3138 = vmatpush1.bf16.msra.mxu0 %v2890
        %3139 = vmatprep.subr.bf16.mxu0 0
        %3140 = vmatpush1.bf16.msra.mxu0 %v2893
        %3141 = vmatprep.subr.bf16.mxu0 0
        %3142 = vmatpush1.bf16.msra.mxu0 %v2896
        %3143 = vmatprep.subr.bf16.mxu0 0
        %3144 = vmatpush1.bf16.msra.mxu0 %v2899
        %3145 = vmatprep.subr.bf16.mxu0 0
        %3146 = vmatpush1.bf16.msra.mxu0 %v2902
        %3147 = vmatprep.subr.bf16.mxu0 0
        %3148 = vmatpush1.bf16.msra.mxu0 %v2905
        %3149 = vmatprep.subr.bf16.mxu0 0
        %3150 = vmatpush1.bf16.msra.mxu0 0
        %3151 = vmatprep.subr.bf16.mxu0 0
        %3152 = vmatpush1.bf16.msra.mxu0 0
        %3153 = vmatprep.subr.bf16.mxu0 0
        %3154 = vmatpush1.bf16.msra.mxu0 0
        %3155 = vmatprep.subr.bf16.mxu0 0
        %3156 = vmatpush1.bf16.msra.mxu0 0
        %3157 = vmatprep.subr.bf16.mxu0 0
        %3158 = vmatpush1.bf16.msra.mxu0 0
        %3159 = vmatprep.subr.bf16.mxu0 0
        %3160 = vmatpush1.bf16.msra.mxu0 0
        %3161 = vmatprep.subr.bf16.mxu0 0
        %3162 = vmatpush1.bf16.msra.mxu0 0
        %3163 = vmatprep.subr.bf16.mxu0 0
        %3164 = vmatpush1.bf16.msra.mxu0 0
        %3165 = vmatprep.mubr.bf16.mxu0 0
        %3166 = vmatmul.mubr.bf16.gmra.mrb[0].mxu0 %v2494
        %v3167 = vpop.f32.mrb[0].mxu0
        %v3168 = vadd.f32 %v3119, %v3167
        %v3169 = vpop.f32.mrb[0].mxu0
        %v3170 = vpop.f32.mrb[0].mxu0
        %v3171 = vadd.f32 %v3122, %v3170
        %v3172 = vpop.f32.mrb[0].mxu0
        %3173 = vmatprep.mubr.bf16.mxu0 0
        %3174 = vmatmul.mubr.bf16.gmra.mrb[0].mxu0 %v2497
        %v3175 = vpop.f32.mrb[0].mxu0
        %v3176 = vadd.f32 %v3127, %v3175
        %v3177 = vpop.f32.mrb[0].mxu0
        %v3178 = vpop.f32.mrb[0].mxu0
        %v3179 = vadd.f32 %v3130, %v3178
        %v3180 = vpop.f32.mrb[0].mxu0
        %3181 = vdwg.mxu0
        %v3182 = vpack.c.bf16 %v3070, %v3066
        %v3183 = vpack.c.bf16 %v3072, %v3068
        %v3184 = vpack.c.bf16 %v3171, %v3168
        %v3185 = vpack.c.bf16 %v3080, %v3076
        %v3186 = vpack.c.bf16 %v3082, %v3078
        %v3187 = vpack.c.bf16 %v3179, %v3176
        %v3188 = vld [vmem:[#allocation32] sm:$0x7]
        %v3191 = vunpack.c.l.s4 1966171168
        %v3192 = vunpack.c.0.s8 %v3191
        %v3193 = vlaneseq
        %v3194 = vshrl.u32 %v3193, 7
        %v3195 = vsub.s32 %v3192, %v3194
        %v3196 = vrot.slane %v3188, %v3195
        %v3197 = vcombine.high %v3196, %v3196
        %v3199 = vunpack.c.l.s4 1966171168
        %v3200 = vunpack.c.0.s8 %v3199
        %v3201 = vlaneseq
        %v3202 = vshrl.u32 %v3201, 7
        %v3203 = vsub.s32 %v3200, %v3202
        %v3204 = vrot.slane %v3196, %v3203
        %v3206 = vunpack.c.l.s4 1966171168
        %v3207 = vunpack.c.0.s8 %v3206
        %v3208 = vlaneseq
        %v3209 = vshrl.u32 %v3208, 7
        %v3210 = vsub.s32 %v3207, %v3209
        %v3211 = vrot.slane %v3197, %v3210
        %v3212 = vcombine.high %v3204, %v3204
        %v3214 = vpack.i.b16 %v3204, %v3204
        %v3216 = vlaneseq
        %v3217 = vshrl.u32 %v3216, 7
        %v3218 = vsub.s32 0, %v3217
        %v3219 = vrot.slane %v3214, %v3218
        %v3221 = vpack.i.b16 %v3211, %v3211
        %v3223 = vlaneseq
        %v3224 = vshrl.u32 %v3223, 7
        %v3225 = vsub.s32 0, %v3224
        %v3226 = vrot.slane %v3221, %v3225
        %v3228 = vpack.i.b16 %v3212, %v3212
        %v3230 = vlaneseq
        %v3231 = vshrl.u32 %v3230, 7
        %v3232 = vsub.s32 0, %v3231
        %v3233 = vrot.slane %v3228, %v3232
        %v3234 = vadd.bf16 %v3182, %v3219
        %v3235 = vadd.bf16 %v3183, %v3226
        %v3236 = vadd.bf16 %v3184, %v3233
        %v3237 = vadd.bf16 %v3185, %v3219
        %v3238 = vadd.bf16 %v3186, %v3226
        %v3239 = vadd.bf16 %v3187, %v3233
        %v3240 = vmax.bf16 %v3234, 0
        %v3241 = vmax.bf16 %v3235, 0
        %v3242 = vmax.bf16 %v3236, 0
        %v3243 = vmax.bf16 %v3237, 0
        %v3244 = vmax.bf16 %v3238, 0
        %v3245 = vmax.bf16 %v3239, 0
        %v3246 = vld [vmem:[#allocation34] sm:$0xf]
        %v3247 = vld [vmem:[#allocation34 + $0x4] sm:$0xf]
        %v3248 = vld [vmem:[#allocation34 + $0x8] sm:$0xf]
        %v3249 = vld [vmem:[#allocation34 + $0xc] sm:$0xf]
        %v3250 = vld [vmem:[#allocation34 + $0x10] sm:$0xf]
        %v3251 = vld [vmem:[#allocation34 + $0x14] sm:$0xf]
        %v3252 = vld [vmem:[#allocation34 + $0x18] sm:$0xf]
        %v3253 = vld [vmem:[#allocation34 + $0x1c] sm:$0xf]
        %v3254 = vld [vmem:[#allocation34 + $0x20] sm:$0xf]
        %v3255 = vld [vmem:[#allocation34 + $0x24] sm:$0xf]
        %v3256 = vld [vmem:[#allocation34 + $0x28] sm:$0xf]
        %v3257 = vld [vmem:[#allocation34 + $0x2c] sm:$0xf]
        %v3258 = vld [vmem:[#allocation34 + $0x30] sm:$0xf]
        %v3259 = vld [vmem:[#allocation34 + $0x34] sm:$0xf]
        %v3260 = vld [vmem:[#allocation34 + $0x38] sm:$0xf]
        %v3261 = vld [vmem:[#allocation34 + $0x3c] sm:$0xf]
        %v3262 = vld [vmem:[#allocation34 + $0x40] sm:$0xf]
        %v3263 = vld [vmem:[#allocation34 + $0x44] sm:$0xf]
        %v3264 = vld [vmem:[#allocation34 + $0x48] sm:$0xf]
        %v3265 = vld [vmem:[#allocation34 + $0x4c] sm:$0xf]
        %v3266 = vld [vmem:[#allocation34 + $0x50] sm:$0xf]
        %v3267 = vld [vmem:[#allocation34 + $0x54] sm:$0xf]
        %v3268 = vld [vmem:[#allocation34 + $0x58] sm:$0xf]
        %v3269 = vld [vmem:[#allocation34 + $0x5c] sm:$0xf]
        %v3270 = vld [vmem:[#allocation34 + $0x60] sm:$0xf]
        %v3271 = vld [vmem:[#allocation34 + $0x64] sm:$0xf]
        %v3272 = vld [vmem:[#allocation34 + $0x68] sm:$0xf]
        %v3273 = vld [vmem:[#allocation34 + $0x6c] sm:$0xf]
        %v3274 = vld [vmem:[#allocation34 + $0x70] sm:$0xf]
        %v3275 = vld [vmem:[#allocation34 + $0x74] sm:$0xf]
        %v3276 = vld [vmem:[#allocation34 + $0x78] sm:$0xf]
        %v3277 = vld [vmem:[#allocation34 + $0x7c] sm:$0xf]
        %v3278 = vld [vmem:[#allocation34 + $0x80] sm:$0xf]
        %v3279 = vld [vmem:[#allocation34 + $0x84] sm:$0xf]
        %v3280 = vld [vmem:[#allocation34 + $0x88] sm:$0xf]
        %v3281 = vld [vmem:[#allocation34 + $0x8c] sm:$0xf]
        %v3282 = vld [vmem:[#allocation34 + $0x90] sm:$0xf]
        %v3283 = vld [vmem:[#allocation34 + $0x94] sm:$0xf]
        %v3284 = vld [vmem:[#allocation34 + $0x98] sm:$0xf]
        %v3285 = vld [vmem:[#allocation34 + $0x9c] sm:$0xf]
        %v3286 = vld [vmem:[#allocation34 + $0xa0] sm:$0xf]
        %v3287 = vld [vmem:[#allocation34 + $0xa4] sm:$0xf]
        %v3288 = vld [vmem:[#allocation34 + $0xa8] sm:$0xf]
        %v3289 = vld [vmem:[#allocation34 + $0xac] sm:$0xf]
        %v3290 = vld [vmem:[#allocation34 + $0xb0] sm:$0xf]
        %v3291 = vld [vmem:[#allocation34 + $0xb4] sm:$0xf]
        %v3292 = vld [vmem:[#allocation34 + $0xb8] sm:$0xf]
        %v3293 = vld [vmem:[#allocation34 + $0xbc] sm:$0xf]
        %v3294 = vld [vmem:[#allocation35] sm:$0x1]
        %v3296 = vlaneseq
        %v3297 = vshrl.u32 %v3296, 7
        %v3298 = vsub.s32 0, %v3297
        %v3299 = vrot.slane %v3294, %v3298
        %v3349 = vunpack.c.l.b16 %v3246
        %v3350 = vunpack.c.l.b16 %v3247
        %v3351 = vunpack.c.l.b16 %v3248
        %v3352 = vunpack.c.l.b16 %v3249
        %v3353 = vunpack.c.l.b16 %v3250
        %v3354 = vunpack.c.l.b16 %v3251
        %v3355 = vunpack.c.l.b16 %v3252
        %v3356 = vunpack.c.l.b16 %v3253
        %v3357 = vunpack.c.l.b16 %v3254
        %v3358 = vunpack.c.l.b16 %v3255
        %v3359 = vunpack.c.l.b16 %v3256
        %v3360 = vunpack.c.l.b16 %v3257
        %v3361 = vunpack.c.l.b16 %v3258
        %v3362 = vunpack.c.l.b16 %v3259
        %v3363 = vunpack.c.l.b16 %v3260
        %v3364 = vunpack.c.l.b16 %v3261
        %v3365 = vunpack.c.l.b16 %v3262
        %v3366 = vunpack.c.l.b16 %v3263
        %v3367 = vunpack.c.l.b16 %v3264
        %v3368 = vunpack.c.l.b16 %v3265
        %v3369 = vunpack.c.l.b16 %v3266
        %v3370 = vunpack.c.l.b16 %v3267
        %v3371 = vunpack.c.l.b16 %v3268
        %v3372 = vunpack.c.l.b16 %v3269
        %v3373 = vunpack.c.l.b16 %v3270
        %v3374 = vunpack.c.l.b16 %v3271
        %v3375 = vunpack.c.l.b16 %v3272
        %v3376 = vunpack.c.l.b16 %v3273
        %v3377 = vunpack.c.l.b16 %v3274
        %v3378 = vunpack.c.l.b16 %v3275
        %v3379 = vunpack.c.l.b16 %v3276
        %v3380 = vunpack.c.l.b16 %v3277
        %v3381 = vunpack.c.l.b16 %v3278
        %v3382 = vunpack.c.l.b16 %v3279
        %v3383 = vunpack.c.l.b16 %v3280
        %v3384 = vunpack.c.l.b16 %v3281
        %v3385 = vunpack.c.l.b16 %v3282
        %v3386 = vunpack.c.l.b16 %v3283
        %v3387 = vunpack.c.l.b16 %v3284
        %v3388 = vunpack.c.l.b16 %v3285
        %v3389 = vunpack.c.l.b16 %v3286
        %v3390 = vunpack.c.l.b16 %v3287
        %v3391 = vunpack.c.l.b16 %v3288
        %v3392 = vunpack.c.l.b16 %v3289
        %v3393 = vunpack.c.l.b16 %v3290
        %v3394 = vunpack.c.l.b16 %v3291
        %v3395 = vunpack.c.l.b16 %v3292
        %v3396 = vunpack.c.l.b16 %v3293
        %v3397 = vpack.c.b16 %v3350, %v3349
        %v3398 = vpack.c.b16 %v3352, %v3351
        %v3399 = vpack.c.b16 %v3354, %v3353
        %v3400 = vpack.c.b16 %v3356, %v3355
        %v3401 = vpack.c.b16 %v3358, %v3357
        %v3402 = vpack.c.b16 %v3360, %v3359
        %v3403 = vpack.c.b16 %v3362, %v3361
        %v3404 = vpack.c.b16 %v3364, %v3363
        %v3405 = vpack.c.b16 %v3366, %v3365
        %v3406 = vpack.c.b16 %v3368, %v3367
        %v3407 = vpack.c.b16 %v3370, %v3369
        %v3408 = vpack.c.b16 %v3372, %v3371
        %v3409 = vpack.c.b16 %v3374, %v3373
        %v3410 = vpack.c.b16 %v3376, %v3375
        %v3411 = vpack.c.b16 %v3378, %v3377
        %v3412 = vpack.c.b16 %v3380, %v3379
        %v3413 = vpack.c.b16 %v3382, %v3381
        %v3414 = vpack.c.b16 %v3384, %v3383
        %v3415 = vpack.c.b16 %v3386, %v3385
        %v3416 = vpack.c.b16 %v3388, %v3387
        %v3417 = vpack.c.b16 %v3390, %v3389
        %v3418 = vpack.c.b16 %v3392, %v3391
        %v3419 = vpack.c.b16 %v3394, %v3393
        %v3420 = vpack.c.b16 %v3396, %v3395
        %3445 = vmatprep.subr.bf16.mxu0 0
        %3446 = vmatpush1.bf16.msra.mxu0 %v3397
        %3447 = vmatprep.subr.bf16.mxu0 0
        %3448 = vmatpush1.bf16.msra.mxu0 %v3398
        %3449 = vmatprep.subr.bf16.mxu0 0
        %3450 = vmatpush1.bf16.msra.mxu0 %v3399
        %3451 = vmatprep.subr.bf16.mxu0 0
        %3452 = vmatpush1.bf16.msra.mxu0 %v3400
        %3453 = vmatprep.subr.bf16.mxu0 0
        %3454 = vmatpush1.bf16.msra.mxu0 %v3401
        %3455 = vmatprep.subr.bf16.mxu0 0
        %3456 = vmatpush1.bf16.msra.mxu0 %v3402
        %3457 = vmatprep.subr.bf16.mxu0 0
        %3458 = vmatpush1.bf16.msra.mxu0 %v3403
        %3459 = vmatprep.subr.bf16.mxu0 0
        %3460 = vmatpush1.bf16.msra.mxu0 %v3404
        %3461 = vmatprep.subr.bf16.mxu0 0
        %3462 = vmatpush1.bf16.msra.mxu0 %v3405
        %3463 = vmatprep.subr.bf16.mxu0 0
        %3464 = vmatpush1.bf16.msra.mxu0 %v3406
        %3465 = vmatprep.subr.bf16.mxu0 0
        %3466 = vmatpush1.bf16.msra.mxu0 %v3407
        %3467 = vmatprep.subr.bf16.mxu0 0
        %3468 = vmatpush1.bf16.msra.mxu0 %v3408
        %3469 = vmatprep.subr.bf16.mxu0 0
        %3470 = vmatpush1.bf16.msra.mxu0 %v3409
        %3471 = vmatprep.subr.bf16.mxu0 0
        %3472 = vmatpush1.bf16.msra.mxu0 %v3410
        %3473 = vmatprep.subr.bf16.mxu0 0
        %3474 = vmatpush1.bf16.msra.mxu0 %v3411
        %3475 = vmatprep.subr.bf16.mxu0 0
        %3476 = vmatpush1.bf16.msra.mxu0 %v3412
        %3477 = vmatprep.mubr.bf16.mxu0 %v3241
        %3478 = vmatmul.mubr.bf16.gmra.mrb[0].mxu0 %v3240
        %v3479 = vpop.f32.mrb[0].mxu0
        %v3480 = vadd.f32 %v3299, %v3479
        %v3481 = vpop.f32.mrb[0].mxu0
        %v3482 = vpop.f32.mrb[0].mxu0
        %v3483 = vadd.f32 %v3299, %v3482
        %v3484 = vpop.f32.mrb[0].mxu0
        %3485 = vmatprep.mubr.bf16.mxu0 %v3244
        %3486 = vmatmul.mubr.bf16.gmra.mrb[0].mxu0 %v3243
        %v3487 = vpop.f32.mrb[0].mxu0
        %v3488 = vadd.f32 %v3299, %v3487
        %v3489 = vpop.f32.mrb[0].mxu0
        %v3490 = vpop.f32.mrb[0].mxu0
        %v3491 = vadd.f32 %v3299, %v3490
        %v3492 = vpop.f32.mrb[0].mxu0
        %3493 = vdwg.mxu0
        %3494 = vmatprep.subr.bf16.mxu0 0
        %3495 = vmatpush1.bf16.msra.mxu0 %v3413
        %3496 = vmatprep.subr.bf16.mxu0 0
        %3497 = vmatpush1.bf16.msra.mxu0 %v3414
        %3498 = vmatprep.subr.bf16.mxu0 0
        %3499 = vmatpush1.bf16.msra.mxu0 %v3415
        %3500 = vmatprep.subr.bf16.mxu0 0
        %3501 = vmatpush1.bf16.msra.mxu0 %v3416
        %3502 = vmatprep.subr.bf16.mxu0 0
        %3503 = vmatpush1.bf16.msra.mxu0 %v3417
        %3504 = vmatprep.subr.bf16.mxu0 0
        %3505 = vmatpush1.bf16.msra.mxu0 %v3418
        %3506 = vmatprep.subr.bf16.mxu0 0
        %3507 = vmatpush1.bf16.msra.mxu0 %v3419
        %3508 = vmatprep.subr.bf16.mxu0 0
        %3509 = vmatpush1.bf16.msra.mxu0 %v3420
        %3510 = vmatprep.subr.bf16.mxu0 0
        %3511 = vmatpush1.bf16.msra.mxu0 0
        %3512 = vmatprep.subr.bf16.mxu0 0
        %3513 = vmatpush1.bf16.msra.mxu0 0
        %3514 = vmatprep.subr.bf16.mxu0 0
        %3515 = vmatpush1.bf16.msra.mxu0 0
        %3516 = vmatprep.subr.bf16.mxu0 0
        %3517 = vmatpush1.bf16.msra.mxu0 0
        %3518 = vmatprep.subr.bf16.mxu0 0
        %3519 = vmatpush1.bf16.msra.mxu0 0
        %3520 = vmatprep.subr.bf16.mxu0 0
        %3521 = vmatpush1.bf16.msra.mxu0 0
        %3522 = vmatprep.subr.bf16.mxu0 0
        %3523 = vmatpush1.bf16.msra.mxu0 0
        %3524 = vmatprep.subr.bf16.mxu0 0
        %3525 = vmatpush1.bf16.msra.mxu0 0
        %3526 = vmatprep.mubr.bf16.mxu0 0
        %3527 = vmatmul.mubr.bf16.gmra.mrb[0].mxu0 %v3242
        %v3528 = vpop.f32.mrb[0].mxu0
        %v3529 = vadd.f32 %v3480, %v3528
        %v3530 = vpop.f32.mrb[0].mxu0
        %v3531 = vpop.f32.mrb[0].mxu0
        %v3532 = vadd.f32 %v3483, %v3531
        %v3533 = vpop.f32.mrb[0].mxu0
        %3534 = vmatprep.mubr.bf16.mxu0 0
        %3535 = vmatmul.mubr.bf16.gmra.mrb[0].mxu0 %v3245
        %v3536 = vpop.f32.mrb[0].mxu0
        %v3537 = vadd.f32 %v3488, %v3536
        %v3538 = vpop.f32.mrb[0].mxu0
        %v3539 = vpop.f32.mrb[0].mxu0
        %v3540 = vadd.f32 %v3491, %v3539
        %v3541 = vpop.f32.mrb[0].mxu0
        %3542 = vdwg.mxu0
        %v3543 = vld [vmem:[#allocation38] sm:$0x1]
        %v3545 = vlaneseq
        %v3546 = vshrl.u32 %v3545, 7
        %v3547 = vsub.s32 0, %v3546
        %v3548 = vrot.slane %v3543, %v3547
        %v3550 = vmul.f32 %v3529, %v3548
        %v3551 = vmul.f32 %v3532, %v3548
        %v3552 = vmul.f32 %v3537, %v3548
        %v3553 = vmul.f32 %v3540, %v3548
        %v3554 = vld [vmem:[#allocation40] sm:$0x1]
        %v3556 = vlaneseq
        %v3557 = vshrl.u32 %v3556, 7
        %v3558 = vsub.s32 0, %v3557
        %v3559 = vrot.slane %v3554, %v3558
        %v3561 = vadd.f32 %v3550, %v3559
        %v3562 = vadd.f32 %v3551, %v3559
        %v3563 = vadd.f32 %v3552, %v3559
        %v3564 = vadd.f32 %v3553, %v3559
        %3565 = vst [vmem:[%s1129] sm:$0xff] %v3561
        %3566 = vst [vmem:[%s1129 + $0x8] sm:$0xff] %v3562
        %3567 = vst [vmem:[%s1129 + $0x10] sm:$0xff] %v3563
        %3568 = vst [vmem:[%s1129 + $0x18] sm:$0xff] %v3564
        %s3569 = sand.u32 %s599, 1
        %s3570 = scalar_lea.sflag [#allocation4], %s3569
        %s3571 = sand.u32 %s599, 1
        %s3572 = smul.addr %s3571, 32
        %s3573 = scalar_lea.vmem [#allocation41], %s3572
        // Predicated region
        $region221: #{tpu_custom_call.1} parent=119 // pred_check
          %p3574 = pneg %p609
        $region222: #{tpu_custom_call.1} parent=119 // pred_check_branch
          %3576 = sbr.rel (%p3574) target = $region224
        $region223: #{tpu_custom_call.1} parent=119 // pred_region
          %s3577 = smul.u32 4, %s56
          %s3579 = ssub.s32 512, 512
          %3580 = vsyncadd %s3570, %s3579
          %s3581 = smul.addr %s3577, 128
          %s3582 = scalar_lea.hbm %s25, %s3581
          %s3583 = sshll.u32 %s3573, 4
          %s3584 = int_to_ptr.vmem [resolvable:$true] %s3583
          %3589 = dma.vmem_to_hbm [thread:$0]  %s3584, 512, %s3582, %s3570, 128, 128, 8
        $region224: #{tpu_custom_call.1} parent=119 // pred_fallthru
          _
      $region120: #{tpu_custom_call.1} parent=5 // pred_fallthru
        _
      %p3590 = scmp.le.s32.totalorder 2, %s51
      // Predicated region
      $region225: #{tpu_custom_call.1} parent=5 // pred_check
        %p3591 = pneg %p3590
      $region226: #{tpu_custom_call.1} parent=5 // pred_check_branch
        %3593 = sbr.rel (%p3591) target = $region228
      $region227: #{tpu_custom_call.1} parent=5 // pred_region
        %s3594 = ssub.s32 %s51, 2
        // Predicated region
        $region229: #{tpu_custom_call.1} parent=227 // pred_check
          %p3595 = pneg %p615
        $region230: #{tpu_custom_call.1} parent=227 // pred_check_branch
          %3597 = sbr.rel (%p3595) target = $region232
        $region231: #{tpu_custom_call.1} parent=227 // pred_region
          %s3598 = sand.u32 %s600, 1
          %s3599 = scalar_lea.sflag [#allocation4], %s3598
          %s3600 = sand.u32 %s600, 1
          %s3601 = smul.addr %s3600, 32
          %s3602 = scalar_lea.vmem [#allocation41], %s3601
          %3603 = dma.done %s3599, 512
        $region232: #{tpu_custom_call.1} parent=227 // pred_fallthru
          _
      $region228: #{tpu_custom_call.1} parent=5 // pred_fallthru
        _
    $region6: #{tpu_custom_call.1} parent=1 // loop_footer
      %s55 = sadd.s32 1, %s51
    $region7: #{tpu_custom_call.1} parent=1 // loop_footer_branch
      %50 = sbr.rel target = $region3
    $region8: #{tpu_custom_call.1} parent=1 // loop_exit
      _
    %3604 = vsyncpa [#allocation3], 1
    %s3605 = scalar_lea.sflag [#allocation3], 1
    %3606 = vsyncpa %s3605, 1
    %3607 = vsyncpa [#allocation6], 1
    %s3608 = scalar_lea.sflag [#allocation6], 1
    %3609 = vsyncpa %s3608, 1
    %3610 = vsyncpa [#allocation9], 1
    %3611 = vsyncpa [#allocation12], 1
    %3612 = vsyncpa [#allocation15], 1
    %3613 = vsyncpa [#allocation18], 1
    %3614 = vsyncpa [#allocation21], 1
    %3615 = vsyncpa [#allocation24], 1
    %3616 = vsyncpa [#allocation27], 1
    %3617 = vsyncpa [#allocation30], 1
    %3618 = vsyncpa [#allocation33], 1
    %3619 = vsyncpa [#allocation36], 1
    %3620 = vsyncpa [#allocation39], 1
    %3621 = vsyncpa [#allocation4], 1
    %s3622 = scalar_lea.sflag [#allocation4], 1
    %3623 = vsyncpa %s3622, 1

</llo_original>
